<compile_context>
chip_gen: v6e
topology: v6e:2x2x1
jax: 0.10.0
libtpu: 0.0.40
codegen_flags: <defaults>
</compile_context>

<pallas_src>
import numpy as np

import jax
import jax.numpy as jnp
from jax.experimental import pallas as pl
from jax.experimental.pallas import tpu as pltpu


def _dot(a, b):
    return jnp.dot(a, b, preferred_element_type=jnp.float32)


# ----------------------------------------------------------------------------
# The fused kernel: one batch tile (TB samples) per grid step.
# Row layout of the activation slabs: row = b*32 + h (b = sample within tile).
# Valid rows after pool1 sit at b*32 + 2*oh1, after pool2 at b*32 + 4*ph;
# in-between rows hold finite garbage that is never read for valid outputs.
# ----------------------------------------------------------------------------
def _lenet_kernel(x_ref, t1_ref, b1_ref, r1_ref, t2_ref, b2_ref, r2_ref,
                  s_ref, w1_ref, c1_ref, w2_ref, c2_ref, w3_ref, c3_ref,
                  o_ref):
    x = x_ref[...]                                   # (N, 96), N = TB*32, lanes = w*3 + c
    n = x.shape[0]

    # ---- conv1 (3->6, 5x5 valid): 5 batched Toeplitz GEMMs over shifted slabs ----
    l1 = n - 4
    acc1 = _dot(x[0:l1, :], t1_ref[0])
    for dy in range(1, 5):
        acc1 = acc1 + _dot(x[dy:dy + l1, :], t1_ref[dy])
    y1 = jnp.maximum(acc1 + b1_ref[...], 0.0)        # (N-4, 168), lanes = ow*6 + oc

    # ---- pool1: H pairs via shifted elementwise max, W pairs via one-hot GEMMs ----
    m1 = jnp.maximum(y1[0:l1 - 1, :], y1[1:l1, :])   # valid rows at b*32 + 2*oh1
    p1 = jnp.maximum(_dot(m1, r1_ref[0]), _dot(m1, r1_ref[1]))   # (N-5, 84), lanes = pw*6 + c

    # ---- conv2 (6->16, 5x5): 5 shifted Toeplitz GEMMs (stride-2 stretched rows) ----
    l2 = n - 13
    acc2 = _dot(p1[0:l2, :], t2_ref[0])
    for dy in range(1, 5):
        acc2 = acc2 + _dot(p1[2 * dy:2 * dy + l2, :], t2_ref[dy])
    y2 = jnp.maximum(acc2 + b2_ref[...], 0.0)        # (N-13, 160), valid rows at b*32 + 2*oh2

    # ---- pool2 ----
    m2 = jnp.maximum(y2[0:l2 - 2, :], y2[2:l2, :])   # valid rows at b*32 + 4*ph
    p2 = jnp.maximum(_dot(m2, r2_ref[0]), _dot(m2, r2_ref[1]))   # (N-15, 80), lanes = pw*16 + c

    # ---- fc1: one-hot row selection (row b*32 + 4*ph of every sample) + weight slab ----
    h = _dot(_dot(s_ref[0], p2), w1_ref[0])
    for ph in range(1, 5):
        h = h + _dot(_dot(s_ref[ph], p2), w1_ref[ph])
    h1 = jnp.maximum(h + c1_ref[...], 0.0)           # (TB, 128), lanes 120..127 are exact zeros

    # ---- fc2 / fc3 (zero-padded to 128 lanes) ----
    h2 = jnp.maximum(_dot(h1, w2_ref[...]) + c2_ref[...], 0.0)   # (TB, 128)
    o_ref[...] = _dot(h2, w3_ref[...]) + c3_ref[...]             # (TB, 10)


def _pick_batch_tile(batch):
    # Multiple-of-8 tile (legal lane/sublane blocking for the (TB,10) output),
    # preferring a grid of >= 2 steps so both v7x TensorCores get work.
    for tb in (32, 24, 16, 8):
        if batch % tb == 0 and batch // tb >= 2:
            return tb
    for tb in (32, 24, 16, 8):
        if batch % tb == 0:
            return tb
    return batch          # block == full array: always legal


def lenet_forward(kparams, x_nchw):
    B = x_nchw.shape[0]
    TB = _pick_batch_tile(B)
    N = TB * 32

    # One-time NCHW -> NHWC repack; (B, 32, 96) -> (B*32, 96) is layout-preserving.
    xs = jnp.transpose(x_nchw, (0, 2, 3, 1)).reshape(B * 32, 96)

    # One-hot fc1 row selectors (depend only on the static batch tile).
    sel = np.zeros((5, TB, N - 15), np.float32)
    for ph in range(5):
        for b in range(TB):
            sel[ph, b, b * 32 + 4 * ph] = 1.0
    sel = jnp.asarray(sel)

    def full_spec(shape):
        nd = len(shape)
        return pl.BlockSpec(shape, lambda i: (0,) * nd)

    return pl.pallas_call(
        _lenet_kernel,
        out_shape=jax.ShapeDtypeStruct((B, 10), jnp.float32),
        grid=(B // TB,),
        in_specs=[
            pl.BlockSpec((N, 96), lambda i: (i, 0)),     # batch-tiled input slab
            full_spec((5, 96, 168)),                     # conv1 Toeplitz (per dy)
            full_spec((1, 168)),                         # conv1 bias (tiled over ow)
            full_spec((2, 168, 84)),                     # pool1 W selectors
            full_spec((5, 84, 160)),                     # conv2 Toeplitz (per dy)
            full_spec((1, 160)),                         # conv2 bias
            full_spec((2, 160, 80)),                     # pool2 W selectors
            full_spec((5, TB, N - 15)),                  # fc1 row selectors
            full_spec((5, 80, 128)),                     # fc1 weight slabs (padded)
            full_spec((1, 128)),                         # fc1 bias (padded)
            full_spec((128, 128)),                       # fc2 weight (padded)
            full_spec((1, 128)),                         # fc2 bias (padded)
            full_spec((128, 10)),                        # fc3 weight
            full_spec((1, 10)),                          # fc3 bias
        ],
        out_specs=pl.BlockSpec((TB, 10), lambda i: (i, 0)),
        compiler_params=pltpu.CompilerParams(
            dimension_semantics=("parallel",),
            vmem_limit_bytes=32 * 1024 * 1024),
    )(xs, kparams["t1"], kparams["b1"], kparams["r1"],
      kparams["t2"], kparams["b2"], kparams["r2"],
      sel, kparams["w1"], kparams["c1"],
      kparams["w2"], kparams["c2"], kparams["w3"], kparams["c3"])


# ----------------------------------------------------------------------------
# Parameter construction (PyTorch-native layout) + one-time kernel repack
# ----------------------------------------------------------------------------
def init_params(key):
    def uinit(k, shape, fan_in):
        bound = float(1.0 / np.sqrt(fan_in))
        return jax.random.uniform(k, shape, jnp.float32, -bound, bound)

    ks = jax.random.split(key, 10)
    return {
        "conv1_w": uinit(ks[0], (6, 3, 5, 5), 75),     # (OC, IC, KH, KW)
        "conv1_b": uinit(ks[1], (6,), 75),
        "conv2_w": uinit(ks[2], (16, 6, 5, 5), 150),
        "conv2_b": uinit(ks[3], (16,), 150),
        "fc1_w": uinit(ks[4], (120, 400), 400),        # (out, in), in ordered (c, h, w)
        "fc1_b": uinit(ks[5], (120,), 400),
        "fc2_w": uinit(ks[6], (84, 120), 120),
        "fc2_b": uinit(ks[7], (84,), 120),
        "fc3_w": uinit(ks[8], (10, 84), 84),
        "fc3_b": uinit(ks[9], (10,), 84),
    }


def prepare_kernel_params(params):
    """One-time host-side repack of PyTorch weights into the kernel layout."""
    c1w = np.asarray(params["conv1_w"], np.float32)
    c1b = np.asarray(params["conv1_b"], np.float32)
    c2w = np.asarray(params["conv2_w"], np.float32)
    c2b = np.asarray(params["conv2_b"], np.float32)

    # conv1 Toeplitz over (w, c) lanes: T1[dy, w*3+c, ow*6+oc].
    T1 = np.zeros((5, 96, 168), np.float32)
    for dy in range(5):
        for ow in range(28):
            for dx in range(5):
                for c in range(3):
                    T1[dy, (ow + dx) * 3 + c, ow * 6:(ow + 1) * 6] = c1w[:, c, dy, dx]
    B1 = np.tile(c1b, 28).reshape(1, 168)

    # pool1 W selectors (even/odd output columns).
    R1 = np.zeros((2, 168, 84), np.float32)
    for p in range(2):
        for pw in range(14):
            ow = 2 * pw + p
            R1[p, ow * 6:(ow + 1) * 6, pw * 6:(pw + 1) * 6] = np.eye(6, dtype=np.float32)

    # conv2 Toeplitz over (w, c) lanes: T2[dy, w*6+c, ow*16+oc].
    T2 = np.zeros((5, 84, 160), np.float32)
    for dy in range(5):
        for ow in range(10):
            for dx in range(5):
                for c in range(6):
                    T2[dy, (ow + dx) * 6 + c, ow * 16:(ow + 1) * 16] = c2w[:, c, dy, dx]
    B2 = np.tile(c2b, 10).reshape(1, 160)

    R2 = np.zeros((2, 160, 80), np.float32)
    for p in range(2):
        for pw in range(5):
            ow = 2 * pw + p
            R2[p, ow * 16:(ow + 1) * 16, pw * 16:(pw + 1) * 16] = np.eye(16, dtype=np.float32)

    # fc1: per pooled-row (ph) weight slab; kernel lane order is pw*16 + c,
    # torch NCHW-flatten index is c*25 + ph*5 + pw.  Outputs padded 120 -> 128.
    f1w = np.asarray(params["fc1_w"], np.float32)
    W1 = np.zeros((5, 80, 128), np.float32)
    for ph in range(5):
        for pw in range(5):
            for c in range(16):
                W1[ph, pw * 16 + c, :120] = f1w[:, c * 25 + ph * 5 + pw]
    C1 = np.zeros((1, 128), np.float32)
    C1[0, :120] = np.asarray(params["fc1_b"], np.float32)

    W2 = np.zeros((128, 128), np.float32)
    W2[:120, :84] = np.asarray(params["fc2_w"], np.float32).T
    C2 = np.zeros((1, 128), np.float32)
    C2[0, :84] = np.asarray(params["fc2_b"], np.float32)

    W3 = np.zeros((128, 10), np.float32)
    W3[:84, :] = np.asarray(params["fc3_w"], np.float32).T
    C3 = np.asarray(params["fc3_b"], np.float32).reshape(1, 10)

    host = dict(t1=T1, b1=B1, r1=R1, t2=T2, b2=B2, r2=R2,
                w1=W1, c1=C1, w2=W2, c2=C2, w3=W3, c3=C3)
    return {k: jnp.asarray(v) for k, v in host.items()}


# Pure-JAX/XLA reference of Net.forward (self-check only).
def reference_forward(params, x):
    dn = ("NCHW", "OIHW", "NCHW")
    y = jax.lax.conv_general_dilated(x, params["conv1_w"], (1, 1), "VALID",
                                     dimension_numbers=dn)
    y = jnp.maximum(y + params["conv1_b"].reshape(1, 6, 1, 1), 0.0)
    y = jax.lax.reduce_window(y, -jnp.inf, jax.lax.max, (1, 1, 2, 2), (1, 1, 2, 2), "VALID")
    y = jax.lax.conv_general_dilated(y, params["conv2_w"], (1, 1), "VALID",
                                     dimension_numbers=dn)
    y = jnp.maximum(y + params["conv2_b"].reshape(1, 16, 1, 1), 0.0)
    y = jax.lax.reduce_window(y, -jnp.inf, jax.lax.max, (1, 1, 2, 2), (1, 1, 2, 2), "VALID")
    y = y.reshape(y.shape[0], -1)
    y = jnp.maximum(y @ params["fc1_w"].T + params["fc1_b"], 0.0)
    y = jnp.maximum(y @ params["fc2_w"].T + params["fc2_b"], 0.0)
    return y @ params["fc3_w"].T + params["fc3_b"]


if __name__ == "__main__":
    key = jax.random.PRNGKey(0)
    pkey, xkey = jax.random.split(key)
    params = init_params(pkey)
    kparams = prepare_kernel_params(params)

    B = 16                               # -> TB=8, grid=(2,) : both v7x cores busy
    x = jax.random.normal(xkey, (B, 3, 32, 32), dtype=jnp.float32)

    fwd = jax.jit(lenet_forward)
    out = jax.block_until_ready(fwd(kparams, x))

    assert out.shape == (B, 10), out.shape
    assert bool(jnp.all(jnp.isfinite(out)))

    # Numerical self-check against the pure-JAX reference of Net.forward.
    ref = reference_forward(params, x)
    err = float(jnp.max(jnp.abs(out - ref)))
    assert err < 1e-2, f"mismatch vs reference: max abs err {err}"

    print("KERNEL_OK")
</pallas_src>

<mosaic_0001>
module attributes {stable_mosaic.version = 11 : i64} {
  func.func @_lenet_kernel(%arg0: i32, %arg1: memref<256x96xf32, #tpu.memory_space<vmem>>, %arg2: memref<5x96x168xf32, #tpu.memory_space<vmem>>, %arg3: memref<1x168xf32, #tpu.memory_space<vmem>>, %arg4: memref<2x168x84xf32, #tpu.memory_space<vmem>>, %arg5: memref<5x84x160xf32, #tpu.memory_space<vmem>>, %arg6: memref<1x160xf32, #tpu.memory_space<vmem>>, %arg7: memref<2x160x80xf32, #tpu.memory_space<vmem>>, %arg8: memref<5x8x241xf32, #tpu.memory_space<vmem>>, %arg9: memref<5x80x128xf32, #tpu.memory_space<vmem>>, %arg10: memref<1x128xf32, #tpu.memory_space<vmem>>, %arg11: memref<128x128xf32, #tpu.memory_space<vmem>>, %arg12: memref<1x128xf32, #tpu.memory_space<vmem>>, %arg13: memref<128x10xf32, #tpu.memory_space<vmem>>, %arg14: memref<1x10xf32, #tpu.memory_space<vmem>>, %arg15: memref<8x10xf32, #tpu.memory_space<vmem>>) attributes {dimension_semantics = [#tpu.dimension_semantics<parallel>], iteration_bounds = array<i64: 2>, scalar_prefetch = 0 : i64, scratch_operands = 0 : i64, tpu.core_type = #tpu.core_type<tc>, window_params = [{transform_indices = @transform_0, window_bounds = array<i64: 256, 96>}, {pipeline_mode = #tpu.pipeline_mode<synchronous>, transform_indices = @transform_1, window_bounds = array<i64: 5, 96, 168>}, {pipeline_mode = #tpu.pipeline_mode<synchronous>, transform_indices = @transform_2, window_bounds = array<i64: 1, 168>}, {pipeline_mode = #tpu.pipeline_mode<synchronous>, transform_indices = @transform_3, window_bounds = array<i64: 2, 168, 84>}, {pipeline_mode = #tpu.pipeline_mode<synchronous>, transform_indices = @transform_4, window_bounds = array<i64: 5, 84, 160>}, {pipeline_mode = #tpu.pipeline_mode<synchronous>, transform_indices = @transform_5, window_bounds = array<i64: 1, 160>}, {pipeline_mode = #tpu.pipeline_mode<synchronous>, transform_indices = @transform_6, window_bounds = array<i64: 2, 160, 80>}, {pipeline_mode = #tpu.pipeline_mode<synchronous>, transform_indices = @transform_7, window_bounds = array<i64: 5, 8, 241>}, {pipeline_mode = #tpu.pipeline_mode<synchronous>, transform_indices = @transform_8, window_bounds = array<i64: 5, 80, 128>}, {pipeline_mode = #tpu.pipeline_mode<synchronous>, transform_indices = @transform_9, window_bounds = array<i64: 1, 128>}, {pipeline_mode = #tpu.pipeline_mode<synchronous>, transform_indices = @transform_10, window_bounds = array<i64: 128, 128>}, {pipeline_mode = #tpu.pipeline_mode<synchronous>, transform_indices = @transform_11, window_bounds = array<i64: 1, 128>}, {pipeline_mode = #tpu.pipeline_mode<synchronous>, transform_indices = @transform_12, window_bounds = array<i64: 128, 10>}, {pipeline_mode = #tpu.pipeline_mode<synchronous>, transform_indices = @transform_13, window_bounds = array<i64: 1, 10>}, {transform_indices = @transform_14, window_bounds = array<i64: 8, 10>}]} {
    %c0 = arith.constant 0 : index
    %c0_0 = arith.constant 0 : index
    %0 = vector.load %arg1[%c0, %c0_0] : memref<256x96xf32, #tpu.memory_space<vmem>>, vector<256x96xf32>
    %1 = vector.extract_strided_slice %0 {offsets = [0, 0], sizes = [252, 96], strides = [1, 1]} : vector<256x96xf32> to vector<252x96xf32>
    %c0_1 = arith.constant 0 : index
    %c0_2 = arith.constant 0 : index
    %c0_3 = arith.constant 0 : index
    %2 = vector.load %arg2[%c0_1, %c0_2, %c0_3] : memref<5x96x168xf32, #tpu.memory_space<vmem>>, vector<1x96x168xf32>
    %3 = vector.shape_cast %2 : vector<1x96x168xf32> to vector<96x168xf32>
    %cst = arith.constant dense<0.000000e+00> : vector<252x168xf32>
    %4 = tpu.matmul %1, %3, %cst {dimension_numbers = #tpu.dot_dimension_numbers<[1], [0], [0], [1], [0, 0, 1, 1], [], []>} : vector<252x96xf32>, vector<96x168xf32>, vector<252x168xf32> -> vector<252x168xf32>
    %5 = vector.extract_strided_slice %0 {offsets = [1, 0], sizes = [252, 96], strides = [1, 1]} : vector<256x96xf32> to vector<252x96xf32>
    %c1 = arith.constant 1 : index
    %c0_4 = arith.constant 0 : index
    %c0_5 = arith.constant 0 : index
    %6 = vector.load %arg2[%c1, %c0_4, %c0_5] : memref<5x96x168xf32, #tpu.memory_space<vmem>>, vector<1x96x168xf32>
    %7 = vector.shape_cast %6 : vector<1x96x168xf32> to vector<96x168xf32>
    %cst_6 = arith.constant dense<0.000000e+00> : vector<252x168xf32>
    %8 = tpu.matmul %5, %7, %cst_6 {dimension_numbers = #tpu.dot_dimension_numbers<[1], [0], [0], [1], [0, 0, 1, 1], [], []>} : vector<252x96xf32>, vector<96x168xf32>, vector<252x168xf32> -> vector<252x168xf32>
    %9 = arith.addf %4, %8 : vector<252x168xf32>
    %10 = vector.extract_strided_slice %0 {offsets = [2, 0], sizes = [252, 96], strides = [1, 1]} : vector<256x96xf32> to vector<252x96xf32>
    %c2 = arith.constant 2 : index
    %c0_7 = arith.constant 0 : index
    %c0_8 = arith.constant 0 : index
    %11 = vector.load %arg2[%c2, %c0_7, %c0_8] : memref<5x96x168xf32, #tpu.memory_space<vmem>>, vector<1x96x168xf32>
    %12 = vector.shape_cast %11 : vector<1x96x168xf32> to vector<96x168xf32>
    %cst_9 = arith.constant dense<0.000000e+00> : vector<252x168xf32>
    %13 = tpu.matmul %10, %12, %cst_9 {dimension_numbers = #tpu.dot_dimension_numbers<[1], [0], [0], [1], [0, 0, 1, 1], [], []>} : vector<252x96xf32>, vector<96x168xf32>, vector<252x168xf32> -> vector<252x168xf32>
    %14 = arith.addf %9, %13 : vector<252x168xf32>
    %15 = vector.extract_strided_slice %0 {offsets = [3, 0], sizes = [252, 96], strides = [1, 1]} : vector<256x96xf32> to vector<252x96xf32>
    %c3 = arith.constant 3 : index
    %c0_10 = arith.constant 0 : index
    %c0_11 = arith.constant 0 : index
    %16 = vector.load %arg2[%c3, %c0_10, %c0_11] : memref<5x96x168xf32, #tpu.memory_space<vmem>>, vector<1x96x168xf32>
    %17 = vector.shape_cast %16 : vector<1x96x168xf32> to vector<96x168xf32>
    %cst_12 = arith.constant dense<0.000000e+00> : vector<252x168xf32>
    %18 = tpu.matmul %15, %17, %cst_12 {dimension_numbers = #tpu.dot_dimension_numbers<[1], [0], [0], [1], [0, 0, 1, 1], [], []>} : vector<252x96xf32>, vector<96x168xf32>, vector<252x168xf32> -> vector<252x168xf32>
    %19 = arith.addf %14, %18 : vector<252x168xf32>
    %20 = vector.extract_strided_slice %0 {offsets = [4, 0], sizes = [252, 96], strides = [1, 1]} : vector<256x96xf32> to vector<252x96xf32>
    %c4 = arith.constant 4 : index
    %c0_13 = arith.constant 0 : index
    %c0_14 = arith.constant 0 : index
    %21 = vector.load %arg2[%c4, %c0_13, %c0_14] : memref<5x96x168xf32, #tpu.memory_space<vmem>>, vector<1x96x168xf32>
    %22 = vector.shape_cast %21 : vector<1x96x168xf32> to vector<96x168xf32>
    %cst_15 = arith.constant dense<0.000000e+00> : vector<252x168xf32>
    %23 = tpu.matmul %20, %22, %cst_15 {dimension_numbers = #tpu.dot_dimension_numbers<[1], [0], [0], [1], [0, 0, 1, 1], [], []>} : vector<252x96xf32>, vector<96x168xf32>, vector<252x168xf32> -> vector<252x168xf32>
    %24 = arith.addf %19, %23 : vector<252x168xf32>
    %c0_16 = arith.constant 0 : index
    %c0_17 = arith.constant 0 : index
    %25 = vector.load %arg3[%c0_16, %c0_17] : memref<1x168xf32, #tpu.memory_space<vmem>>, vector<1x168xf32>
    %26 = vector.broadcast %25 : vector<1x168xf32> to vector<252x168xf32>
    %27 = arith.addf %24, %26 : vector<252x168xf32>
    %cst_18 = arith.constant 0.000000e+00 : f32
    %28 = vector.broadcast %cst_18 : f32 to vector<252x168xf32>
    %29 = arith.maximumf %27, %28 : vector<252x168xf32>
    %30 = vector.extract_strided_slice %29 {offsets = [0, 0], sizes = [251, 168], strides = [1, 1]} : vector<252x168xf32> to vector<251x168xf32>
    %31 = vector.extract_strided_slice %29 {offsets = [1, 0], sizes = [251, 168], strides = [1, 1]} : vector<252x168xf32> to vector<251x168xf32>
    %32 = arith.maximumf %30, %31 : vector<251x168xf32>
    %c0_19 = arith.constant 0 : index
    %c0_20 = arith.constant 0 : index
    %c0_21 = arith.constant 0 : index
    %33 = vector.load %arg4[%c0_19, %c0_20, %c0_21] : memref<2x168x84xf32, #tpu.memory_space<vmem>>, vector<1x168x84xf32>
    %34 = vector.shape_cast %33 : vector<1x168x84xf32> to vector<168x84xf32>
    %cst_22 = arith.constant dense<0.000000e+00> : vector<251x84xf32>
    %35 = tpu.matmul %32, %34, %cst_22 {dimension_numbers = #tpu.dot_dimension_numbers<[1], [0], [0], [1], [0, 0, 1, 1], [], []>} : vector<251x168xf32>, vector<168x84xf32>, vector<251x84xf32> -> vector<251x84xf32>
    %c1_23 = arith.constant 1 : index
    %c0_24 = arith.constant 0 : index
    %c0_25 = arith.constant 0 : index
    %36 = vector.load %arg4[%c1_23, %c0_24, %c0_25] : memref<2x168x84xf32, #tpu.memory_space<vmem>>, vector<1x168x84xf32>
    %37 = vector.shape_cast %36 : vector<1x168x84xf32> to vector<168x84xf32>
    %cst_26 = arith.constant dense<0.000000e+00> : vector<251x84xf32>
    %38 = tpu.matmul %32, %37, %cst_26 {dimension_numbers = #tpu.dot_dimension_numbers<[1], [0], [0], [1], [0, 0, 1, 1], [], []>} : vector<251x168xf32>, vector<168x84xf32>, vector<251x84xf32> -> vector<251x84xf32>
    %39 = arith.maximumf %35, %38 : vector<251x84xf32>
    %40 = vector.extract_strided_slice %39 {offsets = [0, 0], sizes = [243, 84], strides = [1, 1]} : vector<251x84xf32> to vector<243x84xf32>
    %c0_27 = arith.constant 0 : index
    %c0_28 = arith.constant 0 : index
    %c0_29 = arith.constant 0 : index
    %41 = vector.load %arg5[%c0_27, %c0_28, %c0_29] : memref<5x84x160xf32, #tpu.memory_space<vmem>>, vector<1x84x160xf32>
    %42 = vector.shape_cast %41 : vector<1x84x160xf32> to vector<84x160xf32>
    %cst_30 = arith.constant dense<0.000000e+00> : vector<243x160xf32>
    %43 = tpu.matmul %40, %42, %cst_30 {dimension_numbers = #tpu.dot_dimension_numbers<[1], [0], [0], [1], [0, 0, 1, 1], [], []>} : vector<243x84xf32>, vector<84x160xf32>, vector<243x160xf32> -> vector<243x160xf32>
    %44 = vector.extract_strided_slice %39 {offsets = [2, 0], sizes = [243, 84], strides = [1, 1]} : vector<251x84xf32> to vector<243x84xf32>
    %c1_31 = arith.constant 1 : index
    %c0_32 = arith.constant 0 : index
    %c0_33 = arith.constant 0 : index
    %45 = vector.load %arg5[%c1_31, %c0_32, %c0_33] : memref<5x84x160xf32, #tpu.memory_space<vmem>>, vector<1x84x160xf32>
    %46 = vector.shape_cast %45 : vector<1x84x160xf32> to vector<84x160xf32>
    %cst_34 = arith.constant dense<0.000000e+00> : vector<243x160xf32>
    %47 = tpu.matmul %44, %46, %cst_34 {dimension_numbers = #tpu.dot_dimension_numbers<[1], [0], [0], [1], [0, 0, 1, 1], [], []>} : vector<243x84xf32>, vector<84x160xf32>, vector<243x160xf32> -> vector<243x160xf32>
    %48 = arith.addf %43, %47 : vector<243x160xf32>
    %49 = vector.extract_strided_slice %39 {offsets = [4, 0], sizes = [243, 84], strides = [1, 1]} : vector<251x84xf32> to vector<243x84xf32>
    %c2_35 = arith.constant 2 : index
    %c0_36 = arith.constant 0 : index
    %c0_37 = arith.constant 0 : index
    %50 = vector.load %arg5[%c2_35, %c0_36, %c0_37] : memref<5x84x160xf32, #tpu.memory_space<vmem>>, vector<1x84x160xf32>
    %51 = vector.shape_cast %50 : vector<1x84x160xf32> to vector<84x160xf32>
    %cst_38 = arith.constant dense<0.000000e+00> : vector<243x160xf32>
    %52 = tpu.matmul %49, %51, %cst_38 {dimension_numbers = #tpu.dot_dimension_numbers<[1], [0], [0], [1], [0, 0, 1, 1], [], []>} : vector<243x84xf32>, vector<84x160xf32>, vector<243x160xf32> -> vector<243x160xf32>
    %53 = arith.addf %48, %52 : vector<243x160xf32>
    %54 = vector.extract_strided_slice %39 {offsets = [6, 0], sizes = [243, 84], strides = [1, 1]} : vector<251x84xf32> to vector<243x84xf32>
    %c3_39 = arith.constant 3 : index
    %c0_40 = arith.constant 0 : index
    %c0_41 = arith.constant 0 : index
    %55 = vector.load %arg5[%c3_39, %c0_40, %c0_41] : memref<5x84x160xf32, #tpu.memory_space<vmem>>, vector<1x84x160xf32>
    %56 = vector.shape_cast %55 : vector<1x84x160xf32> to vector<84x160xf32>
    %cst_42 = arith.constant dense<0.000000e+00> : vector<243x160xf32>
    %57 = tpu.matmul %54, %56, %cst_42 {dimension_numbers = #tpu.dot_dimension_numbers<[1], [0], [0], [1], [0, 0, 1, 1], [], []>} : vector<243x84xf32>, vector<84x160xf32>, vector<243x160xf32> -> vector<243x160xf32>
    %58 = arith.addf %53, %57 : vector<243x160xf32>
    %59 = vector.extract_strided_slice %39 {offsets = [8, 0], sizes = [243, 84], strides = [1, 1]} : vector<251x84xf32> to vector<243x84xf32>
    %c4_43 = arith.constant 4 : index
    %c0_44 = arith.constant 0 : index
    %c0_45 = arith.constant 0 : index
    %60 = vector.load %arg5[%c4_43, %c0_44, %c0_45] : memref<5x84x160xf32, #tpu.memory_space<vmem>>, vector<1x84x160xf32>
    %61 = vector.shape_cast %60 : vector<1x84x160xf32> to vector<84x160xf32>
    %cst_46 = arith.constant dense<0.000000e+00> : vector<243x160xf32>
    %62 = tpu.matmul %59, %61, %cst_46 {dimension_numbers = #tpu.dot_dimension_numbers<[1], [0], [0], [1], [0, 0, 1, 1], [], []>} : vector<243x84xf32>, vector<84x160xf32>, vector<243x160xf32> -> vector<243x160xf32>
    %63 = arith.addf %58, %62 : vector<243x160xf32>
    %c0_47 = arith.constant 0 : index
    %c0_48 = arith.constant 0 : index
    %64 = vector.load %arg6[%c0_47, %c0_48] : memref<1x160xf32, #tpu.memory_space<vmem>>, vector<1x160xf32>
    %65 = vector.broadcast %64 : vector<1x160xf32> to vector<243x160xf32>
    %66 = arith.addf %63, %65 : vector<243x160xf32>
    %cst_49 = arith.constant 0.000000e+00 : f32
    %67 = vector.broadcast %cst_49 : f32 to vector<243x160xf32>
    %68 = arith.maximumf %66, %67 : vector<243x160xf32>
    %69 = vector.extract_strided_slice %68 {offsets = [0, 0], sizes = [241, 160], strides = [1, 1]} : vector<243x160xf32> to vector<241x160xf32>
    %70 = vector.extract_strided_slice %68 {offsets = [2, 0], sizes = [241, 160], strides = [1, 1]} : vector<243x160xf32> to vector<241x160xf32>
    %71 = arith.maximumf %69, %70 : vector<241x160xf32>
    %c0_50 = arith.constant 0 : index
    %c0_51 = arith.constant 0 : index
    %c0_52 = arith.constant 0 : index
    %72 = vector.load %arg7[%c0_50, %c0_51, %c0_52] : memref<2x160x80xf32, #tpu.memory_space<vmem>>, vector<1x160x80xf32>
    %73 = vector.shape_cast %72 : vector<1x160x80xf32> to vector<160x80xf32>
    %cst_53 = arith.constant dense<0.000000e+00> : vector<241x80xf32>
    %74 = tpu.matmul %71, %73, %cst_53 {dimension_numbers = #tpu.dot_dimension_numbers<[1], [0], [0], [1], [0, 0, 1, 1], [], []>} : vector<241x160xf32>, vector<160x80xf32>, vector<241x80xf32> -> vector<241x80xf32>
    %c1_54 = arith.constant 1 : index
    %c0_55 = arith.constant 0 : index
    %c0_56 = arith.constant 0 : index
    %75 = vector.load %arg7[%c1_54, %c0_55, %c0_56] : memref<2x160x80xf32, #tpu.memory_space<vmem>>, vector<1x160x80xf32>
    %76 = vector.shape_cast %75 : vector<1x160x80xf32> to vector<160x80xf32>
    %cst_57 = arith.constant dense<0.000000e+00> : vector<241x80xf32>
    %77 = tpu.matmul %71, %76, %cst_57 {dimension_numbers = #tpu.dot_dimension_numbers<[1], [0], [0], [1], [0, 0, 1, 1], [], []>} : vector<241x160xf32>, vector<160x80xf32>, vector<241x80xf32> -> vector<241x80xf32>
    %78 = arith.maximumf %74, %77 : vector<241x80xf32>
    %c0_58 = arith.constant 0 : index
    %c0_59 = arith.constant 0 : index
    %c0_60 = arith.constant 0 : index
    %79 = vector.load %arg8[%c0_58, %c0_59, %c0_60] : memref<5x8x241xf32, #tpu.memory_space<vmem>>, vector<1x8x241xf32>
    %80 = vector.shape_cast %79 : vector<1x8x241xf32> to vector<8x241xf32>
    %cst_61 = arith.constant dense<0.000000e+00> : vector<8x80xf32>
    %81 = tpu.matmul %80, %78, %cst_61 {dimension_numbers = #tpu.dot_dimension_numbers<[1], [0], [0], [1], [0, 0, 1, 1], [], []>} : vector<8x241xf32>, vector<241x80xf32>, vector<8x80xf32> -> vector<8x80xf32>
    %c0_62 = arith.constant 0 : index
    %c0_63 = arith.constant 0 : index
    %c0_64 = arith.constant 0 : index
    %82 = vector.load %arg9[%c0_62, %c0_63, %c0_64] : memref<5x80x128xf32, #tpu.memory_space<vmem>>, vector<1x80x128xf32>
    %83 = vector.shape_cast %82 : vector<1x80x128xf32> to vector<80x128xf32>
    %cst_65 = arith.constant dense<0.000000e+00> : vector<8x128xf32>
    %84 = tpu.matmul %81, %83, %cst_65 {dimension_numbers = #tpu.dot_dimension_numbers<[1], [0], [0], [1], [0, 0, 1, 1], [], []>} : vector<8x80xf32>, vector<80x128xf32>, vector<8x128xf32> -> vector<8x128xf32>
    %c1_66 = arith.constant 1 : index
    %c0_67 = arith.constant 0 : index
    %c0_68 = arith.constant 0 : index
    %85 = vector.load %arg8[%c1_66, %c0_67, %c0_68] : memref<5x8x241xf32, #tpu.memory_space<vmem>>, vector<1x8x241xf32>
    %86 = vector.shape_cast %85 : vector<1x8x241xf32> to vector<8x241xf32>
    %cst_69 = arith.constant dense<0.000000e+00> : vector<8x80xf32>
    %87 = tpu.matmul %86, %78, %cst_69 {dimension_numbers = #tpu.dot_dimension_numbers<[1], [0], [0], [1], [0, 0, 1, 1], [], []>} : vector<8x241xf32>, vector<241x80xf32>, vector<8x80xf32> -> vector<8x80xf32>
    %c1_70 = arith.constant 1 : index
    %c0_71 = arith.constant 0 : index
    %c0_72 = arith.constant 0 : index
    %88 = vector.load %arg9[%c1_70, %c0_71, %c0_72] : memref<5x80x128xf32, #tpu.memory_space<vmem>>, vector<1x80x128xf32>
    %89 = vector.shape_cast %88 : vector<1x80x128xf32> to vector<80x128xf32>
    %cst_73 = arith.constant dense<0.000000e+00> : vector<8x128xf32>
    %90 = tpu.matmul %87, %89, %cst_73 {dimension_numbers = #tpu.dot_dimension_numbers<[1], [0], [0], [1], [0, 0, 1, 1], [], []>} : vector<8x80xf32>, vector<80x128xf32>, vector<8x128xf32> -> vector<8x128xf32>
    %91 = arith.addf %84, %90 : vector<8x128xf32>
    %c2_74 = arith.constant 2 : index
    %c0_75 = arith.constant 0 : index
    %c0_76 = arith.constant 0 : index
    %92 = vector.load %arg8[%c2_74, %c0_75, %c0_76] : memref<5x8x241xf32, #tpu.memory_space<vmem>>, vector<1x8x241xf32>
    %93 = vector.shape_cast %92 : vector<1x8x241xf32> to vector<8x241xf32>
    %cst_77 = arith.constant dense<0.000000e+00> : vector<8x80xf32>
    %94 = tpu.matmul %93, %78, %cst_77 {dimension_numbers = #tpu.dot_dimension_numbers<[1], [0], [0], [1], [0, 0, 1, 1], [], []>} : vector<8x241xf32>, vector<241x80xf32>, vector<8x80xf32> -> vector<8x80xf32>
    %c2_78 = arith.constant 2 : index
    %c0_79 = arith.constant 0 : index
    %c0_80 = arith.constant 0 : index
    %95 = vector.load %arg9[%c2_78, %c0_79, %c0_80] : memref<5x80x128xf32, #tpu.memory_space<vmem>>, vector<1x80x128xf32>
    %96 = vector.shape_cast %95 : vector<1x80x128xf32> to vector<80x128xf32>
    %cst_81 = arith.constant dense<0.000000e+00> : vector<8x128xf32>
    %97 = tpu.matmul %94, %96, %cst_81 {dimension_numbers = #tpu.dot_dimension_numbers<[1], [0], [0], [1], [0, 0, 1, 1], [], []>} : vector<8x80xf32>, vector<80x128xf32>, vector<8x128xf32> -> vector<8x128xf32>
    %98 = arith.addf %91, %97 : vector<8x128xf32>
    %c3_82 = arith.constant 3 : index
    %c0_83 = arith.constant 0 : index
    %c0_84 = arith.constant 0 : index
    %99 = vector.load %arg8[%c3_82, %c0_83, %c0_84] : memref<5x8x241xf32, #tpu.memory_space<vmem>>, vector<1x8x241xf32>
    %100 = vector.shape_cast %99 : vector<1x8x241xf32> to vector<8x241xf32>
    %cst_85 = arith.constant dense<0.000000e+00> : vector<8x80xf32>
    %101 = tpu.matmul %100, %78, %cst_85 {dimension_numbers = #tpu.dot_dimension_numbers<[1], [0], [0], [1], [0, 0, 1, 1], [], []>} : vector<8x241xf32>, vector<241x80xf32>, vector<8x80xf32> -> vector<8x80xf32>
    %c3_86 = arith.constant 3 : index
    %c0_87 = arith.constant 0 : index
    %c0_88 = arith.constant 0 : index
    %102 = vector.load %arg9[%c3_86, %c0_87, %c0_88] : memref<5x80x128xf32, #tpu.memory_space<vmem>>, vector<1x80x128xf32>
    %103 = vector.shape_cast %102 : vector<1x80x128xf32> to vector<80x128xf32>
    %cst_89 = arith.constant dense<0.000000e+00> : vector<8x128xf32>
    %104 = tpu.matmul %101, %103, %cst_89 {dimension_numbers = #tpu.dot_dimension_numbers<[1], [0], [0], [1], [0, 0, 1, 1], [], []>} : vector<8x80xf32>, vector<80x128xf32>, vector<8x128xf32> -> vector<8x128xf32>
    %105 = arith.addf %98, %104 : vector<8x128xf32>
    %c4_90 = arith.constant 4 : index
    %c0_91 = arith.constant 0 : index
    %c0_92 = arith.constant 0 : index
    %106 = vector.load %arg8[%c4_90, %c0_91, %c0_92] : memref<5x8x241xf32, #tpu.memory_space<vmem>>, vector<1x8x241xf32>
    %107 = vector.shape_cast %106 : vector<1x8x241xf32> to vector<8x241xf32>
    %cst_93 = arith.constant dense<0.000000e+00> : vector<8x80xf32>
    %108 = tpu.matmul %107, %78, %cst_93 {dimension_numbers = #tpu.dot_dimension_numbers<[1], [0], [0], [1], [0, 0, 1, 1], [], []>} : vector<8x241xf32>, vector<241x80xf32>, vector<8x80xf32> -> vector<8x80xf32>
    %c4_94 = arith.constant 4 : index
    %c0_95 = arith.constant 0 : index
    %c0_96 = arith.constant 0 : index
    %109 = vector.load %arg9[%c4_94, %c0_95, %c0_96] : memref<5x80x128xf32, #tpu.memory_space<vmem>>, vector<1x80x128xf32>
    %110 = vector.shape_cast %109 : vector<1x80x128xf32> to vector<80x128xf32>
    %cst_97 = arith.constant dense<0.000000e+00> : vector<8x128xf32>
    %111 = tpu.matmul %108, %110, %cst_97 {dimension_numbers = #tpu.dot_dimension_numbers<[1], [0], [0], [1], [0, 0, 1, 1], [], []>} : vector<8x80xf32>, vector<80x128xf32>, vector<8x128xf32> -> vector<8x128xf32>
    %112 = arith.addf %105, %111 : vector<8x128xf32>
    %c0_98 = arith.constant 0 : index
    %c0_99 = arith.constant 0 : index
    %113 = vector.load %arg10[%c0_98, %c0_99] : memref<1x128xf32, #tpu.memory_space<vmem>>, vector<1x128xf32>
    %114 = vector.broadcast %113 : vector<1x128xf32> to vector<8x128xf32>
    %115 = arith.addf %112, %114 : vector<8x128xf32>
    %cst_100 = arith.constant 0.000000e+00 : f32
    %116 = vector.broadcast %cst_100 : f32 to vector<8x128xf32>
    %117 = arith.maximumf %115, %116 : vector<8x128xf32>
    %c0_101 = arith.constant 0 : index
    %c0_102 = arith.constant 0 : index
    %118 = vector.load %arg11[%c0_101, %c0_102] : memref<128x128xf32, #tpu.memory_space<vmem>>, vector<128x128xf32>
    %cst_103 = arith.constant dense<0.000000e+00> : vector<8x128xf32>
    %119 = tpu.matmul %117, %118, %cst_103 {dimension_numbers = #tpu.dot_dimension_numbers<[1], [0], [0], [1], [0, 0, 1, 1], [], []>} : vector<8x128xf32>, vector<128x128xf32>, vector<8x128xf32> -> vector<8x128xf32>
    %c0_104 = arith.constant 0 : index
    %c0_105 = arith.constant 0 : index
    %120 = vector.load %arg12[%c0_104, %c0_105] : memref<1x128xf32, #tpu.memory_space<vmem>>, vector<1x128xf32>
    %121 = vector.broadcast %120 : vector<1x128xf32> to vector<8x128xf32>
    %122 = arith.addf %119, %121 : vector<8x128xf32>
    %cst_106 = arith.constant 0.000000e+00 : f32
    %123 = vector.broadcast %cst_106 : f32 to vector<8x128xf32>
    %124 = arith.maximumf %122, %123 : vector<8x128xf32>
    %c0_107 = arith.constant 0 : index
    %c0_108 = arith.constant 0 : index
    %125 = vector.load %arg13[%c0_107, %c0_108] : memref<128x10xf32, #tpu.memory_space<vmem>>, vector<128x10xf32>
    %cst_109 = arith.constant dense<0.000000e+00> : vector<8x10xf32>
    %126 = tpu.matmul %124, %125, %cst_109 {dimension_numbers = #tpu.dot_dimension_numbers<[1], [0], [0], [1], [0, 0, 1, 1], [], []>} : vector<8x128xf32>, vector<128x10xf32>, vector<8x10xf32> -> vector<8x10xf32>
    %c0_110 = arith.constant 0 : index
    %c0_111 = arith.constant 0 : index
    %127 = vector.load %arg14[%c0_110, %c0_111] : memref<1x10xf32, #tpu.memory_space<vmem>>, vector<1x10xf32>
    %128 = vector.broadcast %127 : vector<1x10xf32> to vector<8x10xf32>
    %129 = arith.addf %126, %128 : vector<8x10xf32>
    %c0_112 = arith.constant 0 : index
    %c0_113 = arith.constant 0 : index
    %130 = vector.load %arg15[%c0_112, %c0_113] : memref<8x10xf32, #tpu.memory_space<vmem>>, vector<8x10xf32>
    tpu.vector_store %arg15[%c0_112, %c0_113], %129 {strides = array<i32>} : memref<8x10xf32, #tpu.memory_space<vmem>>, vector<8x10xf32>,
    return
  }
  func.func @transform_0(%arg0: i32) -> (i32, i32) {
    %c0_i32 = arith.constant 0 : i32
    %c0_i32_0 = arith.constant 0 : i32
    return %arg0, %c0_i32 : i32, i32
  }
  func.func @transform_1(%arg0: i32) -> (i32, i32, i32) {
    %c0_i32 = arith.constant 0 : i32
    %c0_i32_0 = arith.constant 0 : i32
    %c0_i32_1 = arith.constant 0 : i32
    %c0_i32_2 = arith.constant 0 : i32
    return %c0_i32, %c0_i32_0, %c0_i32_1 : i32, i32, i32
  }
  func.func @transform_2(%arg0: i32) -> (i32, i32) {
    %c0_i32 = arith.constant 0 : i32
    %c0_i32_0 = arith.constant 0 : i32
    %c0_i32_1 = arith.constant 0 : i32
    return %c0_i32, %c0_i32_0 : i32, i32
  }
  func.func @transform_3(%arg0: i32) -> (i32, i32, i32) {
    %c0_i32 = arith.constant 0 : i32
    %c0_i32_0 = arith.constant 0 : i32
    %c0_i32_1 = arith.constant 0 : i32
    %c0_i32_2 = arith.constant 0 : i32
    return %c0_i32, %c0_i32_0, %c0_i32_1 : i32, i32, i32
  }
  func.func @transform_4(%arg0: i32) -> (i32, i32, i32) {
    %c0_i32 = arith.constant 0 : i32
    %c0_i32_0 = arith.constant 0 : i32
    %c0_i32_1 = arith.constant 0 : i32
    %c0_i32_2 = arith.constant 0 : i32
    return %c0_i32, %c0_i32_0, %c0_i32_1 : i32, i32, i32
  }
  func.func @transform_5(%arg0: i32) -> (i32, i32) {
    %c0_i32 = arith.constant 0 : i32
    %c0_i32_0 = arith.constant 0 : i32
    %c0_i32_1 = arith.constant 0 : i32
    return %c0_i32, %c0_i32_0 : i32, i32
  }
  func.func @transform_6(%arg0: i32) -> (i32, i32, i32) {
    %c0_i32 = arith.constant 0 : i32
    %c0_i32_0 = arith.constant 0 : i32
    %c0_i32_1 = arith.constant 0 : i32
    %c0_i32_2 = arith.constant 0 : i32
    return %c0_i32, %c0_i32_0, %c0_i32_1 : i32, i32, i32
  }
  func.func @transform_7(%arg0: i32) -> (i32, i32, i32) {
    %c0_i32 = arith.constant 0 : i32
    %c0_i32_0 = arith.constant 0 : i32
    %c0_i32_1 = arith.constant 0 : i32
    %c0_i32_2 = arith.constant 0 : i32
    return %c0_i32, %c0_i32_0, %c0_i32_1 : i32, i32, i32
  }
  func.func @transform_8(%arg0: i32) -> (i32, i32, i32) {
    %c0_i32 = arith.constant 0 : i32
    %c0_i32_0 = arith.constant 0 : i32
    %c0_i32_1 = arith.constant 0 : i32
    %c0_i32_2 = arith.constant 0 : i32
    return %c0_i32, %c0_i32_0, %c0_i32_1 : i32, i32, i32
  }
  func.func @transform_9(%arg0: i32) -> (i32, i32) {
    %c0_i32 = arith.constant 0 : i32
    %c0_i32_0 = arith.constant 0 : i32
    %c0_i32_1 = arith.constant 0 : i32
    return %c0_i32, %c0_i32_0 : i32, i32
  }
  func.func @transform_10(%arg0: i32) -> (i32, i32) {
    %c0_i32 = arith.constant 0 : i32
    %c0_i32_0 = arith.constant 0 : i32
    %c0_i32_1 = arith.constant 0 : i32
    return %c0_i32, %c0_i32_0 : i32, i32
  }
  func.func @transform_11(%arg0: i32) -> (i32, i32) {
    %c0_i32 = arith.constant 0 : i32
    %c0_i32_0 = arith.constant 0 : i32
    %c0_i32_1 = arith.constant 0 : i32
    return %c0_i32, %c0_i32_0 : i32, i32
  }
  func.func @transform_12(%arg0: i32) -> (i32, i32) {
    %c0_i32 = arith.constant 0 : i32
    %c0_i32_0 = arith.constant 0 : i32
    %c0_i32_1 = arith.constant 0 : i32
    return %c0_i32, %c0_i32_0 : i32, i32
  }
  func.func @transform_13(%arg0: i32) -> (i32, i32) {
    %c0_i32 = arith.constant 0 : i32
    %c0_i32_0 = arith.constant 0 : i32
    %c0_i32_1 = arith.constant 0 : i32
    return %c0_i32, %c0_i32_0 : i32, i32
  }
  func.func @transform_14(%arg0: i32) -> (i32, i32) {
    %c0_i32 = arith.constant 0 : i32
    %c0_i32_0 = arith.constant 0 : i32
    return %arg0, %c0_i32 : i32, i32
  }
}

</mosaic_0001>

<llo_original>
// kernel: lenet_forward.1
$region0: #{lenet_forward.1}
  #allocation0 [shape = 'u32[]', space=smem, size = 0x4, offset = 0x4, fixed_abs, tag = 'smem constant byte address 0x4 - core index']
  #allocation1 [shape = 'u32[144,128]{1,0:T(1,128)}', space=vmem, size = 0x12000, scoped, tag = 'internal scratch']
  %s0 = inlined_call_operand.vmem [shape: f32[512,96], index: 0, kind: input, shape index: {}]
  %s1 = inlined_call_operand.vmem [shape: f32[5,96,168], index: 1, kind: input, shape index: {}]
  %s2 = inlined_call_operand.vmem [shape: f32[1,168], index: 2, kind: input, shape index: {}]
  %s3 = inlined_call_operand.vmem [shape: f32[2,168,84], index: 3, kind: input, shape index: {}]
  %s4 = inlined_call_operand.vmem [shape: f32[5,84,160], index: 4, kind: input, shape index: {}]
  %s5 = inlined_call_operand.vmem [shape: f32[1,160], index: 5, kind: input, shape index: {}]
  %s6 = inlined_call_operand.vmem [shape: f32[2,160,80], index: 6, kind: input, shape index: {}]
  %s7 = inlined_call_operand.vmem [shape: f32[5,8,241], index: 7, kind: input, shape index: {}]
  %s8 = inlined_call_operand.vmem [shape: f32[5,80,128], index: 8, kind: input, shape index: {}]
  %s9 = inlined_call_operand.vmem [shape: f32[1,128], index: 9, kind: input, shape index: {}]
  %s10 = inlined_call_operand.vmem [shape: f32[128,128], index: 10, kind: input, shape index: {}]
  %s11 = inlined_call_operand.vmem [shape: f32[1,128], index: 11, kind: input, shape index: {}]
  %s12 = inlined_call_operand.vmem [shape: f32[128,10], index: 12, kind: input, shape index: {}]
  %s13 = inlined_call_operand.vmem [shape: f32[1,10], index: 13, kind: input, shape index: {}]
  %s14 = inlined_call_operand.hbm [shape: f32[16,10], index: 14, kind: output, shape index: {}]
  %s15 = sld [smem:[#allocation0]]
  $region89: #{lenet_forward.1} parent=0
    _
  %s17 = ssub.s32 1, %s15
  %s18 = scalar_select 0, %s17, %s15
  $region1: #{lenet_forward.1} parent=0
    #allocation2 [shape = 'u8[8192]{0}', space=vmem, size = 0x2000, scoped, tag = 'output window, operand 0']
    #allocation3 [shape = 's32[2]{0}', space=sflag, size = 0x8, scoped, tag = 'scoped memory for lenet_forward.1']
    %19 = vsyncpa [#allocation3], 0
    %s20 = scalar_lea.sflag [#allocation3], 1
    %21 = vsyncpa %s20, 0
    loop: start=0, step=1, limit=4
    $region2: #{lenet_forward.1} parent=1 // loop_pre_header
      _
    $region3: #{lenet_forward.1} parent=1 // loop_header
      %s23 = sphi 0, %s27
      %p24 = scmp.ge.s32.totalorder %s23, 4
      %s33 = sphi 0, %s35
      %s36 = sphi 0, %s33
      %s37 = sphi 0, %s36
      %s53 = sphi 0, %s37
      %s57 = sphi 0, %s57
      %s59 = sphi 0, %s57
      %s60 = sphi 0, %s59
      %s74 = sphi 0, %s60
      %s78 = sphi 0, %s78
      %s80 = sphi 0, %s78
      %s81 = sphi 0, %s80
      %s95 = sphi 0, %s81
      %s99 = sphi 0, %s99
      %s101 = sphi 0, %s99
      %s102 = sphi 0, %s101
      %s116 = sphi 0, %s102
      %s120 = sphi 0, %s120
      %s122 = sphi 0, %s120
      %s123 = sphi 0, %s122
      %s137 = sphi 0, %s123
      %s141 = sphi 0, %s141
      %s143 = sphi 0, %s141
      %s144 = sphi 0, %s143
      %s158 = sphi 0, %s144
      %s162 = sphi 0, %s162
      %s164 = sphi 0, %s162
      %s165 = sphi 0, %s164
      %s179 = sphi 0, %s165
      %s183 = sphi 0, %s183
      %s185 = sphi 0, %s183
      %s186 = sphi 0, %s185
      %s200 = sphi 0, %s186
      %s204 = sphi 0, %s204
      %s206 = sphi 0, %s204
      %s207 = sphi 0, %s206
      %s221 = sphi 0, %s207
      %s225 = sphi 0, %s225
      %s227 = sphi 0, %s225
      %s228 = sphi 0, %s227
      %s242 = sphi 0, %s228
      %s246 = sphi 0, %s246
      %s248 = sphi 0, %s246
      %s249 = sphi 0, %s248
      %s263 = sphi 0, %s249
      %s267 = sphi 0, %s267
      %s269 = sphi 0, %s267
      %s270 = sphi 0, %s269
      %s284 = sphi 0, %s270
      %s288 = sphi 0, %s288
      %s290 = sphi 0, %s288
      %s291 = sphi 0, %s290
      %s305 = sphi 0, %s291
      %s309 = sphi 0, %s309
      %s311 = sphi 0, %s309
      %s312 = sphi 0, %s311
      %s326 = sphi 0, %s312
      %s332 = sphi 0, %s334
      %s335 = sphi 0, %s332
      %s336 = sphi 0, %s335
      %s352 = sphi 0, %s336
    $region4: #{lenet_forward.1} parent=1 // loop_header_branch
      %26 = sbr.rel (%p24) target = $region8
    $region5: #{lenet_forward.1} parent=1 // loop_body
      %s28 = ssub.s32 %s23, 1
      %s29 = ssub.s32 %s23, 2
      %s30 = sadd.s32 %s23, 1
      %s31 = ssub.s32 %s23, %s30
      %p32 = scmp.eq.s32.totalorder %s31, 0
      %s34 = sadd.s32 %s33, 1
      %s35 = scalar_select %p32, %s33, %s34
      %p38 = pneg %p32
      %p39 = scmp.eq.s32.totalorder %s23, 1
      %p40 = por %p38, %p39
      %p41 = scmp.ne.s32.totalorder %s33, %s36
      %p42 = scmp.eq.s32.totalorder %s23, 0
      %p43 = por %p41, %p42
      %p44 = scmp.ne.s32.totalorder %s33, %s36
      %p45 = scmp.eq.s32.totalorder %s28, 1
      %p46 = por %p44, %p45
      %p47 = scmp.ne.s32.totalorder %s36, %s37
      %p48 = scmp.eq.s32.totalorder %s28, 0
      %p49 = por %p47, %p48
      %p50 = scmp.ne.s32.totalorder %s36, %s37
      %p51 = scmp.eq.s32.totalorder %s29, 1
      %p52 = por %p50, %p51
      %p54 = scmp.ne.s32.totalorder %s37, %s53
      %p55 = scmp.eq.s32.totalorder %s29, 0
      %p56 = por %p54, %p55
      %s58 = sadd.s32 %s57, 1
      %p61 = scmp.eq.s32.totalorder %s23, 1
      %p62 = scmp.ne.s32.totalorder %s57, %s59
      %p63 = scmp.eq.s32.totalorder %s23, 0
      %p64 = por %p62, %p63
      %p65 = scmp.ne.s32.totalorder %s57, %s59
      %p66 = scmp.eq.s32.totalorder %s28, 1
      %p67 = por %p65, %p66
      %p68 = scmp.ne.s32.totalorder %s59, %s60
      %p69 = scmp.eq.s32.totalorder %s28, 0
      %p70 = por %p68, %p69
      %p71 = scmp.ne.s32.totalorder %s59, %s60
      %p72 = scmp.eq.s32.totalorder %s29, 1
      %p73 = por %p71, %p72
      %p75 = scmp.ne.s32.totalorder %s60, %s74
      %p76 = scmp.eq.s32.totalorder %s29, 0
      %p77 = por %p75, %p76
      %s79 = sadd.s32 %s78, 1
      %p82 = scmp.eq.s32.totalorder %s23, 1
      %p83 = scmp.ne.s32.totalorder %s78, %s80
      %p84 = scmp.eq.s32.totalorder %s23, 0
      %p85 = por %p83, %p84
      %p86 = scmp.ne.s32.totalorder %s78, %s80
      %p87 = scmp.eq.s32.totalorder %s28, 1
      %p88 = por %p86, %p87
      %p89 = scmp.ne.s32.totalorder %s80, %s81
      %p90 = scmp.eq.s32.totalorder %s28, 0
      %p91 = por %p89, %p90
      %p92 = scmp.ne.s32.totalorder %s80, %s81
      %p93 = scmp.eq.s32.totalorder %s29, 1
      %p94 = por %p92, %p93
      %p96 = scmp.ne.s32.totalorder %s81, %s95
      %p97 = scmp.eq.s32.totalorder %s29, 0
      %p98 = por %p96, %p97
      %s100 = sadd.s32 %s99, 1
      %p103 = scmp.eq.s32.totalorder %s23, 1
      %p104 = scmp.ne.s32.totalorder %s99, %s101
      %p105 = scmp.eq.s32.totalorder %s23, 0
      %p106 = por %p104, %p105
      %p107 = scmp.ne.s32.totalorder %s99, %s101
      %p108 = scmp.eq.s32.totalorder %s28, 1
      %p109 = por %p107, %p108
      %p110 = scmp.ne.s32.totalorder %s101, %s102
      %p111 = scmp.eq.s32.totalorder %s28, 0
      %p112 = por %p110, %p111
      %p113 = scmp.ne.s32.totalorder %s101, %s102
      %p114 = scmp.eq.s32.totalorder %s29, 1
      %p115 = por %p113, %p114
      %p117 = scmp.ne.s32.totalorder %s102, %s116
      %p118 = scmp.eq.s32.totalorder %s29, 0
      %p119 = por %p117, %p118
      %s121 = sadd.s32 %s120, 1
      %p124 = scmp.eq.s32.totalorder %s23, 1
      %p125 = scmp.ne.s32.totalorder %s120, %s122
      %p126 = scmp.eq.s32.totalorder %s23, 0
      %p127 = por %p125, %p126
      %p128 = scmp.ne.s32.totalorder %s120, %s122
      %p129 = scmp.eq.s32.totalorder %s28, 1
      %p130 = por %p128, %p129
      %p131 = scmp.ne.s32.totalorder %s122, %s123
      %p132 = scmp.eq.s32.totalorder %s28, 0
      %p133 = por %p131, %p132
      %p134 = scmp.ne.s32.totalorder %s122, %s123
      %p135 = scmp.eq.s32.totalorder %s29, 1
      %p136 = por %p134, %p135
      %p138 = scmp.ne.s32.totalorder %s123, %s137
      %p139 = scmp.eq.s32.totalorder %s29, 0
      %p140 = por %p138, %p139
      %s142 = sadd.s32 %s141, 1
      %p145 = scmp.eq.s32.totalorder %s23, 1
      %p146 = scmp.ne.s32.totalorder %s141, %s143
      %p147 = scmp.eq.s32.totalorder %s23, 0
      %p148 = por %p146, %p147
      %p149 = scmp.ne.s32.totalorder %s141, %s143
      %p150 = scmp.eq.s32.totalorder %s28, 1
      %p151 = por %p149, %p150
      %p152 = scmp.ne.s32.totalorder %s143, %s144
      %p153 = scmp.eq.s32.totalorder %s28, 0
      %p154 = por %p152, %p153
      %p155 = scmp.ne.s32.totalorder %s143, %s144
      %p156 = scmp.eq.s32.totalorder %s29, 1
      %p157 = por %p155, %p156
      %p159 = scmp.ne.s32.totalorder %s144, %s158
      %p160 = scmp.eq.s32.totalorder %s29, 0
      %p161 = por %p159, %p160
      %s163 = sadd.s32 %s162, 1
      %p166 = scmp.eq.s32.totalorder %s23, 1
      %p167 = scmp.ne.s32.totalorder %s162, %s164
      %p168 = scmp.eq.s32.totalorder %s23, 0
      %p169 = por %p167, %p168
      %p170 = scmp.ne.s32.totalorder %s162, %s164
      %p171 = scmp.eq.s32.totalorder %s28, 1
      %p172 = por %p170, %p171
      %p173 = scmp.ne.s32.totalorder %s164, %s165
      %p174 = scmp.eq.s32.totalorder %s28, 0
      %p175 = por %p173, %p174
      %p176 = scmp.ne.s32.totalorder %s164, %s165
      %p177 = scmp.eq.s32.totalorder %s29, 1
      %p178 = por %p176, %p177
      %p180 = scmp.ne.s32.totalorder %s165, %s179
      %p181 = scmp.eq.s32.totalorder %s29, 0
      %p182 = por %p180, %p181
      %s184 = sadd.s32 %s183, 1
      %p187 = scmp.eq.s32.totalorder %s23, 1
      %p188 = scmp.ne.s32.totalorder %s183, %s185
      %p189 = scmp.eq.s32.totalorder %s23, 0
      %p190 = por %p188, %p189
      %p191 = scmp.ne.s32.totalorder %s183, %s185
      %p192 = scmp.eq.s32.totalorder %s28, 1
      %p193 = por %p191, %p192
      %p194 = scmp.ne.s32.totalorder %s185, %s186
      %p195 = scmp.eq.s32.totalorder %s28, 0
      %p196 = por %p194, %p195
      %p197 = scmp.ne.s32.totalorder %s185, %s186
      %p198 = scmp.eq.s32.totalorder %s29, 1
      %p199 = por %p197, %p198
      %p201 = scmp.ne.s32.totalorder %s186, %s200
      %p202 = scmp.eq.s32.totalorder %s29, 0
      %p203 = por %p201, %p202
      %s205 = sadd.s32 %s204, 1
      %p208 = scmp.eq.s32.totalorder %s23, 1
      %p209 = scmp.ne.s32.totalorder %s204, %s206
      %p210 = scmp.eq.s32.totalorder %s23, 0
      %p211 = por %p209, %p210
      %p212 = scmp.ne.s32.totalorder %s204, %s206
      %p213 = scmp.eq.s32.totalorder %s28, 1
      %p214 = por %p212, %p213
      %p215 = scmp.ne.s32.totalorder %s206, %s207
      %p216 = scmp.eq.s32.totalorder %s28, 0
      %p217 = por %p215, %p216
      %p218 = scmp.ne.s32.totalorder %s206, %s207
      %p219 = scmp.eq.s32.totalorder %s29, 1
      %p220 = por %p218, %p219
      %p222 = scmp.ne.s32.totalorder %s207, %s221
      %p223 = scmp.eq.s32.totalorder %s29, 0
      %p224 = por %p222, %p223
      %s226 = sadd.s32 %s225, 1
      %p229 = scmp.eq.s32.totalorder %s23, 1
      %p230 = scmp.ne.s32.totalorder %s225, %s227
      %p231 = scmp.eq.s32.totalorder %s23, 0
      %p232 = por %p230, %p231
      %p233 = scmp.ne.s32.totalorder %s225, %s227
      %p234 = scmp.eq.s32.totalorder %s28, 1
      %p235 = por %p233, %p234
      %p236 = scmp.ne.s32.totalorder %s227, %s228
      %p237 = scmp.eq.s32.totalorder %s28, 0
      %p238 = por %p236, %p237
      %p239 = scmp.ne.s32.totalorder %s227, %s228
      %p240 = scmp.eq.s32.totalorder %s29, 1
      %p241 = por %p239, %p240
      %p243 = scmp.ne.s32.totalorder %s228, %s242
      %p244 = scmp.eq.s32.totalorder %s29, 0
      %p245 = por %p243, %p244
      %s247 = sadd.s32 %s246, 1
      %p250 = scmp.eq.s32.totalorder %s23, 1
      %p251 = scmp.ne.s32.totalorder %s246, %s248
      %p252 = scmp.eq.s32.totalorder %s23, 0
      %p253 = por %p251, %p252
      %p254 = scmp.ne.s32.totalorder %s246, %s248
      %p255 = scmp.eq.s32.totalorder %s28, 1
      %p256 = por %p254, %p255
      %p257 = scmp.ne.s32.totalorder %s248, %s249
      %p258 = scmp.eq.s32.totalorder %s28, 0
      %p259 = por %p257, %p258
      %p260 = scmp.ne.s32.totalorder %s248, %s249
      %p261 = scmp.eq.s32.totalorder %s29, 1
      %p262 = por %p260, %p261
      %p264 = scmp.ne.s32.totalorder %s249, %s263
      %p265 = scmp.eq.s32.totalorder %s29, 0
      %p266 = por %p264, %p265
      %s268 = sadd.s32 %s267, 1
      %p271 = scmp.eq.s32.totalorder %s23, 1
      %p272 = scmp.ne.s32.totalorder %s267, %s269
      %p273 = scmp.eq.s32.totalorder %s23, 0
      %p274 = por %p272, %p273
      %p275 = scmp.ne.s32.totalorder %s267, %s269
      %p276 = scmp.eq.s32.totalorder %s28, 1
      %p277 = por %p275, %p276
      %p278 = scmp.ne.s32.totalorder %s269, %s270
      %p279 = scmp.eq.s32.totalorder %s28, 0
      %p280 = por %p278, %p279
      %p281 = scmp.ne.s32.totalorder %s269, %s270
      %p282 = scmp.eq.s32.totalorder %s29, 1
      %p283 = por %p281, %p282
      %p285 = scmp.ne.s32.totalorder %s270, %s284
      %p286 = scmp.eq.s32.totalorder %s29, 0
      %p287 = por %p285, %p286
      %s289 = sadd.s32 %s288, 1
      %p292 = scmp.eq.s32.totalorder %s23, 1
      %p293 = scmp.ne.s32.totalorder %s288, %s290
      %p294 = scmp.eq.s32.totalorder %s23, 0
      %p295 = por %p293, %p294
      %p296 = scmp.ne.s32.totalorder %s288, %s290
      %p297 = scmp.eq.s32.totalorder %s28, 1
      %p298 = por %p296, %p297
      %p299 = scmp.ne.s32.totalorder %s290, %s291
      %p300 = scmp.eq.s32.totalorder %s28, 0
      %p301 = por %p299, %p300
      %p302 = scmp.ne.s32.totalorder %s290, %s291
      %p303 = scmp.eq.s32.totalorder %s29, 1
      %p304 = por %p302, %p303
      %p306 = scmp.ne.s32.totalorder %s291, %s305
      %p307 = scmp.eq.s32.totalorder %s29, 0
      %p308 = por %p306, %p307
      %s310 = sadd.s32 %s309, 1
      %p313 = scmp.eq.s32.totalorder %s23, 1
      %p314 = scmp.ne.s32.totalorder %s309, %s311
      %p315 = scmp.eq.s32.totalorder %s23, 0
      %p316 = por %p314, %p315
      %p317 = scmp.ne.s32.totalorder %s309, %s311
      %p318 = scmp.eq.s32.totalorder %s28, 1
      %p319 = por %p317, %p318
      %p320 = scmp.ne.s32.totalorder %s311, %s312
      %p321 = scmp.eq.s32.totalorder %s28, 0
      %p322 = por %p320, %p321
      %p323 = scmp.ne.s32.totalorder %s311, %s312
      %p324 = scmp.eq.s32.totalorder %s29, 1
      %p325 = por %p323, %p324
      %p327 = scmp.ne.s32.totalorder %s312, %s326
      %p328 = scmp.eq.s32.totalorder %s29, 0
      %p329 = por %p327, %p328
      %s330 = ssub.s32 %s23, %s30
      %p331 = scmp.eq.s32.totalorder %s330, 0
      %s333 = sadd.s32 %s332, 1
      %s334 = scalar_select %p331, %s332, %s333
      %p337 = pneg %p331
      %p338 = scmp.eq.s32.totalorder %s23, 1
      %p339 = por %p337, %p338
      %p340 = scmp.ne.s32.totalorder %s332, %s335
      %p341 = scmp.eq.s32.totalorder %s23, 0
      %p342 = por %p340, %p341
      %p343 = scmp.ne.s32.totalorder %s332, %s335
      %p344 = scmp.eq.s32.totalorder %s28, 1
      %p345 = por %p343, %p344
      %p346 = scmp.ne.s32.totalorder %s335, %s336
      %p347 = scmp.eq.s32.totalorder %s28, 0
      %p348 = por %p346, %p347
      %p349 = scmp.ne.s32.totalorder %s335, %s336
      %p350 = scmp.eq.s32.totalorder %s29, 1
      %p351 = por %p349, %p350
      %p353 = scmp.ne.s32.totalorder %s336, %s352
      %p354 = scmp.eq.s32.totalorder %s29, 0
      %p355 = por %p353, %p354
      %p356 = scmp.le.s32.totalorder 1, %s23
      %p357 = scmp.lt.s32.totalorder %s23, 3
      %p358 = pnand %p356, %p357
      %p359 = pneg %p358
      // Predicated region
      $region9: #{lenet_forward.1} parent=5 // pred_check
        _
      $region10: #{lenet_forward.1} parent=5 // pred_check_branch
        %361 = sbr.rel (%p358) target = $region12
      $region11: #{lenet_forward.1} parent=5 // pred_region
        %s362 = ssub.s32 %s23, 1
        // Predicated region
        $region13: #{lenet_forward.1} parent=11 // pred_check
          %p363 = pneg %p70
        $region14: #{lenet_forward.1} parent=11 // pred_check_branch
          %365 = sbr.rel (%p363) target = $region16
        $region15: #{lenet_forward.1} parent=11 // pred_region
          _
        $region16: #{lenet_forward.1} parent=11 // pred_fallthru
          _
        // Predicated region
        $region17: #{lenet_forward.1} parent=11 // pred_check
          %p366 = pneg %p91
        $region18: #{lenet_forward.1} parent=11 // pred_check_branch
          %368 = sbr.rel (%p366) target = $region20
        $region19: #{lenet_forward.1} parent=11 // pred_region
          _
        $region20: #{lenet_forward.1} parent=11 // pred_fallthru
          _
        // Predicated region
        $region21: #{lenet_forward.1} parent=11 // pred_check
          %p369 = pneg %p112
        $region22: #{lenet_forward.1} parent=11 // pred_check_branch
          %371 = sbr.rel (%p369) target = $region24
        $region23: #{lenet_forward.1} parent=11 // pred_region
          _
        $region24: #{lenet_forward.1} parent=11 // pred_fallthru
          _
        // Predicated region
        $region25: #{lenet_forward.1} parent=11 // pred_check
          %p372 = pneg %p133
        $region26: #{lenet_forward.1} parent=11 // pred_check_branch
          %374 = sbr.rel (%p372) target = $region28
        $region27: #{lenet_forward.1} parent=11 // pred_region
          _
        $region28: #{lenet_forward.1} parent=11 // pred_fallthru
          _
        // Predicated region
        $region29: #{lenet_forward.1} parent=11 // pred_check
          %p375 = pneg %p154
        $region30: #{lenet_forward.1} parent=11 // pred_check_branch
          %377 = sbr.rel (%p375) target = $region32
        $region31: #{lenet_forward.1} parent=11 // pred_region
          _
        $region32: #{lenet_forward.1} parent=11 // pred_fallthru
          _
        // Predicated region
        $region33: #{lenet_forward.1} parent=11 // pred_check
          %p378 = pneg %p175
        $region34: #{lenet_forward.1} parent=11 // pred_check_branch
          %380 = sbr.rel (%p378) target = $region36
        $region35: #{lenet_forward.1} parent=11 // pred_region
          _
        $region36: #{lenet_forward.1} parent=11 // pred_fallthru
          _
        // Predicated region
        $region37: #{lenet_forward.1} parent=11 // pred_check
          %p381 = pneg %p196
        $region38: #{lenet_forward.1} parent=11 // pred_check_branch
          %383 = sbr.rel (%p381) target = $region40
        $region39: #{lenet_forward.1} parent=11 // pred_region
          _
        $region40: #{lenet_forward.1} parent=11 // pred_fallthru
          _
        // Predicated region
        $region41: #{lenet_forward.1} parent=11 // pred_check
          %p384 = pneg %p217
        $region42: #{lenet_forward.1} parent=11 // pred_check_branch
          %386 = sbr.rel (%p384) target = $region44
        $region43: #{lenet_forward.1} parent=11 // pred_region
          _
        $region44: #{lenet_forward.1} parent=11 // pred_fallthru
          _
        // Predicated region
        $region45: #{lenet_forward.1} parent=11 // pred_check
          %p387 = pneg %p238
        $region46: #{lenet_forward.1} parent=11 // pred_check_branch
          %389 = sbr.rel (%p387) target = $region48
        $region47: #{lenet_forward.1} parent=11 // pred_region
          _
        $region48: #{lenet_forward.1} parent=11 // pred_fallthru
          _
        // Predicated region
        $region49: #{lenet_forward.1} parent=11 // pred_check
          %p390 = pneg %p259
        $region50: #{lenet_forward.1} parent=11 // pred_check_branch
          %392 = sbr.rel (%p390) target = $region52
        $region51: #{lenet_forward.1} parent=11 // pred_region
          _
        $region52: #{lenet_forward.1} parent=11 // pred_fallthru
          _
        // Predicated region
        $region53: #{lenet_forward.1} parent=11 // pred_check
          %p393 = pneg %p280
        $region54: #{lenet_forward.1} parent=11 // pred_check_branch
          %395 = sbr.rel (%p393) target = $region56
        $region55: #{lenet_forward.1} parent=11 // pred_region
          _
        $region56: #{lenet_forward.1} parent=11 // pred_fallthru
          _
        // Predicated region
        $region57: #{lenet_forward.1} parent=11 // pred_check
          %p396 = pneg %p301
        $region58: #{lenet_forward.1} parent=11 // pred_check_branch
          %398 = sbr.rel (%p396) target = $region60
        $region59: #{lenet_forward.1} parent=11 // pred_region
          _
        $region60: #{lenet_forward.1} parent=11 // pred_fallthru
          _
        // Predicated region
        $region61: #{lenet_forward.1} parent=11 // pred_check
          %p399 = pneg %p322
        $region62: #{lenet_forward.1} parent=11 // pred_check_branch
          %401 = sbr.rel (%p399) target = $region64
        $region63: #{lenet_forward.1} parent=11 // pred_region
          _
        $region64: #{lenet_forward.1} parent=11 // pred_fallthru
          _
      $region12: #{lenet_forward.1} parent=5 // pred_fallthru
        _
      %p402 = scmp.lt.s32.totalorder %s23, 2
      // Predicated region
      $region65: #{lenet_forward.1} parent=5 // pred_check
        %p403 = pneg %p402
      $region66: #{lenet_forward.1} parent=5 // pred_check_branch
        %405 = sbr.rel (%p403) target = $region68
      $region67: #{lenet_forward.1} parent=5 // pred_region
        // Predicated region
        $region69: #{lenet_forward.1} parent=67 // pred_check
          %p406 = pneg %p43
        $region70: #{lenet_forward.1} parent=67 // pred_check_branch
          %408 = sbr.rel (%p406) target = $region72
        $region71: #{lenet_forward.1} parent=67 // pred_region
          %s409 = smul.u32 32, %s23
          %p410 = scmp.lt.s32.totalorder %s409, 63
          %s411 = scalar_select %p410, %s409, 63
          %s412 = smul.addr %s411, 8
          %s413 = scalar_lea.vmem %s0, %s412
          %s414 = smul.u32 32, %s23
        $region72: #{lenet_forward.1} parent=67 // pred_fallthru
          _
      $region68: #{lenet_forward.1} parent=5 // pred_fallthru
        _
      %p415 = scmp.le.s32.totalorder 1, %s23
      %p416 = scmp.lt.s32.totalorder %s23, 3
      %p417 = pnand %p415, %p416
      %p418 = pneg %p417
      // Predicated region
      $region73: #{lenet_forward.1} parent=5 // pred_check
        _
      $region74: #{lenet_forward.1} parent=5 // pred_check_branch
        %420 = sbr.rel (%p417) target = $region76
      $region75: #{lenet_forward.1} parent=5 // pred_region
        %s421 = ssub.s32 %s23, 1
        %s422 = smul.u32 32, %s28
        %p423 = scmp.lt.s32.totalorder %s422, 63
        %s424 = scalar_select %p423, %s422, 63
        %s425 = smul.addr %s424, 8
        %s426 = scalar_lea.vmem %s0, %s425
        %p427 = pneg %p49
        %p428 = pneg %p46
        %p429 = pneg %p70
        %p430 = pneg %p67
        %p431 = pneg %p91
        %p432 = pneg %p88
        %p433 = pneg %p112
        %p434 = pneg %p109
        %p435 = pneg %p133
        %p436 = pneg %p130
        %p437 = pneg %p154
        %p438 = pneg %p151
        %p439 = pneg %p175
        %p440 = pneg %p172
        %p441 = pneg %p196
        %p442 = pneg %p193
        %p443 = pneg %p217
        %p444 = pneg %p214
        %p445 = pneg %p238
        %p446 = pneg %p235
        %p447 = pneg %p259
        %p448 = pneg %p256
        %p449 = pneg %p280
        %p450 = pneg %p277
        %p451 = pneg %p301
        %p452 = pneg %p298
        %p453 = pneg %p322
        %p454 = pneg %p319
        %p455 = pneg %p348
        %p456 = pneg %p345
        %s457 = sand.u32 %s335, 1
        %s458 = scalar_lea.sflag [#allocation3], %s457
        %s459 = sand.u32 %s335, 1
        %s460 = smul.addr %s459, 8
        %s461 = scalar_lea.vmem [#allocation2], %s460
        %s462 = smul.u32 32, %s28
        %p463 = scmp.lt.s32.totalorder %s462, 63
        %s464 = scalar_select %p463, %s462, 63
        %s465 = smul.addr %s464, 8
        %s466 = scalar_lea.vmem %s0, %s465
        %s467 = smul.u32 32, %s28
        %v468 = vld [vmem:[%s466] sm:$0xff]
        %v469 = vld [vmem:[%s466 + $0x8] sm:$0xff]
        %v470 = vld [vmem:[%s466 + $0x10] sm:$0xff]
        %v471 = vld [vmem:[%s466 + $0x18] sm:$0xff]
        %v472 = vld [vmem:[%s466 + $0x20] sm:$0xff]
        %v473 = vld [vmem:[%s466 + $0x28] sm:$0xff]
        %v474 = vld [vmem:[%s466 + $0x30] sm:$0xff]
        %v475 = vld [vmem:[%s466 + $0x38] sm:$0xff]
        %v476 = vld [vmem:[%s466 + $0x40] sm:$0xff]
        %v477 = vld [vmem:[%s466 + $0x48] sm:$0xff]
        %v478 = vld [vmem:[%s466 + $0x50] sm:$0xff]
        %v479 = vld [vmem:[%s466 + $0x58] sm:$0xff]
        %v480 = vld [vmem:[%s466 + $0x60] sm:$0xff]
        %v481 = vld [vmem:[%s466 + $0x68] sm:$0xff]
        %v482 = vld [vmem:[%s466 + $0x70] sm:$0xff]
        %v483 = vld [vmem:[%s466 + $0x78] sm:$0xff]
        %v484 = vld [vmem:[%s466 + $0x80] sm:$0xff]
        %v485 = vld [vmem:[%s466 + $0x88] sm:$0xff]
        %v486 = vld [vmem:[%s466 + $0x90] sm:$0xff]
        %v487 = vld [vmem:[%s466 + $0x98] sm:$0xff]
        %v488 = vld [vmem:[%s466 + $0xa0] sm:$0xff]
        %v489 = vld [vmem:[%s466 + $0xa8] sm:$0xff]
        %v490 = vld [vmem:[%s466 + $0xb0] sm:$0xff]
        %v491 = vld [vmem:[%s466 + $0xb8] sm:$0xff]
        %v492 = vld [vmem:[%s466 + $0xc0] sm:$0xff]
        %v493 = vld [vmem:[%s466 + $0xc8] sm:$0xff]
        %v494 = vld [vmem:[%s466 + $0xd0] sm:$0xff]
        %v495 = vld [vmem:[%s466 + $0xd8] sm:$0xff]
        %v496 = vld [vmem:[%s466 + $0xe0] sm:$0xff]
        %v497 = vld [vmem:[%s466 + $0xe8] sm:$0xff]
        %v498 = vld [vmem:[%s466 + $0xf0] sm:$0xff]
        %v499 = vld [vmem:[%s466 + $0xf8] sm:$0xff]
        %v500 = vld [vmem:[%s1] sm:$0xff]
        %v501 = vld [vmem:[%s1 + $0x8] sm:$0xff]
        %v502 = vld [vmem:[%s1 + $0x10] sm:$0xff]
        %v503 = vld [vmem:[%s1 + $0x18] sm:$0xff]
        %v504 = vld [vmem:[%s1 + $0x20] sm:$0xff]
        %v505 = vld [vmem:[%s1 + $0x28] sm:$0xff]
        %v506 = vld [vmem:[%s1 + $0x30] sm:$0xff]
        %v507 = vld [vmem:[%s1 + $0x38] sm:$0xff]
        %v508 = vld [vmem:[%s1 + $0x40] sm:$0xff]
        %v509 = vld [vmem:[%s1 + $0x48] sm:$0xff]
        %v510 = vld [vmem:[%s1 + $0x50] sm:$0xff]
        %v511 = vld [vmem:[%s1 + $0x58] sm:$0xff]
        %v512 = vld [vmem:[%s1 + $0x60] sm:$0xff]
        %v513 = vld [vmem:[%s1 + $0x68] sm:$0xff]
        %v514 = vld [vmem:[%s1 + $0x70] sm:$0xff]
        %v515 = vld [vmem:[%s1 + $0x78] sm:$0xff]
        %v516 = vld [vmem:[%s1 + $0x80] sm:$0xff]
        %v517 = vld [vmem:[%s1 + $0x88] sm:$0xff]
        %v518 = vld [vmem:[%s1 + $0x90] sm:$0xff]
        %v519 = vld [vmem:[%s1 + $0x98] sm:$0xff]
        %v520 = vld [vmem:[%s1 + $0xa0] sm:$0xff]
        %v521 = vld [vmem:[%s1 + $0xa8] sm:$0xff]
        %v522 = vld [vmem:[%s1 + $0xb0] sm:$0xff]
        %v523 = vld [vmem:[%s1 + $0xb8] sm:$0xff]
        %s524 = scalar_lea.vmem %s1, 192
        %v525 = vld [vmem:[%s524] sm:$0xff]
        %v526 = vld [vmem:[%s524 + $0x8] sm:$0xff]
        %v527 = vld [vmem:[%s524 + $0x10] sm:$0xff]
        %v528 = vld [vmem:[%s524 + $0x18] sm:$0xff]
        %v529 = vld [vmem:[%s524 + $0x20] sm:$0xff]
        %v530 = vld [vmem:[%s524 + $0x28] sm:$0xff]
        %v531 = vld [vmem:[%s524 + $0x30] sm:$0xff]
        %v532 = vld [vmem:[%s524 + $0x38] sm:$0xff]
        %v533 = vld [vmem:[%s524 + $0x40] sm:$0xff]
        %v534 = vld [vmem:[%s524 + $0x48] sm:$0xff]
        %v535 = vld [vmem:[%s524 + $0x50] sm:$0xff]
        %v536 = vld [vmem:[%s524 + $0x58] sm:$0xff]
        %v537 = vld [vmem:[%s524 + $0x60] sm:$0xff]
        %v538 = vld [vmem:[%s524 + $0x68] sm:$0xff]
        %v539 = vld [vmem:[%s524 + $0x70] sm:$0xff]
        %v540 = vld [vmem:[%s524 + $0x78] sm:$0xff]
        %v541 = vld [vmem:[%s524 + $0x80] sm:$0xff]
        %v542 = vld [vmem:[%s524 + $0x88] sm:$0xff]
        %v543 = vld [vmem:[%s524 + $0x90] sm:$0xff]
        %v544 = vld [vmem:[%s524 + $0x98] sm:$0xff]
        %v545 = vld [vmem:[%s524 + $0xa0] sm:$0xff]
        %v546 = vld [vmem:[%s524 + $0xa8] sm:$0xff]
        %v547 = vld [vmem:[%s524 + $0xb0] sm:$0xff]
        %v548 = vld [vmem:[%s524 + $0xb8] sm:$0xff]
        %vm581 = vcmask 1046528
        %v582 = vrot.slane %v468, 1
        %v583 = vrot.slane %v469, 1
        %v584 = vsel %vm581, %v582, %v583
        %v585 = vrot.slane %v470, 1
        %v586 = vsel %vm581, %v583, %v585
        %v587 = vrot.slane %v471, 1
        %v588 = vsel %vm581, %v585, %v587
        %v589 = vrot.slane %v472, 1
        %v590 = vsel %vm581, %v587, %v589
        %v591 = vrot.slane %v473, 1
        %v592 = vsel %vm581, %v589, %v591
        %v593 = vrot.slane %v474, 1
        %v594 = vsel %vm581, %v591, %v593
        %v595 = vrot.slane %v475, 1
        %v596 = vsel %vm581, %v593, %v595
        %v597 = vrot.slane %v476, 1
        %v598 = vsel %vm581, %v595, %v597
        %v599 = vrot.slane %v477, 1
        %v600 = vsel %vm581, %v597, %v599
        %v601 = vrot.slane %v478, 1
        %v602 = vsel %vm581, %v599, %v601
        %v603 = vrot.slane %v479, 1
        %v604 = vsel %vm581, %v601, %v603
        %v605 = vrot.slane %v480, 1
        %v606 = vsel %vm581, %v603, %v605
        %v607 = vrot.slane %v481, 1
        %v608 = vsel %vm581, %v605, %v607
        %v609 = vrot.slane %v482, 1
        %v610 = vsel %vm581, %v607, %v609
        %v611 = vrot.slane %v483, 1
        %v612 = vsel %vm581, %v609, %v611
        %v613 = vrot.slane %v484, 1
        %v614 = vsel %vm581, %v611, %v613
        %v615 = vrot.slane %v485, 1
        %v616 = vsel %vm581, %v613, %v615
        %v617 = vrot.slane %v486, 1
        %v618 = vsel %vm581, %v615, %v617
        %v619 = vrot.slane %v487, 1
        %v620 = vsel %vm581, %v617, %v619
        %v621 = vrot.slane %v488, 1
        %v622 = vsel %vm581, %v619, %v621
        %v623 = vrot.slane %v489, 1
        %v624 = vsel %vm581, %v621, %v623
        %v625 = vrot.slane %v490, 1
        %v626 = vsel %vm581, %v623, %v625
        %v627 = vrot.slane %v491, 1
        %v628 = vsel %vm581, %v625, %v627
        %v629 = vrot.slane %v492, 1
        %v630 = vsel %vm581, %v627, %v629
        %v631 = vrot.slane %v493, 1
        %v632 = vsel %vm581, %v629, %v631
        %v633 = vrot.slane %v494, 1
        %v634 = vsel %vm581, %v631, %v633
        %v635 = vrot.slane %v495, 1
        %v636 = vsel %vm581, %v633, %v635
        %v637 = vrot.slane %v496, 1
        %v638 = vsel %vm581, %v635, %v637
        %v639 = vrot.slane %v497, 1
        %v640 = vsel %vm581, %v637, %v639
        %v641 = vrot.slane %v498, 1
        %v642 = vsel %vm581, %v639, %v641
        %v643 = vrot.slane %v499, 1
        %v644 = vsel %vm581, %v641, %v643
        %vm645 = vcmask 785408
        %v646 = vsel %vm645, %v584, 0
        %v648 = vsel %vm645, %v586, 0
        %v650 = vsel %vm645, %v588, 0
        %v652 = vsel %vm645, %v590, 0
        %v654 = vsel %vm645, %v592, 0
        %v656 = vsel %vm645, %v594, 0
        %v658 = vsel %vm645, %v596, 0
        %v660 = vsel %vm645, %v598, 0
        %v662 = vsel %vm645, %v600, 0
        %v664 = vsel %vm645, %v602, 0
        %v666 = vsel %vm645, %v604, 0
        %v668 = vsel %vm645, %v606, 0
        %v670 = vsel %vm645, %v608, 0
        %v672 = vsel %vm645, %v610, 0
        %v674 = vsel %vm645, %v612, 0
        %v676 = vsel %vm645, %v614, 0
        %v678 = vsel %vm645, %v616, 0
        %v680 = vsel %vm645, %v618, 0
        %v682 = vsel %vm645, %v620, 0
        %v684 = vsel %vm645, %v622, 0
        %v686 = vsel %vm645, %v624, 0
        %v688 = vsel %vm645, %v626, 0
        %v690 = vsel %vm645, %v628, 0
        %v692 = vsel %vm645, %v630, 0
        %v694 = vsel %vm645, %v632, 0
        %v696 = vsel %vm645, %v634, 0
        %v698 = vsel %vm645, %v636, 0
        %v700 = vsel %vm645, %v638, 0
        %v702 = vsel %vm645, %v640, 0
        %v704 = vsel %vm645, %v642, 0
        %v706 = vsel %vm645, %v644, 0
        %v708 = vsel %vm645, %v643, 0
        %710 = vmatprep.subr.mxu0 0.0
        %711 = vmatpush1.msra.mxu0 0.0
        %712 = vmatprep.subr.mxu0 0.0
        %713 = vmatpush1.msra.mxu0 0.0
        %714 = vmatprep.subr.mxu0 0.0
        %715 = vmatpush1.msra.mxu0 0.0
        %716 = vmatprep.subr.mxu0 0.0
        %717 = vmatpush1.msra.mxu0 0.0
        %718 = vmatprep.subr.mxu0 %v548
        %719 = vmatpush1.msra.mxu0 %v547
        %720 = vmatprep.subr.mxu0 %v546
        %721 = vmatpush1.msra.mxu0 %v545
        %722 = vmatprep.subr.mxu0 %v544
        %723 = vmatpush1.msra.mxu0 %v543
        %724 = vmatprep.subr.mxu0 %v542
        %725 = vmatpush1.msra.mxu0 %v541
        %726 = vmatprep.subr.mxu0 %v540
        %727 = vmatpush1.msra.mxu0 %v539
        %728 = vmatprep.subr.mxu0 %v538
        %729 = vmatpush1.msra.mxu0 %v537
        %730 = vmatprep.subr.mxu0 %v536
        %731 = vmatpush1.msra.mxu0 %v535
        %732 = vmatprep.subr.mxu0 %v534
        %733 = vmatpush1.msra.mxu0 %v533
        %734 = vmatprep.subr.mxu0 %v532
        %735 = vmatpush1.msra.mxu0 %v531
        %736 = vmatprep.subr.mxu0 %v530
        %737 = vmatpush1.msra.mxu0 %v529
        %738 = vmatprep.subr.mxu0 %v528
        %739 = vmatpush1.msra.mxu0 %v527
        %740 = vmatprep.subr.mxu0 %v526
        %741 = vmatpush1.msra.mxu0 %v525
        %742 = vmatprep.subr.mxu0 0.0
        %743 = vmatpush2.msra.mxu0 0.0
        %744 = vmatprep.subr.mxu0 0.0
        %745 = vmatpush2.msra.mxu0 0.0
        %746 = vmatprep.subr.mxu0 0.0
        %747 = vmatpush2.msra.mxu0 0.0
        %748 = vmatprep.subr.mxu0 0.0
        %749 = vmatpush2.msra.mxu0 0.0
        %750 = vmatprep.subr.mxu0 0.0
        %751 = vmatpush2.msra.mxu0 0.0
        %752 = vmatprep.subr.mxu0 0.0
        %753 = vmatpush2.msra.mxu0 0.0
        %754 = vmatprep.subr.mxu0 0.0
        %755 = vmatpush2.msra.mxu0 0.0
        %756 = vmatprep.subr.mxu0 0.0
        %757 = vmatpush2.msra.mxu0 0.0
        %758 = vmatprep.subr.mxu0 0.0
        %759 = vmatpush2.msra.mxu0 0.0
        %760 = vmatprep.subr.mxu0 0.0
        %761 = vmatpush2.msra.mxu0 0.0
        %762 = vmatprep.subr.mxu0 0.0
        %763 = vmatpush2.msra.mxu0 0.0
        %764 = vmatprep.subr.mxu0 0.0
        %765 = vmatpush2.msra.mxu0 0.0
        %766 = vmatprep.subr.mxu0 0.0
        %767 = vmatpush2.msra.mxu0 0.0
        %768 = vmatprep.subr.mxu0 0.0
        %769 = vmatpush2.msra.mxu0 0.0
        %770 = vmatprep.subr.mxu0 0.0
        %771 = vmatpush2.msra.mxu0 0.0
        %772 = vmatprep.subr.mxu0 0.0
        %773 = vmatpush2.msra.mxu0 0.0
        %774 = vmatprep.mubr.f32.mxu0 0.0
        %775 = vmatmul.mubr.f32.gmra.mxu0 %v646
        %v776 = vpop.f32.mrf.mxu0
        %v777 = vadd.f32 0.0, %v776
        %v778 = vpop.f32.mrf.mxu0
        %v779 = vadd.f32 0.0, %v778
        %780 = vmatprep.mubr.f32.mxu0 0.0
        %781 = vmatmul.mubr.f32.gmra.mxu0 %v648
        %v782 = vpop.f32.mrf.mxu0
        %v783 = vadd.f32 0.0, %v782
        %v784 = vpop.f32.mrf.mxu0
        %v785 = vadd.f32 0.0, %v784
        %786 = vmatprep.mubr.f32.mxu0 0.0
        %787 = vmatmul.mubr.f32.gmra.mxu0 %v650
        %v788 = vpop.f32.mrf.mxu0
        %v789 = vadd.f32 0.0, %v788
        %v790 = vpop.f32.mrf.mxu0
        %v791 = vadd.f32 0.0, %v790
        %792 = vmatprep.mubr.f32.mxu0 0.0
        %793 = vmatmul.mubr.f32.gmra.mxu0 %v652
        %v794 = vpop.f32.mrf.mxu0
        %v795 = vadd.f32 0.0, %v794
        %v796 = vpop.f32.mrf.mxu0
        %v797 = vadd.f32 0.0, %v796
        %798 = vmatprep.mubr.f32.mxu0 0.0
        %799 = vmatmul.mubr.f32.gmra.mxu0 %v654
        %v800 = vpop.f32.mrf.mxu0
        %v801 = vadd.f32 0.0, %v800
        %v802 = vpop.f32.mrf.mxu0
        %v803 = vadd.f32 0.0, %v802
        %804 = vmatprep.mubr.f32.mxu0 0.0
        %805 = vmatmul.mubr.f32.gmra.mxu0 %v656
        %v806 = vpop.f32.mrf.mxu0
        %v807 = vadd.f32 0.0, %v806
        %v808 = vpop.f32.mrf.mxu0
        %v809 = vadd.f32 0.0, %v808
        %810 = vmatprep.mubr.f32.mxu0 0.0
        %811 = vmatmul.mubr.f32.gmra.mxu0 %v658
        %v812 = vpop.f32.mrf.mxu0
        %v813 = vadd.f32 0.0, %v812
        %v814 = vpop.f32.mrf.mxu0
        %v815 = vadd.f32 0.0, %v814
        %816 = vmatprep.mubr.f32.mxu0 0.0
        %817 = vmatmul.mubr.f32.gmra.mxu0 %v660
        %v818 = vpop.f32.mrf.mxu0
        %v819 = vadd.f32 0.0, %v818
        %v820 = vpop.f32.mrf.mxu0
        %v821 = vadd.f32 0.0, %v820
        %822 = vmatprep.mubr.f32.mxu0 0.0
        %823 = vmatmul.mubr.f32.gmra.mxu0 %v662
        %v824 = vpop.f32.mrf.mxu0
        %v825 = vadd.f32 0.0, %v824
        %v826 = vpop.f32.mrf.mxu0
        %v827 = vadd.f32 0.0, %v826
        %828 = vmatprep.mubr.f32.mxu0 0.0
        %829 = vmatmul.mubr.f32.gmra.mxu0 %v664
        %v830 = vpop.f32.mrf.mxu0
        %v831 = vadd.f32 0.0, %v830
        %v832 = vpop.f32.mrf.mxu0
        %v833 = vadd.f32 0.0, %v832
        %834 = vmatprep.mubr.f32.mxu0 0.0
        %835 = vmatmul.mubr.f32.gmra.mxu0 %v666
        %v836 = vpop.f32.mrf.mxu0
        %v837 = vadd.f32 0.0, %v836
        %v838 = vpop.f32.mrf.mxu0
        %v839 = vadd.f32 0.0, %v838
        %840 = vmatprep.mubr.f32.mxu0 0.0
        %841 = vmatmul.mubr.f32.gmra.mxu0 %v668
        %v842 = vpop.f32.mrf.mxu0
        %v843 = vadd.f32 0.0, %v842
        %v844 = vpop.f32.mrf.mxu0
        %v845 = vadd.f32 0.0, %v844
        %846 = vmatprep.mubr.f32.mxu0 0.0
        %847 = vmatmul.mubr.f32.gmra.mxu0 %v670
        %v848 = vpop.f32.mrf.mxu0
        %v849 = vadd.f32 0.0, %v848
        %v850 = vpop.f32.mrf.mxu0
        %v851 = vadd.f32 0.0, %v850
        %852 = vmatprep.mubr.f32.mxu0 0.0
        %853 = vmatmul.mubr.f32.gmra.mxu0 %v672
        %v854 = vpop.f32.mrf.mxu0
        %v855 = vadd.f32 0.0, %v854
        %v856 = vpop.f32.mrf.mxu0
        %v857 = vadd.f32 0.0, %v856
        %858 = vmatprep.mubr.f32.mxu0 0.0
        %859 = vmatmul.mubr.f32.gmra.mxu0 %v674
        %v860 = vpop.f32.mrf.mxu0
        %v861 = vadd.f32 0.0, %v860
        %v862 = vpop.f32.mrf.mxu0
        %v863 = vadd.f32 0.0, %v862
        %864 = vmatprep.mubr.f32.mxu0 0.0
        %865 = vmatmul.mubr.f32.gmra.mxu0 %v676
        %v866 = vpop.f32.mrf.mxu0
        %v867 = vadd.f32 0.0, %v866
        %v868 = vpop.f32.mrf.mxu0
        %v869 = vadd.f32 0.0, %v868
        %870 = vmatprep.mubr.f32.mxu0 0.0
        %871 = vmatmul.mubr.f32.gmra.mxu0 %v678
        %v872 = vpop.f32.mrf.mxu0
        %v873 = vadd.f32 0.0, %v872
        %v874 = vpop.f32.mrf.mxu0
        %v875 = vadd.f32 0.0, %v874
        %876 = vmatprep.mubr.f32.mxu0 0.0
        %877 = vmatmul.mubr.f32.gmra.mxu0 %v680
        %v878 = vpop.f32.mrf.mxu0
        %v879 = vadd.f32 0.0, %v878
        %v880 = vpop.f32.mrf.mxu0
        %v881 = vadd.f32 0.0, %v880
        %882 = vmatprep.mubr.f32.mxu0 0.0
        %883 = vmatmul.mubr.f32.gmra.mxu0 %v682
        %v884 = vpop.f32.mrf.mxu0
        %v885 = vadd.f32 0.0, %v884
        %v886 = vpop.f32.mrf.mxu0
        %v887 = vadd.f32 0.0, %v886
        %888 = vmatprep.mubr.f32.mxu0 0.0
        %889 = vmatmul.mubr.f32.gmra.mxu0 %v684
        %v890 = vpop.f32.mrf.mxu0
        %v891 = vadd.f32 0.0, %v890
        %v892 = vpop.f32.mrf.mxu0
        %v893 = vadd.f32 0.0, %v892
        %894 = vmatprep.mubr.f32.mxu0 0.0
        %895 = vmatmul.mubr.f32.gmra.mxu0 %v686
        %v896 = vpop.f32.mrf.mxu0
        %v897 = vadd.f32 0.0, %v896
        %v898 = vpop.f32.mrf.mxu0
        %v899 = vadd.f32 0.0, %v898
        %900 = vmatprep.mubr.f32.mxu0 0.0
        %901 = vmatmul.mubr.f32.gmra.mxu0 %v688
        %v902 = vpop.f32.mrf.mxu0
        %v903 = vadd.f32 0.0, %v902
        %v904 = vpop.f32.mrf.mxu0
        %v905 = vadd.f32 0.0, %v904
        %906 = vmatprep.mubr.f32.mxu0 0.0
        %907 = vmatmul.mubr.f32.gmra.mxu0 %v690
        %v908 = vpop.f32.mrf.mxu0
        %v909 = vadd.f32 0.0, %v908
        %v910 = vpop.f32.mrf.mxu0
        %v911 = vadd.f32 0.0, %v910
        %912 = vmatprep.mubr.f32.mxu0 0.0
        %913 = vmatmul.mubr.f32.gmra.mxu0 %v692
        %v914 = vpop.f32.mrf.mxu0
        %v915 = vadd.f32 0.0, %v914
        %v916 = vpop.f32.mrf.mxu0
        %v917 = vadd.f32 0.0, %v916
        %918 = vmatprep.mubr.f32.mxu0 0.0
        %919 = vmatmul.mubr.f32.gmra.mxu0 %v694
        %v920 = vpop.f32.mrf.mxu0
        %v921 = vadd.f32 0.0, %v920
        %v922 = vpop.f32.mrf.mxu0
        %v923 = vadd.f32 0.0, %v922
        %924 = vmatprep.mubr.f32.mxu0 0.0
        %925 = vmatmul.mubr.f32.gmra.mxu0 %v696
        %v926 = vpop.f32.mrf.mxu0
        %v927 = vadd.f32 0.0, %v926
        %v928 = vpop.f32.mrf.mxu0
        %v929 = vadd.f32 0.0, %v928
        %930 = vmatprep.mubr.f32.mxu0 0.0
        %931 = vmatmul.mubr.f32.gmra.mxu0 %v698
        %v932 = vpop.f32.mrf.mxu0
        %v933 = vadd.f32 0.0, %v932
        %v934 = vpop.f32.mrf.mxu0
        %v935 = vadd.f32 0.0, %v934
        %936 = vmatprep.mubr.f32.mxu0 0.0
        %937 = vmatmul.mubr.f32.gmra.mxu0 %v700
        %v938 = vpop.f32.mrf.mxu0
        %v939 = vadd.f32 0.0, %v938
        %v940 = vpop.f32.mrf.mxu0
        %v941 = vadd.f32 0.0, %v940
        %942 = vmatprep.mubr.f32.mxu0 0.0
        %943 = vmatmul.mubr.f32.gmra.mxu0 %v702
        %v944 = vpop.f32.mrf.mxu0
        %v945 = vadd.f32 0.0, %v944
        %v946 = vpop.f32.mrf.mxu0
        %v947 = vadd.f32 0.0, %v946
        %948 = vmatprep.mubr.f32.mxu0 0.0
        %949 = vmatmul.mubr.f32.gmra.mxu0 %v704
        %v950 = vpop.f32.mrf.mxu0
        %v951 = vadd.f32 0.0, %v950
        %v952 = vpop.f32.mrf.mxu0
        %v953 = vadd.f32 0.0, %v952
        %954 = vmatprep.mubr.f32.mxu0 0.0
        %955 = vmatmul.mubr.f32.gmra.mxu0 %v706
        %v956 = vpop.f32.mrf.mxu0
        %v957 = vadd.f32 0.0, %v956
        %v958 = vpop.f32.mrf.mxu0
        %v959 = vadd.f32 0.0, %v958
        %960 = vmatprep.mubr.f32.mxu0 0.0
        %961 = vmatmul.mubr.f32.gmra.mxu0 %v708
        %v962 = vpop.f32.mrf.mxu0
        %v963 = vadd.f32 0.0, %v962
        %v964 = vpop.f32.mrf.mxu0
        %v965 = vadd.f32 0.0, %v964
        %966 = vdwg.mxu0
        %v967 = vsel %vm645, %v468, 0
        %v969 = vsel %vm645, %v469, 0
        %v971 = vsel %vm645, %v470, 0
        %v973 = vsel %vm645, %v471, 0
        %v975 = vsel %vm645, %v472, 0
        %v977 = vsel %vm645, %v473, 0
        %v979 = vsel %vm645, %v474, 0
        %v981 = vsel %vm645, %v475, 0
        %v983 = vsel %vm645, %v476, 0
        %v985 = vsel %vm645, %v477, 0
        %v987 = vsel %vm645, %v478, 0
        %v989 = vsel %vm645, %v479, 0
        %v991 = vsel %vm645, %v480, 0
        %v993 = vsel %vm645, %v481, 0
        %v995 = vsel %vm645, %v482, 0
        %v997 = vsel %vm645, %v483, 0
        %v999 = vsel %vm645, %v484, 0
        %v1001 = vsel %vm645, %v485, 0
        %v1003 = vsel %vm645, %v486, 0
        %v1005 = vsel %vm645, %v487, 0
        %v1007 = vsel %vm645, %v488, 0
        %v1009 = vsel %vm645, %v489, 0
        %v1011 = vsel %vm645, %v490, 0
        %v1013 = vsel %vm645, %v491, 0
        %v1015 = vsel %vm645, %v492, 0
        %v1017 = vsel %vm645, %v493, 0
        %v1019 = vsel %vm645, %v494, 0
        %v1021 = vsel %vm645, %v495, 0
        %v1023 = vsel %vm645, %v496, 0
        %v1025 = vsel %vm645, %v497, 0
        %v1027 = vsel %vm645, %v498, 0
        %v1029 = vsel %vm645, %v499, 0
        %1031 = vmatprep.subr.mxu0 0.0
        %1032 = vmatpush1.msra.mxu0 0.0
        %1033 = vmatprep.subr.mxu0 0.0
        %1034 = vmatpush1.msra.mxu0 0.0
        %1035 = vmatprep.subr.mxu0 0.0
        %1036 = vmatpush1.msra.mxu0 0.0
        %1037 = vmatprep.subr.mxu0 0.0
        %1038 = vmatpush1.msra.mxu0 0.0
        %1039 = vmatprep.subr.mxu0 %v523
        %1040 = vmatpush1.msra.mxu0 %v522
        %1041 = vmatprep.subr.mxu0 %v521
        %1042 = vmatpush1.msra.mxu0 %v520
        %1043 = vmatprep.subr.mxu0 %v519
        %1044 = vmatpush1.msra.mxu0 %v518
        %1045 = vmatprep.subr.mxu0 %v517
        %1046 = vmatpush1.msra.mxu0 %v516
        %1047 = vmatprep.subr.mxu0 %v515
        %1048 = vmatpush1.msra.mxu0 %v514
        %1049 = vmatprep.subr.mxu0 %v513
        %1050 = vmatpush1.msra.mxu0 %v512
        %1051 = vmatprep.subr.mxu0 %v511
        %1052 = vmatpush1.msra.mxu0 %v510
        %1053 = vmatprep.subr.mxu0 %v509
        %1054 = vmatpush1.msra.mxu0 %v508
        %1055 = vmatprep.subr.mxu0 %v507
        %1056 = vmatpush1.msra.mxu0 %v506
        %1057 = vmatprep.subr.mxu0 %v505
        %1058 = vmatpush1.msra.mxu0 %v504
        %1059 = vmatprep.subr.mxu0 %v503
        %1060 = vmatpush1.msra.mxu0 %v502
        %1061 = vmatprep.subr.mxu0 %v501
        %1062 = vmatpush1.msra.mxu0 %v500
        %1063 = vmatprep.subr.mxu0 0.0
        %1064 = vmatpush2.msra.mxu0 0.0
        %1065 = vmatprep.subr.mxu0 0.0
        %1066 = vmatpush2.msra.mxu0 0.0
        %1067 = vmatprep.subr.mxu0 0.0
        %1068 = vmatpush2.msra.mxu0 0.0
        %1069 = vmatprep.subr.mxu0 0.0
        %1070 = vmatpush2.msra.mxu0 0.0
        %1071 = vmatprep.subr.mxu0 0.0
        %1072 = vmatpush2.msra.mxu0 0.0
        %1073 = vmatprep.subr.mxu0 0.0
        %1074 = vmatpush2.msra.mxu0 0.0
        %1075 = vmatprep.subr.mxu0 0.0
        %1076 = vmatpush2.msra.mxu0 0.0
        %1077 = vmatprep.subr.mxu0 0.0
        %1078 = vmatpush2.msra.mxu0 0.0
        %1079 = vmatprep.subr.mxu0 0.0
        %1080 = vmatpush2.msra.mxu0 0.0
        %1081 = vmatprep.subr.mxu0 0.0
        %1082 = vmatpush2.msra.mxu0 0.0
        %1083 = vmatprep.subr.mxu0 0.0
        %1084 = vmatpush2.msra.mxu0 0.0
        %1085 = vmatprep.subr.mxu0 0.0
        %1086 = vmatpush2.msra.mxu0 0.0
        %1087 = vmatprep.subr.mxu0 0.0
        %1088 = vmatpush2.msra.mxu0 0.0
        %1089 = vmatprep.subr.mxu0 0.0
        %1090 = vmatpush2.msra.mxu0 0.0
        %1091 = vmatprep.subr.mxu0 0.0
        %1092 = vmatpush2.msra.mxu0 0.0
        %1093 = vmatprep.subr.mxu0 0.0
        %1094 = vmatpush2.msra.mxu0 0.0
        %1095 = vmatprep.mubr.f32.mxu0 0.0
        %1096 = vmatmul.mubr.f32.gmra.mxu0 %v967
        %v1097 = vpop.f32.mrf.mxu0
        %v1098 = vadd.f32 %v777, %v1097
        %v1099 = vpop.f32.mrf.mxu0
        %v1100 = vadd.f32 %v779, %v1099
        %1101 = vmatprep.mubr.f32.mxu0 0.0
        %1102 = vmatmul.mubr.f32.gmra.mxu0 %v969
        %v1103 = vpop.f32.mrf.mxu0
        %v1104 = vadd.f32 %v783, %v1103
        %v1105 = vpop.f32.mrf.mxu0
        %v1106 = vadd.f32 %v785, %v1105
        %1107 = vmatprep.mubr.f32.mxu0 0.0
        %1108 = vmatmul.mubr.f32.gmra.mxu0 %v971
        %v1109 = vpop.f32.mrf.mxu0
        %v1110 = vadd.f32 %v789, %v1109
        %v1111 = vpop.f32.mrf.mxu0
        %v1112 = vadd.f32 %v791, %v1111
        %1113 = vmatprep.mubr.f32.mxu0 0.0
        %1114 = vmatmul.mubr.f32.gmra.mxu0 %v973
        %v1115 = vpop.f32.mrf.mxu0
        %v1116 = vadd.f32 %v795, %v1115
        %v1117 = vpop.f32.mrf.mxu0
        %v1118 = vadd.f32 %v797, %v1117
        %1119 = vmatprep.mubr.f32.mxu0 0.0
        %1120 = vmatmul.mubr.f32.gmra.mxu0 %v975
        %v1121 = vpop.f32.mrf.mxu0
        %v1122 = vadd.f32 %v801, %v1121
        %v1123 = vpop.f32.mrf.mxu0
        %v1124 = vadd.f32 %v803, %v1123
        %1125 = vmatprep.mubr.f32.mxu0 0.0
        %1126 = vmatmul.mubr.f32.gmra.mxu0 %v977
        %v1127 = vpop.f32.mrf.mxu0
        %v1128 = vadd.f32 %v807, %v1127
        %v1129 = vpop.f32.mrf.mxu0
        %v1130 = vadd.f32 %v809, %v1129
        %1131 = vmatprep.mubr.f32.mxu0 0.0
        %1132 = vmatmul.mubr.f32.gmra.mxu0 %v979
        %v1133 = vpop.f32.mrf.mxu0
        %v1134 = vadd.f32 %v813, %v1133
        %v1135 = vpop.f32.mrf.mxu0
        %v1136 = vadd.f32 %v815, %v1135
        %1137 = vmatprep.mubr.f32.mxu0 0.0
        %1138 = vmatmul.mubr.f32.gmra.mxu0 %v981
        %v1139 = vpop.f32.mrf.mxu0
        %v1140 = vadd.f32 %v819, %v1139
        %v1141 = vpop.f32.mrf.mxu0
        %v1142 = vadd.f32 %v821, %v1141
        %1143 = vmatprep.mubr.f32.mxu0 0.0
        %1144 = vmatmul.mubr.f32.gmra.mxu0 %v983
        %v1145 = vpop.f32.mrf.mxu0
        %v1146 = vadd.f32 %v825, %v1145
        %v1147 = vpop.f32.mrf.mxu0
        %v1148 = vadd.f32 %v827, %v1147
        %1149 = vmatprep.mubr.f32.mxu0 0.0
        %1150 = vmatmul.mubr.f32.gmra.mxu0 %v985
        %v1151 = vpop.f32.mrf.mxu0
        %v1152 = vadd.f32 %v831, %v1151
        %v1153 = vpop.f32.mrf.mxu0
        %v1154 = vadd.f32 %v833, %v1153
        %1155 = vmatprep.mubr.f32.mxu0 0.0
        %1156 = vmatmul.mubr.f32.gmra.mxu0 %v987
        %v1157 = vpop.f32.mrf.mxu0
        %v1158 = vadd.f32 %v837, %v1157
        %v1159 = vpop.f32.mrf.mxu0
        %v1160 = vadd.f32 %v839, %v1159
        %1161 = vmatprep.mubr.f32.mxu0 0.0
        %1162 = vmatmul.mubr.f32.gmra.mxu0 %v989
        %v1163 = vpop.f32.mrf.mxu0
        %v1164 = vadd.f32 %v843, %v1163
        %v1165 = vpop.f32.mrf.mxu0
        %v1166 = vadd.f32 %v845, %v1165
        %1167 = vmatprep.mubr.f32.mxu0 0.0
        %1168 = vmatmul.mubr.f32.gmra.mxu0 %v991
        %v1169 = vpop.f32.mrf.mxu0
        %v1170 = vadd.f32 %v849, %v1169
        %v1171 = vpop.f32.mrf.mxu0
        %v1172 = vadd.f32 %v851, %v1171
        %1173 = vmatprep.mubr.f32.mxu0 0.0
        %1174 = vmatmul.mubr.f32.gmra.mxu0 %v993
        %v1175 = vpop.f32.mrf.mxu0
        %v1176 = vadd.f32 %v855, %v1175
        %v1177 = vpop.f32.mrf.mxu0
        %v1178 = vadd.f32 %v857, %v1177
        %1179 = vmatprep.mubr.f32.mxu0 0.0
        %1180 = vmatmul.mubr.f32.gmra.mxu0 %v995
        %v1181 = vpop.f32.mrf.mxu0
        %v1182 = vadd.f32 %v861, %v1181
        %v1183 = vpop.f32.mrf.mxu0
        %v1184 = vadd.f32 %v863, %v1183
        %1185 = vmatprep.mubr.f32.mxu0 0.0
        %1186 = vmatmul.mubr.f32.gmra.mxu0 %v997
        %v1187 = vpop.f32.mrf.mxu0
        %v1188 = vadd.f32 %v867, %v1187
        %v1189 = vpop.f32.mrf.mxu0
        %v1190 = vadd.f32 %v869, %v1189
        %1191 = vmatprep.mubr.f32.mxu0 0.0
        %1192 = vmatmul.mubr.f32.gmra.mxu0 %v999
        %v1193 = vpop.f32.mrf.mxu0
        %v1194 = vadd.f32 %v873, %v1193
        %v1195 = vpop.f32.mrf.mxu0
        %v1196 = vadd.f32 %v875, %v1195
        %1197 = vmatprep.mubr.f32.mxu0 0.0
        %1198 = vmatmul.mubr.f32.gmra.mxu0 %v1001
        %v1199 = vpop.f32.mrf.mxu0
        %v1200 = vadd.f32 %v879, %v1199
        %v1201 = vpop.f32.mrf.mxu0
        %v1202 = vadd.f32 %v881, %v1201
        %1203 = vmatprep.mubr.f32.mxu0 0.0
        %1204 = vmatmul.mubr.f32.gmra.mxu0 %v1003
        %v1205 = vpop.f32.mrf.mxu0
        %v1206 = vadd.f32 %v885, %v1205
        %v1207 = vpop.f32.mrf.mxu0
        %v1208 = vadd.f32 %v887, %v1207
        %1209 = vmatprep.mubr.f32.mxu0 0.0
        %1210 = vmatmul.mubr.f32.gmra.mxu0 %v1005
        %v1211 = vpop.f32.mrf.mxu0
        %v1212 = vadd.f32 %v891, %v1211
        %v1213 = vpop.f32.mrf.mxu0
        %v1214 = vadd.f32 %v893, %v1213
        %1215 = vmatprep.mubr.f32.mxu0 0.0
        %1216 = vmatmul.mubr.f32.gmra.mxu0 %v1007
        %v1217 = vpop.f32.mrf.mxu0
        %v1218 = vadd.f32 %v897, %v1217
        %v1219 = vpop.f32.mrf.mxu0
        %v1220 = vadd.f32 %v899, %v1219
        %1221 = vmatprep.mubr.f32.mxu0 0.0
        %1222 = vmatmul.mubr.f32.gmra.mxu0 %v1009
        %v1223 = vpop.f32.mrf.mxu0
        %v1224 = vadd.f32 %v903, %v1223
        %v1225 = vpop.f32.mrf.mxu0
        %v1226 = vadd.f32 %v905, %v1225
        %1227 = vmatprep.mubr.f32.mxu0 0.0
        %1228 = vmatmul.mubr.f32.gmra.mxu0 %v1011
        %v1229 = vpop.f32.mrf.mxu0
        %v1230 = vadd.f32 %v909, %v1229
        %v1231 = vpop.f32.mrf.mxu0
        %v1232 = vadd.f32 %v911, %v1231
        %1233 = vmatprep.mubr.f32.mxu0 0.0
        %1234 = vmatmul.mubr.f32.gmra.mxu0 %v1013
        %v1235 = vpop.f32.mrf.mxu0
        %v1236 = vadd.f32 %v915, %v1235
        %v1237 = vpop.f32.mrf.mxu0
        %v1238 = vadd.f32 %v917, %v1237
        %1239 = vmatprep.mubr.f32.mxu0 0.0
        %1240 = vmatmul.mubr.f32.gmra.mxu0 %v1015
        %v1241 = vpop.f32.mrf.mxu0
        %v1242 = vadd.f32 %v921, %v1241
        %v1243 = vpop.f32.mrf.mxu0
        %v1244 = vadd.f32 %v923, %v1243
        %1245 = vmatprep.mubr.f32.mxu0 0.0
        %1246 = vmatmul.mubr.f32.gmra.mxu0 %v1017
        %v1247 = vpop.f32.mrf.mxu0
        %v1248 = vadd.f32 %v927, %v1247
        %v1249 = vpop.f32.mrf.mxu0
        %v1250 = vadd.f32 %v929, %v1249
        %1251 = vmatprep.mubr.f32.mxu0 0.0
        %1252 = vmatmul.mubr.f32.gmra.mxu0 %v1019
        %v1253 = vpop.f32.mrf.mxu0
        %v1254 = vadd.f32 %v933, %v1253
        %v1255 = vpop.f32.mrf.mxu0
        %v1256 = vadd.f32 %v935, %v1255
        %1257 = vmatprep.mubr.f32.mxu0 0.0
        %1258 = vmatmul.mubr.f32.gmra.mxu0 %v1021
        %v1259 = vpop.f32.mrf.mxu0
        %v1260 = vadd.f32 %v939, %v1259
        %v1261 = vpop.f32.mrf.mxu0
        %v1262 = vadd.f32 %v941, %v1261
        %1263 = vmatprep.mubr.f32.mxu0 0.0
        %1264 = vmatmul.mubr.f32.gmra.mxu0 %v1023
        %v1265 = vpop.f32.mrf.mxu0
        %v1266 = vadd.f32 %v945, %v1265
        %v1267 = vpop.f32.mrf.mxu0
        %v1268 = vadd.f32 %v947, %v1267
        %1269 = vmatprep.mubr.f32.mxu0 0.0
        %1270 = vmatmul.mubr.f32.gmra.mxu0 %v1025
        %v1271 = vpop.f32.mrf.mxu0
        %v1272 = vadd.f32 %v951, %v1271
        %v1273 = vpop.f32.mrf.mxu0
        %v1274 = vadd.f32 %v953, %v1273
        %1275 = vmatprep.mubr.f32.mxu0 0.0
        %1276 = vmatmul.mubr.f32.gmra.mxu0 %v1027
        %v1277 = vpop.f32.mrf.mxu0
        %v1278 = vadd.f32 %v957, %v1277
        %v1279 = vpop.f32.mrf.mxu0
        %v1280 = vadd.f32 %v959, %v1279
        %1281 = vmatprep.mubr.f32.mxu0 0.0
        %1282 = vmatmul.mubr.f32.gmra.mxu0 %v1029
        %v1283 = vpop.f32.mrf.mxu0
        %v1284 = vadd.f32 %v963, %v1283
        %v1285 = vpop.f32.mrf.mxu0
        %v1286 = vadd.f32 %v965, %v1285
        %1287 = vdwg.mxu0
        %s1288 = scalar_lea.vmem %s1, 384
        %v1289 = vld [vmem:[%s1288] sm:$0xff]
        %v1290 = vld [vmem:[%s1288 + $0x8] sm:$0xff]
        %v1291 = vld [vmem:[%s1288 + $0x10] sm:$0xff]
        %v1292 = vld [vmem:[%s1288 + $0x18] sm:$0xff]
        %v1293 = vld [vmem:[%s1288 + $0x20] sm:$0xff]
        %v1294 = vld [vmem:[%s1288 + $0x28] sm:$0xff]
        %v1295 = vld [vmem:[%s1288 + $0x30] sm:$0xff]
        %v1296 = vld [vmem:[%s1288 + $0x38] sm:$0xff]
        %v1297 = vld [vmem:[%s1288 + $0x40] sm:$0xff]
        %v1298 = vld [vmem:[%s1288 + $0x48] sm:$0xff]
        %v1299 = vld [vmem:[%s1288 + $0x50] sm:$0xff]
        %v1300 = vld [vmem:[%s1288 + $0x58] sm:$0xff]
        %v1301 = vld [vmem:[%s1288 + $0x60] sm:$0xff]
        %v1302 = vld [vmem:[%s1288 + $0x68] sm:$0xff]
        %v1303 = vld [vmem:[%s1288 + $0x70] sm:$0xff]
        %v1304 = vld [vmem:[%s1288 + $0x78] sm:$0xff]
        %v1305 = vld [vmem:[%s1288 + $0x80] sm:$0xff]
        %v1306 = vld [vmem:[%s1288 + $0x88] sm:$0xff]
        %v1307 = vld [vmem:[%s1288 + $0x90] sm:$0xff]
        %v1308 = vld [vmem:[%s1288 + $0x98] sm:$0xff]
        %v1309 = vld [vmem:[%s1288 + $0xa0] sm:$0xff]
        %v1310 = vld [vmem:[%s1288 + $0xa8] sm:$0xff]
        %v1311 = vld [vmem:[%s1288 + $0xb0] sm:$0xff]
        %v1312 = vld [vmem:[%s1288 + $0xb8] sm:$0xff]
        %vm1313 = vcmask 1045504
        %v1314 = vrot.slane %v468, 2
        %v1315 = vrot.slane %v469, 2
        %v1316 = vsel %vm1313, %v1314, %v1315
        %v1317 = vrot.slane %v470, 2
        %v1318 = vsel %vm1313, %v1315, %v1317
        %v1319 = vrot.slane %v471, 2
        %v1320 = vsel %vm1313, %v1317, %v1319
        %v1321 = vrot.slane %v472, 2
        %v1322 = vsel %vm1313, %v1319, %v1321
        %v1323 = vrot.slane %v473, 2
        %v1324 = vsel %vm1313, %v1321, %v1323
        %v1325 = vrot.slane %v474, 2
        %v1326 = vsel %vm1313, %v1323, %v1325
        %v1327 = vrot.slane %v475, 2
        %v1328 = vsel %vm1313, %v1325, %v1327
        %v1329 = vrot.slane %v476, 2
        %v1330 = vsel %vm1313, %v1327, %v1329
        %v1331 = vrot.slane %v477, 2
        %v1332 = vsel %vm1313, %v1329, %v1331
        %v1333 = vrot.slane %v478, 2
        %v1334 = vsel %vm1313, %v1331, %v1333
        %v1335 = vrot.slane %v479, 2
        %v1336 = vsel %vm1313, %v1333, %v1335
        %v1337 = vrot.slane %v480, 2
        %v1338 = vsel %vm1313, %v1335, %v1337
        %v1339 = vrot.slane %v481, 2
        %v1340 = vsel %vm1313, %v1337, %v1339
        %v1341 = vrot.slane %v482, 2
        %v1342 = vsel %vm1313, %v1339, %v1341
        %v1343 = vrot.slane %v483, 2
        %v1344 = vsel %vm1313, %v1341, %v1343
        %v1345 = vrot.slane %v484, 2
        %v1346 = vsel %vm1313, %v1343, %v1345
        %v1347 = vrot.slane %v485, 2
        %v1348 = vsel %vm1313, %v1345, %v1347
        %v1349 = vrot.slane %v486, 2
        %v1350 = vsel %vm1313, %v1347, %v1349
        %v1351 = vrot.slane %v487, 2
        %v1352 = vsel %vm1313, %v1349, %v1351
        %v1353 = vrot.slane %v488, 2
        %v1354 = vsel %vm1313, %v1351, %v1353
        %v1355 = vrot.slane %v489, 2
        %v1356 = vsel %vm1313, %v1353, %v1355
        %v1357 = vrot.slane %v490, 2
        %v1358 = vsel %vm1313, %v1355, %v1357
        %v1359 = vrot.slane %v491, 2
        %v1360 = vsel %vm1313, %v1357, %v1359
        %v1361 = vrot.slane %v492, 2
        %v1362 = vsel %vm1313, %v1359, %v1361
        %v1363 = vrot.slane %v493, 2
        %v1364 = vsel %vm1313, %v1361, %v1363
        %v1365 = vrot.slane %v494, 2
        %v1366 = vsel %vm1313, %v1363, %v1365
        %v1367 = vrot.slane %v495, 2
        %v1368 = vsel %vm1313, %v1365, %v1367
        %v1369 = vrot.slane %v496, 2
        %v1370 = vsel %vm1313, %v1367, %v1369
        %v1371 = vrot.slane %v497, 2
        %v1372 = vsel %vm1313, %v1369, %v1371
        %v1373 = vrot.slane %v498, 2
        %v1374 = vsel %vm1313, %v1371, %v1373
        %v1375 = vrot.slane %v499, 2
        %v1376 = vsel %vm1313, %v1373, %v1375
        %v1377 = vsel %vm645, %v1316, 0
        %v1379 = vsel %vm645, %v1318, 0
        %v1381 = vsel %vm645, %v1320, 0
        %v1383 = vsel %vm645, %v1322, 0
        %v1385 = vsel %vm645, %v1324, 0
        %v1387 = vsel %vm645, %v1326, 0
        %v1389 = vsel %vm645, %v1328, 0
        %v1391 = vsel %vm645, %v1330, 0
        %v1393 = vsel %vm645, %v1332, 0
        %v1395 = vsel %vm645, %v1334, 0
        %v1397 = vsel %vm645, %v1336, 0
        %v1399 = vsel %vm645, %v1338, 0
        %v1401 = vsel %vm645, %v1340, 0
        %v1403 = vsel %vm645, %v1342, 0
        %v1405 = vsel %vm645, %v1344, 0
        %v1407 = vsel %vm645, %v1346, 0
        %v1409 = vsel %vm645, %v1348, 0
        %v1411 = vsel %vm645, %v1350, 0
        %v1413 = vsel %vm645, %v1352, 0
        %v1415 = vsel %vm645, %v1354, 0
        %v1417 = vsel %vm645, %v1356, 0
        %v1419 = vsel %vm645, %v1358, 0
        %v1421 = vsel %vm645, %v1360, 0
        %v1423 = vsel %vm645, %v1362, 0
        %v1425 = vsel %vm645, %v1364, 0
        %v1427 = vsel %vm645, %v1366, 0
        %v1429 = vsel %vm645, %v1368, 0
        %v1431 = vsel %vm645, %v1370, 0
        %v1433 = vsel %vm645, %v1372, 0
        %v1435 = vsel %vm645, %v1374, 0
        %v1437 = vsel %vm645, %v1376, 0
        %v1439 = vsel %vm645, %v1375, 0
        %1441 = vmatprep.subr.mxu0 0.0
        %1442 = vmatpush1.msra.mxu0 0.0
        %1443 = vmatprep.subr.mxu0 0.0
        %1444 = vmatpush1.msra.mxu0 0.0
        %1445 = vmatprep.subr.mxu0 0.0
        %1446 = vmatpush1.msra.mxu0 0.0
        %1447 = vmatprep.subr.mxu0 0.0
        %1448 = vmatpush1.msra.mxu0 0.0
        %1449 = vmatprep.subr.mxu0 %v1312
        %1450 = vmatpush1.msra.mxu0 %v1311
        %1451 = vmatprep.subr.mxu0 %v1310
        %1452 = vmatpush1.msra.mxu0 %v1309
        %1453 = vmatprep.subr.mxu0 %v1308
        %1454 = vmatpush1.msra.mxu0 %v1307
        %1455 = vmatprep.subr.mxu0 %v1306
        %1456 = vmatpush1.msra.mxu0 %v1305
        %1457 = vmatprep.subr.mxu0 %v1304
        %1458 = vmatpush1.msra.mxu0 %v1303
        %1459 = vmatprep.subr.mxu0 %v1302
        %1460 = vmatpush1.msra.mxu0 %v1301
        %1461 = vmatprep.subr.mxu0 %v1300
        %1462 = vmatpush1.msra.mxu0 %v1299
        %1463 = vmatprep.subr.mxu0 %v1298
        %1464 = vmatpush1.msra.mxu0 %v1297
        %1465 = vmatprep.subr.mxu0 %v1296
        %1466 = vmatpush1.msra.mxu0 %v1295
        %1467 = vmatprep.subr.mxu0 %v1294
        %1468 = vmatpush1.msra.mxu0 %v1293
        %1469 = vmatprep.subr.mxu0 %v1292
        %1470 = vmatpush1.msra.mxu0 %v1291
        %1471 = vmatprep.subr.mxu0 %v1290
        %1472 = vmatpush1.msra.mxu0 %v1289
        %1473 = vmatprep.subr.mxu0 0.0
        %1474 = vmatpush2.msra.mxu0 0.0
        %1475 = vmatprep.subr.mxu0 0.0
        %1476 = vmatpush2.msra.mxu0 0.0
        %1477 = vmatprep.subr.mxu0 0.0
        %1478 = vmatpush2.msra.mxu0 0.0
        %1479 = vmatprep.subr.mxu0 0.0
        %1480 = vmatpush2.msra.mxu0 0.0
        %1481 = vmatprep.subr.mxu0 0.0
        %1482 = vmatpush2.msra.mxu0 0.0
        %1483 = vmatprep.subr.mxu0 0.0
        %1484 = vmatpush2.msra.mxu0 0.0
        %1485 = vmatprep.subr.mxu0 0.0
        %1486 = vmatpush2.msra.mxu0 0.0
        %1487 = vmatprep.subr.mxu0 0.0
        %1488 = vmatpush2.msra.mxu0 0.0
        %1489 = vmatprep.subr.mxu0 0.0
        %1490 = vmatpush2.msra.mxu0 0.0
        %1491 = vmatprep.subr.mxu0 0.0
        %1492 = vmatpush2.msra.mxu0 0.0
        %1493 = vmatprep.subr.mxu0 0.0
        %1494 = vmatpush2.msra.mxu0 0.0
        %1495 = vmatprep.subr.mxu0 0.0
        %1496 = vmatpush2.msra.mxu0 0.0
        %1497 = vmatprep.subr.mxu0 0.0
        %1498 = vmatpush2.msra.mxu0 0.0
        %1499 = vmatprep.subr.mxu0 0.0
        %1500 = vmatpush2.msra.mxu0 0.0
        %1501 = vmatprep.subr.mxu0 0.0
        %1502 = vmatpush2.msra.mxu0 0.0
        %1503 = vmatprep.subr.mxu0 0.0
        %1504 = vmatpush2.msra.mxu0 0.0
        %1505 = vmatprep.mubr.f32.mxu0 0.0
        %1506 = vmatmul.mubr.f32.gmra.mxu0 %v1377
        %v1507 = vpop.f32.mrf.mxu0
        %v1508 = vadd.f32 0.0, %v1507
        %v1509 = vpop.f32.mrf.mxu0
        %v1510 = vadd.f32 0.0, %v1509
        %1511 = vmatprep.mubr.f32.mxu0 0.0
        %1512 = vmatmul.mubr.f32.gmra.mxu0 %v1379
        %v1513 = vpop.f32.mrf.mxu0
        %v1514 = vadd.f32 0.0, %v1513
        %v1515 = vpop.f32.mrf.mxu0
        %v1516 = vadd.f32 0.0, %v1515
        %1517 = vmatprep.mubr.f32.mxu0 0.0
        %1518 = vmatmul.mubr.f32.gmra.mxu0 %v1381
        %v1519 = vpop.f32.mrf.mxu0
        %v1520 = vadd.f32 0.0, %v1519
        %v1521 = vpop.f32.mrf.mxu0
        %v1522 = vadd.f32 0.0, %v1521
        %1523 = vmatprep.mubr.f32.mxu0 0.0
        %1524 = vmatmul.mubr.f32.gmra.mxu0 %v1383
        %v1525 = vpop.f32.mrf.mxu0
        %v1526 = vadd.f32 0.0, %v1525
        %v1527 = vpop.f32.mrf.mxu0
        %v1528 = vadd.f32 0.0, %v1527
        %1529 = vmatprep.mubr.f32.mxu0 0.0
        %1530 = vmatmul.mubr.f32.gmra.mxu0 %v1385
        %v1531 = vpop.f32.mrf.mxu0
        %v1532 = vadd.f32 0.0, %v1531
        %v1533 = vpop.f32.mrf.mxu0
        %v1534 = vadd.f32 0.0, %v1533
        %1535 = vmatprep.mubr.f32.mxu0 0.0
        %1536 = vmatmul.mubr.f32.gmra.mxu0 %v1387
        %v1537 = vpop.f32.mrf.mxu0
        %v1538 = vadd.f32 0.0, %v1537
        %v1539 = vpop.f32.mrf.mxu0
        %v1540 = vadd.f32 0.0, %v1539
        %1541 = vmatprep.mubr.f32.mxu0 0.0
        %1542 = vmatmul.mubr.f32.gmra.mxu0 %v1389
        %v1543 = vpop.f32.mrf.mxu0
        %v1544 = vadd.f32 0.0, %v1543
        %v1545 = vpop.f32.mrf.mxu0
        %v1546 = vadd.f32 0.0, %v1545
        %1547 = vmatprep.mubr.f32.mxu0 0.0
        %1548 = vmatmul.mubr.f32.gmra.mxu0 %v1391
        %v1549 = vpop.f32.mrf.mxu0
        %v1550 = vadd.f32 0.0, %v1549
        %v1551 = vpop.f32.mrf.mxu0
        %v1552 = vadd.f32 0.0, %v1551
        %1553 = vmatprep.mubr.f32.mxu0 0.0
        %1554 = vmatmul.mubr.f32.gmra.mxu0 %v1393
        %v1555 = vpop.f32.mrf.mxu0
        %v1556 = vadd.f32 0.0, %v1555
        %v1557 = vpop.f32.mrf.mxu0
        %v1558 = vadd.f32 0.0, %v1557
        %1559 = vmatprep.mubr.f32.mxu0 0.0
        %1560 = vmatmul.mubr.f32.gmra.mxu0 %v1395
        %v1561 = vpop.f32.mrf.mxu0
        %v1562 = vadd.f32 0.0, %v1561
        %v1563 = vpop.f32.mrf.mxu0
        %v1564 = vadd.f32 0.0, %v1563
        %1565 = vmatprep.mubr.f32.mxu0 0.0
        %1566 = vmatmul.mubr.f32.gmra.mxu0 %v1397
        %v1567 = vpop.f32.mrf.mxu0
        %v1568 = vadd.f32 0.0, %v1567
        %v1569 = vpop.f32.mrf.mxu0
        %v1570 = vadd.f32 0.0, %v1569
        %1571 = vmatprep.mubr.f32.mxu0 0.0
        %1572 = vmatmul.mubr.f32.gmra.mxu0 %v1399
        %v1573 = vpop.f32.mrf.mxu0
        %v1574 = vadd.f32 0.0, %v1573
        %v1575 = vpop.f32.mrf.mxu0
        %v1576 = vadd.f32 0.0, %v1575
        %1577 = vmatprep.mubr.f32.mxu0 0.0
        %1578 = vmatmul.mubr.f32.gmra.mxu0 %v1401
        %v1579 = vpop.f32.mrf.mxu0
        %v1580 = vadd.f32 0.0, %v1579
        %v1581 = vpop.f32.mrf.mxu0
        %v1582 = vadd.f32 0.0, %v1581
        %1583 = vmatprep.mubr.f32.mxu0 0.0
        %1584 = vmatmul.mubr.f32.gmra.mxu0 %v1403
        %v1585 = vpop.f32.mrf.mxu0
        %v1586 = vadd.f32 0.0, %v1585
        %v1587 = vpop.f32.mrf.mxu0
        %v1588 = vadd.f32 0.0, %v1587
        %1589 = vmatprep.mubr.f32.mxu0 0.0
        %1590 = vmatmul.mubr.f32.gmra.mxu0 %v1405
        %v1591 = vpop.f32.mrf.mxu0
        %v1592 = vadd.f32 0.0, %v1591
        %v1593 = vpop.f32.mrf.mxu0
        %v1594 = vadd.f32 0.0, %v1593
        %1595 = vmatprep.mubr.f32.mxu0 0.0
        %1596 = vmatmul.mubr.f32.gmra.mxu0 %v1407
        %v1597 = vpop.f32.mrf.mxu0
        %v1598 = vadd.f32 0.0, %v1597
        %v1599 = vpop.f32.mrf.mxu0
        %v1600 = vadd.f32 0.0, %v1599
        %1601 = vmatprep.mubr.f32.mxu0 0.0
        %1602 = vmatmul.mubr.f32.gmra.mxu0 %v1409
        %v1603 = vpop.f32.mrf.mxu0
        %v1604 = vadd.f32 0.0, %v1603
        %v1605 = vpop.f32.mrf.mxu0
        %v1606 = vadd.f32 0.0, %v1605
        %1607 = vmatprep.mubr.f32.mxu0 0.0
        %1608 = vmatmul.mubr.f32.gmra.mxu0 %v1411
        %v1609 = vpop.f32.mrf.mxu0
        %v1610 = vadd.f32 0.0, %v1609
        %v1611 = vpop.f32.mrf.mxu0
        %v1612 = vadd.f32 0.0, %v1611
        %1613 = vmatprep.mubr.f32.mxu0 0.0
        %1614 = vmatmul.mubr.f32.gmra.mxu0 %v1413
        %v1615 = vpop.f32.mrf.mxu0
        %v1616 = vadd.f32 0.0, %v1615
        %v1617 = vpop.f32.mrf.mxu0
        %v1618 = vadd.f32 0.0, %v1617
        %1619 = vmatprep.mubr.f32.mxu0 0.0
        %1620 = vmatmul.mubr.f32.gmra.mxu0 %v1415
        %v1621 = vpop.f32.mrf.mxu0
        %v1622 = vadd.f32 0.0, %v1621
        %v1623 = vpop.f32.mrf.mxu0
        %v1624 = vadd.f32 0.0, %v1623
        %1625 = vmatprep.mubr.f32.mxu0 0.0
        %1626 = vmatmul.mubr.f32.gmra.mxu0 %v1417
        %v1627 = vpop.f32.mrf.mxu0
        %v1628 = vadd.f32 0.0, %v1627
        %v1629 = vpop.f32.mrf.mxu0
        %v1630 = vadd.f32 0.0, %v1629
        %1631 = vmatprep.mubr.f32.mxu0 0.0
        %1632 = vmatmul.mubr.f32.gmra.mxu0 %v1419
        %v1633 = vpop.f32.mrf.mxu0
        %v1634 = vadd.f32 0.0, %v1633
        %v1635 = vpop.f32.mrf.mxu0
        %v1636 = vadd.f32 0.0, %v1635
        %1637 = vmatprep.mubr.f32.mxu0 0.0
        %1638 = vmatmul.mubr.f32.gmra.mxu0 %v1421
        %v1639 = vpop.f32.mrf.mxu0
        %v1640 = vadd.f32 0.0, %v1639
        %v1641 = vpop.f32.mrf.mxu0
        %v1642 = vadd.f32 0.0, %v1641
        %1643 = vmatprep.mubr.f32.mxu0 0.0
        %1644 = vmatmul.mubr.f32.gmra.mxu0 %v1423
        %v1645 = vpop.f32.mrf.mxu0
        %v1646 = vadd.f32 0.0, %v1645
        %v1647 = vpop.f32.mrf.mxu0
        %v1648 = vadd.f32 0.0, %v1647
        %1649 = vmatprep.mubr.f32.mxu0 0.0
        %1650 = vmatmul.mubr.f32.gmra.mxu0 %v1425
        %v1651 = vpop.f32.mrf.mxu0
        %v1652 = vadd.f32 0.0, %v1651
        %v1653 = vpop.f32.mrf.mxu0
        %v1654 = vadd.f32 0.0, %v1653
        %1655 = vmatprep.mubr.f32.mxu0 0.0
        %1656 = vmatmul.mubr.f32.gmra.mxu0 %v1427
        %v1657 = vpop.f32.mrf.mxu0
        %v1658 = vadd.f32 0.0, %v1657
        %v1659 = vpop.f32.mrf.mxu0
        %v1660 = vadd.f32 0.0, %v1659
        %1661 = vmatprep.mubr.f32.mxu0 0.0
        %1662 = vmatmul.mubr.f32.gmra.mxu0 %v1429
        %v1663 = vpop.f32.mrf.mxu0
        %v1664 = vadd.f32 0.0, %v1663
        %v1665 = vpop.f32.mrf.mxu0
        %v1666 = vadd.f32 0.0, %v1665
        %1667 = vmatprep.mubr.f32.mxu0 0.0
        %1668 = vmatmul.mubr.f32.gmra.mxu0 %v1431
        %v1669 = vpop.f32.mrf.mxu0
        %v1670 = vadd.f32 0.0, %v1669
        %v1671 = vpop.f32.mrf.mxu0
        %v1672 = vadd.f32 0.0, %v1671
        %1673 = vmatprep.mubr.f32.mxu0 0.0
        %1674 = vmatmul.mubr.f32.gmra.mxu0 %v1433
        %v1675 = vpop.f32.mrf.mxu0
        %v1676 = vadd.f32 0.0, %v1675
        %v1677 = vpop.f32.mrf.mxu0
        %v1678 = vadd.f32 0.0, %v1677
        %1679 = vmatprep.mubr.f32.mxu0 0.0
        %1680 = vmatmul.mubr.f32.gmra.mxu0 %v1435
        %v1681 = vpop.f32.mrf.mxu0
        %v1682 = vadd.f32 0.0, %v1681
        %v1683 = vpop.f32.mrf.mxu0
        %v1684 = vadd.f32 0.0, %v1683
        %1685 = vmatprep.mubr.f32.mxu0 0.0
        %1686 = vmatmul.mubr.f32.gmra.mxu0 %v1437
        %v1687 = vpop.f32.mrf.mxu0
        %v1688 = vadd.f32 0.0, %v1687
        %v1689 = vpop.f32.mrf.mxu0
        %v1690 = vadd.f32 0.0, %v1689
        %1691 = vmatprep.mubr.f32.mxu0 0.0
        %1692 = vmatmul.mubr.f32.gmra.mxu0 %v1439
        %v1693 = vpop.f32.mrf.mxu0
        %v1694 = vadd.f32 0.0, %v1693
        %v1695 = vpop.f32.mrf.mxu0
        %v1696 = vadd.f32 0.0, %v1695
        %1697 = vdwg.mxu0
        %v1698 = vadd.f32 %v1098, %v1508
        %v1699 = vadd.f32 %v1100, %v1510
        %v1700 = vadd.f32 %v1104, %v1514
        %v1701 = vadd.f32 %v1106, %v1516
        %v1702 = vadd.f32 %v1110, %v1520
        %v1703 = vadd.f32 %v1112, %v1522
        %v1704 = vadd.f32 %v1116, %v1526
        %v1705 = vadd.f32 %v1118, %v1528
        %v1706 = vadd.f32 %v1122, %v1532
        %v1707 = vadd.f32 %v1124, %v1534
        %v1708 = vadd.f32 %v1128, %v1538
        %v1709 = vadd.f32 %v1130, %v1540
        %v1710 = vadd.f32 %v1134, %v1544
        %v1711 = vadd.f32 %v1136, %v1546
        %v1712 = vadd.f32 %v1140, %v1550
        %v1713 = vadd.f32 %v1142, %v1552
        %v1714 = vadd.f32 %v1146, %v1556
        %v1715 = vadd.f32 %v1148, %v1558
        %v1716 = vadd.f32 %v1152, %v1562
        %v1717 = vadd.f32 %v1154, %v1564
        %v1718 = vadd.f32 %v1158, %v1568
        %v1719 = vadd.f32 %v1160, %v1570
        %v1720 = vadd.f32 %v1164, %v1574
        %v1721 = vadd.f32 %v1166, %v1576
        %v1722 = vadd.f32 %v1170, %v1580
        %v1723 = vadd.f32 %v1172, %v1582
        %v1724 = vadd.f32 %v1176, %v1586
        %v1725 = vadd.f32 %v1178, %v1588
        %v1726 = vadd.f32 %v1182, %v1592
        %v1727 = vadd.f32 %v1184, %v1594
        %v1728 = vadd.f32 %v1188, %v1598
        %v1729 = vadd.f32 %v1190, %v1600
        %v1730 = vadd.f32 %v1194, %v1604
        %v1731 = vadd.f32 %v1196, %v1606
        %v1732 = vadd.f32 %v1200, %v1610
        %v1733 = vadd.f32 %v1202, %v1612
        %v1734 = vadd.f32 %v1206, %v1616
        %v1735 = vadd.f32 %v1208, %v1618
        %v1736 = vadd.f32 %v1212, %v1622
        %v1737 = vadd.f32 %v1214, %v1624
        %v1738 = vadd.f32 %v1218, %v1628
        %v1739 = vadd.f32 %v1220, %v1630
        %v1740 = vadd.f32 %v1224, %v1634
        %v1741 = vadd.f32 %v1226, %v1636
        %v1742 = vadd.f32 %v1230, %v1640
        %v1743 = vadd.f32 %v1232, %v1642
        %v1744 = vadd.f32 %v1236, %v1646
        %v1745 = vadd.f32 %v1238, %v1648
        %v1746 = vadd.f32 %v1242, %v1652
        %v1747 = vadd.f32 %v1244, %v1654
        %v1748 = vadd.f32 %v1248, %v1658
        %v1749 = vadd.f32 %v1250, %v1660
        %v1750 = vadd.f32 %v1254, %v1664
        %v1751 = vadd.f32 %v1256, %v1666
        %v1752 = vadd.f32 %v1260, %v1670
        %v1753 = vadd.f32 %v1262, %v1672
        %v1754 = vadd.f32 %v1266, %v1676
        %v1755 = vadd.f32 %v1268, %v1678
        %v1756 = vadd.f32 %v1272, %v1682
        %v1757 = vadd.f32 %v1274, %v1684
        %v1758 = vadd.f32 %v1278, %v1688
        %v1759 = vadd.f32 %v1280, %v1690
        %v1760 = vadd.f32 %v1284, %v1694
        %v1761 = vadd.f32 %v1286, %v1696
        %s1762 = scalar_lea.vmem %s1, 576
        %v1763 = vld [vmem:[%s1762] sm:$0xff]
        %v1764 = vld [vmem:[%s1762 + $0x8] sm:$0xff]
        %v1765 = vld [vmem:[%s1762 + $0x10] sm:$0xff]
        %v1766 = vld [vmem:[%s1762 + $0x18] sm:$0xff]
        %v1767 = vld [vmem:[%s1762 + $0x20] sm:$0xff]
        %v1768 = vld [vmem:[%s1762 + $0x28] sm:$0xff]
        %v1769 = vld [vmem:[%s1762 + $0x30] sm:$0xff]
        %v1770 = vld [vmem:[%s1762 + $0x38] sm:$0xff]
        %v1771 = vld [vmem:[%s1762 + $0x40] sm:$0xff]
        %v1772 = vld [vmem:[%s1762 + $0x48] sm:$0xff]
        %v1773 = vld [vmem:[%s1762 + $0x50] sm:$0xff]
        %v1774 = vld [vmem:[%s1762 + $0x58] sm:$0xff]
        %v1775 = vld [vmem:[%s1762 + $0x60] sm:$0xff]
        %v1776 = vld [vmem:[%s1762 + $0x68] sm:$0xff]
        %v1777 = vld [vmem:[%s1762 + $0x70] sm:$0xff]
        %v1778 = vld [vmem:[%s1762 + $0x78] sm:$0xff]
        %v1779 = vld [vmem:[%s1762 + $0x80] sm:$0xff]
        %v1780 = vld [vmem:[%s1762 + $0x88] sm:$0xff]
        %v1781 = vld [vmem:[%s1762 + $0x90] sm:$0xff]
        %v1782 = vld [vmem:[%s1762 + $0x98] sm:$0xff]
        %v1783 = vld [vmem:[%s1762 + $0xa0] sm:$0xff]
        %v1784 = vld [vmem:[%s1762 + $0xa8] sm:$0xff]
        %v1785 = vld [vmem:[%s1762 + $0xb0] sm:$0xff]
        %v1786 = vld [vmem:[%s1762 + $0xb8] sm:$0xff]
        %vm1787 = vcmask 1044480
        %v1788 = vrot.slane %v468, 3
        %v1789 = vrot.slane %v469, 3
        %v1790 = vsel %vm1787, %v1788, %v1789
        %v1791 = vrot.slane %v470, 3
        %v1792 = vsel %vm1787, %v1789, %v1791
        %v1793 = vrot.slane %v471, 3
        %v1794 = vsel %vm1787, %v1791, %v1793
        %v1795 = vrot.slane %v472, 3
        %v1796 = vsel %vm1787, %v1793, %v1795
        %v1797 = vrot.slane %v473, 3
        %v1798 = vsel %vm1787, %v1795, %v1797
        %v1799 = vrot.slane %v474, 3
        %v1800 = vsel %vm1787, %v1797, %v1799
        %v1801 = vrot.slane %v475, 3
        %v1802 = vsel %vm1787, %v1799, %v1801
        %v1803 = vrot.slane %v476, 3
        %v1804 = vsel %vm1787, %v1801, %v1803
        %v1805 = vrot.slane %v477, 3
        %v1806 = vsel %vm1787, %v1803, %v1805
        %v1807 = vrot.slane %v478, 3
        %v1808 = vsel %vm1787, %v1805, %v1807
        %v1809 = vrot.slane %v479, 3
        %v1810 = vsel %vm1787, %v1807, %v1809
        %v1811 = vrot.slane %v480, 3
        %v1812 = vsel %vm1787, %v1809, %v1811
        %v1813 = vrot.slane %v481, 3
        %v1814 = vsel %vm1787, %v1811, %v1813
        %v1815 = vrot.slane %v482, 3
        %v1816 = vsel %vm1787, %v1813, %v1815
        %v1817 = vrot.slane %v483, 3
        %v1818 = vsel %vm1787, %v1815, %v1817
        %v1819 = vrot.slane %v484, 3
        %v1820 = vsel %vm1787, %v1817, %v1819
        %v1821 = vrot.slane %v485, 3
        %v1822 = vsel %vm1787, %v1819, %v1821
        %v1823 = vrot.slane %v486, 3
        %v1824 = vsel %vm1787, %v1821, %v1823
        %v1825 = vrot.slane %v487, 3
        %v1826 = vsel %vm1787, %v1823, %v1825
        %v1827 = vrot.slane %v488, 3
        %v1828 = vsel %vm1787, %v1825, %v1827
        %v1829 = vrot.slane %v489, 3
        %v1830 = vsel %vm1787, %v1827, %v1829
        %v1831 = vrot.slane %v490, 3
        %v1832 = vsel %vm1787, %v1829, %v1831
        %v1833 = vrot.slane %v491, 3
        %v1834 = vsel %vm1787, %v1831, %v1833
        %v1835 = vrot.slane %v492, 3
        %v1836 = vsel %vm1787, %v1833, %v1835
        %v1837 = vrot.slane %v493, 3
        %v1838 = vsel %vm1787, %v1835, %v1837
        %v1839 = vrot.slane %v494, 3
        %v1840 = vsel %vm1787, %v1837, %v1839
        %v1841 = vrot.slane %v495, 3
        %v1842 = vsel %vm1787, %v1839, %v1841
        %v1843 = vrot.slane %v496, 3
        %v1844 = vsel %vm1787, %v1841, %v1843
        %v1845 = vrot.slane %v497, 3
        %v1846 = vsel %vm1787, %v1843, %v1845
        %v1847 = vrot.slane %v498, 3
        %v1848 = vsel %vm1787, %v1845, %v1847
        %v1849 = vrot.slane %v499, 3
        %v1850 = vsel %vm1787, %v1847, %v1849
        %v1851 = vsel %vm645, %v1790, 0
        %v1853 = vsel %vm645, %v1792, 0
        %v1855 = vsel %vm645, %v1794, 0
        %v1857 = vsel %vm645, %v1796, 0
        %v1859 = vsel %vm645, %v1798, 0
        %v1861 = vsel %vm645, %v1800, 0
        %v1863 = vsel %vm645, %v1802, 0
        %v1865 = vsel %vm645, %v1804, 0
        %v1867 = vsel %vm645, %v1806, 0
        %v1869 = vsel %vm645, %v1808, 0
        %v1871 = vsel %vm645, %v1810, 0
        %v1873 = vsel %vm645, %v1812, 0
        %v1875 = vsel %vm645, %v1814, 0
        %v1877 = vsel %vm645, %v1816, 0
        %v1879 = vsel %vm645, %v1818, 0
        %v1881 = vsel %vm645, %v1820, 0
        %v1883 = vsel %vm645, %v1822, 0
        %v1885 = vsel %vm645, %v1824, 0
        %v1887 = vsel %vm645, %v1826, 0
        %v1889 = vsel %vm645, %v1828, 0
        %v1891 = vsel %vm645, %v1830, 0
        %v1893 = vsel %vm645, %v1832, 0
        %v1895 = vsel %vm645, %v1834, 0
        %v1897 = vsel %vm645, %v1836, 0
        %v1899 = vsel %vm645, %v1838, 0
        %v1901 = vsel %vm645, %v1840, 0
        %v1903 = vsel %vm645, %v1842, 0
        %v1905 = vsel %vm645, %v1844, 0
        %v1907 = vsel %vm645, %v1846, 0
        %v1909 = vsel %vm645, %v1848, 0
        %v1911 = vsel %vm645, %v1850, 0
        %v1913 = vsel %vm645, %v1849, 0
        %1915 = vmatprep.subr.mxu0 0.0
        %1916 = vmatpush1.msra.mxu0 0.0
        %1917 = vmatprep.subr.mxu0 0.0
        %1918 = vmatpush1.msra.mxu0 0.0
        %1919 = vmatprep.subr.mxu0 0.0
        %1920 = vmatpush1.msra.mxu0 0.0
        %1921 = vmatprep.subr.mxu0 0.0
        %1922 = vmatpush1.msra.mxu0 0.0
        %1923 = vmatprep.subr.mxu0 %v1786
        %1924 = vmatpush1.msra.mxu0 %v1785
        %1925 = vmatprep.subr.mxu0 %v1784
        %1926 = vmatpush1.msra.mxu0 %v1783
        %1927 = vmatprep.subr.mxu0 %v1782
        %1928 = vmatpush1.msra.mxu0 %v1781
        %1929 = vmatprep.subr.mxu0 %v1780
        %1930 = vmatpush1.msra.mxu0 %v1779
        %1931 = vmatprep.subr.mxu0 %v1778
        %1932 = vmatpush1.msra.mxu0 %v1777
        %1933 = vmatprep.subr.mxu0 %v1776
        %1934 = vmatpush1.msra.mxu0 %v1775
        %1935 = vmatprep.subr.mxu0 %v1774
        %1936 = vmatpush1.msra.mxu0 %v1773
        %1937 = vmatprep.subr.mxu0 %v1772
        %1938 = vmatpush1.msra.mxu0 %v1771
        %1939 = vmatprep.subr.mxu0 %v1770
        %1940 = vmatpush1.msra.mxu0 %v1769
        %1941 = vmatprep.subr.mxu0 %v1768
        %1942 = vmatpush1.msra.mxu0 %v1767
        %1943 = vmatprep.subr.mxu0 %v1766
        %1944 = vmatpush1.msra.mxu0 %v1765
        %1945 = vmatprep.subr.mxu0 %v1764
        %1946 = vmatpush1.msra.mxu0 %v1763
        %1947 = vmatprep.subr.mxu0 0.0
        %1948 = vmatpush2.msra.mxu0 0.0
        %1949 = vmatprep.subr.mxu0 0.0
        %1950 = vmatpush2.msra.mxu0 0.0
        %1951 = vmatprep.subr.mxu0 0.0
        %1952 = vmatpush2.msra.mxu0 0.0
        %1953 = vmatprep.subr.mxu0 0.0
        %1954 = vmatpush2.msra.mxu0 0.0
        %1955 = vmatprep.subr.mxu0 0.0
        %1956 = vmatpush2.msra.mxu0 0.0
        %1957 = vmatprep.subr.mxu0 0.0
        %1958 = vmatpush2.msra.mxu0 0.0
        %1959 = vmatprep.subr.mxu0 0.0
        %1960 = vmatpush2.msra.mxu0 0.0
        %1961 = vmatprep.subr.mxu0 0.0
        %1962 = vmatpush2.msra.mxu0 0.0
        %1963 = vmatprep.subr.mxu0 0.0
        %1964 = vmatpush2.msra.mxu0 0.0
        %1965 = vmatprep.subr.mxu0 0.0
        %1966 = vmatpush2.msra.mxu0 0.0
        %1967 = vmatprep.subr.mxu0 0.0
        %1968 = vmatpush2.msra.mxu0 0.0
        %1969 = vmatprep.subr.mxu0 0.0
        %1970 = vmatpush2.msra.mxu0 0.0
        %1971 = vmatprep.subr.mxu0 0.0
        %1972 = vmatpush2.msra.mxu0 0.0
        %1973 = vmatprep.subr.mxu0 0.0
        %1974 = vmatpush2.msra.mxu0 0.0
        %1975 = vmatprep.subr.mxu0 0.0
        %1976 = vmatpush2.msra.mxu0 0.0
        %1977 = vmatprep.subr.mxu0 0.0
        %1978 = vmatpush2.msra.mxu0 0.0
        %1979 = vmatprep.mubr.f32.mxu0 0.0
        %1980 = vmatmul.mubr.f32.gmra.mxu0 %v1851
        %v1981 = vpop.f32.mrf.mxu0
        %v1982 = vadd.f32 0.0, %v1981
        %v1983 = vpop.f32.mrf.mxu0
        %v1984 = vadd.f32 0.0, %v1983
        %1985 = vmatprep.mubr.f32.mxu0 0.0
        %1986 = vmatmul.mubr.f32.gmra.mxu0 %v1853
        %v1987 = vpop.f32.mrf.mxu0
        %v1988 = vadd.f32 0.0, %v1987
        %v1989 = vpop.f32.mrf.mxu0
        %v1990 = vadd.f32 0.0, %v1989
        %1991 = vmatprep.mubr.f32.mxu0 0.0
        %1992 = vmatmul.mubr.f32.gmra.mxu0 %v1855
        %v1993 = vpop.f32.mrf.mxu0
        %v1994 = vadd.f32 0.0, %v1993
        %v1995 = vpop.f32.mrf.mxu0
        %v1996 = vadd.f32 0.0, %v1995
        %1997 = vmatprep.mubr.f32.mxu0 0.0
        %1998 = vmatmul.mubr.f32.gmra.mxu0 %v1857
        %v1999 = vpop.f32.mrf.mxu0
        %v2000 = vadd.f32 0.0, %v1999
        %v2001 = vpop.f32.mrf.mxu0
        %v2002 = vadd.f32 0.0, %v2001
        %2003 = vmatprep.mubr.f32.mxu0 0.0
        %2004 = vmatmul.mubr.f32.gmra.mxu0 %v1859
        %v2005 = vpop.f32.mrf.mxu0
        %v2006 = vadd.f32 0.0, %v2005
        %v2007 = vpop.f32.mrf.mxu0
        %v2008 = vadd.f32 0.0, %v2007
        %2009 = vmatprep.mubr.f32.mxu0 0.0
        %2010 = vmatmul.mubr.f32.gmra.mxu0 %v1861
        %v2011 = vpop.f32.mrf.mxu0
        %v2012 = vadd.f32 0.0, %v2011
        %v2013 = vpop.f32.mrf.mxu0
        %v2014 = vadd.f32 0.0, %v2013
        %2015 = vmatprep.mubr.f32.mxu0 0.0
        %2016 = vmatmul.mubr.f32.gmra.mxu0 %v1863
        %v2017 = vpop.f32.mrf.mxu0
        %v2018 = vadd.f32 0.0, %v2017
        %v2019 = vpop.f32.mrf.mxu0
        %v2020 = vadd.f32 0.0, %v2019
        %2021 = vmatprep.mubr.f32.mxu0 0.0
        %2022 = vmatmul.mubr.f32.gmra.mxu0 %v1865
        %v2023 = vpop.f32.mrf.mxu0
        %v2024 = vadd.f32 0.0, %v2023
        %v2025 = vpop.f32.mrf.mxu0
        %v2026 = vadd.f32 0.0, %v2025
        %2027 = vmatprep.mubr.f32.mxu0 0.0
        %2028 = vmatmul.mubr.f32.gmra.mxu0 %v1867
        %v2029 = vpop.f32.mrf.mxu0
        %v2030 = vadd.f32 0.0, %v2029
        %v2031 = vpop.f32.mrf.mxu0
        %v2032 = vadd.f32 0.0, %v2031
        %2033 = vmatprep.mubr.f32.mxu0 0.0
        %2034 = vmatmul.mubr.f32.gmra.mxu0 %v1869
        %v2035 = vpop.f32.mrf.mxu0
        %v2036 = vadd.f32 0.0, %v2035
        %v2037 = vpop.f32.mrf.mxu0
        %v2038 = vadd.f32 0.0, %v2037
        %2039 = vmatprep.mubr.f32.mxu0 0.0
        %2040 = vmatmul.mubr.f32.gmra.mxu0 %v1871
        %v2041 = vpop.f32.mrf.mxu0
        %v2042 = vadd.f32 0.0, %v2041
        %v2043 = vpop.f32.mrf.mxu0
        %v2044 = vadd.f32 0.0, %v2043
        %2045 = vmatprep.mubr.f32.mxu0 0.0
        %2046 = vmatmul.mubr.f32.gmra.mxu0 %v1873
        %v2047 = vpop.f32.mrf.mxu0
        %v2048 = vadd.f32 0.0, %v2047
        %v2049 = vpop.f32.mrf.mxu0
        %v2050 = vadd.f32 0.0, %v2049
        %2051 = vmatprep.mubr.f32.mxu0 0.0
        %2052 = vmatmul.mubr.f32.gmra.mxu0 %v1875
        %v2053 = vpop.f32.mrf.mxu0
        %v2054 = vadd.f32 0.0, %v2053
        %v2055 = vpop.f32.mrf.mxu0
        %v2056 = vadd.f32 0.0, %v2055
        %2057 = vmatprep.mubr.f32.mxu0 0.0
        %2058 = vmatmul.mubr.f32.gmra.mxu0 %v1877
        %v2059 = vpop.f32.mrf.mxu0
        %v2060 = vadd.f32 0.0, %v2059
        %v2061 = vpop.f32.mrf.mxu0
        %v2062 = vadd.f32 0.0, %v2061
        %2063 = vmatprep.mubr.f32.mxu0 0.0
        %2064 = vmatmul.mubr.f32.gmra.mxu0 %v1879
        %v2065 = vpop.f32.mrf.mxu0
        %v2066 = vadd.f32 0.0, %v2065
        %v2067 = vpop.f32.mrf.mxu0
        %v2068 = vadd.f32 0.0, %v2067
        %2069 = vmatprep.mubr.f32.mxu0 0.0
        %2070 = vmatmul.mubr.f32.gmra.mxu0 %v1881
        %v2071 = vpop.f32.mrf.mxu0
        %v2072 = vadd.f32 0.0, %v2071
        %v2073 = vpop.f32.mrf.mxu0
        %v2074 = vadd.f32 0.0, %v2073
        %2075 = vmatprep.mubr.f32.mxu0 0.0
        %2076 = vmatmul.mubr.f32.gmra.mxu0 %v1883
        %v2077 = vpop.f32.mrf.mxu0
        %v2078 = vadd.f32 0.0, %v2077
        %v2079 = vpop.f32.mrf.mxu0
        %v2080 = vadd.f32 0.0, %v2079
        %2081 = vmatprep.mubr.f32.mxu0 0.0
        %2082 = vmatmul.mubr.f32.gmra.mxu0 %v1885
        %v2083 = vpop.f32.mrf.mxu0
        %v2084 = vadd.f32 0.0, %v2083
        %v2085 = vpop.f32.mrf.mxu0
        %v2086 = vadd.f32 0.0, %v2085
        %2087 = vmatprep.mubr.f32.mxu0 0.0
        %2088 = vmatmul.mubr.f32.gmra.mxu0 %v1887
        %v2089 = vpop.f32.mrf.mxu0
        %v2090 = vadd.f32 0.0, %v2089
        %v2091 = vpop.f32.mrf.mxu0
        %v2092 = vadd.f32 0.0, %v2091
        %2093 = vmatprep.mubr.f32.mxu0 0.0
        %2094 = vmatmul.mubr.f32.gmra.mxu0 %v1889
        %v2095 = vpop.f32.mrf.mxu0
        %v2096 = vadd.f32 0.0, %v2095
        %v2097 = vpop.f32.mrf.mxu0
        %v2098 = vadd.f32 0.0, %v2097
        %2099 = vmatprep.mubr.f32.mxu0 0.0
        %2100 = vmatmul.mubr.f32.gmra.mxu0 %v1891
        %v2101 = vpop.f32.mrf.mxu0
        %v2102 = vadd.f32 0.0, %v2101
        %v2103 = vpop.f32.mrf.mxu0
        %v2104 = vadd.f32 0.0, %v2103
        %2105 = vmatprep.mubr.f32.mxu0 0.0
        %2106 = vmatmul.mubr.f32.gmra.mxu0 %v1893
        %v2107 = vpop.f32.mrf.mxu0
        %v2108 = vadd.f32 0.0, %v2107
        %v2109 = vpop.f32.mrf.mxu0
        %v2110 = vadd.f32 0.0, %v2109
        %2111 = vmatprep.mubr.f32.mxu0 0.0
        %2112 = vmatmul.mubr.f32.gmra.mxu0 %v1895
        %v2113 = vpop.f32.mrf.mxu0
        %v2114 = vadd.f32 0.0, %v2113
        %v2115 = vpop.f32.mrf.mxu0
        %v2116 = vadd.f32 0.0, %v2115
        %2117 = vmatprep.mubr.f32.mxu0 0.0
        %2118 = vmatmul.mubr.f32.gmra.mxu0 %v1897
        %v2119 = vpop.f32.mrf.mxu0
        %v2120 = vadd.f32 0.0, %v2119
        %v2121 = vpop.f32.mrf.mxu0
        %v2122 = vadd.f32 0.0, %v2121
        %2123 = vmatprep.mubr.f32.mxu0 0.0
        %2124 = vmatmul.mubr.f32.gmra.mxu0 %v1899
        %v2125 = vpop.f32.mrf.mxu0
        %v2126 = vadd.f32 0.0, %v2125
        %v2127 = vpop.f32.mrf.mxu0
        %v2128 = vadd.f32 0.0, %v2127
        %2129 = vmatprep.mubr.f32.mxu0 0.0
        %2130 = vmatmul.mubr.f32.gmra.mxu0 %v1901
        %v2131 = vpop.f32.mrf.mxu0
        %v2132 = vadd.f32 0.0, %v2131
        %v2133 = vpop.f32.mrf.mxu0
        %v2134 = vadd.f32 0.0, %v2133
        %2135 = vmatprep.mubr.f32.mxu0 0.0
        %2136 = vmatmul.mubr.f32.gmra.mxu0 %v1903
        %v2137 = vpop.f32.mrf.mxu0
        %v2138 = vadd.f32 0.0, %v2137
        %v2139 = vpop.f32.mrf.mxu0
        %v2140 = vadd.f32 0.0, %v2139
        %2141 = vmatprep.mubr.f32.mxu0 0.0
        %2142 = vmatmul.mubr.f32.gmra.mxu0 %v1905
        %v2143 = vpop.f32.mrf.mxu0
        %v2144 = vadd.f32 0.0, %v2143
        %v2145 = vpop.f32.mrf.mxu0
        %v2146 = vadd.f32 0.0, %v2145
        %2147 = vmatprep.mubr.f32.mxu0 0.0
        %2148 = vmatmul.mubr.f32.gmra.mxu0 %v1907
        %v2149 = vpop.f32.mrf.mxu0
        %v2150 = vadd.f32 0.0, %v2149
        %v2151 = vpop.f32.mrf.mxu0
        %v2152 = vadd.f32 0.0, %v2151
        %2153 = vmatprep.mubr.f32.mxu0 0.0
        %2154 = vmatmul.mubr.f32.gmra.mxu0 %v1909
        %v2155 = vpop.f32.mrf.mxu0
        %v2156 = vadd.f32 0.0, %v2155
        %v2157 = vpop.f32.mrf.mxu0
        %v2158 = vadd.f32 0.0, %v2157
        %2159 = vmatprep.mubr.f32.mxu0 0.0
        %2160 = vmatmul.mubr.f32.gmra.mxu0 %v1911
        %v2161 = vpop.f32.mrf.mxu0
        %v2162 = vadd.f32 0.0, %v2161
        %v2163 = vpop.f32.mrf.mxu0
        %v2164 = vadd.f32 0.0, %v2163
        %2165 = vmatprep.mubr.f32.mxu0 0.0
        %2166 = vmatmul.mubr.f32.gmra.mxu0 %v1913
        %v2167 = vpop.f32.mrf.mxu0
        %v2168 = vadd.f32 0.0, %v2167
        %v2169 = vpop.f32.mrf.mxu0
        %v2170 = vadd.f32 0.0, %v2169
        %2171 = vdwg.mxu0
        %v2172 = vadd.f32 %v1698, %v1982
        %v2173 = vadd.f32 %v1699, %v1984
        %v2174 = vadd.f32 %v1700, %v1988
        %v2175 = vadd.f32 %v1701, %v1990
        %v2176 = vadd.f32 %v1702, %v1994
        %v2177 = vadd.f32 %v1703, %v1996
        %v2178 = vadd.f32 %v1704, %v2000
        %v2179 = vadd.f32 %v1705, %v2002
        %v2180 = vadd.f32 %v1706, %v2006
        %v2181 = vadd.f32 %v1707, %v2008
        %v2182 = vadd.f32 %v1708, %v2012
        %v2183 = vadd.f32 %v1709, %v2014
        %v2184 = vadd.f32 %v1710, %v2018
        %v2185 = vadd.f32 %v1711, %v2020
        %v2186 = vadd.f32 %v1712, %v2024
        %v2187 = vadd.f32 %v1713, %v2026
        %v2188 = vadd.f32 %v1714, %v2030
        %v2189 = vadd.f32 %v1715, %v2032
        %v2190 = vadd.f32 %v1716, %v2036
        %v2191 = vadd.f32 %v1717, %v2038
        %v2192 = vadd.f32 %v1718, %v2042
        %v2193 = vadd.f32 %v1719, %v2044
        %v2194 = vadd.f32 %v1720, %v2048
        %v2195 = vadd.f32 %v1721, %v2050
        %v2196 = vadd.f32 %v1722, %v2054
        %v2197 = vadd.f32 %v1723, %v2056
        %v2198 = vadd.f32 %v1724, %v2060
        %v2199 = vadd.f32 %v1725, %v2062
        %v2200 = vadd.f32 %v1726, %v2066
        %v2201 = vadd.f32 %v1727, %v2068
        %v2202 = vadd.f32 %v1728, %v2072
        %v2203 = vadd.f32 %v1729, %v2074
        %v2204 = vadd.f32 %v1730, %v2078
        %v2205 = vadd.f32 %v1731, %v2080
        %v2206 = vadd.f32 %v1732, %v2084
        %v2207 = vadd.f32 %v1733, %v2086
        %v2208 = vadd.f32 %v1734, %v2090
        %v2209 = vadd.f32 %v1735, %v2092
        %v2210 = vadd.f32 %v1736, %v2096
        %v2211 = vadd.f32 %v1737, %v2098
        %v2212 = vadd.f32 %v1738, %v2102
        %v2213 = vadd.f32 %v1739, %v2104
        %v2214 = vadd.f32 %v1740, %v2108
        %v2215 = vadd.f32 %v1741, %v2110
        %v2216 = vadd.f32 %v1742, %v2114
        %v2217 = vadd.f32 %v1743, %v2116
        %v2218 = vadd.f32 %v1744, %v2120
        %v2219 = vadd.f32 %v1745, %v2122
        %v2220 = vadd.f32 %v1746, %v2126
        %v2221 = vadd.f32 %v1747, %v2128
        %v2222 = vadd.f32 %v1748, %v2132
        %v2223 = vadd.f32 %v1749, %v2134
        %v2224 = vadd.f32 %v1750, %v2138
        %v2225 = vadd.f32 %v1751, %v2140
        %v2226 = vadd.f32 %v1752, %v2144
        %v2227 = vadd.f32 %v1753, %v2146
        %v2228 = vadd.f32 %v1754, %v2150
        %v2229 = vadd.f32 %v1755, %v2152
        %v2230 = vadd.f32 %v1756, %v2156
        %v2231 = vadd.f32 %v1757, %v2158
        %v2232 = vadd.f32 %v1758, %v2162
        %v2233 = vadd.f32 %v1759, %v2164
        %v2234 = vadd.f32 %v1760, %v2168
        %v2235 = vadd.f32 %v1761, %v2170
        %s2236 = scalar_lea.vmem %s1, 768
        %v2237 = vld [vmem:[%s2236] sm:$0xff]
        %v2238 = vld [vmem:[%s2236 + $0x8] sm:$0xff]
        %v2239 = vld [vmem:[%s2236 + $0x10] sm:$0xff]
        %v2240 = vld [vmem:[%s2236 + $0x18] sm:$0xff]
        %v2241 = vld [vmem:[%s2236 + $0x20] sm:$0xff]
        %v2242 = vld [vmem:[%s2236 + $0x28] sm:$0xff]
        %v2243 = vld [vmem:[%s2236 + $0x30] sm:$0xff]
        %v2244 = vld [vmem:[%s2236 + $0x38] sm:$0xff]
        %v2245 = vld [vmem:[%s2236 + $0x40] sm:$0xff]
        %v2246 = vld [vmem:[%s2236 + $0x48] sm:$0xff]
        %v2247 = vld [vmem:[%s2236 + $0x50] sm:$0xff]
        %v2248 = vld [vmem:[%s2236 + $0x58] sm:$0xff]
        %v2249 = vld [vmem:[%s2236 + $0x60] sm:$0xff]
        %v2250 = vld [vmem:[%s2236 + $0x68] sm:$0xff]
        %v2251 = vld [vmem:[%s2236 + $0x70] sm:$0xff]
        %v2252 = vld [vmem:[%s2236 + $0x78] sm:$0xff]
        %v2253 = vld [vmem:[%s2236 + $0x80] sm:$0xff]
        %v2254 = vld [vmem:[%s2236 + $0x88] sm:$0xff]
        %v2255 = vld [vmem:[%s2236 + $0x90] sm:$0xff]
        %v2256 = vld [vmem:[%s2236 + $0x98] sm:$0xff]
        %v2257 = vld [vmem:[%s2236 + $0xa0] sm:$0xff]
        %v2258 = vld [vmem:[%s2236 + $0xa8] sm:$0xff]
        %v2259 = vld [vmem:[%s2236 + $0xb0] sm:$0xff]
        %v2260 = vld [vmem:[%s2236 + $0xb8] sm:$0xff]
        %vm2261 = vcmask 1043456
        %v2262 = vrot.slane %v468, 4
        %v2263 = vrot.slane %v469, 4
        %v2264 = vsel %vm2261, %v2262, %v2263
        %v2265 = vrot.slane %v470, 4
        %v2266 = vsel %vm2261, %v2263, %v2265
        %v2267 = vrot.slane %v471, 4
        %v2268 = vsel %vm2261, %v2265, %v2267
        %v2269 = vrot.slane %v472, 4
        %v2270 = vsel %vm2261, %v2267, %v2269
        %v2271 = vrot.slane %v473, 4
        %v2272 = vsel %vm2261, %v2269, %v2271
        %v2273 = vrot.slane %v474, 4
        %v2274 = vsel %vm2261, %v2271, %v2273
        %v2275 = vrot.slane %v475, 4
        %v2276 = vsel %vm2261, %v2273, %v2275
        %v2277 = vrot.slane %v476, 4
        %v2278 = vsel %vm2261, %v2275, %v2277
        %v2279 = vrot.slane %v477, 4
        %v2280 = vsel %vm2261, %v2277, %v2279
        %v2281 = vrot.slane %v478, 4
        %v2282 = vsel %vm2261, %v2279, %v2281
        %v2283 = vrot.slane %v479, 4
        %v2284 = vsel %vm2261, %v2281, %v2283
        %v2285 = vrot.slane %v480, 4
        %v2286 = vsel %vm2261, %v2283, %v2285
        %v2287 = vrot.slane %v481, 4
        %v2288 = vsel %vm2261, %v2285, %v2287
        %v2289 = vrot.slane %v482, 4
        %v2290 = vsel %vm2261, %v2287, %v2289
        %v2291 = vrot.slane %v483, 4
        %v2292 = vsel %vm2261, %v2289, %v2291
        %v2293 = vrot.slane %v484, 4
        %v2294 = vsel %vm2261, %v2291, %v2293
        %v2295 = vrot.slane %v485, 4
        %v2296 = vsel %vm2261, %v2293, %v2295
        %v2297 = vrot.slane %v486, 4
        %v2298 = vsel %vm2261, %v2295, %v2297
        %v2299 = vrot.slane %v487, 4
        %v2300 = vsel %vm2261, %v2297, %v2299
        %v2301 = vrot.slane %v488, 4
        %v2302 = vsel %vm2261, %v2299, %v2301
        %v2303 = vrot.slane %v489, 4
        %v2304 = vsel %vm2261, %v2301, %v2303
        %v2305 = vrot.slane %v490, 4
        %v2306 = vsel %vm2261, %v2303, %v2305
        %v2307 = vrot.slane %v491, 4
        %v2308 = vsel %vm2261, %v2305, %v2307
        %v2309 = vrot.slane %v492, 4
        %v2310 = vsel %vm2261, %v2307, %v2309
        %v2311 = vrot.slane %v493, 4
        %v2312 = vsel %vm2261, %v2309, %v2311
        %v2313 = vrot.slane %v494, 4
        %v2314 = vsel %vm2261, %v2311, %v2313
        %v2315 = vrot.slane %v495, 4
        %v2316 = vsel %vm2261, %v2313, %v2315
        %v2317 = vrot.slane %v496, 4
        %v2318 = vsel %vm2261, %v2315, %v2317
        %v2319 = vrot.slane %v497, 4
        %v2320 = vsel %vm2261, %v2317, %v2319
        %v2321 = vrot.slane %v498, 4
        %v2322 = vsel %vm2261, %v2319, %v2321
        %v2323 = vrot.slane %v499, 4
        %v2324 = vsel %vm2261, %v2321, %v2323
        %v2325 = vsel %vm645, %v2264, 0
        %v2327 = vsel %vm645, %v2266, 0
        %v2329 = vsel %vm645, %v2268, 0
        %v2331 = vsel %vm645, %v2270, 0
        %v2333 = vsel %vm645, %v2272, 0
        %v2335 = vsel %vm645, %v2274, 0
        %v2337 = vsel %vm645, %v2276, 0
        %v2339 = vsel %vm645, %v2278, 0
        %v2341 = vsel %vm645, %v2280, 0
        %v2343 = vsel %vm645, %v2282, 0
        %v2345 = vsel %vm645, %v2284, 0
        %v2347 = vsel %vm645, %v2286, 0
        %v2349 = vsel %vm645, %v2288, 0
        %v2351 = vsel %vm645, %v2290, 0
        %v2353 = vsel %vm645, %v2292, 0
        %v2355 = vsel %vm645, %v2294, 0
        %v2357 = vsel %vm645, %v2296, 0
        %v2359 = vsel %vm645, %v2298, 0
        %v2361 = vsel %vm645, %v2300, 0
        %v2363 = vsel %vm645, %v2302, 0
        %v2365 = vsel %vm645, %v2304, 0
        %v2367 = vsel %vm645, %v2306, 0
        %v2369 = vsel %vm645, %v2308, 0
        %v2371 = vsel %vm645, %v2310, 0
        %v2373 = vsel %vm645, %v2312, 0
        %v2375 = vsel %vm645, %v2314, 0
        %v2377 = vsel %vm645, %v2316, 0
        %v2379 = vsel %vm645, %v2318, 0
        %v2381 = vsel %vm645, %v2320, 0
        %v2383 = vsel %vm645, %v2322, 0
        %v2385 = vsel %vm645, %v2324, 0
        %v2387 = vsel %vm645, %v2323, 0
        %2389 = vmatprep.subr.mxu0 0.0
        %2390 = vmatpush1.msra.mxu0 0.0
        %2391 = vmatprep.subr.mxu0 0.0
        %2392 = vmatpush1.msra.mxu0 0.0
        %2393 = vmatprep.subr.mxu0 0.0
        %2394 = vmatpush1.msra.mxu0 0.0
        %2395 = vmatprep.subr.mxu0 0.0
        %2396 = vmatpush1.msra.mxu0 0.0
        %2397 = vmatprep.subr.mxu0 %v2260
        %2398 = vmatpush1.msra.mxu0 %v2259
        %2399 = vmatprep.subr.mxu0 %v2258
        %2400 = vmatpush1.msra.mxu0 %v2257
        %2401 = vmatprep.subr.mxu0 %v2256
        %2402 = vmatpush1.msra.mxu0 %v2255
        %2403 = vmatprep.subr.mxu0 %v2254
        %2404 = vmatpush1.msra.mxu0 %v2253
        %2405 = vmatprep.subr.mxu0 %v2252
        %2406 = vmatpush1.msra.mxu0 %v2251
        %2407 = vmatprep.subr.mxu0 %v2250
        %2408 = vmatpush1.msra.mxu0 %v2249
        %2409 = vmatprep.subr.mxu0 %v2248
        %2410 = vmatpush1.msra.mxu0 %v2247
        %2411 = vmatprep.subr.mxu0 %v2246
        %2412 = vmatpush1.msra.mxu0 %v2245
        %2413 = vmatprep.subr.mxu0 %v2244
        %2414 = vmatpush1.msra.mxu0 %v2243
        %2415 = vmatprep.subr.mxu0 %v2242
        %2416 = vmatpush1.msra.mxu0 %v2241
        %2417 = vmatprep.subr.mxu0 %v2240
        %2418 = vmatpush1.msra.mxu0 %v2239
        %2419 = vmatprep.subr.mxu0 %v2238
        %2420 = vmatpush1.msra.mxu0 %v2237
        %2421 = vmatprep.subr.mxu0 0.0
        %2422 = vmatpush2.msra.mxu0 0.0
        %2423 = vmatprep.subr.mxu0 0.0
        %2424 = vmatpush2.msra.mxu0 0.0
        %2425 = vmatprep.subr.mxu0 0.0
        %2426 = vmatpush2.msra.mxu0 0.0
        %2427 = vmatprep.subr.mxu0 0.0
        %2428 = vmatpush2.msra.mxu0 0.0
        %2429 = vmatprep.subr.mxu0 0.0
        %2430 = vmatpush2.msra.mxu0 0.0
        %2431 = vmatprep.subr.mxu0 0.0
        %2432 = vmatpush2.msra.mxu0 0.0
        %2433 = vmatprep.subr.mxu0 0.0
        %2434 = vmatpush2.msra.mxu0 0.0
        %2435 = vmatprep.subr.mxu0 0.0
        %2436 = vmatpush2.msra.mxu0 0.0
        %2437 = vmatprep.subr.mxu0 0.0
        %2438 = vmatpush2.msra.mxu0 0.0
        %2439 = vmatprep.subr.mxu0 0.0
        %2440 = vmatpush2.msra.mxu0 0.0
        %2441 = vmatprep.subr.mxu0 0.0
        %2442 = vmatpush2.msra.mxu0 0.0
        %2443 = vmatprep.subr.mxu0 0.0
        %2444 = vmatpush2.msra.mxu0 0.0
        %2445 = vmatprep.subr.mxu0 0.0
        %2446 = vmatpush2.msra.mxu0 0.0
        %2447 = vmatprep.subr.mxu0 0.0
        %2448 = vmatpush2.msra.mxu0 0.0
        %2449 = vmatprep.subr.mxu0 0.0
        %2450 = vmatpush2.msra.mxu0 0.0
        %2451 = vmatprep.subr.mxu0 0.0
        %2452 = vmatpush2.msra.mxu0 0.0
        %2453 = vmatprep.mubr.f32.mxu0 0.0
        %2454 = vmatmul.mubr.f32.gmra.mxu0 %v2325
        %v2455 = vpop.f32.mrf.mxu0
        %v2456 = vadd.f32 0.0, %v2455
        %v2457 = vpop.f32.mrf.mxu0
        %v2458 = vadd.f32 0.0, %v2457
        %2459 = vmatprep.mubr.f32.mxu0 0.0
        %2460 = vmatmul.mubr.f32.gmra.mxu0 %v2327
        %v2461 = vpop.f32.mrf.mxu0
        %v2462 = vadd.f32 0.0, %v2461
        %v2463 = vpop.f32.mrf.mxu0
        %v2464 = vadd.f32 0.0, %v2463
        %2465 = vmatprep.mubr.f32.mxu0 0.0
        %2466 = vmatmul.mubr.f32.gmra.mxu0 %v2329
        %v2467 = vpop.f32.mrf.mxu0
        %v2468 = vadd.f32 0.0, %v2467
        %v2469 = vpop.f32.mrf.mxu0
        %v2470 = vadd.f32 0.0, %v2469
        %2471 = vmatprep.mubr.f32.mxu0 0.0
        %2472 = vmatmul.mubr.f32.gmra.mxu0 %v2331
        %v2473 = vpop.f32.mrf.mxu0
        %v2474 = vadd.f32 0.0, %v2473
        %v2475 = vpop.f32.mrf.mxu0
        %v2476 = vadd.f32 0.0, %v2475
        %2477 = vmatprep.mubr.f32.mxu0 0.0
        %2478 = vmatmul.mubr.f32.gmra.mxu0 %v2333
        %v2479 = vpop.f32.mrf.mxu0
        %v2480 = vadd.f32 0.0, %v2479
        %v2481 = vpop.f32.mrf.mxu0
        %v2482 = vadd.f32 0.0, %v2481
        %2483 = vmatprep.mubr.f32.mxu0 0.0
        %2484 = vmatmul.mubr.f32.gmra.mxu0 %v2335
        %v2485 = vpop.f32.mrf.mxu0
        %v2486 = vadd.f32 0.0, %v2485
        %v2487 = vpop.f32.mrf.mxu0
        %v2488 = vadd.f32 0.0, %v2487
        %2489 = vmatprep.mubr.f32.mxu0 0.0
        %2490 = vmatmul.mubr.f32.gmra.mxu0 %v2337
        %v2491 = vpop.f32.mrf.mxu0
        %v2492 = vadd.f32 0.0, %v2491
        %v2493 = vpop.f32.mrf.mxu0
        %v2494 = vadd.f32 0.0, %v2493
        %2495 = vmatprep.mubr.f32.mxu0 0.0
        %2496 = vmatmul.mubr.f32.gmra.mxu0 %v2339
        %v2497 = vpop.f32.mrf.mxu0
        %v2498 = vadd.f32 0.0, %v2497
        %v2499 = vpop.f32.mrf.mxu0
        %v2500 = vadd.f32 0.0, %v2499
        %2501 = vmatprep.mubr.f32.mxu0 0.0
        %2502 = vmatmul.mubr.f32.gmra.mxu0 %v2341
        %v2503 = vpop.f32.mrf.mxu0
        %v2504 = vadd.f32 0.0, %v2503
        %v2505 = vpop.f32.mrf.mxu0
        %v2506 = vadd.f32 0.0, %v2505
        %2507 = vmatprep.mubr.f32.mxu0 0.0
        %2508 = vmatmul.mubr.f32.gmra.mxu0 %v2343
        %v2509 = vpop.f32.mrf.mxu0
        %v2510 = vadd.f32 0.0, %v2509
        %v2511 = vpop.f32.mrf.mxu0
        %v2512 = vadd.f32 0.0, %v2511
        %2513 = vmatprep.mubr.f32.mxu0 0.0
        %2514 = vmatmul.mubr.f32.gmra.mxu0 %v2345
        %v2515 = vpop.f32.mrf.mxu0
        %v2516 = vadd.f32 0.0, %v2515
        %v2517 = vpop.f32.mrf.mxu0
        %v2518 = vadd.f32 0.0, %v2517
        %2519 = vmatprep.mubr.f32.mxu0 0.0
        %2520 = vmatmul.mubr.f32.gmra.mxu0 %v2347
        %v2521 = vpop.f32.mrf.mxu0
        %v2522 = vadd.f32 0.0, %v2521
        %v2523 = vpop.f32.mrf.mxu0
        %v2524 = vadd.f32 0.0, %v2523
        %2525 = vmatprep.mubr.f32.mxu0 0.0
        %2526 = vmatmul.mubr.f32.gmra.mxu0 %v2349
        %v2527 = vpop.f32.mrf.mxu0
        %v2528 = vadd.f32 0.0, %v2527
        %v2529 = vpop.f32.mrf.mxu0
        %v2530 = vadd.f32 0.0, %v2529
        %2531 = vmatprep.mubr.f32.mxu0 0.0
        %2532 = vmatmul.mubr.f32.gmra.mxu0 %v2351
        %v2533 = vpop.f32.mrf.mxu0
        %v2534 = vadd.f32 0.0, %v2533
        %v2535 = vpop.f32.mrf.mxu0
        %v2536 = vadd.f32 0.0, %v2535
        %2537 = vmatprep.mubr.f32.mxu0 0.0
        %2538 = vmatmul.mubr.f32.gmra.mxu0 %v2353
        %v2539 = vpop.f32.mrf.mxu0
        %v2540 = vadd.f32 0.0, %v2539
        %v2541 = vpop.f32.mrf.mxu0
        %v2542 = vadd.f32 0.0, %v2541
        %2543 = vmatprep.mubr.f32.mxu0 0.0
        %2544 = vmatmul.mubr.f32.gmra.mxu0 %v2355
        %v2545 = vpop.f32.mrf.mxu0
        %v2546 = vadd.f32 0.0, %v2545
        %v2547 = vpop.f32.mrf.mxu0
        %v2548 = vadd.f32 0.0, %v2547
        %2549 = vmatprep.mubr.f32.mxu0 0.0
        %2550 = vmatmul.mubr.f32.gmra.mxu0 %v2357
        %v2551 = vpop.f32.mrf.mxu0
        %v2552 = vadd.f32 0.0, %v2551
        %v2553 = vpop.f32.mrf.mxu0
        %v2554 = vadd.f32 0.0, %v2553
        %2555 = vmatprep.mubr.f32.mxu0 0.0
        %2556 = vmatmul.mubr.f32.gmra.mxu0 %v2359
        %v2557 = vpop.f32.mrf.mxu0
        %v2558 = vadd.f32 0.0, %v2557
        %v2559 = vpop.f32.mrf.mxu0
        %v2560 = vadd.f32 0.0, %v2559
        %2561 = vmatprep.mubr.f32.mxu0 0.0
        %2562 = vmatmul.mubr.f32.gmra.mxu0 %v2361
        %v2563 = vpop.f32.mrf.mxu0
        %v2564 = vadd.f32 0.0, %v2563
        %v2565 = vpop.f32.mrf.mxu0
        %v2566 = vadd.f32 0.0, %v2565
        %2567 = vmatprep.mubr.f32.mxu0 0.0
        %2568 = vmatmul.mubr.f32.gmra.mxu0 %v2363
        %v2569 = vpop.f32.mrf.mxu0
        %v2570 = vadd.f32 0.0, %v2569
        %v2571 = vpop.f32.mrf.mxu0
        %v2572 = vadd.f32 0.0, %v2571
        %2573 = vmatprep.mubr.f32.mxu0 0.0
        %2574 = vmatmul.mubr.f32.gmra.mxu0 %v2365
        %v2575 = vpop.f32.mrf.mxu0
        %v2576 = vadd.f32 0.0, %v2575
        %v2577 = vpop.f32.mrf.mxu0
        %v2578 = vadd.f32 0.0, %v2577
        %2579 = vmatprep.mubr.f32.mxu0 0.0
        %2580 = vmatmul.mubr.f32.gmra.mxu0 %v2367
        %v2581 = vpop.f32.mrf.mxu0
        %v2582 = vadd.f32 0.0, %v2581
        %v2583 = vpop.f32.mrf.mxu0
        %v2584 = vadd.f32 0.0, %v2583
        %2585 = vmatprep.mubr.f32.mxu0 0.0
        %2586 = vmatmul.mubr.f32.gmra.mxu0 %v2369
        %v2587 = vpop.f32.mrf.mxu0
        %v2588 = vadd.f32 0.0, %v2587
        %v2589 = vpop.f32.mrf.mxu0
        %v2590 = vadd.f32 0.0, %v2589
        %2591 = vmatprep.mubr.f32.mxu0 0.0
        %2592 = vmatmul.mubr.f32.gmra.mxu0 %v2371
        %v2593 = vpop.f32.mrf.mxu0
        %v2594 = vadd.f32 0.0, %v2593
        %v2595 = vpop.f32.mrf.mxu0
        %v2596 = vadd.f32 0.0, %v2595
        %2597 = vmatprep.mubr.f32.mxu0 0.0
        %2598 = vmatmul.mubr.f32.gmra.mxu0 %v2373
        %v2599 = vpop.f32.mrf.mxu0
        %v2600 = vadd.f32 0.0, %v2599
        %v2601 = vpop.f32.mrf.mxu0
        %v2602 = vadd.f32 0.0, %v2601
        %2603 = vmatprep.mubr.f32.mxu0 0.0
        %2604 = vmatmul.mubr.f32.gmra.mxu0 %v2375
        %v2605 = vpop.f32.mrf.mxu0
        %v2606 = vadd.f32 0.0, %v2605
        %v2607 = vpop.f32.mrf.mxu0
        %v2608 = vadd.f32 0.0, %v2607
        %2609 = vmatprep.mubr.f32.mxu0 0.0
        %2610 = vmatmul.mubr.f32.gmra.mxu0 %v2377
        %v2611 = vpop.f32.mrf.mxu0
        %v2612 = vadd.f32 0.0, %v2611
        %v2613 = vpop.f32.mrf.mxu0
        %v2614 = vadd.f32 0.0, %v2613
        %2615 = vmatprep.mubr.f32.mxu0 0.0
        %2616 = vmatmul.mubr.f32.gmra.mxu0 %v2379
        %v2617 = vpop.f32.mrf.mxu0
        %v2618 = vadd.f32 0.0, %v2617
        %v2619 = vpop.f32.mrf.mxu0
        %v2620 = vadd.f32 0.0, %v2619
        %2621 = vmatprep.mubr.f32.mxu0 0.0
        %2622 = vmatmul.mubr.f32.gmra.mxu0 %v2381
        %v2623 = vpop.f32.mrf.mxu0
        %v2624 = vadd.f32 0.0, %v2623
        %v2625 = vpop.f32.mrf.mxu0
        %v2626 = vadd.f32 0.0, %v2625
        %2627 = vmatprep.mubr.f32.mxu0 0.0
        %2628 = vmatmul.mubr.f32.gmra.mxu0 %v2383
        %v2629 = vpop.f32.mrf.mxu0
        %v2630 = vadd.f32 0.0, %v2629
        %v2631 = vpop.f32.mrf.mxu0
        %v2632 = vadd.f32 0.0, %v2631
        %2633 = vmatprep.mubr.f32.mxu0 0.0
        %2634 = vmatmul.mubr.f32.gmra.mxu0 %v2385
        %v2635 = vpop.f32.mrf.mxu0
        %v2636 = vadd.f32 0.0, %v2635
        %v2637 = vpop.f32.mrf.mxu0
        %v2638 = vadd.f32 0.0, %v2637
        %2639 = vmatprep.mubr.f32.mxu0 0.0
        %2640 = vmatmul.mubr.f32.gmra.mxu0 %v2387
        %v2641 = vpop.f32.mrf.mxu0
        %v2642 = vadd.f32 0.0, %v2641
        %v2643 = vpop.f32.mrf.mxu0
        %v2644 = vadd.f32 0.0, %v2643
        %2645 = vdwg.mxu0
        %v2646 = vadd.f32 %v2172, %v2456
        %v2647 = vadd.f32 %v2173, %v2458
        %v2648 = vadd.f32 %v2174, %v2462
        %v2649 = vadd.f32 %v2175, %v2464
        %v2650 = vadd.f32 %v2176, %v2468
        %v2651 = vadd.f32 %v2177, %v2470
        %v2652 = vadd.f32 %v2178, %v2474
        %v2653 = vadd.f32 %v2179, %v2476
        %v2654 = vadd.f32 %v2180, %v2480
        %v2655 = vadd.f32 %v2181, %v2482
        %v2656 = vadd.f32 %v2182, %v2486
        %v2657 = vadd.f32 %v2183, %v2488
        %v2658 = vadd.f32 %v2184, %v2492
        %v2659 = vadd.f32 %v2185, %v2494
        %v2660 = vadd.f32 %v2186, %v2498
        %v2661 = vadd.f32 %v2187, %v2500
        %v2662 = vadd.f32 %v2188, %v2504
        %v2663 = vadd.f32 %v2189, %v2506
        %v2664 = vadd.f32 %v2190, %v2510
        %v2665 = vadd.f32 %v2191, %v2512
        %v2666 = vadd.f32 %v2192, %v2516
        %v2667 = vadd.f32 %v2193, %v2518
        %v2668 = vadd.f32 %v2194, %v2522
        %v2669 = vadd.f32 %v2195, %v2524
        %v2670 = vadd.f32 %v2196, %v2528
        %v2671 = vadd.f32 %v2197, %v2530
        %v2672 = vadd.f32 %v2198, %v2534
        %v2673 = vadd.f32 %v2199, %v2536
        %v2674 = vadd.f32 %v2200, %v2540
        %v2675 = vadd.f32 %v2201, %v2542
        %v2676 = vadd.f32 %v2202, %v2546
        %v2677 = vadd.f32 %v2203, %v2548
        %v2678 = vadd.f32 %v2204, %v2552
        %v2679 = vadd.f32 %v2205, %v2554
        %v2680 = vadd.f32 %v2206, %v2558
        %v2681 = vadd.f32 %v2207, %v2560
        %v2682 = vadd.f32 %v2208, %v2564
        %v2683 = vadd.f32 %v2209, %v2566
        %v2684 = vadd.f32 %v2210, %v2570
        %v2685 = vadd.f32 %v2211, %v2572
        %v2686 = vadd.f32 %v2212, %v2576
        %v2687 = vadd.f32 %v2213, %v2578
        %v2688 = vadd.f32 %v2214, %v2582
        %v2689 = vadd.f32 %v2215, %v2584
        %v2690 = vadd.f32 %v2216, %v2588
        %v2691 = vadd.f32 %v2217, %v2590
        %v2692 = vadd.f32 %v2218, %v2594
        %v2693 = vadd.f32 %v2219, %v2596
        %v2694 = vadd.f32 %v2220, %v2600
        %v2695 = vadd.f32 %v2221, %v2602
        %v2696 = vadd.f32 %v2222, %v2606
        %v2697 = vadd.f32 %v2223, %v2608
        %v2698 = vadd.f32 %v2224, %v2612
        %v2699 = vadd.f32 %v2225, %v2614
        %v2700 = vadd.f32 %v2226, %v2618
        %v2701 = vadd.f32 %v2227, %v2620
        %v2702 = vadd.f32 %v2228, %v2624
        %v2703 = vadd.f32 %v2229, %v2626
        %v2704 = vadd.f32 %v2230, %v2630
        %v2705 = vadd.f32 %v2231, %v2632
        %v2706 = vadd.f32 %v2232, %v2636
        %v2707 = vadd.f32 %v2233, %v2638
        %v2708 = vadd.f32 %v2234, %v2642
        %v2709 = vadd.f32 %v2235, %v2644
        %v2710 = vld [vmem:[%s2] sm:$0x3]
        %v2712 = vlaneseq
        %v2713 = vshrl.u32 %v2712, 7
        %v2714 = vsub.s32 0, %v2713
        %v2715 = vrot.slane %v2710, %v2714
        %v2716 = vlaneseq
        %v2717 = vshrl.u32 %v2716, 7
        %v2718 = vsub.s32 1, %v2717
        %v2719 = vrot.slane %v2710, %v2718
        %v2722 = vadd.f32 %v2646, %v2715
        %v2723 = vadd.f32 %v2647, %v2719
        %v2724 = vadd.f32 %v2648, %v2715
        %v2725 = vadd.f32 %v2649, %v2719
        %v2726 = vadd.f32 %v2650, %v2715
        %v2727 = vadd.f32 %v2651, %v2719
        %v2728 = vadd.f32 %v2652, %v2715
        %v2729 = vadd.f32 %v2653, %v2719
        %v2730 = vadd.f32 %v2654, %v2715
        %v2731 = vadd.f32 %v2655, %v2719
        %v2732 = vadd.f32 %v2656, %v2715
        %v2733 = vadd.f32 %v2657, %v2719
        %v2734 = vadd.f32 %v2658, %v2715
        %v2735 = vadd.f32 %v2659, %v2719
        %v2736 = vadd.f32 %v2660, %v2715
        %v2737 = vadd.f32 %v2661, %v2719
        %v2738 = vadd.f32 %v2662, %v2715
        %v2739 = vadd.f32 %v2663, %v2719
        %v2740 = vadd.f32 %v2664, %v2715
        %v2741 = vadd.f32 %v2665, %v2719
        %v2742 = vadd.f32 %v2666, %v2715
        %v2743 = vadd.f32 %v2667, %v2719
        %v2744 = vadd.f32 %v2668, %v2715
        %v2745 = vadd.f32 %v2669, %v2719
        %v2746 = vadd.f32 %v2670, %v2715
        %v2747 = vadd.f32 %v2671, %v2719
        %v2748 = vadd.f32 %v2672, %v2715
        %v2749 = vadd.f32 %v2673, %v2719
        %v2750 = vadd.f32 %v2674, %v2715
        %v2751 = vadd.f32 %v2675, %v2719
        %v2752 = vadd.f32 %v2676, %v2715
        %v2753 = vadd.f32 %v2677, %v2719
        %v2754 = vadd.f32 %v2678, %v2715
        %v2755 = vadd.f32 %v2679, %v2719
        %v2756 = vadd.f32 %v2680, %v2715
        %v2757 = vadd.f32 %v2681, %v2719
        %v2758 = vadd.f32 %v2682, %v2715
        %v2759 = vadd.f32 %v2683, %v2719
        %v2760 = vadd.f32 %v2684, %v2715
        %v2761 = vadd.f32 %v2685, %v2719
        %v2762 = vadd.f32 %v2686, %v2715
        %v2763 = vadd.f32 %v2687, %v2719
        %v2764 = vadd.f32 %v2688, %v2715
        %v2765 = vadd.f32 %v2689, %v2719
        %v2766 = vadd.f32 %v2690, %v2715
        %v2767 = vadd.f32 %v2691, %v2719
        %v2768 = vadd.f32 %v2692, %v2715
        %v2769 = vadd.f32 %v2693, %v2719
        %v2770 = vadd.f32 %v2694, %v2715
        %v2771 = vadd.f32 %v2695, %v2719
        %v2772 = vadd.f32 %v2696, %v2715
        %v2773 = vadd.f32 %v2697, %v2719
        %v2774 = vadd.f32 %v2698, %v2715
        %v2775 = vadd.f32 %v2699, %v2719
        %v2776 = vadd.f32 %v2700, %v2715
        %v2777 = vadd.f32 %v2701, %v2719
        %v2778 = vadd.f32 %v2702, %v2715
        %v2779 = vadd.f32 %v2703, %v2719
        %v2780 = vadd.f32 %v2704, %v2715
        %v2781 = vadd.f32 %v2705, %v2719
        %v2782 = vadd.f32 %v2706, %v2715
        %v2783 = vadd.f32 %v2707, %v2719
        %v2784 = vadd.f32 %v2708, %v2715
        %v2785 = vadd.f32 %v2709, %v2719
        %v2786 = vmax.f32 %v2722, 0.0
        %v2787 = vmax.f32 %v2723, 0.0
        %v2788 = vmax.f32 %v2724, 0.0
        %v2789 = vmax.f32 %v2725, 0.0
        %v2790 = vmax.f32 %v2726, 0.0
        %v2791 = vmax.f32 %v2727, 0.0
        %v2792 = vmax.f32 %v2728, 0.0
        %v2793 = vmax.f32 %v2729, 0.0
        %v2794 = vmax.f32 %v2730, 0.0
        %v2795 = vmax.f32 %v2731, 0.0
        %v2796 = vmax.f32 %v2732, 0.0
        %v2797 = vmax.f32 %v2733, 0.0
        %v2798 = vmax.f32 %v2734, 0.0
        %v2799 = vmax.f32 %v2735, 0.0
        %v2800 = vmax.f32 %v2736, 0.0
        %v2801 = vmax.f32 %v2737, 0.0
        %v2802 = vmax.f32 %v2738, 0.0
        %v2803 = vmax.f32 %v2739, 0.0
        %v2804 = vmax.f32 %v2740, 0.0
        %v2805 = vmax.f32 %v2741, 0.0
        %v2806 = vmax.f32 %v2742, 0.0
        %v2807 = vmax.f32 %v2743, 0.0
        %v2808 = vmax.f32 %v2744, 0.0
        %v2809 = vmax.f32 %v2745, 0.0
        %v2810 = vmax.f32 %v2746, 0.0
        %v2811 = vmax.f32 %v2747, 0.0
        %v2812 = vmax.f32 %v2748, 0.0
        %v2813 = vmax.f32 %v2749, 0.0
        %v2814 = vmax.f32 %v2750, 0.0
        %v2815 = vmax.f32 %v2751, 0.0
        %v2816 = vmax.f32 %v2752, 0.0
        %v2817 = vmax.f32 %v2753, 0.0
        %v2818 = vmax.f32 %v2754, 0.0
        %v2819 = vmax.f32 %v2755, 0.0
        %v2820 = vmax.f32 %v2756, 0.0
        %v2821 = vmax.f32 %v2757, 0.0
        %v2822 = vmax.f32 %v2758, 0.0
        %v2823 = vmax.f32 %v2759, 0.0
        %v2824 = vmax.f32 %v2760, 0.0
        %v2825 = vmax.f32 %v2761, 0.0
        %v2826 = vmax.f32 %v2762, 0.0
        %v2827 = vmax.f32 %v2763, 0.0
        %v2828 = vmax.f32 %v2764, 0.0
        %v2829 = vmax.f32 %v2765, 0.0
        %v2830 = vmax.f32 %v2766, 0.0
        %v2831 = vmax.f32 %v2767, 0.0
        %v2832 = vmax.f32 %v2768, 0.0
        %v2833 = vmax.f32 %v2769, 0.0
        %v2834 = vmax.f32 %v2770, 0.0
        %v2835 = vmax.f32 %v2771, 0.0
        %v2836 = vmax.f32 %v2772, 0.0
        %v2837 = vmax.f32 %v2773, 0.0
        %v2838 = vmax.f32 %v2774, 0.0
        %v2839 = vmax.f32 %v2775, 0.0
        %v2840 = vmax.f32 %v2776, 0.0
        %v2841 = vmax.f32 %v2777, 0.0
        %v2842 = vmax.f32 %v2778, 0.0
        %v2843 = vmax.f32 %v2779, 0.0
        %v2844 = vmax.f32 %v2780, 0.0
        %v2845 = vmax.f32 %v2781, 0.0
        %v2846 = vmax.f32 %v2782, 0.0
        %v2847 = vmax.f32 %v2783, 0.0
        %v2848 = vmax.f32 %v2784, 0.0
        %v2849 = vmax.f32 %v2785, 0.0
        %v2914 = vrot.slane %v2786, 1
        %v2915 = vrot.slane %v2788, 1
        %v2916 = vsel %vm581, %v2914, %v2915
        %v2917 = vrot.slane %v2787, 1
        %v2918 = vrot.slane %v2789, 1
        %v2919 = vsel %vm581, %v2917, %v2918
        %v2920 = vrot.slane %v2790, 1
        %v2921 = vsel %vm581, %v2915, %v2920
        %v2922 = vrot.slane %v2791, 1
        %v2923 = vsel %vm581, %v2918, %v2922
        %v2924 = vrot.slane %v2792, 1
        %v2925 = vsel %vm581, %v2920, %v2924
        %v2926 = vrot.slane %v2793, 1
        %v2927 = vsel %vm581, %v2922, %v2926
        %v2928 = vrot.slane %v2794, 1
        %v2929 = vsel %vm581, %v2924, %v2928
        %v2930 = vrot.slane %v2795, 1
        %v2931 = vsel %vm581, %v2926, %v2930
        %v2932 = vrot.slane %v2796, 1
        %v2933 = vsel %vm581, %v2928, %v2932
        %v2934 = vrot.slane %v2797, 1
        %v2935 = vsel %vm581, %v2930, %v2934
        %v2936 = vrot.slane %v2798, 1
        %v2937 = vsel %vm581, %v2932, %v2936
        %v2938 = vrot.slane %v2799, 1
        %v2939 = vsel %vm581, %v2934, %v2938
        %v2940 = vrot.slane %v2800, 1
        %v2941 = vsel %vm581, %v2936, %v2940
        %v2942 = vrot.slane %v2801, 1
        %v2943 = vsel %vm581, %v2938, %v2942
        %v2944 = vrot.slane %v2802, 1
        %v2945 = vsel %vm581, %v2940, %v2944
        %v2946 = vrot.slane %v2803, 1
        %v2947 = vsel %vm581, %v2942, %v2946
        %v2948 = vrot.slane %v2804, 1
        %v2949 = vsel %vm581, %v2944, %v2948
        %v2950 = vrot.slane %v2805, 1
        %v2951 = vsel %vm581, %v2946, %v2950
        %v2952 = vrot.slane %v2806, 1
        %v2953 = vsel %vm581, %v2948, %v2952
        %v2954 = vrot.slane %v2807, 1
        %v2955 = vsel %vm581, %v2950, %v2954
        %v2956 = vrot.slane %v2808, 1
        %v2957 = vsel %vm581, %v2952, %v2956
        %v2958 = vrot.slane %v2809, 1
        %v2959 = vsel %vm581, %v2954, %v2958
        %v2960 = vrot.slane %v2810, 1
        %v2961 = vsel %vm581, %v2956, %v2960
        %v2962 = vrot.slane %v2811, 1
        %v2963 = vsel %vm581, %v2958, %v2962
        %v2964 = vrot.slane %v2812, 1
        %v2965 = vsel %vm581, %v2960, %v2964
        %v2966 = vrot.slane %v2813, 1
        %v2967 = vsel %vm581, %v2962, %v2966
        %v2968 = vrot.slane %v2814, 1
        %v2969 = vsel %vm581, %v2964, %v2968
        %v2970 = vrot.slane %v2815, 1
        %v2971 = vsel %vm581, %v2966, %v2970
        %v2972 = vrot.slane %v2816, 1
        %v2973 = vsel %vm581, %v2968, %v2972
        %v2974 = vrot.slane %v2817, 1
        %v2975 = vsel %vm581, %v2970, %v2974
        %v2976 = vrot.slane %v2818, 1
        %v2977 = vsel %vm581, %v2972, %v2976
        %v2978 = vrot.slane %v2819, 1
        %v2979 = vsel %vm581, %v2974, %v2978
        %v2980 = vrot.slane %v2820, 1
        %v2981 = vsel %vm581, %v2976, %v2980
        %v2982 = vrot.slane %v2821, 1
        %v2983 = vsel %vm581, %v2978, %v2982
        %v2984 = vrot.slane %v2822, 1
        %v2985 = vsel %vm581, %v2980, %v2984
        %v2986 = vrot.slane %v2823, 1
        %v2987 = vsel %vm581, %v2982, %v2986
        %v2988 = vrot.slane %v2824, 1
        %v2989 = vsel %vm581, %v2984, %v2988
        %v2990 = vrot.slane %v2825, 1
        %v2991 = vsel %vm581, %v2986, %v2990
        %v2992 = vrot.slane %v2826, 1
        %v2993 = vsel %vm581, %v2988, %v2992
        %v2994 = vrot.slane %v2827, 1
        %v2995 = vsel %vm581, %v2990, %v2994
        %v2996 = vrot.slane %v2828, 1
        %v2997 = vsel %vm581, %v2992, %v2996
        %v2998 = vrot.slane %v2829, 1
        %v2999 = vsel %vm581, %v2994, %v2998
        %v3000 = vrot.slane %v2830, 1
        %v3001 = vsel %vm581, %v2996, %v3000
        %v3002 = vrot.slane %v2831, 1
        %v3003 = vsel %vm581, %v2998, %v3002
        %v3004 = vrot.slane %v2832, 1
        %v3005 = vsel %vm581, %v3000, %v3004
        %v3006 = vrot.slane %v2833, 1
        %v3007 = vsel %vm581, %v3002, %v3006
        %v3008 = vrot.slane %v2834, 1
        %v3009 = vsel %vm581, %v3004, %v3008
        %v3010 = vrot.slane %v2835, 1
        %v3011 = vsel %vm581, %v3006, %v3010
        %v3012 = vrot.slane %v2836, 1
        %v3013 = vsel %vm581, %v3008, %v3012
        %v3014 = vrot.slane %v2837, 1
        %v3015 = vsel %vm581, %v3010, %v3014
        %v3016 = vrot.slane %v2838, 1
        %v3017 = vsel %vm581, %v3012, %v3016
        %v3018 = vrot.slane %v2839, 1
        %v3019 = vsel %vm581, %v3014, %v3018
        %v3020 = vrot.slane %v2840, 1
        %v3021 = vsel %vm581, %v3016, %v3020
        %v3022 = vrot.slane %v2841, 1
        %v3023 = vsel %vm581, %v3018, %v3022
        %v3024 = vrot.slane %v2842, 1
        %v3025 = vsel %vm581, %v3020, %v3024
        %v3026 = vrot.slane %v2843, 1
        %v3027 = vsel %vm581, %v3022, %v3026
        %v3028 = vrot.slane %v2844, 1
        %v3029 = vsel %vm581, %v3024, %v3028
        %v3030 = vrot.slane %v2845, 1
        %v3031 = vsel %vm581, %v3026, %v3030
        %v3032 = vrot.slane %v2846, 1
        %v3033 = vsel %vm581, %v3028, %v3032
        %v3034 = vrot.slane %v2847, 1
        %v3035 = vsel %vm581, %v3030, %v3034
        %v3036 = vrot.slane %v2848, 1
        %v3037 = vsel %vm581, %v3032, %v3036
        %v3038 = vrot.slane %v2849, 1
        %v3039 = vsel %vm581, %v3034, %v3038
        %v3104 = vmax.f32 %v2786, %v2916
        %v3105 = vmax.f32 %v2787, %v2919
        %v3106 = vmax.f32 %v2788, %v2921
        %v3107 = vmax.f32 %v2789, %v2923
        %v3108 = vmax.f32 %v2790, %v2925
        %v3109 = vmax.f32 %v2791, %v2927
        %v3110 = vmax.f32 %v2792, %v2929
        %v3111 = vmax.f32 %v2793, %v2931
        %v3112 = vmax.f32 %v2794, %v2933
        %v3113 = vmax.f32 %v2795, %v2935
        %v3114 = vmax.f32 %v2796, %v2937
        %v3115 = vmax.f32 %v2797, %v2939
        %v3116 = vmax.f32 %v2798, %v2941
        %v3117 = vmax.f32 %v2799, %v2943
        %v3118 = vmax.f32 %v2800, %v2945
        %v3119 = vmax.f32 %v2801, %v2947
        %v3120 = vmax.f32 %v2802, %v2949
        %v3121 = vmax.f32 %v2803, %v2951
        %v3122 = vmax.f32 %v2804, %v2953
        %v3123 = vmax.f32 %v2805, %v2955
        %v3124 = vmax.f32 %v2806, %v2957
        %v3125 = vmax.f32 %v2807, %v2959
        %v3126 = vmax.f32 %v2808, %v2961
        %v3127 = vmax.f32 %v2809, %v2963
        %v3128 = vmax.f32 %v2810, %v2965
        %v3129 = vmax.f32 %v2811, %v2967
        %v3130 = vmax.f32 %v2812, %v2969
        %v3131 = vmax.f32 %v2813, %v2971
        %v3132 = vmax.f32 %v2814, %v2973
        %v3133 = vmax.f32 %v2815, %v2975
        %v3134 = vmax.f32 %v2816, %v2977
        %v3135 = vmax.f32 %v2817, %v2979
        %v3136 = vmax.f32 %v2818, %v2981
        %v3137 = vmax.f32 %v2819, %v2983
        %v3138 = vmax.f32 %v2820, %v2985
        %v3139 = vmax.f32 %v2821, %v2987
        %v3140 = vmax.f32 %v2822, %v2989
        %v3141 = vmax.f32 %v2823, %v2991
        %v3142 = vmax.f32 %v2824, %v2993
        %v3143 = vmax.f32 %v2825, %v2995
        %v3144 = vmax.f32 %v2826, %v2997
        %v3145 = vmax.f32 %v2827, %v2999
        %v3146 = vmax.f32 %v2828, %v3001
        %v3147 = vmax.f32 %v2829, %v3003
        %v3148 = vmax.f32 %v2830, %v3005
        %v3149 = vmax.f32 %v2831, %v3007
        %v3150 = vmax.f32 %v2832, %v3009
        %v3151 = vmax.f32 %v2833, %v3011
        %v3152 = vmax.f32 %v2834, %v3013
        %v3153 = vmax.f32 %v2835, %v3015
        %v3154 = vmax.f32 %v2836, %v3017
        %v3155 = vmax.f32 %v2837, %v3019
        %v3156 = vmax.f32 %v2838, %v3021
        %v3157 = vmax.f32 %v2839, %v3023
        %v3158 = vmax.f32 %v2840, %v3025
        %v3159 = vmax.f32 %v2841, %v3027
        %v3160 = vmax.f32 %v2842, %v3029
        %v3161 = vmax.f32 %v2843, %v3031
        %v3162 = vmax.f32 %v2844, %v3033
        %v3163 = vmax.f32 %v2845, %v3035
        %v3164 = vmax.f32 %v2846, %v3037
        %v3165 = vmax.f32 %v2847, %v3039
        %v3166 = vmax.f32 %v2848, %v3036
        %v3167 = vmax.f32 %v2849, %v3038
        %v3168 = vld [vmem:[%s3] sm:$0xff]
        %v3169 = vld [vmem:[%s3 + $0x8] sm:$0xff]
        %v3170 = vld [vmem:[%s3 + $0x10] sm:$0xff]
        %v3171 = vld [vmem:[%s3 + $0x18] sm:$0xff]
        %v3172 = vld [vmem:[%s3 + $0x20] sm:$0xff]
        %v3173 = vld [vmem:[%s3 + $0x28] sm:$0xff]
        %v3174 = vld [vmem:[%s3 + $0x30] sm:$0xff]
        %v3175 = vld [vmem:[%s3 + $0x38] sm:$0xff]
        %v3176 = vld [vmem:[%s3 + $0x40] sm:$0xff]
        %v3177 = vld [vmem:[%s3 + $0x48] sm:$0xff]
        %v3178 = vld [vmem:[%s3 + $0x50] sm:$0xff]
        %v3179 = vld [vmem:[%s3 + $0x58] sm:$0xff]
        %v3180 = vld [vmem:[%s3 + $0x60] sm:$0xff]
        %v3181 = vld [vmem:[%s3 + $0x68] sm:$0xff]
        %v3182 = vld [vmem:[%s3 + $0x70] sm:$0xff]
        %v3183 = vld [vmem:[%s3 + $0x78] sm:$0xff]
        %v3184 = vld [vmem:[%s3 + $0x80] sm:$0xff]
        %v3185 = vld [vmem:[%s3 + $0x88] sm:$0xff]
        %v3186 = vld [vmem:[%s3 + $0x90] sm:$0xff]
        %v3187 = vld [vmem:[%s3 + $0x98] sm:$0xff]
        %v3188 = vld [vmem:[%s3 + $0xa0] sm:$0xff]
        %vm3189 = vcmask 326656
        %v3191 = vsel %vm3189, %v3105, 0
        %v3194 = vsel %vm3189, %v3107, 0
        %v3197 = vsel %vm3189, %v3109, 0
        %v3200 = vsel %vm3189, %v3111, 0
        %v3203 = vsel %vm3189, %v3113, 0
        %v3206 = vsel %vm3189, %v3115, 0
        %v3209 = vsel %vm3189, %v3117, 0
        %v3212 = vsel %vm3189, %v3119, 0
        %v3215 = vsel %vm3189, %v3121, 0
        %v3218 = vsel %vm3189, %v3123, 0
        %v3221 = vsel %vm3189, %v3125, 0
        %v3224 = vsel %vm3189, %v3127, 0
        %v3227 = vsel %vm3189, %v3129, 0
        %v3230 = vsel %vm3189, %v3131, 0
        %v3233 = vsel %vm3189, %v3133, 0
        %v3236 = vsel %vm3189, %v3135, 0
        %v3239 = vsel %vm3189, %v3137, 0
        %v3242 = vsel %vm3189, %v3139, 0
        %v3245 = vsel %vm3189, %v3141, 0
        %v3248 = vsel %vm3189, %v3143, 0
        %v3251 = vsel %vm3189, %v3145, 0
        %v3254 = vsel %vm3189, %v3147, 0
        %v3257 = vsel %vm3189, %v3149, 0
        %v3260 = vsel %vm3189, %v3151, 0
        %v3263 = vsel %vm3189, %v3153, 0
        %v3266 = vsel %vm3189, %v3155, 0
        %v3269 = vsel %vm3189, %v3157, 0
        %v3272 = vsel %vm3189, %v3159, 0
        %v3275 = vsel %vm3189, %v3161, 0
        %v3278 = vsel %vm3189, %v3163, 0
        %v3281 = vsel %vm3189, %v3165, 0
        %v3284 = vsel %vm3189, %v3167, 0
        %3286 = vmatprep.subr.mxu0 0.0
        %3287 = vmatpush1.msra.mxu0 %v3183
        %3288 = vmatprep.subr.mxu0 0.0
        %3289 = vmatpush1.msra.mxu0 %v3182
        %3290 = vmatprep.subr.mxu0 0.0
        %3291 = vmatpush1.msra.mxu0 %v3181
        %3292 = vmatprep.subr.mxu0 0.0
        %3293 = vmatpush1.msra.mxu0 %v3180
        %3294 = vmatprep.subr.mxu0 0.0
        %3295 = vmatpush1.msra.mxu0 %v3179
        %3296 = vmatprep.subr.mxu0 0.0
        %3297 = vmatpush1.msra.mxu0 %v3178
        %3298 = vmatprep.subr.mxu0 0.0
        %3299 = vmatpush1.msra.mxu0 %v3177
        %3300 = vmatprep.subr.mxu0 0.0
        %3301 = vmatpush1.msra.mxu0 %v3176
        %3302 = vmatprep.subr.mxu0 0.0
        %3303 = vmatpush1.msra.mxu0 %v3175
        %3304 = vmatprep.subr.mxu0 0.0
        %3305 = vmatpush1.msra.mxu0 %v3174
        %3306 = vmatprep.subr.mxu0 0.0
        %3307 = vmatpush1.msra.mxu0 %v3173
        %3308 = vmatprep.subr.mxu0 0.0
        %3309 = vmatpush1.msra.mxu0 %v3172
        %3310 = vmatprep.subr.mxu0 0.0
        %3311 = vmatpush1.msra.mxu0 %v3171
        %3312 = vmatprep.subr.mxu0 0.0
        %3313 = vmatpush1.msra.mxu0 %v3170
        %3314 = vmatprep.subr.mxu0 0.0
        %3315 = vmatpush1.msra.mxu0 %v3169
        %3316 = vmatprep.subr.mxu0 0.0
        %3317 = vmatpush1.msra.mxu0 %v3168
        %3318 = vmatprep.subr.mxu0 0.0
        %3319 = vmatpush2.msra.mxu0 0.0
        %3320 = vmatprep.subr.mxu0 0.0
        %3321 = vmatpush2.msra.mxu0 0.0
        %3322 = vmatprep.subr.mxu0 0.0
        %3323 = vmatpush2.msra.mxu0 0.0
        %3324 = vmatprep.subr.mxu0 0.0
        %3325 = vmatpush2.msra.mxu0 0.0
        %3326 = vmatprep.subr.mxu0 0.0
        %3327 = vmatpush2.msra.mxu0 0.0
        %3328 = vmatprep.subr.mxu0 0.0
        %3329 = vmatpush2.msra.mxu0 0.0
        %3330 = vmatprep.subr.mxu0 0.0
        %3331 = vmatpush2.msra.mxu0 0.0
        %3332 = vmatprep.subr.mxu0 0.0
        %3333 = vmatpush2.msra.mxu0 0.0
        %3334 = vmatprep.subr.mxu0 0.0
        %3335 = vmatpush2.msra.mxu0 0.0
        %3336 = vmatprep.subr.mxu0 0.0
        %3337 = vmatpush2.msra.mxu0 0.0
        %3338 = vmatprep.subr.mxu0 0.0
        %3339 = vmatpush2.msra.mxu0 0.0
        %3340 = vmatprep.subr.mxu0 0.0
        %3341 = vmatpush2.msra.mxu0 %v3188
        %3342 = vmatprep.subr.mxu0 0.0
        %3343 = vmatpush2.msra.mxu0 %v3187
        %3344 = vmatprep.subr.mxu0 0.0
        %3345 = vmatpush2.msra.mxu0 %v3186
        %3346 = vmatprep.subr.mxu0 0.0
        %3347 = vmatpush2.msra.mxu0 %v3185
        %3348 = vmatprep.subr.mxu0 0.0
        %3349 = vmatpush2.msra.mxu0 %v3184
        %3350 = vmatprep.mubr.f32.mxu0 %v3191
        %3351 = vmatmul.mubr.f32.gmra.mxu0 %v3104
        %v3352 = vpop.f32.mrf.mxu0
        %v3353 = vadd.f32 0.0, %v3352
        %v3354 = vpop.f32.mrf.mxu0
        %3355 = vmatprep.mubr.f32.mxu0 %v3194
        %3356 = vmatmul.mubr.f32.gmra.mxu0 %v3106
        %v3357 = vpop.f32.mrf.mxu0
        %v3358 = vadd.f32 0.0, %v3357
        %v3359 = vpop.f32.mrf.mxu0
        %3360 = vmatprep.mubr.f32.mxu0 %v3197
        %3361 = vmatmul.mubr.f32.gmra.mxu0 %v3108
        %v3362 = vpop.f32.mrf.mxu0
        %v3363 = vadd.f32 0.0, %v3362
        %v3364 = vpop.f32.mrf.mxu0
        %3365 = vmatprep.mubr.f32.mxu0 %v3200
        %3366 = vmatmul.mubr.f32.gmra.mxu0 %v3110
        %v3367 = vpop.f32.mrf.mxu0
        %v3368 = vadd.f32 0.0, %v3367
        %v3369 = vpop.f32.mrf.mxu0
        %3370 = vmatprep.mubr.f32.mxu0 %v3203
        %3371 = vmatmul.mubr.f32.gmra.mxu0 %v3112
        %v3372 = vpop.f32.mrf.mxu0
        %v3373 = vadd.f32 0.0, %v3372
        %v3374 = vpop.f32.mrf.mxu0
        %3375 = vmatprep.mubr.f32.mxu0 %v3206
        %3376 = vmatmul.mubr.f32.gmra.mxu0 %v3114
        %v3377 = vpop.f32.mrf.mxu0
        %v3378 = vadd.f32 0.0, %v3377
        %v3379 = vpop.f32.mrf.mxu0
        %3380 = vmatprep.mubr.f32.mxu0 %v3209
        %3381 = vmatmul.mubr.f32.gmra.mxu0 %v3116
        %v3382 = vpop.f32.mrf.mxu0
        %v3383 = vadd.f32 0.0, %v3382
        %v3384 = vpop.f32.mrf.mxu0
        %3385 = vmatprep.mubr.f32.mxu0 %v3212
        %3386 = vmatmul.mubr.f32.gmra.mxu0 %v3118
        %v3387 = vpop.f32.mrf.mxu0
        %v3388 = vadd.f32 0.0, %v3387
        %v3389 = vpop.f32.mrf.mxu0
        %3390 = vmatprep.mubr.f32.mxu0 %v3215
        %3391 = vmatmul.mubr.f32.gmra.mxu0 %v3120
        %v3392 = vpop.f32.mrf.mxu0
        %v3393 = vadd.f32 0.0, %v3392
        %v3394 = vpop.f32.mrf.mxu0
        %3395 = vmatprep.mubr.f32.mxu0 %v3218
        %3396 = vmatmul.mubr.f32.gmra.mxu0 %v3122
        %v3397 = vpop.f32.mrf.mxu0
        %v3398 = vadd.f32 0.0, %v3397
        %v3399 = vpop.f32.mrf.mxu0
        %3400 = vmatprep.mubr.f32.mxu0 %v3221
        %3401 = vmatmul.mubr.f32.gmra.mxu0 %v3124
        %v3402 = vpop.f32.mrf.mxu0
        %v3403 = vadd.f32 0.0, %v3402
        %v3404 = vpop.f32.mrf.mxu0
        %3405 = vmatprep.mubr.f32.mxu0 %v3224
        %3406 = vmatmul.mubr.f32.gmra.mxu0 %v3126
        %v3407 = vpop.f32.mrf.mxu0
        %v3408 = vadd.f32 0.0, %v3407
        %v3409 = vpop.f32.mrf.mxu0
        %3410 = vmatprep.mubr.f32.mxu0 %v3227
        %3411 = vmatmul.mubr.f32.gmra.mxu0 %v3128
        %v3412 = vpop.f32.mrf.mxu0
        %v3413 = vadd.f32 0.0, %v3412
        %v3414 = vpop.f32.mrf.mxu0
        %3415 = vmatprep.mubr.f32.mxu0 %v3230
        %3416 = vmatmul.mubr.f32.gmra.mxu0 %v3130
        %v3417 = vpop.f32.mrf.mxu0
        %v3418 = vadd.f32 0.0, %v3417
        %v3419 = vpop.f32.mrf.mxu0
        %3420 = vmatprep.mubr.f32.mxu0 %v3233
        %3421 = vmatmul.mubr.f32.gmra.mxu0 %v3132
        %v3422 = vpop.f32.mrf.mxu0
        %v3423 = vadd.f32 0.0, %v3422
        %v3424 = vpop.f32.mrf.mxu0
        %3425 = vmatprep.mubr.f32.mxu0 %v3236
        %3426 = vmatmul.mubr.f32.gmra.mxu0 %v3134
        %v3427 = vpop.f32.mrf.mxu0
        %v3428 = vadd.f32 0.0, %v3427
        %v3429 = vpop.f32.mrf.mxu0
        %3430 = vmatprep.mubr.f32.mxu0 %v3239
        %3431 = vmatmul.mubr.f32.gmra.mxu0 %v3136
        %v3432 = vpop.f32.mrf.mxu0
        %v3433 = vadd.f32 0.0, %v3432
        %v3434 = vpop.f32.mrf.mxu0
        %3435 = vmatprep.mubr.f32.mxu0 %v3242
        %3436 = vmatmul.mubr.f32.gmra.mxu0 %v3138
        %v3437 = vpop.f32.mrf.mxu0
        %v3438 = vadd.f32 0.0, %v3437
        %v3439 = vpop.f32.mrf.mxu0
        %3440 = vmatprep.mubr.f32.mxu0 %v3245
        %3441 = vmatmul.mubr.f32.gmra.mxu0 %v3140
        %v3442 = vpop.f32.mrf.mxu0
        %v3443 = vadd.f32 0.0, %v3442
        %v3444 = vpop.f32.mrf.mxu0
        %3445 = vmatprep.mubr.f32.mxu0 %v3248
        %3446 = vmatmul.mubr.f32.gmra.mxu0 %v3142
        %v3447 = vpop.f32.mrf.mxu0
        %v3448 = vadd.f32 0.0, %v3447
        %v3449 = vpop.f32.mrf.mxu0
        %3450 = vmatprep.mubr.f32.mxu0 %v3251
        %3451 = vmatmul.mubr.f32.gmra.mxu0 %v3144
        %v3452 = vpop.f32.mrf.mxu0
        %v3453 = vadd.f32 0.0, %v3452
        %v3454 = vpop.f32.mrf.mxu0
        %3455 = vmatprep.mubr.f32.mxu0 %v3254
        %3456 = vmatmul.mubr.f32.gmra.mxu0 %v3146
        %v3457 = vpop.f32.mrf.mxu0
        %v3458 = vadd.f32 0.0, %v3457
        %v3459 = vpop.f32.mrf.mxu0
        %3460 = vmatprep.mubr.f32.mxu0 %v3257
        %3461 = vmatmul.mubr.f32.gmra.mxu0 %v3148
        %v3462 = vpop.f32.mrf.mxu0
        %v3463 = vadd.f32 0.0, %v3462
        %v3464 = vpop.f32.mrf.mxu0
        %3465 = vmatprep.mubr.f32.mxu0 %v3260
        %3466 = vmatmul.mubr.f32.gmra.mxu0 %v3150
        %v3467 = vpop.f32.mrf.mxu0
        %v3468 = vadd.f32 0.0, %v3467
        %v3469 = vpop.f32.mrf.mxu0
        %3470 = vmatprep.mubr.f32.mxu0 %v3263
        %3471 = vmatmul.mubr.f32.gmra.mxu0 %v3152
        %v3472 = vpop.f32.mrf.mxu0
        %v3473 = vadd.f32 0.0, %v3472
        %v3474 = vpop.f32.mrf.mxu0
        %3475 = vmatprep.mubr.f32.mxu0 %v3266
        %3476 = vmatmul.mubr.f32.gmra.mxu0 %v3154
        %v3477 = vpop.f32.mrf.mxu0
        %v3478 = vadd.f32 0.0, %v3477
        %v3479 = vpop.f32.mrf.mxu0
        %3480 = vmatprep.mubr.f32.mxu0 %v3269
        %3481 = vmatmul.mubr.f32.gmra.mxu0 %v3156
        %v3482 = vpop.f32.mrf.mxu0
        %v3483 = vadd.f32 0.0, %v3482
        %v3484 = vpop.f32.mrf.mxu0
        %3485 = vmatprep.mubr.f32.mxu0 %v3272
        %3486 = vmatmul.mubr.f32.gmra.mxu0 %v3158
        %v3487 = vpop.f32.mrf.mxu0
        %v3488 = vadd.f32 0.0, %v3487
        %v3489 = vpop.f32.mrf.mxu0
        %3490 = vmatprep.mubr.f32.mxu0 %v3275
        %3491 = vmatmul.mubr.f32.gmra.mxu0 %v3160
        %v3492 = vpop.f32.mrf.mxu0
        %v3493 = vadd.f32 0.0, %v3492
        %v3494 = vpop.f32.mrf.mxu0
        %3495 = vmatprep.mubr.f32.mxu0 %v3278
        %3496 = vmatmul.mubr.f32.gmra.mxu0 %v3162
        %v3497 = vpop.f32.mrf.mxu0
        %v3498 = vadd.f32 0.0, %v3497
        %v3499 = vpop.f32.mrf.mxu0
        %3500 = vmatprep.mubr.f32.mxu0 %v3281
        %3501 = vmatmul.mubr.f32.gmra.mxu0 %v3164
        %v3502 = vpop.f32.mrf.mxu0
        %v3503 = vadd.f32 0.0, %v3502
        %v3504 = vpop.f32.mrf.mxu0
        %3505 = vmatprep.mubr.f32.mxu0 %v3284
        %3506 = vmatmul.mubr.f32.gmra.mxu0 %v3166
        %v3507 = vpop.f32.mrf.mxu0
        %v3508 = vadd.f32 0.0, %v3507
        %v3509 = vpop.f32.mrf.mxu0
        %3510 = vdwg.mxu0
        %s3511 = scalar_lea.vmem %s3, 168
        %v3512 = vld [vmem:[%s3511] sm:$0xff]
        %v3513 = vld [vmem:[%s3511 + $0x8] sm:$0xff]
        %v3514 = vld [vmem:[%s3511 + $0x10] sm:$0xff]
        %v3515 = vld [vmem:[%s3511 + $0x18] sm:$0xff]
        %v3516 = vld [vmem:[%s3511 + $0x20] sm:$0xff]
        %v3517 = vld [vmem:[%s3511 + $0x28] sm:$0xff]
        %v3518 = vld [vmem:[%s3511 + $0x30] sm:$0xff]
        %v3519 = vld [vmem:[%s3511 + $0x38] sm:$0xff]
        %v3520 = vld [vmem:[%s3511 + $0x40] sm:$0xff]
        %v3521 = vld [vmem:[%s3511 + $0x48] sm:$0xff]
        %v3522 = vld [vmem:[%s3511 + $0x50] sm:$0xff]
        %v3523 = vld [vmem:[%s3511 + $0x58] sm:$0xff]
        %v3524 = vld [vmem:[%s3511 + $0x60] sm:$0xff]
        %v3525 = vld [vmem:[%s3511 + $0x68] sm:$0xff]
        %v3526 = vld [vmem:[%s3511 + $0x70] sm:$0xff]
        %v3527 = vld [vmem:[%s3511 + $0x78] sm:$0xff]
        %v3528 = vld [vmem:[%s3511 + $0x80] sm:$0xff]
        %v3529 = vld [vmem:[%s3511 + $0x88] sm:$0xff]
        %v3530 = vld [vmem:[%s3511 + $0x90] sm:$0xff]
        %v3531 = vld [vmem:[%s3511 + $0x98] sm:$0xff]
        %v3532 = vld [vmem:[%s3511 + $0xa0] sm:$0xff]
        %3533 = vmatprep.subr.mxu0 0.0
        %3534 = vmatpush1.msra.mxu0 %v3527
        %3535 = vmatprep.subr.mxu0 0.0
        %3536 = vmatpush1.msra.mxu0 %v3526
        %3537 = vmatprep.subr.mxu0 0.0
        %3538 = vmatpush1.msra.mxu0 %v3525
        %3539 = vmatprep.subr.mxu0 0.0
        %3540 = vmatpush1.msra.mxu0 %v3524
        %3541 = vmatprep.subr.mxu0 0.0
        %3542 = vmatpush1.msra.mxu0 %v3523
        %3543 = vmatprep.subr.mxu0 0.0
        %3544 = vmatpush1.msra.mxu0 %v3522
        %3545 = vmatprep.subr.mxu0 0.0
        %3546 = vmatpush1.msra.mxu0 %v3521
        %3547 = vmatprep.subr.mxu0 0.0
        %3548 = vmatpush1.msra.mxu0 %v3520
        %3549 = vmatprep.subr.mxu0 0.0
        %3550 = vmatpush1.msra.mxu0 %v3519
        %3551 = vmatprep.subr.mxu0 0.0
        %3552 = vmatpush1.msra.mxu0 %v3518
        %3553 = vmatprep.subr.mxu0 0.0
        %3554 = vmatpush1.msra.mxu0 %v3517
        %3555 = vmatprep.subr.mxu0 0.0
        %3556 = vmatpush1.msra.mxu0 %v3516
        %3557 = vmatprep.subr.mxu0 0.0
        %3558 = vmatpush1.msra.mxu0 %v3515
        %3559 = vmatprep.subr.mxu0 0.0
        %3560 = vmatpush1.msra.mxu0 %v3514
        %3561 = vmatprep.subr.mxu0 0.0
        %3562 = vmatpush1.msra.mxu0 %v3513
        %3563 = vmatprep.subr.mxu0 0.0
        %3564 = vmatpush1.msra.mxu0 %v3512
        %3565 = vmatprep.subr.mxu0 0.0
        %3566 = vmatpush2.msra.mxu0 0.0
        %3567 = vmatprep.subr.mxu0 0.0
        %3568 = vmatpush2.msra.mxu0 0.0
        %3569 = vmatprep.subr.mxu0 0.0
        %3570 = vmatpush2.msra.mxu0 0.0
        %3571 = vmatprep.subr.mxu0 0.0
        %3572 = vmatpush2.msra.mxu0 0.0
        %3573 = vmatprep.subr.mxu0 0.0
        %3574 = vmatpush2.msra.mxu0 0.0
        %3575 = vmatprep.subr.mxu0 0.0
        %3576 = vmatpush2.msra.mxu0 0.0
        %3577 = vmatprep.subr.mxu0 0.0
        %3578 = vmatpush2.msra.mxu0 0.0
        %3579 = vmatprep.subr.mxu0 0.0
        %3580 = vmatpush2.msra.mxu0 0.0
        %3581 = vmatprep.subr.mxu0 0.0
        %3582 = vmatpush2.msra.mxu0 0.0
        %3583 = vmatprep.subr.mxu0 0.0
        %3584 = vmatpush2.msra.mxu0 0.0
        %3585 = vmatprep.subr.mxu0 0.0
        %3586 = vmatpush2.msra.mxu0 0.0
        %3587 = vmatprep.subr.mxu0 0.0
        %3588 = vmatpush2.msra.mxu0 %v3532
        %3589 = vmatprep.subr.mxu0 0.0
        %3590 = vmatpush2.msra.mxu0 %v3531
        %3591 = vmatprep.subr.mxu0 0.0
        %3592 = vmatpush2.msra.mxu0 %v3530
        %3593 = vmatprep.subr.mxu0 0.0
        %3594 = vmatpush2.msra.mxu0 %v3529
        %3595 = vmatprep.subr.mxu0 0.0
        %3596 = vmatpush2.msra.mxu0 %v3528
        %3597 = vmatprep.mubr.f32.mxu0 %v3191
        %3598 = vmatmul.mubr.f32.gmra.mxu0 %v3104
        %v3599 = vpop.f32.mrf.mxu0
        %v3600 = vadd.f32 0.0, %v3599
        %v3601 = vpop.f32.mrf.mxu0
        %3602 = vmatprep.mubr.f32.mxu0 %v3194
        %3603 = vmatmul.mubr.f32.gmra.mxu0 %v3106
        %v3604 = vpop.f32.mrf.mxu0
        %v3605 = vadd.f32 0.0, %v3604
        %v3606 = vpop.f32.mrf.mxu0
        %3607 = vmatprep.mubr.f32.mxu0 %v3197
        %3608 = vmatmul.mubr.f32.gmra.mxu0 %v3108
        %v3609 = vpop.f32.mrf.mxu0
        %v3610 = vadd.f32 0.0, %v3609
        %v3611 = vpop.f32.mrf.mxu0
        %3612 = vmatprep.mubr.f32.mxu0 %v3200
        %3613 = vmatmul.mubr.f32.gmra.mxu0 %v3110
        %v3614 = vpop.f32.mrf.mxu0
        %v3615 = vadd.f32 0.0, %v3614
        %v3616 = vpop.f32.mrf.mxu0
        %3617 = vmatprep.mubr.f32.mxu0 %v3203
        %3618 = vmatmul.mubr.f32.gmra.mxu0 %v3112
        %v3619 = vpop.f32.mrf.mxu0
        %v3620 = vadd.f32 0.0, %v3619
        %v3621 = vpop.f32.mrf.mxu0
        %3622 = vmatprep.mubr.f32.mxu0 %v3206
        %3623 = vmatmul.mubr.f32.gmra.mxu0 %v3114
        %v3624 = vpop.f32.mrf.mxu0
        %v3625 = vadd.f32 0.0, %v3624
        %v3626 = vpop.f32.mrf.mxu0
        %3627 = vmatprep.mubr.f32.mxu0 %v3209
        %3628 = vmatmul.mubr.f32.gmra.mxu0 %v3116
        %v3629 = vpop.f32.mrf.mxu0
        %v3630 = vadd.f32 0.0, %v3629
        %v3631 = vpop.f32.mrf.mxu0
        %3632 = vmatprep.mubr.f32.mxu0 %v3212
        %3633 = vmatmul.mubr.f32.gmra.mxu0 %v3118
        %v3634 = vpop.f32.mrf.mxu0
        %v3635 = vadd.f32 0.0, %v3634
        %v3636 = vpop.f32.mrf.mxu0
        %3637 = vmatprep.mubr.f32.mxu0 %v3215
        %3638 = vmatmul.mubr.f32.gmra.mxu0 %v3120
        %v3639 = vpop.f32.mrf.mxu0
        %v3640 = vadd.f32 0.0, %v3639
        %v3641 = vpop.f32.mrf.mxu0
        %3642 = vmatprep.mubr.f32.mxu0 %v3218
        %3643 = vmatmul.mubr.f32.gmra.mxu0 %v3122
        %v3644 = vpop.f32.mrf.mxu0
        %v3645 = vadd.f32 0.0, %v3644
        %v3646 = vpop.f32.mrf.mxu0
        %3647 = vmatprep.mubr.f32.mxu0 %v3221
        %3648 = vmatmul.mubr.f32.gmra.mxu0 %v3124
        %v3649 = vpop.f32.mrf.mxu0
        %v3650 = vadd.f32 0.0, %v3649
        %v3651 = vpop.f32.mrf.mxu0
        %3652 = vmatprep.mubr.f32.mxu0 %v3224
        %3653 = vmatmul.mubr.f32.gmra.mxu0 %v3126
        %v3654 = vpop.f32.mrf.mxu0
        %v3655 = vadd.f32 0.0, %v3654
        %v3656 = vpop.f32.mrf.mxu0
        %3657 = vmatprep.mubr.f32.mxu0 %v3227
        %3658 = vmatmul.mubr.f32.gmra.mxu0 %v3128
        %v3659 = vpop.f32.mrf.mxu0
        %v3660 = vadd.f32 0.0, %v3659
        %v3661 = vpop.f32.mrf.mxu0
        %3662 = vmatprep.mubr.f32.mxu0 %v3230
        %3663 = vmatmul.mubr.f32.gmra.mxu0 %v3130
        %v3664 = vpop.f32.mrf.mxu0
        %v3665 = vadd.f32 0.0, %v3664
        %v3666 = vpop.f32.mrf.mxu0
        %3667 = vmatprep.mubr.f32.mxu0 %v3233
        %3668 = vmatmul.mubr.f32.gmra.mxu0 %v3132
        %v3669 = vpop.f32.mrf.mxu0
        %v3670 = vadd.f32 0.0, %v3669
        %v3671 = vpop.f32.mrf.mxu0
        %3672 = vmatprep.mubr.f32.mxu0 %v3236
        %3673 = vmatmul.mubr.f32.gmra.mxu0 %v3134
        %v3674 = vpop.f32.mrf.mxu0
        %v3675 = vadd.f32 0.0, %v3674
        %v3676 = vpop.f32.mrf.mxu0
        %3677 = vmatprep.mubr.f32.mxu0 %v3239
        %3678 = vmatmul.mubr.f32.gmra.mxu0 %v3136
        %v3679 = vpop.f32.mrf.mxu0
        %v3680 = vadd.f32 0.0, %v3679
        %v3681 = vpop.f32.mrf.mxu0
        %3682 = vmatprep.mubr.f32.mxu0 %v3242
        %3683 = vmatmul.mubr.f32.gmra.mxu0 %v3138
        %v3684 = vpop.f32.mrf.mxu0
        %v3685 = vadd.f32 0.0, %v3684
        %v3686 = vpop.f32.mrf.mxu0
        %3687 = vmatprep.mubr.f32.mxu0 %v3245
        %3688 = vmatmul.mubr.f32.gmra.mxu0 %v3140
        %v3689 = vpop.f32.mrf.mxu0
        %v3690 = vadd.f32 0.0, %v3689
        %v3691 = vpop.f32.mrf.mxu0
        %3692 = vmatprep.mubr.f32.mxu0 %v3248
        %3693 = vmatmul.mubr.f32.gmra.mxu0 %v3142
        %v3694 = vpop.f32.mrf.mxu0
        %v3695 = vadd.f32 0.0, %v3694
        %v3696 = vpop.f32.mrf.mxu0
        %3697 = vmatprep.mubr.f32.mxu0 %v3251
        %3698 = vmatmul.mubr.f32.gmra.mxu0 %v3144
        %v3699 = vpop.f32.mrf.mxu0
        %v3700 = vadd.f32 0.0, %v3699
        %v3701 = vpop.f32.mrf.mxu0
        %3702 = vmatprep.mubr.f32.mxu0 %v3254
        %3703 = vmatmul.mubr.f32.gmra.mxu0 %v3146
        %v3704 = vpop.f32.mrf.mxu0
        %v3705 = vadd.f32 0.0, %v3704
        %v3706 = vpop.f32.mrf.mxu0
        %3707 = vmatprep.mubr.f32.mxu0 %v3257
        %3708 = vmatmul.mubr.f32.gmra.mxu0 %v3148
        %v3709 = vpop.f32.mrf.mxu0
        %v3710 = vadd.f32 0.0, %v3709
        %v3711 = vpop.f32.mrf.mxu0
        %3712 = vmatprep.mubr.f32.mxu0 %v3260
        %3713 = vmatmul.mubr.f32.gmra.mxu0 %v3150
        %v3714 = vpop.f32.mrf.mxu0
        %v3715 = vadd.f32 0.0, %v3714
        %v3716 = vpop.f32.mrf.mxu0
        %3717 = vmatprep.mubr.f32.mxu0 %v3263
        %3718 = vmatmul.mubr.f32.gmra.mxu0 %v3152
        %v3719 = vpop.f32.mrf.mxu0
        %v3720 = vadd.f32 0.0, %v3719
        %v3721 = vpop.f32.mrf.mxu0
        %3722 = vmatprep.mubr.f32.mxu0 %v3266
        %3723 = vmatmul.mubr.f32.gmra.mxu0 %v3154
        %v3724 = vpop.f32.mrf.mxu0
        %v3725 = vadd.f32 0.0, %v3724
        %v3726 = vpop.f32.mrf.mxu0
        %3727 = vmatprep.mubr.f32.mxu0 %v3269
        %3728 = vmatmul.mubr.f32.gmra.mxu0 %v3156
        %v3729 = vpop.f32.mrf.mxu0
        %v3730 = vadd.f32 0.0, %v3729
        %v3731 = vpop.f32.mrf.mxu0
        %3732 = vmatprep.mubr.f32.mxu0 %v3272
        %3733 = vmatmul.mubr.f32.gmra.mxu0 %v3158
        %v3734 = vpop.f32.mrf.mxu0
        %v3735 = vadd.f32 0.0, %v3734
        %v3736 = vpop.f32.mrf.mxu0
        %3737 = vmatprep.mubr.f32.mxu0 %v3275
        %3738 = vmatmul.mubr.f32.gmra.mxu0 %v3160
        %v3739 = vpop.f32.mrf.mxu0
        %v3740 = vadd.f32 0.0, %v3739
        %v3741 = vpop.f32.mrf.mxu0
        %3742 = vmatprep.mubr.f32.mxu0 %v3278
        %3743 = vmatmul.mubr.f32.gmra.mxu0 %v3162
        %v3744 = vpop.f32.mrf.mxu0
        %v3745 = vadd.f32 0.0, %v3744
        %v3746 = vpop.f32.mrf.mxu0
        %3747 = vmatprep.mubr.f32.mxu0 %v3281
        %3748 = vmatmul.mubr.f32.gmra.mxu0 %v3164
        %v3749 = vpop.f32.mrf.mxu0
        %v3750 = vadd.f32 0.0, %v3749
        %v3751 = vpop.f32.mrf.mxu0
        %3752 = vmatprep.mubr.f32.mxu0 %v3284
        %3753 = vmatmul.mubr.f32.gmra.mxu0 %v3166
        %v3754 = vpop.f32.mrf.mxu0
        %v3755 = vadd.f32 0.0, %v3754
        %v3756 = vpop.f32.mrf.mxu0
        %3757 = vdwg.mxu0
        %v3758 = vmax.f32 %v3353, %v3600
        %v3759 = vmax.f32 %v3358, %v3605
        %v3760 = vmax.f32 %v3363, %v3610
        %v3761 = vmax.f32 %v3368, %v3615
        %v3762 = vmax.f32 %v3373, %v3620
        %v3763 = vmax.f32 %v3378, %v3625
        %v3764 = vmax.f32 %v3383, %v3630
        %v3765 = vmax.f32 %v3388, %v3635
        %v3766 = vmax.f32 %v3393, %v3640
        %v3767 = vmax.f32 %v3398, %v3645
        %v3768 = vmax.f32 %v3403, %v3650
        %v3769 = vmax.f32 %v3408, %v3655
        %v3770 = vmax.f32 %v3413, %v3660
        %v3771 = vmax.f32 %v3418, %v3665
        %v3772 = vmax.f32 %v3423, %v3670
        %v3773 = vmax.f32 %v3428, %v3675
        %v3774 = vmax.f32 %v3433, %v3680
        %v3775 = vmax.f32 %v3438, %v3685
        %v3776 = vmax.f32 %v3443, %v3690
        %v3777 = vmax.f32 %v3448, %v3695
        %v3778 = vmax.f32 %v3453, %v3700
        %v3779 = vmax.f32 %v3458, %v3705
        %v3780 = vmax.f32 %v3463, %v3710
        %v3781 = vmax.f32 %v3468, %v3715
        %v3782 = vmax.f32 %v3473, %v3720
        %v3783 = vmax.f32 %v3478, %v3725
        %v3784 = vmax.f32 %v3483, %v3730
        %v3785 = vmax.f32 %v3488, %v3735
        %v3786 = vmax.f32 %v3493, %v3740
        %v3787 = vmax.f32 %v3498, %v3745
        %v3788 = vmax.f32 %v3503, %v3750
        %v3789 = vmax.f32 %v3508, %v3755
        %v3790 = vld [vmem:[%s4] sm:$0xff]
        %v3791 = vld [vmem:[%s4 + $0x8] sm:$0xff]
        %v3792 = vld [vmem:[%s4 + $0x10] sm:$0xff]
        %v3793 = vld [vmem:[%s4 + $0x18] sm:$0xff]
        %v3794 = vld [vmem:[%s4 + $0x20] sm:$0xff]
        %v3795 = vld [vmem:[%s4 + $0x28] sm:$0xff]
        %v3796 = vld [vmem:[%s4 + $0x30] sm:$0xff]
        %v3797 = vld [vmem:[%s4 + $0x38] sm:$0xff]
        %v3798 = vld [vmem:[%s4 + $0x40] sm:$0xff]
        %v3799 = vld [vmem:[%s4 + $0x48] sm:$0xff]
        %v3800 = vld [vmem:[%s4 + $0x50] sm:$0xff]
        %v3801 = vld [vmem:[%s4 + $0x58] sm:$0xff]
        %v3802 = vld [vmem:[%s4 + $0x60] sm:$0xff]
        %v3803 = vld [vmem:[%s4 + $0x68] sm:$0xff]
        %v3804 = vld [vmem:[%s4 + $0x70] sm:$0xff]
        %v3805 = vld [vmem:[%s4 + $0x78] sm:$0xff]
        %v3806 = vld [vmem:[%s4 + $0x80] sm:$0xff]
        %v3807 = vld [vmem:[%s4 + $0x88] sm:$0xff]
        %v3808 = vld [vmem:[%s4 + $0x90] sm:$0xff]
        %v3809 = vld [vmem:[%s4 + $0x98] sm:$0xff]
        %v3810 = vld [vmem:[%s4 + $0xa0] sm:$0xf]
        %v3811 = vld [vmem:[%s4 + $0xa8] sm:$0xf]
        %s3812 = scalar_lea.vmem %s4, 176
        %v3813 = vld [vmem:[%s3812] sm:$0xff]
        %v3814 = vld [vmem:[%s3812 + $0x8] sm:$0xff]
        %v3815 = vld [vmem:[%s3812 + $0x10] sm:$0xff]
        %v3816 = vld [vmem:[%s3812 + $0x18] sm:$0xff]
        %v3817 = vld [vmem:[%s3812 + $0x20] sm:$0xff]
        %v3818 = vld [vmem:[%s3812 + $0x28] sm:$0xff]
        %v3819 = vld [vmem:[%s3812 + $0x30] sm:$0xff]
        %v3820 = vld [vmem:[%s3812 + $0x38] sm:$0xff]
        %v3821 = vld [vmem:[%s3812 + $0x40] sm:$0xff]
        %v3822 = vld [vmem:[%s3812 + $0x48] sm:$0xff]
        %v3823 = vld [vmem:[%s3812 + $0x50] sm:$0xff]
        %v3824 = vld [vmem:[%s3812 + $0x58] sm:$0xff]
        %v3825 = vld [vmem:[%s3812 + $0x60] sm:$0xff]
        %v3826 = vld [vmem:[%s3812 + $0x68] sm:$0xff]
        %v3827 = vld [vmem:[%s3812 + $0x70] sm:$0xff]
        %v3828 = vld [vmem:[%s3812 + $0x78] sm:$0xff]
        %v3829 = vld [vmem:[%s3812 + $0x80] sm:$0xff]
        %v3830 = vld [vmem:[%s3812 + $0x88] sm:$0xff]
        %v3831 = vld [vmem:[%s3812 + $0x90] sm:$0xff]
        %v3832 = vld [vmem:[%s3812 + $0x98] sm:$0xff]
        %v3833 = vld [vmem:[%s3812 + $0xa0] sm:$0xf]
        %v3834 = vld [vmem:[%s3812 + $0xa8] sm:$0xf]
        %v3866 = vrot.slane %v3758, 2
        %v3867 = vrot.slane %v3759, 2
        %v3868 = vsel %vm1313, %v3866, %v3867
        %v3869 = vrot.slane %v3760, 2
        %v3870 = vsel %vm1313, %v3867, %v3869
        %v3871 = vrot.slane %v3761, 2
        %v3872 = vsel %vm1313, %v3869, %v3871
        %v3873 = vrot.slane %v3762, 2
        %v3874 = vsel %vm1313, %v3871, %v3873
        %v3875 = vrot.slane %v3763, 2
        %v3876 = vsel %vm1313, %v3873, %v3875
        %v3877 = vrot.slane %v3764, 2
        %v3878 = vsel %vm1313, %v3875, %v3877
        %v3879 = vrot.slane %v3765, 2
        %v3880 = vsel %vm1313, %v3877, %v3879
        %v3881 = vrot.slane %v3766, 2
        %v3882 = vsel %vm1313, %v3879, %v3881
        %v3883 = vrot.slane %v3767, 2
        %v3884 = vsel %vm1313, %v3881, %v3883
        %v3885 = vrot.slane %v3768, 2
        %v3886 = vsel %vm1313, %v3883, %v3885
        %v3887 = vrot.slane %v3769, 2
        %v3888 = vsel %vm1313, %v3885, %v3887
        %v3889 = vrot.slane %v3770, 2
        %v3890 = vsel %vm1313, %v3887, %v3889
        %v3891 = vrot.slane %v3771, 2
        %v3892 = vsel %vm1313, %v3889, %v3891
        %v3893 = vrot.slane %v3772, 2
        %v3894 = vsel %vm1313, %v3891, %v3893
        %v3895 = vrot.slane %v3773, 2
        %v3896 = vsel %vm1313, %v3893, %v3895
        %v3897 = vrot.slane %v3774, 2
        %v3898 = vsel %vm1313, %v3895, %v3897
        %v3899 = vrot.slane %v3775, 2
        %v3900 = vsel %vm1313, %v3897, %v3899
        %v3901 = vrot.slane %v3776, 2
        %v3902 = vsel %vm1313, %v3899, %v3901
        %v3903 = vrot.slane %v3777, 2
        %v3904 = vsel %vm1313, %v3901, %v3903
        %v3905 = vrot.slane %v3778, 2
        %v3906 = vsel %vm1313, %v3903, %v3905
        %v3907 = vrot.slane %v3779, 2
        %v3908 = vsel %vm1313, %v3905, %v3907
        %v3909 = vrot.slane %v3780, 2
        %v3910 = vsel %vm1313, %v3907, %v3909
        %v3911 = vrot.slane %v3781, 2
        %v3912 = vsel %vm1313, %v3909, %v3911
        %v3913 = vrot.slane %v3782, 2
        %v3914 = vsel %vm1313, %v3911, %v3913
        %v3915 = vrot.slane %v3783, 2
        %v3916 = vsel %vm1313, %v3913, %v3915
        %v3917 = vrot.slane %v3784, 2
        %v3918 = vsel %vm1313, %v3915, %v3917
        %v3919 = vrot.slane %v3785, 2
        %v3920 = vsel %vm1313, %v3917, %v3919
        %v3921 = vrot.slane %v3786, 2
        %v3922 = vsel %vm1313, %v3919, %v3921
        %v3923 = vrot.slane %v3787, 2
        %v3924 = vsel %vm1313, %v3921, %v3923
        %v3925 = vrot.slane %v3788, 2
        %v3926 = vsel %vm1313, %v3923, %v3925
        %vm3927 = vcmask 687104
        %v3928 = vsel %vm3927, %v3868, 0
        %v3930 = vsel %vm3927, %v3870, 0
        %v3932 = vsel %vm3927, %v3872, 0
        %v3934 = vsel %vm3927, %v3874, 0
        %v3936 = vsel %vm3927, %v3876, 0
        %v3938 = vsel %vm3927, %v3878, 0
        %v3940 = vsel %vm3927, %v3880, 0
        %v3942 = vsel %vm3927, %v3882, 0
        %v3944 = vsel %vm3927, %v3884, 0
        %v3946 = vsel %vm3927, %v3886, 0
        %v3948 = vsel %vm3927, %v3888, 0
        %v3950 = vsel %vm3927, %v3890, 0
        %v3952 = vsel %vm3927, %v3892, 0
        %v3954 = vsel %vm3927, %v3894, 0
        %v3956 = vsel %vm3927, %v3896, 0
        %v3958 = vsel %vm3927, %v3898, 0
        %v3960 = vsel %vm3927, %v3900, 0
        %v3962 = vsel %vm3927, %v3902, 0
        %v3964 = vsel %vm3927, %v3904, 0
        %v3966 = vsel %vm3927, %v3906, 0
        %v3968 = vsel %vm3927, %v3908, 0
        %v3970 = vsel %vm3927, %v3910, 0
        %v3972 = vsel %vm3927, %v3912, 0
        %v3974 = vsel %vm3927, %v3914, 0
        %v3976 = vsel %vm3927, %v3916, 0
        %v3978 = vsel %vm3927, %v3918, 0
        %v3980 = vsel %vm3927, %v3920, 0
        %v3982 = vsel %vm3927, %v3922, 0
        %v3984 = vsel %vm3927, %v3924, 0
        %v3986 = vsel %vm3927, %v3926, 0
        %v3988 = vsel %vm3927, %v3925, 0
        %v3991 = vsel %vm2261, %v3833, 0
        %v3994 = vsel %vm2261, %v3834, 0
        %3996 = vmatprep.subr.mxu0 0.0
        %3997 = vmatpush1.msra.mxu0 0.0
        %3998 = vmatprep.subr.mxu0 0.0
        %3999 = vmatpush1.msra.mxu0 0.0
        %4000 = vmatprep.subr.mxu0 0.0
        %4001 = vmatpush1.msra.mxu0 0.0
        %4002 = vmatprep.subr.mxu0 0.0
        %4003 = vmatpush1.msra.mxu0 0.0
        %4004 = vmatprep.subr.mxu0 0.0
        %4005 = vmatpush1.msra.mxu0 0.0
        %4006 = vmatprep.subr.mxu0 %v3994
        %4007 = vmatpush1.msra.mxu0 %v3991
        %4008 = vmatprep.subr.mxu0 %v3832
        %4009 = vmatpush1.msra.mxu0 %v3831
        %4010 = vmatprep.subr.mxu0 %v3830
        %4011 = vmatpush1.msra.mxu0 %v3829
        %4012 = vmatprep.subr.mxu0 %v3828
        %4013 = vmatpush1.msra.mxu0 %v3827
        %4014 = vmatprep.subr.mxu0 %v3826
        %4015 = vmatpush1.msra.mxu0 %v3825
        %4016 = vmatprep.subr.mxu0 %v3824
        %4017 = vmatpush1.msra.mxu0 %v3823
        %4018 = vmatprep.subr.mxu0 %v3822
        %4019 = vmatpush1.msra.mxu0 %v3821
        %4020 = vmatprep.subr.mxu0 %v3820
        %4021 = vmatpush1.msra.mxu0 %v3819
        %4022 = vmatprep.subr.mxu0 %v3818
        %4023 = vmatpush1.msra.mxu0 %v3817
        %4024 = vmatprep.subr.mxu0 %v3816
        %4025 = vmatpush1.msra.mxu0 %v3815
        %4026 = vmatprep.subr.mxu0 %v3814
        %4027 = vmatpush1.msra.mxu0 %v3813
        %4028 = vmatprep.subr.mxu0 0.0
        %4029 = vmatpush2.msra.mxu0 0.0
        %4030 = vmatprep.subr.mxu0 0.0
        %4031 = vmatpush2.msra.mxu0 0.0
        %4032 = vmatprep.subr.mxu0 0.0
        %4033 = vmatpush2.msra.mxu0 0.0
        %4034 = vmatprep.subr.mxu0 0.0
        %4035 = vmatpush2.msra.mxu0 0.0
        %4036 = vmatprep.subr.mxu0 0.0
        %4037 = vmatpush2.msra.mxu0 0.0
        %4038 = vmatprep.subr.mxu0 0.0
        %4039 = vmatpush2.msra.mxu0 0.0
        %4040 = vmatprep.subr.mxu0 0.0
        %4041 = vmatpush2.msra.mxu0 0.0
        %4042 = vmatprep.subr.mxu0 0.0
        %4043 = vmatpush2.msra.mxu0 0.0
        %4044 = vmatprep.subr.mxu0 0.0
        %4045 = vmatpush2.msra.mxu0 0.0
        %4046 = vmatprep.subr.mxu0 0.0
        %4047 = vmatpush2.msra.mxu0 0.0
        %4048 = vmatprep.subr.mxu0 0.0
        %4049 = vmatpush2.msra.mxu0 0.0
        %4050 = vmatprep.subr.mxu0 0.0
        %4051 = vmatpush2.msra.mxu0 0.0
        %4052 = vmatprep.subr.mxu0 0.0
        %4053 = vmatpush2.msra.mxu0 0.0
        %4054 = vmatprep.subr.mxu0 0.0
        %4055 = vmatpush2.msra.mxu0 0.0
        %4056 = vmatprep.subr.mxu0 0.0
        %4057 = vmatpush2.msra.mxu0 0.0
        %4058 = vmatprep.subr.mxu0 0.0
        %4059 = vmatpush2.msra.mxu0 0.0
        %4060 = vmatprep.mubr.f32.mxu0 0.0
        %4061 = vmatmul.mubr.f32.gmra.mxu0 %v3928
        %v4062 = vpop.f32.mrf.mxu0
        %v4063 = vadd.f32 0.0, %v4062
        %v4064 = vpop.f32.mrf.mxu0
        %v4065 = vadd.f32 0.0, %v4064
        %4066 = vmatprep.mubr.f32.mxu0 0.0
        %4067 = vmatmul.mubr.f32.gmra.mxu0 %v3930
        %v4068 = vpop.f32.mrf.mxu0
        %v4069 = vadd.f32 0.0, %v4068
        %v4070 = vpop.f32.mrf.mxu0
        %v4071 = vadd.f32 0.0, %v4070
        %4072 = vmatprep.mubr.f32.mxu0 0.0
        %4073 = vmatmul.mubr.f32.gmra.mxu0 %v3932
        %v4074 = vpop.f32.mrf.mxu0
        %v4075 = vadd.f32 0.0, %v4074
        %v4076 = vpop.f32.mrf.mxu0
        %v4077 = vadd.f32 0.0, %v4076
        %4078 = vmatprep.mubr.f32.mxu0 0.0
        %4079 = vmatmul.mubr.f32.gmra.mxu0 %v3934
        %v4080 = vpop.f32.mrf.mxu0
        %v4081 = vadd.f32 0.0, %v4080
        %v4082 = vpop.f32.mrf.mxu0
        %v4083 = vadd.f32 0.0, %v4082
        %4084 = vmatprep.mubr.f32.mxu0 0.0
        %4085 = vmatmul.mubr.f32.gmra.mxu0 %v3936
        %v4086 = vpop.f32.mrf.mxu0
        %v4087 = vadd.f32 0.0, %v4086
        %v4088 = vpop.f32.mrf.mxu0
        %v4089 = vadd.f32 0.0, %v4088
        %4090 = vmatprep.mubr.f32.mxu0 0.0
        %4091 = vmatmul.mubr.f32.gmra.mxu0 %v3938
        %v4092 = vpop.f32.mrf.mxu0
        %v4093 = vadd.f32 0.0, %v4092
        %v4094 = vpop.f32.mrf.mxu0
        %v4095 = vadd.f32 0.0, %v4094
        %4096 = vmatprep.mubr.f32.mxu0 0.0
        %4097 = vmatmul.mubr.f32.gmra.mxu0 %v3940
        %v4098 = vpop.f32.mrf.mxu0
        %v4099 = vadd.f32 0.0, %v4098
        %v4100 = vpop.f32.mrf.mxu0
        %v4101 = vadd.f32 0.0, %v4100
        %4102 = vmatprep.mubr.f32.mxu0 0.0
        %4103 = vmatmul.mubr.f32.gmra.mxu0 %v3942
        %v4104 = vpop.f32.mrf.mxu0
        %v4105 = vadd.f32 0.0, %v4104
        %v4106 = vpop.f32.mrf.mxu0
        %v4107 = vadd.f32 0.0, %v4106
        %4108 = vmatprep.mubr.f32.mxu0 0.0
        %4109 = vmatmul.mubr.f32.gmra.mxu0 %v3944
        %v4110 = vpop.f32.mrf.mxu0
        %v4111 = vadd.f32 0.0, %v4110
        %v4112 = vpop.f32.mrf.mxu0
        %v4113 = vadd.f32 0.0, %v4112
        %4114 = vmatprep.mubr.f32.mxu0 0.0
        %4115 = vmatmul.mubr.f32.gmra.mxu0 %v3946
        %v4116 = vpop.f32.mrf.mxu0
        %v4117 = vadd.f32 0.0, %v4116
        %v4118 = vpop.f32.mrf.mxu0
        %v4119 = vadd.f32 0.0, %v4118
        %4120 = vmatprep.mubr.f32.mxu0 0.0
        %4121 = vmatmul.mubr.f32.gmra.mxu0 %v3948
        %v4122 = vpop.f32.mrf.mxu0
        %v4123 = vadd.f32 0.0, %v4122
        %v4124 = vpop.f32.mrf.mxu0
        %v4125 = vadd.f32 0.0, %v4124
        %4126 = vmatprep.mubr.f32.mxu0 0.0
        %4127 = vmatmul.mubr.f32.gmra.mxu0 %v3950
        %v4128 = vpop.f32.mrf.mxu0
        %v4129 = vadd.f32 0.0, %v4128
        %v4130 = vpop.f32.mrf.mxu0
        %v4131 = vadd.f32 0.0, %v4130
        %4132 = vmatprep.mubr.f32.mxu0 0.0
        %4133 = vmatmul.mubr.f32.gmra.mxu0 %v3952
        %v4134 = vpop.f32.mrf.mxu0
        %v4135 = vadd.f32 0.0, %v4134
        %v4136 = vpop.f32.mrf.mxu0
        %v4137 = vadd.f32 0.0, %v4136
        %4138 = vmatprep.mubr.f32.mxu0 0.0
        %4139 = vmatmul.mubr.f32.gmra.mxu0 %v3954
        %v4140 = vpop.f32.mrf.mxu0
        %v4141 = vadd.f32 0.0, %v4140
        %v4142 = vpop.f32.mrf.mxu0
        %v4143 = vadd.f32 0.0, %v4142
        %4144 = vmatprep.mubr.f32.mxu0 0.0
        %4145 = vmatmul.mubr.f32.gmra.mxu0 %v3956
        %v4146 = vpop.f32.mrf.mxu0
        %v4147 = vadd.f32 0.0, %v4146
        %v4148 = vpop.f32.mrf.mxu0
        %v4149 = vadd.f32 0.0, %v4148
        %4150 = vmatprep.mubr.f32.mxu0 0.0
        %4151 = vmatmul.mubr.f32.gmra.mxu0 %v3958
        %v4152 = vpop.f32.mrf.mxu0
        %v4153 = vadd.f32 0.0, %v4152
        %v4154 = vpop.f32.mrf.mxu0
        %v4155 = vadd.f32 0.0, %v4154
        %4156 = vmatprep.mubr.f32.mxu0 0.0
        %4157 = vmatmul.mubr.f32.gmra.mxu0 %v3960
        %v4158 = vpop.f32.mrf.mxu0
        %v4159 = vadd.f32 0.0, %v4158
        %v4160 = vpop.f32.mrf.mxu0
        %v4161 = vadd.f32 0.0, %v4160
        %4162 = vmatprep.mubr.f32.mxu0 0.0
        %4163 = vmatmul.mubr.f32.gmra.mxu0 %v3962
        %v4164 = vpop.f32.mrf.mxu0
        %v4165 = vadd.f32 0.0, %v4164
        %v4166 = vpop.f32.mrf.mxu0
        %v4167 = vadd.f32 0.0, %v4166
        %4168 = vmatprep.mubr.f32.mxu0 0.0
        %4169 = vmatmul.mubr.f32.gmra.mxu0 %v3964
        %v4170 = vpop.f32.mrf.mxu0
        %v4171 = vadd.f32 0.0, %v4170
        %v4172 = vpop.f32.mrf.mxu0
        %v4173 = vadd.f32 0.0, %v4172
        %4174 = vmatprep.mubr.f32.mxu0 0.0
        %4175 = vmatmul.mubr.f32.gmra.mxu0 %v3966
        %v4176 = vpop.f32.mrf.mxu0
        %v4177 = vadd.f32 0.0, %v4176
        %v4178 = vpop.f32.mrf.mxu0
        %v4179 = vadd.f32 0.0, %v4178
        %4180 = vmatprep.mubr.f32.mxu0 0.0
        %4181 = vmatmul.mubr.f32.gmra.mxu0 %v3968
        %v4182 = vpop.f32.mrf.mxu0
        %v4183 = vadd.f32 0.0, %v4182
        %v4184 = vpop.f32.mrf.mxu0
        %v4185 = vadd.f32 0.0, %v4184
        %4186 = vmatprep.mubr.f32.mxu0 0.0
        %4187 = vmatmul.mubr.f32.gmra.mxu0 %v3970
        %v4188 = vpop.f32.mrf.mxu0
        %v4189 = vadd.f32 0.0, %v4188
        %v4190 = vpop.f32.mrf.mxu0
        %v4191 = vadd.f32 0.0, %v4190
        %4192 = vmatprep.mubr.f32.mxu0 0.0
        %4193 = vmatmul.mubr.f32.gmra.mxu0 %v3972
        %v4194 = vpop.f32.mrf.mxu0
        %v4195 = vadd.f32 0.0, %v4194
        %v4196 = vpop.f32.mrf.mxu0
        %v4197 = vadd.f32 0.0, %v4196
        %4198 = vmatprep.mubr.f32.mxu0 0.0
        %4199 = vmatmul.mubr.f32.gmra.mxu0 %v3974
        %v4200 = vpop.f32.mrf.mxu0
        %v4201 = vadd.f32 0.0, %v4200
        %v4202 = vpop.f32.mrf.mxu0
        %v4203 = vadd.f32 0.0, %v4202
        %4204 = vmatprep.mubr.f32.mxu0 0.0
        %4205 = vmatmul.mubr.f32.gmra.mxu0 %v3976
        %v4206 = vpop.f32.mrf.mxu0
        %v4207 = vadd.f32 0.0, %v4206
        %v4208 = vpop.f32.mrf.mxu0
        %v4209 = vadd.f32 0.0, %v4208
        %4210 = vmatprep.mubr.f32.mxu0 0.0
        %4211 = vmatmul.mubr.f32.gmra.mxu0 %v3978
        %v4212 = vpop.f32.mrf.mxu0
        %v4213 = vadd.f32 0.0, %v4212
        %v4214 = vpop.f32.mrf.mxu0
        %v4215 = vadd.f32 0.0, %v4214
        %4216 = vmatprep.mubr.f32.mxu0 0.0
        %4217 = vmatmul.mubr.f32.gmra.mxu0 %v3980
        %v4218 = vpop.f32.mrf.mxu0
        %v4219 = vadd.f32 0.0, %v4218
        %v4220 = vpop.f32.mrf.mxu0
        %v4221 = vadd.f32 0.0, %v4220
        %4222 = vmatprep.mubr.f32.mxu0 0.0
        %4223 = vmatmul.mubr.f32.gmra.mxu0 %v3982
        %v4224 = vpop.f32.mrf.mxu0
        %v4225 = vadd.f32 0.0, %v4224
        %v4226 = vpop.f32.mrf.mxu0
        %v4227 = vadd.f32 0.0, %v4226
        %4228 = vmatprep.mubr.f32.mxu0 0.0
        %4229 = vmatmul.mubr.f32.gmra.mxu0 %v3984
        %v4230 = vpop.f32.mrf.mxu0
        %v4231 = vadd.f32 0.0, %v4230
        %v4232 = vpop.f32.mrf.mxu0
        %v4233 = vadd.f32 0.0, %v4232
        %4234 = vmatprep.mubr.f32.mxu0 0.0
        %4235 = vmatmul.mubr.f32.gmra.mxu0 %v3986
        %v4236 = vpop.f32.mrf.mxu0
        %v4237 = vadd.f32 0.0, %v4236
        %v4238 = vpop.f32.mrf.mxu0
        %v4239 = vadd.f32 0.0, %v4238
        %4240 = vmatprep.mubr.f32.mxu0 0.0
        %4241 = vmatmul.mubr.f32.gmra.mxu0 %v3988
        %v4242 = vpop.f32.mrf.mxu0
        %v4243 = vadd.f32 0.0, %v4242
        %v4244 = vpop.f32.mrf.mxu0
        %v4245 = vadd.f32 0.0, %v4244
        %4246 = vdwg.mxu0
        %v4247 = vsel %vm3927, %v3758, 0
        %v4249 = vsel %vm3927, %v3759, 0
        %v4251 = vsel %vm3927, %v3760, 0
        %v4253 = vsel %vm3927, %v3761, 0
        %v4255 = vsel %vm3927, %v3762, 0
        %v4257 = vsel %vm3927, %v3763, 0
        %v4259 = vsel %vm3927, %v3764, 0
        %v4261 = vsel %vm3927, %v3765, 0
        %v4263 = vsel %vm3927, %v3766, 0
        %v4265 = vsel %vm3927, %v3767, 0
        %v4267 = vsel %vm3927, %v3768, 0
        %v4269 = vsel %vm3927, %v3769, 0
        %v4271 = vsel %vm3927, %v3770, 0
        %v4273 = vsel %vm3927, %v3771, 0
        %v4275 = vsel %vm3927, %v3772, 0
        %v4277 = vsel %vm3927, %v3773, 0
        %v4279 = vsel %vm3927, %v3774, 0
        %v4281 = vsel %vm3927, %v3775, 0
        %v4283 = vsel %vm3927, %v3776, 0
        %v4285 = vsel %vm3927, %v3777, 0
        %v4287 = vsel %vm3927, %v3778, 0
        %v4289 = vsel %vm3927, %v3779, 0
        %v4291 = vsel %vm3927, %v3780, 0
        %v4293 = vsel %vm3927, %v3781, 0
        %v4295 = vsel %vm3927, %v3782, 0
        %v4297 = vsel %vm3927, %v3783, 0
        %v4299 = vsel %vm3927, %v3784, 0
        %v4301 = vsel %vm3927, %v3785, 0
        %v4303 = vsel %vm3927, %v3786, 0
        %v4305 = vsel %vm3927, %v3787, 0
        %v4307 = vsel %vm3927, %v3788, 0
        %v4310 = vsel %vm2261, %v3810, 0
        %v4313 = vsel %vm2261, %v3811, 0
        %4315 = vmatprep.subr.mxu0 0.0
        %4316 = vmatpush1.msra.mxu0 0.0
        %4317 = vmatprep.subr.mxu0 0.0
        %4318 = vmatpush1.msra.mxu0 0.0
        %4319 = vmatprep.subr.mxu0 0.0
        %4320 = vmatpush1.msra.mxu0 0.0
        %4321 = vmatprep.subr.mxu0 0.0
        %4322 = vmatpush1.msra.mxu0 0.0
        %4323 = vmatprep.subr.mxu0 0.0
        %4324 = vmatpush1.msra.mxu0 0.0
        %4325 = vmatprep.subr.mxu0 %v4313
        %4326 = vmatpush1.msra.mxu0 %v4310
        %4327 = vmatprep.subr.mxu0 %v3809
        %4328 = vmatpush1.msra.mxu0 %v3808
        %4329 = vmatprep.subr.mxu0 %v3807
        %4330 = vmatpush1.msra.mxu0 %v3806
        %4331 = vmatprep.subr.mxu0 %v3805
        %4332 = vmatpush1.msra.mxu0 %v3804
        %4333 = vmatprep.subr.mxu0 %v3803
        %4334 = vmatpush1.msra.mxu0 %v3802
        %4335 = vmatprep.subr.mxu0 %v3801
        %4336 = vmatpush1.msra.mxu0 %v3800
        %4337 = vmatprep.subr.mxu0 %v3799
        %4338 = vmatpush1.msra.mxu0 %v3798
        %4339 = vmatprep.subr.mxu0 %v3797
        %4340 = vmatpush1.msra.mxu0 %v3796
        %4341 = vmatprep.subr.mxu0 %v3795
        %4342 = vmatpush1.msra.mxu0 %v3794
        %4343 = vmatprep.subr.mxu0 %v3793
        %4344 = vmatpush1.msra.mxu0 %v3792
        %4345 = vmatprep.subr.mxu0 %v3791
        %4346 = vmatpush1.msra.mxu0 %v3790
        %4347 = vmatprep.subr.mxu0 0.0
        %4348 = vmatpush2.msra.mxu0 0.0
        %4349 = vmatprep.subr.mxu0 0.0
        %4350 = vmatpush2.msra.mxu0 0.0
        %4351 = vmatprep.subr.mxu0 0.0
        %4352 = vmatpush2.msra.mxu0 0.0
        %4353 = vmatprep.subr.mxu0 0.0
        %4354 = vmatpush2.msra.mxu0 0.0
        %4355 = vmatprep.subr.mxu0 0.0
        %4356 = vmatpush2.msra.mxu0 0.0
        %4357 = vmatprep.subr.mxu0 0.0
        %4358 = vmatpush2.msra.mxu0 0.0
        %4359 = vmatprep.subr.mxu0 0.0
        %4360 = vmatpush2.msra.mxu0 0.0
        %4361 = vmatprep.subr.mxu0 0.0
        %4362 = vmatpush2.msra.mxu0 0.0
        %4363 = vmatprep.subr.mxu0 0.0
        %4364 = vmatpush2.msra.mxu0 0.0
        %4365 = vmatprep.subr.mxu0 0.0
        %4366 = vmatpush2.msra.mxu0 0.0
        %4367 = vmatprep.subr.mxu0 0.0
        %4368 = vmatpush2.msra.mxu0 0.0
        %4369 = vmatprep.subr.mxu0 0.0
        %4370 = vmatpush2.msra.mxu0 0.0
        %4371 = vmatprep.subr.mxu0 0.0
        %4372 = vmatpush2.msra.mxu0 0.0
        %4373 = vmatprep.subr.mxu0 0.0
        %4374 = vmatpush2.msra.mxu0 0.0
        %4375 = vmatprep.subr.mxu0 0.0
        %4376 = vmatpush2.msra.mxu0 0.0
        %4377 = vmatprep.subr.mxu0 0.0
        %4378 = vmatpush2.msra.mxu0 0.0
        %4379 = vmatprep.mubr.f32.mxu0 0.0
        %4380 = vmatmul.mubr.f32.gmra.mxu0 %v4247
        %v4381 = vpop.f32.mrf.mxu0
        %v4382 = vadd.f32 %v4063, %v4381
        %v4383 = vpop.f32.mrf.mxu0
        %v4384 = vadd.f32 %v4065, %v4383
        %4385 = vmatprep.mubr.f32.mxu0 0.0
        %4386 = vmatmul.mubr.f32.gmra.mxu0 %v4249
        %v4387 = vpop.f32.mrf.mxu0
        %v4388 = vadd.f32 %v4069, %v4387
        %v4389 = vpop.f32.mrf.mxu0
        %v4390 = vadd.f32 %v4071, %v4389
        %4391 = vmatprep.mubr.f32.mxu0 0.0
        %4392 = vmatmul.mubr.f32.gmra.mxu0 %v4251
        %v4393 = vpop.f32.mrf.mxu0
        %v4394 = vadd.f32 %v4075, %v4393
        %v4395 = vpop.f32.mrf.mxu0
        %v4396 = vadd.f32 %v4077, %v4395
        %4397 = vmatprep.mubr.f32.mxu0 0.0
        %4398 = vmatmul.mubr.f32.gmra.mxu0 %v4253
        %v4399 = vpop.f32.mrf.mxu0
        %v4400 = vadd.f32 %v4081, %v4399
        %v4401 = vpop.f32.mrf.mxu0
        %v4402 = vadd.f32 %v4083, %v4401
        %4403 = vmatprep.mubr.f32.mxu0 0.0
        %4404 = vmatmul.mubr.f32.gmra.mxu0 %v4255
        %v4405 = vpop.f32.mrf.mxu0
        %v4406 = vadd.f32 %v4087, %v4405
        %v4407 = vpop.f32.mrf.mxu0
        %v4408 = vadd.f32 %v4089, %v4407
        %4409 = vmatprep.mubr.f32.mxu0 0.0
        %4410 = vmatmul.mubr.f32.gmra.mxu0 %v4257
        %v4411 = vpop.f32.mrf.mxu0
        %v4412 = vadd.f32 %v4093, %v4411
        %v4413 = vpop.f32.mrf.mxu0
        %v4414 = vadd.f32 %v4095, %v4413
        %4415 = vmatprep.mubr.f32.mxu0 0.0
        %4416 = vmatmul.mubr.f32.gmra.mxu0 %v4259
        %v4417 = vpop.f32.mrf.mxu0
        %v4418 = vadd.f32 %v4099, %v4417
        %v4419 = vpop.f32.mrf.mxu0
        %v4420 = vadd.f32 %v4101, %v4419
        %4421 = vmatprep.mubr.f32.mxu0 0.0
        %4422 = vmatmul.mubr.f32.gmra.mxu0 %v4261
        %v4423 = vpop.f32.mrf.mxu0
        %v4424 = vadd.f32 %v4105, %v4423
        %v4425 = vpop.f32.mrf.mxu0
        %v4426 = vadd.f32 %v4107, %v4425
        %4427 = vmatprep.mubr.f32.mxu0 0.0
        %4428 = vmatmul.mubr.f32.gmra.mxu0 %v4263
        %v4429 = vpop.f32.mrf.mxu0
        %v4430 = vadd.f32 %v4111, %v4429
        %v4431 = vpop.f32.mrf.mxu0
        %v4432 = vadd.f32 %v4113, %v4431
        %4433 = vmatprep.mubr.f32.mxu0 0.0
        %4434 = vmatmul.mubr.f32.gmra.mxu0 %v4265
        %v4435 = vpop.f32.mrf.mxu0
        %v4436 = vadd.f32 %v4117, %v4435
        %v4437 = vpop.f32.mrf.mxu0
        %v4438 = vadd.f32 %v4119, %v4437
        %4439 = vmatprep.mubr.f32.mxu0 0.0
        %4440 = vmatmul.mubr.f32.gmra.mxu0 %v4267
        %v4441 = vpop.f32.mrf.mxu0
        %v4442 = vadd.f32 %v4123, %v4441
        %v4443 = vpop.f32.mrf.mxu0
        %v4444 = vadd.f32 %v4125, %v4443
        %4445 = vmatprep.mubr.f32.mxu0 0.0
        %4446 = vmatmul.mubr.f32.gmra.mxu0 %v4269
        %v4447 = vpop.f32.mrf.mxu0
        %v4448 = vadd.f32 %v4129, %v4447
        %v4449 = vpop.f32.mrf.mxu0
        %v4450 = vadd.f32 %v4131, %v4449
        %4451 = vmatprep.mubr.f32.mxu0 0.0
        %4452 = vmatmul.mubr.f32.gmra.mxu0 %v4271
        %v4453 = vpop.f32.mrf.mxu0
        %v4454 = vadd.f32 %v4135, %v4453
        %v4455 = vpop.f32.mrf.mxu0
        %v4456 = vadd.f32 %v4137, %v4455
        %4457 = vmatprep.mubr.f32.mxu0 0.0
        %4458 = vmatmul.mubr.f32.gmra.mxu0 %v4273
        %v4459 = vpop.f32.mrf.mxu0
        %v4460 = vadd.f32 %v4141, %v4459
        %v4461 = vpop.f32.mrf.mxu0
        %v4462 = vadd.f32 %v4143, %v4461
        %4463 = vmatprep.mubr.f32.mxu0 0.0
        %4464 = vmatmul.mubr.f32.gmra.mxu0 %v4275
        %v4465 = vpop.f32.mrf.mxu0
        %v4466 = vadd.f32 %v4147, %v4465
        %v4467 = vpop.f32.mrf.mxu0
        %v4468 = vadd.f32 %v4149, %v4467
        %4469 = vmatprep.mubr.f32.mxu0 0.0
        %4470 = vmatmul.mubr.f32.gmra.mxu0 %v4277
        %v4471 = vpop.f32.mrf.mxu0
        %v4472 = vadd.f32 %v4153, %v4471
        %v4473 = vpop.f32.mrf.mxu0
        %v4474 = vadd.f32 %v4155, %v4473
        %4475 = vmatprep.mubr.f32.mxu0 0.0
        %4476 = vmatmul.mubr.f32.gmra.mxu0 %v4279
        %v4477 = vpop.f32.mrf.mxu0
        %v4478 = vadd.f32 %v4159, %v4477
        %v4479 = vpop.f32.mrf.mxu0
        %v4480 = vadd.f32 %v4161, %v4479
        %4481 = vmatprep.mubr.f32.mxu0 0.0
        %4482 = vmatmul.mubr.f32.gmra.mxu0 %v4281
        %v4483 = vpop.f32.mrf.mxu0
        %v4484 = vadd.f32 %v4165, %v4483
        %v4485 = vpop.f32.mrf.mxu0
        %v4486 = vadd.f32 %v4167, %v4485
        %4487 = vmatprep.mubr.f32.mxu0 0.0
        %4488 = vmatmul.mubr.f32.gmra.mxu0 %v4283
        %v4489 = vpop.f32.mrf.mxu0
        %v4490 = vadd.f32 %v4171, %v4489
        %v4491 = vpop.f32.mrf.mxu0
        %v4492 = vadd.f32 %v4173, %v4491
        %4493 = vmatprep.mubr.f32.mxu0 0.0
        %4494 = vmatmul.mubr.f32.gmra.mxu0 %v4285
        %v4495 = vpop.f32.mrf.mxu0
        %v4496 = vadd.f32 %v4177, %v4495
        %v4497 = vpop.f32.mrf.mxu0
        %v4498 = vadd.f32 %v4179, %v4497
        %4499 = vmatprep.mubr.f32.mxu0 0.0
        %4500 = vmatmul.mubr.f32.gmra.mxu0 %v4287
        %v4501 = vpop.f32.mrf.mxu0
        %v4502 = vadd.f32 %v4183, %v4501
        %v4503 = vpop.f32.mrf.mxu0
        %v4504 = vadd.f32 %v4185, %v4503
        %4505 = vmatprep.mubr.f32.mxu0 0.0
        %4506 = vmatmul.mubr.f32.gmra.mxu0 %v4289
        %v4507 = vpop.f32.mrf.mxu0
        %v4508 = vadd.f32 %v4189, %v4507
        %v4509 = vpop.f32.mrf.mxu0
        %v4510 = vadd.f32 %v4191, %v4509
        %4511 = vmatprep.mubr.f32.mxu0 0.0
        %4512 = vmatmul.mubr.f32.gmra.mxu0 %v4291
        %v4513 = vpop.f32.mrf.mxu0
        %v4514 = vadd.f32 %v4195, %v4513
        %v4515 = vpop.f32.mrf.mxu0
        %v4516 = vadd.f32 %v4197, %v4515
        %4517 = vmatprep.mubr.f32.mxu0 0.0
        %4518 = vmatmul.mubr.f32.gmra.mxu0 %v4293
        %v4519 = vpop.f32.mrf.mxu0
        %v4520 = vadd.f32 %v4201, %v4519
        %v4521 = vpop.f32.mrf.mxu0
        %v4522 = vadd.f32 %v4203, %v4521
        %4523 = vmatprep.mubr.f32.mxu0 0.0
        %4524 = vmatmul.mubr.f32.gmra.mxu0 %v4295
        %v4525 = vpop.f32.mrf.mxu0
        %v4526 = vadd.f32 %v4207, %v4525
        %v4527 = vpop.f32.mrf.mxu0
        %v4528 = vadd.f32 %v4209, %v4527
        %4529 = vmatprep.mubr.f32.mxu0 0.0
        %4530 = vmatmul.mubr.f32.gmra.mxu0 %v4297
        %v4531 = vpop.f32.mrf.mxu0
        %v4532 = vadd.f32 %v4213, %v4531
        %v4533 = vpop.f32.mrf.mxu0
        %v4534 = vadd.f32 %v4215, %v4533
        %4535 = vmatprep.mubr.f32.mxu0 0.0
        %4536 = vmatmul.mubr.f32.gmra.mxu0 %v4299
        %v4537 = vpop.f32.mrf.mxu0
        %v4538 = vadd.f32 %v4219, %v4537
        %v4539 = vpop.f32.mrf.mxu0
        %v4540 = vadd.f32 %v4221, %v4539
        %4541 = vmatprep.mubr.f32.mxu0 0.0
        %4542 = vmatmul.mubr.f32.gmra.mxu0 %v4301
        %v4543 = vpop.f32.mrf.mxu0
        %v4544 = vadd.f32 %v4225, %v4543
        %v4545 = vpop.f32.mrf.mxu0
        %v4546 = vadd.f32 %v4227, %v4545
        %4547 = vmatprep.mubr.f32.mxu0 0.0
        %4548 = vmatmul.mubr.f32.gmra.mxu0 %v4303
        %v4549 = vpop.f32.mrf.mxu0
        %v4550 = vadd.f32 %v4231, %v4549
        %v4551 = vpop.f32.mrf.mxu0
        %v4552 = vadd.f32 %v4233, %v4551
        %4553 = vmatprep.mubr.f32.mxu0 0.0
        %4554 = vmatmul.mubr.f32.gmra.mxu0 %v4305
        %v4555 = vpop.f32.mrf.mxu0
        %v4556 = vadd.f32 %v4237, %v4555
        %v4557 = vpop.f32.mrf.mxu0
        %v4558 = vadd.f32 %v4239, %v4557
        %4559 = vmatprep.mubr.f32.mxu0 0.0
        %4560 = vmatmul.mubr.f32.gmra.mxu0 %v4307
        %v4561 = vpop.f32.mrf.mxu0
        %v4562 = vadd.f32 %v4243, %v4561
        %v4563 = vpop.f32.mrf.mxu0
        %v4564 = vadd.f32 %v4245, %v4563
        %4565 = vdwg.mxu0
        %s4566 = scalar_lea.vmem %s4, 352
        %v4567 = vld [vmem:[%s4566] sm:$0xff]
        %v4568 = vld [vmem:[%s4566 + $0x8] sm:$0xff]
        %v4569 = vld [vmem:[%s4566 + $0x10] sm:$0xff]
        %v4570 = vld [vmem:[%s4566 + $0x18] sm:$0xff]
        %v4571 = vld [vmem:[%s4566 + $0x20] sm:$0xff]
        %v4572 = vld [vmem:[%s4566 + $0x28] sm:$0xff]
        %v4573 = vld [vmem:[%s4566 + $0x30] sm:$0xff]
        %v4574 = vld [vmem:[%s4566 + $0x38] sm:$0xff]
        %v4575 = vld [vmem:[%s4566 + $0x40] sm:$0xff]
        %v4576 = vld [vmem:[%s4566 + $0x48] sm:$0xff]
        %v4577 = vld [vmem:[%s4566 + $0x50] sm:$0xff]
        %v4578 = vld [vmem:[%s4566 + $0x58] sm:$0xff]
        %v4579 = vld [vmem:[%s4566 + $0x60] sm:$0xff]
        %v4580 = vld [vmem:[%s4566 + $0x68] sm:$0xff]
        %v4581 = vld [vmem:[%s4566 + $0x70] sm:$0xff]
        %v4582 = vld [vmem:[%s4566 + $0x78] sm:$0xff]
        %v4583 = vld [vmem:[%s4566 + $0x80] sm:$0xff]
        %v4584 = vld [vmem:[%s4566 + $0x88] sm:$0xff]
        %v4585 = vld [vmem:[%s4566 + $0x90] sm:$0xff]
        %v4586 = vld [vmem:[%s4566 + $0x98] sm:$0xff]
        %v4587 = vld [vmem:[%s4566 + $0xa0] sm:$0xf]
        %v4588 = vld [vmem:[%s4566 + $0xa8] sm:$0xf]
        %v4589 = vrot.slane %v3758, 4
        %v4590 = vrot.slane %v3759, 4
        %v4591 = vsel %vm2261, %v4589, %v4590
        %v4592 = vrot.slane %v3760, 4
        %v4593 = vsel %vm2261, %v4590, %v4592
        %v4594 = vrot.slane %v3761, 4
        %v4595 = vsel %vm2261, %v4592, %v4594
        %v4596 = vrot.slane %v3762, 4
        %v4597 = vsel %vm2261, %v4594, %v4596
        %v4598 = vrot.slane %v3763, 4
        %v4599 = vsel %vm2261, %v4596, %v4598
        %v4600 = vrot.slane %v3764, 4
        %v4601 = vsel %vm2261, %v4598, %v4600
        %v4602 = vrot.slane %v3765, 4
        %v4603 = vsel %vm2261, %v4600, %v4602
        %v4604 = vrot.slane %v3766, 4
        %v4605 = vsel %vm2261, %v4602, %v4604
        %v4606 = vrot.slane %v3767, 4
        %v4607 = vsel %vm2261, %v4604, %v4606
        %v4608 = vrot.slane %v3768, 4
        %v4609 = vsel %vm2261, %v4606, %v4608
        %v4610 = vrot.slane %v3769, 4
        %v4611 = vsel %vm2261, %v4608, %v4610
        %v4612 = vrot.slane %v3770, 4
        %v4613 = vsel %vm2261, %v4610, %v4612
        %v4614 = vrot.slane %v3771, 4
        %v4615 = vsel %vm2261, %v4612, %v4614
        %v4616 = vrot.slane %v3772, 4
        %v4617 = vsel %vm2261, %v4614, %v4616
        %v4618 = vrot.slane %v3773, 4
        %v4619 = vsel %vm2261, %v4616, %v4618
        %v4620 = vrot.slane %v3774, 4
        %v4621 = vsel %vm2261, %v4618, %v4620
        %v4622 = vrot.slane %v3775, 4
        %v4623 = vsel %vm2261, %v4620, %v4622
        %v4624 = vrot.slane %v3776, 4
        %v4625 = vsel %vm2261, %v4622, %v4624
        %v4626 = vrot.slane %v3777, 4
        %v4627 = vsel %vm2261, %v4624, %v4626
        %v4628 = vrot.slane %v3778, 4
        %v4629 = vsel %vm2261, %v4626, %v4628
        %v4630 = vrot.slane %v3779, 4
        %v4631 = vsel %vm2261, %v4628, %v4630
        %v4632 = vrot.slane %v3780, 4
        %v4633 = vsel %vm2261, %v4630, %v4632
        %v4634 = vrot.slane %v3781, 4
        %v4635 = vsel %vm2261, %v4632, %v4634
        %v4636 = vrot.slane %v3782, 4
        %v4637 = vsel %vm2261, %v4634, %v4636
        %v4638 = vrot.slane %v3783, 4
        %v4639 = vsel %vm2261, %v4636, %v4638
        %v4640 = vrot.slane %v3784, 4
        %v4641 = vsel %vm2261, %v4638, %v4640
        %v4642 = vrot.slane %v3785, 4
        %v4643 = vsel %vm2261, %v4640, %v4642
        %v4644 = vrot.slane %v3786, 4
        %v4645 = vsel %vm2261, %v4642, %v4644
        %v4646 = vrot.slane %v3787, 4
        %v4647 = vsel %vm2261, %v4644, %v4646
        %v4648 = vrot.slane %v3788, 4
        %v4649 = vsel %vm2261, %v4646, %v4648
        %v4650 = vsel %vm3927, %v4591, 0
        %v4652 = vsel %vm3927, %v4593, 0
        %v4654 = vsel %vm3927, %v4595, 0
        %v4656 = vsel %vm3927, %v4597, 0
        %v4658 = vsel %vm3927, %v4599, 0
        %v4660 = vsel %vm3927, %v4601, 0
        %v4662 = vsel %vm3927, %v4603, 0
        %v4664 = vsel %vm3927, %v4605, 0
        %v4666 = vsel %vm3927, %v4607, 0
        %v4668 = vsel %vm3927, %v4609, 0
        %v4670 = vsel %vm3927, %v4611, 0
        %v4672 = vsel %vm3927, %v4613, 0
        %v4674 = vsel %vm3927, %v4615, 0
        %v4676 = vsel %vm3927, %v4617, 0
        %v4678 = vsel %vm3927, %v4619, 0
        %v4680 = vsel %vm3927, %v4621, 0
        %v4682 = vsel %vm3927, %v4623, 0
        %v4684 = vsel %vm3927, %v4625, 0
        %v4686 = vsel %vm3927, %v4627, 0
        %v4688 = vsel %vm3927, %v4629, 0
        %v4690 = vsel %vm3927, %v4631, 0
        %v4692 = vsel %vm3927, %v4633, 0
        %v4694 = vsel %vm3927, %v4635, 0
        %v4696 = vsel %vm3927, %v4637, 0
        %v4698 = vsel %vm3927, %v4639, 0
        %v4700 = vsel %vm3927, %v4641, 0
        %v4702 = vsel %vm3927, %v4643, 0
        %v4704 = vsel %vm3927, %v4645, 0
        %v4706 = vsel %vm3927, %v4647, 0
        %v4708 = vsel %vm3927, %v4649, 0
        %v4710 = vsel %vm3927, %v4648, 0
        %v4713 = vsel %vm2261, %v4587, 0
        %v4716 = vsel %vm2261, %v4588, 0
        %4718 = vmatprep.subr.mxu0 0.0
        %4719 = vmatpush1.msra.mxu0 0.0
        %4720 = vmatprep.subr.mxu0 0.0
        %4721 = vmatpush1.msra.mxu0 0.0
        %4722 = vmatprep.subr.mxu0 0.0
        %4723 = vmatpush1.msra.mxu0 0.0
        %4724 = vmatprep.subr.mxu0 0.0
        %4725 = vmatpush1.msra.mxu0 0.0
        %4726 = vmatprep.subr.mxu0 0.0
        %4727 = vmatpush1.msra.mxu0 0.0
        %4728 = vmatprep.subr.mxu0 %v4716
        %4729 = vmatpush1.msra.mxu0 %v4713
        %4730 = vmatprep.subr.mxu0 %v4586
        %4731 = vmatpush1.msra.mxu0 %v4585
        %4732 = vmatprep.subr.mxu0 %v4584
        %4733 = vmatpush1.msra.mxu0 %v4583
        %4734 = vmatprep.subr.mxu0 %v4582
        %4735 = vmatpush1.msra.mxu0 %v4581
        %4736 = vmatprep.subr.mxu0 %v4580
        %4737 = vmatpush1.msra.mxu0 %v4579
        %4738 = vmatprep.subr.mxu0 %v4578
        %4739 = vmatpush1.msra.mxu0 %v4577
        %4740 = vmatprep.subr.mxu0 %v4576
        %4741 = vmatpush1.msra.mxu0 %v4575
        %4742 = vmatprep.subr.mxu0 %v4574
        %4743 = vmatpush1.msra.mxu0 %v4573
        %4744 = vmatprep.subr.mxu0 %v4572
        %4745 = vmatpush1.msra.mxu0 %v4571
        %4746 = vmatprep.subr.mxu0 %v4570
        %4747 = vmatpush1.msra.mxu0 %v4569
        %4748 = vmatprep.subr.mxu0 %v4568
        %4749 = vmatpush1.msra.mxu0 %v4567
        %4750 = vmatprep.subr.mxu0 0.0
        %4751 = vmatpush2.msra.mxu0 0.0
        %4752 = vmatprep.subr.mxu0 0.0
        %4753 = vmatpush2.msra.mxu0 0.0
        %4754 = vmatprep.subr.mxu0 0.0
        %4755 = vmatpush2.msra.mxu0 0.0
        %4756 = vmatprep.subr.mxu0 0.0
        %4757 = vmatpush2.msra.mxu0 0.0
        %4758 = vmatprep.subr.mxu0 0.0
        %4759 = vmatpush2.msra.mxu0 0.0
        %4760 = vmatprep.subr.mxu0 0.0
        %4761 = vmatpush2.msra.mxu0 0.0
        %4762 = vmatprep.subr.mxu0 0.0
        %4763 = vmatpush2.msra.mxu0 0.0
        %4764 = vmatprep.subr.mxu0 0.0
        %4765 = vmatpush2.msra.mxu0 0.0
        %4766 = vmatprep.subr.mxu0 0.0
        %4767 = vmatpush2.msra.mxu0 0.0
        %4768 = vmatprep.subr.mxu0 0.0
        %4769 = vmatpush2.msra.mxu0 0.0
        %4770 = vmatprep.subr.mxu0 0.0
        %4771 = vmatpush2.msra.mxu0 0.0
        %4772 = vmatprep.subr.mxu0 0.0
        %4773 = vmatpush2.msra.mxu0 0.0
        %4774 = vmatprep.subr.mxu0 0.0
        %4775 = vmatpush2.msra.mxu0 0.0
        %4776 = vmatprep.subr.mxu0 0.0
        %4777 = vmatpush2.msra.mxu0 0.0
        %4778 = vmatprep.subr.mxu0 0.0
        %4779 = vmatpush2.msra.mxu0 0.0
        %4780 = vmatprep.subr.mxu0 0.0
        %4781 = vmatpush2.msra.mxu0 0.0
        %4782 = vmatprep.mubr.f32.mxu0 0.0
        %4783 = vmatmul.mubr.f32.gmra.mxu0 %v4650
        %v4784 = vpop.f32.mrf.mxu0
        %v4785 = vadd.f32 0.0, %v4784
        %v4786 = vpop.f32.mrf.mxu0
        %v4787 = vadd.f32 0.0, %v4786
        %4788 = vmatprep.mubr.f32.mxu0 0.0
        %4789 = vmatmul.mubr.f32.gmra.mxu0 %v4652
        %v4790 = vpop.f32.mrf.mxu0
        %v4791 = vadd.f32 0.0, %v4790
        %v4792 = vpop.f32.mrf.mxu0
        %v4793 = vadd.f32 0.0, %v4792
        %4794 = vmatprep.mubr.f32.mxu0 0.0
        %4795 = vmatmul.mubr.f32.gmra.mxu0 %v4654
        %v4796 = vpop.f32.mrf.mxu0
        %v4797 = vadd.f32 0.0, %v4796
        %v4798 = vpop.f32.mrf.mxu0
        %v4799 = vadd.f32 0.0, %v4798
        %4800 = vmatprep.mubr.f32.mxu0 0.0
        %4801 = vmatmul.mubr.f32.gmra.mxu0 %v4656
        %v4802 = vpop.f32.mrf.mxu0
        %v4803 = vadd.f32 0.0, %v4802
        %v4804 = vpop.f32.mrf.mxu0
        %v4805 = vadd.f32 0.0, %v4804
        %4806 = vmatprep.mubr.f32.mxu0 0.0
        %4807 = vmatmul.mubr.f32.gmra.mxu0 %v4658
        %v4808 = vpop.f32.mrf.mxu0
        %v4809 = vadd.f32 0.0, %v4808
        %v4810 = vpop.f32.mrf.mxu0
        %v4811 = vadd.f32 0.0, %v4810
        %4812 = vmatprep.mubr.f32.mxu0 0.0
        %4813 = vmatmul.mubr.f32.gmra.mxu0 %v4660
        %v4814 = vpop.f32.mrf.mxu0
        %v4815 = vadd.f32 0.0, %v4814
        %v4816 = vpop.f32.mrf.mxu0
        %v4817 = vadd.f32 0.0, %v4816
        %4818 = vmatprep.mubr.f32.mxu0 0.0
        %4819 = vmatmul.mubr.f32.gmra.mxu0 %v4662
        %v4820 = vpop.f32.mrf.mxu0
        %v4821 = vadd.f32 0.0, %v4820
        %v4822 = vpop.f32.mrf.mxu0
        %v4823 = vadd.f32 0.0, %v4822
        %4824 = vmatprep.mubr.f32.mxu0 0.0
        %4825 = vmatmul.mubr.f32.gmra.mxu0 %v4664
        %v4826 = vpop.f32.mrf.mxu0
        %v4827 = vadd.f32 0.0, %v4826
        %v4828 = vpop.f32.mrf.mxu0
        %v4829 = vadd.f32 0.0, %v4828
        %4830 = vmatprep.mubr.f32.mxu0 0.0
        %4831 = vmatmul.mubr.f32.gmra.mxu0 %v4666
        %v4832 = vpop.f32.mrf.mxu0
        %v4833 = vadd.f32 0.0, %v4832
        %v4834 = vpop.f32.mrf.mxu0
        %v4835 = vadd.f32 0.0, %v4834
        %4836 = vmatprep.mubr.f32.mxu0 0.0
        %4837 = vmatmul.mubr.f32.gmra.mxu0 %v4668
        %v4838 = vpop.f32.mrf.mxu0
        %v4839 = vadd.f32 0.0, %v4838
        %v4840 = vpop.f32.mrf.mxu0
        %v4841 = vadd.f32 0.0, %v4840
        %4842 = vmatprep.mubr.f32.mxu0 0.0
        %4843 = vmatmul.mubr.f32.gmra.mxu0 %v4670
        %v4844 = vpop.f32.mrf.mxu0
        %v4845 = vadd.f32 0.0, %v4844
        %v4846 = vpop.f32.mrf.mxu0
        %v4847 = vadd.f32 0.0, %v4846
        %4848 = vmatprep.mubr.f32.mxu0 0.0
        %4849 = vmatmul.mubr.f32.gmra.mxu0 %v4672
        %v4850 = vpop.f32.mrf.mxu0
        %v4851 = vadd.f32 0.0, %v4850
        %v4852 = vpop.f32.mrf.mxu0
        %v4853 = vadd.f32 0.0, %v4852
        %4854 = vmatprep.mubr.f32.mxu0 0.0
        %4855 = vmatmul.mubr.f32.gmra.mxu0 %v4674
        %v4856 = vpop.f32.mrf.mxu0
        %v4857 = vadd.f32 0.0, %v4856
        %v4858 = vpop.f32.mrf.mxu0
        %v4859 = vadd.f32 0.0, %v4858
        %4860 = vmatprep.mubr.f32.mxu0 0.0
        %4861 = vmatmul.mubr.f32.gmra.mxu0 %v4676
        %v4862 = vpop.f32.mrf.mxu0
        %v4863 = vadd.f32 0.0, %v4862
        %v4864 = vpop.f32.mrf.mxu0
        %v4865 = vadd.f32 0.0, %v4864
        %4866 = vmatprep.mubr.f32.mxu0 0.0
        %4867 = vmatmul.mubr.f32.gmra.mxu0 %v4678
        %v4868 = vpop.f32.mrf.mxu0
        %v4869 = vadd.f32 0.0, %v4868
        %v4870 = vpop.f32.mrf.mxu0
        %v4871 = vadd.f32 0.0, %v4870
        %4872 = vmatprep.mubr.f32.mxu0 0.0
        %4873 = vmatmul.mubr.f32.gmra.mxu0 %v4680
        %v4874 = vpop.f32.mrf.mxu0
        %v4875 = vadd.f32 0.0, %v4874
        %v4876 = vpop.f32.mrf.mxu0
        %v4877 = vadd.f32 0.0, %v4876
        %4878 = vmatprep.mubr.f32.mxu0 0.0
        %4879 = vmatmul.mubr.f32.gmra.mxu0 %v4682
        %v4880 = vpop.f32.mrf.mxu0
        %v4881 = vadd.f32 0.0, %v4880
        %v4882 = vpop.f32.mrf.mxu0
        %v4883 = vadd.f32 0.0, %v4882
        %4884 = vmatprep.mubr.f32.mxu0 0.0
        %4885 = vmatmul.mubr.f32.gmra.mxu0 %v4684
        %v4886 = vpop.f32.mrf.mxu0
        %v4887 = vadd.f32 0.0, %v4886
        %v4888 = vpop.f32.mrf.mxu0
        %v4889 = vadd.f32 0.0, %v4888
        %4890 = vmatprep.mubr.f32.mxu0 0.0
        %4891 = vmatmul.mubr.f32.gmra.mxu0 %v4686
        %v4892 = vpop.f32.mrf.mxu0
        %v4893 = vadd.f32 0.0, %v4892
        %v4894 = vpop.f32.mrf.mxu0
        %v4895 = vadd.f32 0.0, %v4894
        %4896 = vmatprep.mubr.f32.mxu0 0.0
        %4897 = vmatmul.mubr.f32.gmra.mxu0 %v4688
        %v4898 = vpop.f32.mrf.mxu0
        %v4899 = vadd.f32 0.0, %v4898
        %v4900 = vpop.f32.mrf.mxu0
        %v4901 = vadd.f32 0.0, %v4900
        %4902 = vmatprep.mubr.f32.mxu0 0.0
        %4903 = vmatmul.mubr.f32.gmra.mxu0 %v4690
        %v4904 = vpop.f32.mrf.mxu0
        %v4905 = vadd.f32 0.0, %v4904
        %v4906 = vpop.f32.mrf.mxu0
        %v4907 = vadd.f32 0.0, %v4906
        %4908 = vmatprep.mubr.f32.mxu0 0.0
        %4909 = vmatmul.mubr.f32.gmra.mxu0 %v4692
        %v4910 = vpop.f32.mrf.mxu0
        %v4911 = vadd.f32 0.0, %v4910
        %v4912 = vpop.f32.mrf.mxu0
        %v4913 = vadd.f32 0.0, %v4912
        %4914 = vmatprep.mubr.f32.mxu0 0.0
        %4915 = vmatmul.mubr.f32.gmra.mxu0 %v4694
        %v4916 = vpop.f32.mrf.mxu0
        %v4917 = vadd.f32 0.0, %v4916
        %v4918 = vpop.f32.mrf.mxu0
        %v4919 = vadd.f32 0.0, %v4918
        %4920 = vmatprep.mubr.f32.mxu0 0.0
        %4921 = vmatmul.mubr.f32.gmra.mxu0 %v4696
        %v4922 = vpop.f32.mrf.mxu0
        %v4923 = vadd.f32 0.0, %v4922
        %v4924 = vpop.f32.mrf.mxu0
        %v4925 = vadd.f32 0.0, %v4924
        %4926 = vmatprep.mubr.f32.mxu0 0.0
        %4927 = vmatmul.mubr.f32.gmra.mxu0 %v4698
        %v4928 = vpop.f32.mrf.mxu0
        %v4929 = vadd.f32 0.0, %v4928
        %v4930 = vpop.f32.mrf.mxu0
        %v4931 = vadd.f32 0.0, %v4930
        %4932 = vmatprep.mubr.f32.mxu0 0.0
        %4933 = vmatmul.mubr.f32.gmra.mxu0 %v4700
        %v4934 = vpop.f32.mrf.mxu0
        %v4935 = vadd.f32 0.0, %v4934
        %v4936 = vpop.f32.mrf.mxu0
        %v4937 = vadd.f32 0.0, %v4936
        %4938 = vmatprep.mubr.f32.mxu0 0.0
        %4939 = vmatmul.mubr.f32.gmra.mxu0 %v4702
        %v4940 = vpop.f32.mrf.mxu0
        %v4941 = vadd.f32 0.0, %v4940
        %v4942 = vpop.f32.mrf.mxu0
        %v4943 = vadd.f32 0.0, %v4942
        %4944 = vmatprep.mubr.f32.mxu0 0.0
        %4945 = vmatmul.mubr.f32.gmra.mxu0 %v4704
        %v4946 = vpop.f32.mrf.mxu0
        %v4947 = vadd.f32 0.0, %v4946
        %v4948 = vpop.f32.mrf.mxu0
        %v4949 = vadd.f32 0.0, %v4948
        %4950 = vmatprep.mubr.f32.mxu0 0.0
        %4951 = vmatmul.mubr.f32.gmra.mxu0 %v4706
        %v4952 = vpop.f32.mrf.mxu0
        %v4953 = vadd.f32 0.0, %v4952
        %v4954 = vpop.f32.mrf.mxu0
        %v4955 = vadd.f32 0.0, %v4954
        %4956 = vmatprep.mubr.f32.mxu0 0.0
        %4957 = vmatmul.mubr.f32.gmra.mxu0 %v4708
        %v4958 = vpop.f32.mrf.mxu0
        %v4959 = vadd.f32 0.0, %v4958
        %v4960 = vpop.f32.mrf.mxu0
        %v4961 = vadd.f32 0.0, %v4960
        %4962 = vmatprep.mubr.f32.mxu0 0.0
        %4963 = vmatmul.mubr.f32.gmra.mxu0 %v4710
        %v4964 = vpop.f32.mrf.mxu0
        %v4965 = vadd.f32 0.0, %v4964
        %v4966 = vpop.f32.mrf.mxu0
        %v4967 = vadd.f32 0.0, %v4966
        %4968 = vdwg.mxu0
        %v4969 = vadd.f32 %v4382, %v4785
        %v4970 = vadd.f32 %v4384, %v4787
        %v4971 = vadd.f32 %v4388, %v4791
        %v4972 = vadd.f32 %v4390, %v4793
        %v4973 = vadd.f32 %v4394, %v4797
        %v4974 = vadd.f32 %v4396, %v4799
        %v4975 = vadd.f32 %v4400, %v4803
        %v4976 = vadd.f32 %v4402, %v4805
        %v4977 = vadd.f32 %v4406, %v4809
        %v4978 = vadd.f32 %v4408, %v4811
        %v4979 = vadd.f32 %v4412, %v4815
        %v4980 = vadd.f32 %v4414, %v4817
        %v4981 = vadd.f32 %v4418, %v4821
        %v4982 = vadd.f32 %v4420, %v4823
        %v4983 = vadd.f32 %v4424, %v4827
        %v4984 = vadd.f32 %v4426, %v4829
        %v4985 = vadd.f32 %v4430, %v4833
        %v4986 = vadd.f32 %v4432, %v4835
        %v4987 = vadd.f32 %v4436, %v4839
        %v4988 = vadd.f32 %v4438, %v4841
        %v4989 = vadd.f32 %v4442, %v4845
        %v4990 = vadd.f32 %v4444, %v4847
        %v4991 = vadd.f32 %v4448, %v4851
        %v4992 = vadd.f32 %v4450, %v4853
        %v4993 = vadd.f32 %v4454, %v4857
        %v4994 = vadd.f32 %v4456, %v4859
        %v4995 = vadd.f32 %v4460, %v4863
        %v4996 = vadd.f32 %v4462, %v4865
        %v4997 = vadd.f32 %v4466, %v4869
        %v4998 = vadd.f32 %v4468, %v4871
        %v4999 = vadd.f32 %v4472, %v4875
        %v5000 = vadd.f32 %v4474, %v4877
        %v5001 = vadd.f32 %v4478, %v4881
        %v5002 = vadd.f32 %v4480, %v4883
        %v5003 = vadd.f32 %v4484, %v4887
        %v5004 = vadd.f32 %v4486, %v4889
        %v5005 = vadd.f32 %v4490, %v4893
        %v5006 = vadd.f32 %v4492, %v4895
        %v5007 = vadd.f32 %v4496, %v4899
        %v5008 = vadd.f32 %v4498, %v4901
        %v5009 = vadd.f32 %v4502, %v4905
        %v5010 = vadd.f32 %v4504, %v4907
        %v5011 = vadd.f32 %v4508, %v4911
        %v5012 = vadd.f32 %v4510, %v4913
        %v5013 = vadd.f32 %v4514, %v4917
        %v5014 = vadd.f32 %v4516, %v4919
        %v5015 = vadd.f32 %v4520, %v4923
        %v5016 = vadd.f32 %v4522, %v4925
        %v5017 = vadd.f32 %v4526, %v4929
        %v5018 = vadd.f32 %v4528, %v4931
        %v5019 = vadd.f32 %v4532, %v4935
        %v5020 = vadd.f32 %v4534, %v4937
        %v5021 = vadd.f32 %v4538, %v4941
        %v5022 = vadd.f32 %v4540, %v4943
        %v5023 = vadd.f32 %v4544, %v4947
        %v5024 = vadd.f32 %v4546, %v4949
        %v5025 = vadd.f32 %v4550, %v4953
        %v5026 = vadd.f32 %v4552, %v4955
        %v5027 = vadd.f32 %v4556, %v4959
        %v5028 = vadd.f32 %v4558, %v4961
        %v5029 = vadd.f32 %v4562, %v4965
        %v5030 = vadd.f32 %v4564, %v4967
        %s5031 = scalar_lea.vmem %s4, 528
        %v5032 = vld [vmem:[%s5031] sm:$0xff]
        %v5033 = vld [vmem:[%s5031 + $0x8] sm:$0xff]
        %v5034 = vld [vmem:[%s5031 + $0x10] sm:$0xff]
        %v5035 = vld [vmem:[%s5031 + $0x18] sm:$0xff]
        %v5036 = vld [vmem:[%s5031 + $0x20] sm:$0xff]
        %v5037 = vld [vmem:[%s5031 + $0x28] sm:$0xff]
        %v5038 = vld [vmem:[%s5031 + $0x30] sm:$0xff]
        %v5039 = vld [vmem:[%s5031 + $0x38] sm:$0xff]
        %v5040 = vld [vmem:[%s5031 + $0x40] sm:$0xff]
        %v5041 = vld [vmem:[%s5031 + $0x48] sm:$0xff]
        %v5042 = vld [vmem:[%s5031 + $0x50] sm:$0xff]
        %v5043 = vld [vmem:[%s5031 + $0x58] sm:$0xff]
        %v5044 = vld [vmem:[%s5031 + $0x60] sm:$0xff]
        %v5045 = vld [vmem:[%s5031 + $0x68] sm:$0xff]
        %v5046 = vld [vmem:[%s5031 + $0x70] sm:$0xff]
        %v5047 = vld [vmem:[%s5031 + $0x78] sm:$0xff]
        %v5048 = vld [vmem:[%s5031 + $0x80] sm:$0xff]
        %v5049 = vld [vmem:[%s5031 + $0x88] sm:$0xff]
        %v5050 = vld [vmem:[%s5031 + $0x90] sm:$0xff]
        %v5051 = vld [vmem:[%s5031 + $0x98] sm:$0xff]
        %v5052 = vld [vmem:[%s5031 + $0xa0] sm:$0xf]
        %v5053 = vld [vmem:[%s5031 + $0xa8] sm:$0xf]
        %vm5055 = vcmask 1041408
        %v5056 = vrot.slane %v3758, 6
        %v5057 = vrot.slane %v3759, 6
        %v5058 = vsel %vm5055, %v5056, %v5057
        %v5059 = vrot.slane %v3760, 6
        %v5060 = vsel %vm5055, %v5057, %v5059
        %v5061 = vrot.slane %v3761, 6
        %v5062 = vsel %vm5055, %v5059, %v5061
        %v5063 = vrot.slane %v3762, 6
        %v5064 = vsel %vm5055, %v5061, %v5063
        %v5065 = vrot.slane %v3763, 6
        %v5066 = vsel %vm5055, %v5063, %v5065
        %v5067 = vrot.slane %v3764, 6
        %v5068 = vsel %vm5055, %v5065, %v5067
        %v5069 = vrot.slane %v3765, 6
        %v5070 = vsel %vm5055, %v5067, %v5069
        %v5071 = vrot.slane %v3766, 6
        %v5072 = vsel %vm5055, %v5069, %v5071
        %v5073 = vrot.slane %v3767, 6
        %v5074 = vsel %vm5055, %v5071, %v5073
        %v5075 = vrot.slane %v3768, 6
        %v5076 = vsel %vm5055, %v5073, %v5075
        %v5077 = vrot.slane %v3769, 6
        %v5078 = vsel %vm5055, %v5075, %v5077
        %v5079 = vrot.slane %v3770, 6
        %v5080 = vsel %vm5055, %v5077, %v5079
        %v5081 = vrot.slane %v3771, 6
        %v5082 = vsel %vm5055, %v5079, %v5081
        %v5083 = vrot.slane %v3772, 6
        %v5084 = vsel %vm5055, %v5081, %v5083
        %v5085 = vrot.slane %v3773, 6
        %v5086 = vsel %vm5055, %v5083, %v5085
        %v5087 = vrot.slane %v3774, 6
        %v5088 = vsel %vm5055, %v5085, %v5087
        %v5089 = vrot.slane %v3775, 6
        %v5090 = vsel %vm5055, %v5087, %v5089
        %v5091 = vrot.slane %v3776, 6
        %v5092 = vsel %vm5055, %v5089, %v5091
        %v5093 = vrot.slane %v3777, 6
        %v5094 = vsel %vm5055, %v5091, %v5093
        %v5095 = vrot.slane %v3778, 6
        %v5096 = vsel %vm5055, %v5093, %v5095
        %v5097 = vrot.slane %v3779, 6
        %v5098 = vsel %vm5055, %v5095, %v5097
        %v5099 = vrot.slane %v3780, 6
        %v5100 = vsel %vm5055, %v5097, %v5099
        %v5101 = vrot.slane %v3781, 6
        %v5102 = vsel %vm5055, %v5099, %v5101
        %v5103 = vrot.slane %v3782, 6
        %v5104 = vsel %vm5055, %v5101, %v5103
        %v5105 = vrot.slane %v3783, 6
        %v5106 = vsel %vm5055, %v5103, %v5105
        %v5107 = vrot.slane %v3784, 6
        %v5108 = vsel %vm5055, %v5105, %v5107
        %v5109 = vrot.slane %v3785, 6
        %v5110 = vsel %vm5055, %v5107, %v5109
        %v5111 = vrot.slane %v3786, 6
        %v5112 = vsel %vm5055, %v5109, %v5111
        %v5113 = vrot.slane %v3787, 6
        %v5114 = vsel %vm5055, %v5111, %v5113
        %v5115 = vrot.slane %v3788, 6
        %v5116 = vsel %vm5055, %v5113, %v5115
        %v5117 = vrot.slane %v3789, 6
        %v5118 = vsel %vm5055, %v5115, %v5117
        %v5119 = vsel %vm3927, %v5058, 0
        %v5121 = vsel %vm3927, %v5060, 0
        %v5123 = vsel %vm3927, %v5062, 0
        %v5125 = vsel %vm3927, %v5064, 0
        %v5127 = vsel %vm3927, %v5066, 0
        %v5129 = vsel %vm3927, %v5068, 0
        %v5131 = vsel %vm3927, %v5070, 0
        %v5133 = vsel %vm3927, %v5072, 0
        %v5135 = vsel %vm3927, %v5074, 0
        %v5137 = vsel %vm3927, %v5076, 0
        %v5139 = vsel %vm3927, %v5078, 0
        %v5141 = vsel %vm3927, %v5080, 0
        %v5143 = vsel %vm3927, %v5082, 0
        %v5145 = vsel %vm3927, %v5084, 0
        %v5147 = vsel %vm3927, %v5086, 0
        %v5149 = vsel %vm3927, %v5088, 0
        %v5151 = vsel %vm3927, %v5090, 0
        %v5153 = vsel %vm3927, %v5092, 0
        %v5155 = vsel %vm3927, %v5094, 0
        %v5157 = vsel %vm3927, %v5096, 0
        %v5159 = vsel %vm3927, %v5098, 0
        %v5161 = vsel %vm3927, %v5100, 0
        %v5163 = vsel %vm3927, %v5102, 0
        %v5165 = vsel %vm3927, %v5104, 0
        %v5167 = vsel %vm3927, %v5106, 0
        %v5169 = vsel %vm3927, %v5108, 0
        %v5171 = vsel %vm3927, %v5110, 0
        %v5173 = vsel %vm3927, %v5112, 0
        %v5175 = vsel %vm3927, %v5114, 0
        %v5177 = vsel %vm3927, %v5116, 0
        %v5179 = vsel %vm3927, %v5118, 0
        %v5182 = vsel %vm2261, %v5052, 0
        %v5185 = vsel %vm2261, %v5053, 0
        %5187 = vmatprep.subr.mxu0 0.0
        %5188 = vmatpush1.msra.mxu0 0.0
        %5189 = vmatprep.subr.mxu0 0.0
        %5190 = vmatpush1.msra.mxu0 0.0
        %5191 = vmatprep.subr.mxu0 0.0
        %5192 = vmatpush1.msra.mxu0 0.0
        %5193 = vmatprep.subr.mxu0 0.0
        %5194 = vmatpush1.msra.mxu0 0.0
        %5195 = vmatprep.subr.mxu0 0.0
        %5196 = vmatpush1.msra.mxu0 0.0
        %5197 = vmatprep.subr.mxu0 %v5185
        %5198 = vmatpush1.msra.mxu0 %v5182
        %5199 = vmatprep.subr.mxu0 %v5051
        %5200 = vmatpush1.msra.mxu0 %v5050
        %5201 = vmatprep.subr.mxu0 %v5049
        %5202 = vmatpush1.msra.mxu0 %v5048
        %5203 = vmatprep.subr.mxu0 %v5047
        %5204 = vmatpush1.msra.mxu0 %v5046
        %5205 = vmatprep.subr.mxu0 %v5045
        %5206 = vmatpush1.msra.mxu0 %v5044
        %5207 = vmatprep.subr.mxu0 %v5043
        %5208 = vmatpush1.msra.mxu0 %v5042
        %5209 = vmatprep.subr.mxu0 %v5041
        %5210 = vmatpush1.msra.mxu0 %v5040
        %5211 = vmatprep.subr.mxu0 %v5039
        %5212 = vmatpush1.msra.mxu0 %v5038
        %5213 = vmatprep.subr.mxu0 %v5037
        %5214 = vmatpush1.msra.mxu0 %v5036
        %5215 = vmatprep.subr.mxu0 %v5035
        %5216 = vmatpush1.msra.mxu0 %v5034
        %5217 = vmatprep.subr.mxu0 %v5033
        %5218 = vmatpush1.msra.mxu0 %v5032
        %5219 = vmatprep.subr.mxu0 0.0
        %5220 = vmatpush2.msra.mxu0 0.0
        %5221 = vmatprep.subr.mxu0 0.0
        %5222 = vmatpush2.msra.mxu0 0.0
        %5223 = vmatprep.subr.mxu0 0.0
        %5224 = vmatpush2.msra.mxu0 0.0
        %5225 = vmatprep.subr.mxu0 0.0
        %5226 = vmatpush2.msra.mxu0 0.0
        %5227 = vmatprep.subr.mxu0 0.0
        %5228 = vmatpush2.msra.mxu0 0.0
        %5229 = vmatprep.subr.mxu0 0.0
        %5230 = vmatpush2.msra.mxu0 0.0
        %5231 = vmatprep.subr.mxu0 0.0
        %5232 = vmatpush2.msra.mxu0 0.0
        %5233 = vmatprep.subr.mxu0 0.0
        %5234 = vmatpush2.msra.mxu0 0.0
        %5235 = vmatprep.subr.mxu0 0.0
        %5236 = vmatpush2.msra.mxu0 0.0
        %5237 = vmatprep.subr.mxu0 0.0
        %5238 = vmatpush2.msra.mxu0 0.0
        %5239 = vmatprep.subr.mxu0 0.0
        %5240 = vmatpush2.msra.mxu0 0.0
        %5241 = vmatprep.subr.mxu0 0.0
        %5242 = vmatpush2.msra.mxu0 0.0
        %5243 = vmatprep.subr.mxu0 0.0
        %5244 = vmatpush2.msra.mxu0 0.0
        %5245 = vmatprep.subr.mxu0 0.0
        %5246 = vmatpush2.msra.mxu0 0.0
        %5247 = vmatprep.subr.mxu0 0.0
        %5248 = vmatpush2.msra.mxu0 0.0
        %5249 = vmatprep.subr.mxu0 0.0
        %5250 = vmatpush2.msra.mxu0 0.0
        %5251 = vmatprep.mubr.f32.mxu0 0.0
        %5252 = vmatmul.mubr.f32.gmra.mxu0 %v5119
        %v5253 = vpop.f32.mrf.mxu0
        %v5254 = vadd.f32 0.0, %v5253
        %v5255 = vpop.f32.mrf.mxu0
        %v5256 = vadd.f32 0.0, %v5255
        %5257 = vmatprep.mubr.f32.mxu0 0.0
        %5258 = vmatmul.mubr.f32.gmra.mxu0 %v5121
        %v5259 = vpop.f32.mrf.mxu0
        %v5260 = vadd.f32 0.0, %v5259
        %v5261 = vpop.f32.mrf.mxu0
        %v5262 = vadd.f32 0.0, %v5261
        %5263 = vmatprep.mubr.f32.mxu0 0.0
        %5264 = vmatmul.mubr.f32.gmra.mxu0 %v5123
        %v5265 = vpop.f32.mrf.mxu0
        %v5266 = vadd.f32 0.0, %v5265
        %v5267 = vpop.f32.mrf.mxu0
        %v5268 = vadd.f32 0.0, %v5267
        %5269 = vmatprep.mubr.f32.mxu0 0.0
        %5270 = vmatmul.mubr.f32.gmra.mxu0 %v5125
        %v5271 = vpop.f32.mrf.mxu0
        %v5272 = vadd.f32 0.0, %v5271
        %v5273 = vpop.f32.mrf.mxu0
        %v5274 = vadd.f32 0.0, %v5273
        %5275 = vmatprep.mubr.f32.mxu0 0.0
        %5276 = vmatmul.mubr.f32.gmra.mxu0 %v5127
        %v5277 = vpop.f32.mrf.mxu0
        %v5278 = vadd.f32 0.0, %v5277
        %v5279 = vpop.f32.mrf.mxu0
        %v5280 = vadd.f32 0.0, %v5279
        %5281 = vmatprep.mubr.f32.mxu0 0.0
        %5282 = vmatmul.mubr.f32.gmra.mxu0 %v5129
        %v5283 = vpop.f32.mrf.mxu0
        %v5284 = vadd.f32 0.0, %v5283
        %v5285 = vpop.f32.mrf.mxu0
        %v5286 = vadd.f32 0.0, %v5285
        %5287 = vmatprep.mubr.f32.mxu0 0.0
        %5288 = vmatmul.mubr.f32.gmra.mxu0 %v5131
        %v5289 = vpop.f32.mrf.mxu0
        %v5290 = vadd.f32 0.0, %v5289
        %v5291 = vpop.f32.mrf.mxu0
        %v5292 = vadd.f32 0.0, %v5291
        %5293 = vmatprep.mubr.f32.mxu0 0.0
        %5294 = vmatmul.mubr.f32.gmra.mxu0 %v5133
        %v5295 = vpop.f32.mrf.mxu0
        %v5296 = vadd.f32 0.0, %v5295
        %v5297 = vpop.f32.mrf.mxu0
        %v5298 = vadd.f32 0.0, %v5297
        %5299 = vmatprep.mubr.f32.mxu0 0.0
        %5300 = vmatmul.mubr.f32.gmra.mxu0 %v5135
        %v5301 = vpop.f32.mrf.mxu0
        %v5302 = vadd.f32 0.0, %v5301
        %v5303 = vpop.f32.mrf.mxu0
        %v5304 = vadd.f32 0.0, %v5303
        %5305 = vmatprep.mubr.f32.mxu0 0.0
        %5306 = vmatmul.mubr.f32.gmra.mxu0 %v5137
        %v5307 = vpop.f32.mrf.mxu0
        %v5308 = vadd.f32 0.0, %v5307
        %v5309 = vpop.f32.mrf.mxu0
        %v5310 = vadd.f32 0.0, %v5309
        %5311 = vmatprep.mubr.f32.mxu0 0.0
        %5312 = vmatmul.mubr.f32.gmra.mxu0 %v5139
        %v5313 = vpop.f32.mrf.mxu0
        %v5314 = vadd.f32 0.0, %v5313
        %v5315 = vpop.f32.mrf.mxu0
        %v5316 = vadd.f32 0.0, %v5315
        %5317 = vmatprep.mubr.f32.mxu0 0.0
        %5318 = vmatmul.mubr.f32.gmra.mxu0 %v5141
        %v5319 = vpop.f32.mrf.mxu0
        %v5320 = vadd.f32 0.0, %v5319
        %v5321 = vpop.f32.mrf.mxu0
        %v5322 = vadd.f32 0.0, %v5321
        %5323 = vmatprep.mubr.f32.mxu0 0.0
        %5324 = vmatmul.mubr.f32.gmra.mxu0 %v5143
        %v5325 = vpop.f32.mrf.mxu0
        %v5326 = vadd.f32 0.0, %v5325
        %v5327 = vpop.f32.mrf.mxu0
        %v5328 = vadd.f32 0.0, %v5327
        %5329 = vmatprep.mubr.f32.mxu0 0.0
        %5330 = vmatmul.mubr.f32.gmra.mxu0 %v5145
        %v5331 = vpop.f32.mrf.mxu0
        %v5332 = vadd.f32 0.0, %v5331
        %v5333 = vpop.f32.mrf.mxu0
        %v5334 = vadd.f32 0.0, %v5333
        %5335 = vmatprep.mubr.f32.mxu0 0.0
        %5336 = vmatmul.mubr.f32.gmra.mxu0 %v5147
        %v5337 = vpop.f32.mrf.mxu0
        %v5338 = vadd.f32 0.0, %v5337
        %v5339 = vpop.f32.mrf.mxu0
        %v5340 = vadd.f32 0.0, %v5339
        %5341 = vmatprep.mubr.f32.mxu0 0.0
        %5342 = vmatmul.mubr.f32.gmra.mxu0 %v5149
        %v5343 = vpop.f32.mrf.mxu0
        %v5344 = vadd.f32 0.0, %v5343
        %v5345 = vpop.f32.mrf.mxu0
        %v5346 = vadd.f32 0.0, %v5345
        %5347 = vmatprep.mubr.f32.mxu0 0.0
        %5348 = vmatmul.mubr.f32.gmra.mxu0 %v5151
        %v5349 = vpop.f32.mrf.mxu0
        %v5350 = vadd.f32 0.0, %v5349
        %v5351 = vpop.f32.mrf.mxu0
        %v5352 = vadd.f32 0.0, %v5351
        %5353 = vmatprep.mubr.f32.mxu0 0.0
        %5354 = vmatmul.mubr.f32.gmra.mxu0 %v5153
        %v5355 = vpop.f32.mrf.mxu0
        %v5356 = vadd.f32 0.0, %v5355
        %v5357 = vpop.f32.mrf.mxu0
        %v5358 = vadd.f32 0.0, %v5357
        %5359 = vmatprep.mubr.f32.mxu0 0.0
        %5360 = vmatmul.mubr.f32.gmra.mxu0 %v5155
        %v5361 = vpop.f32.mrf.mxu0
        %v5362 = vadd.f32 0.0, %v5361
        %v5363 = vpop.f32.mrf.mxu0
        %v5364 = vadd.f32 0.0, %v5363
        %5365 = vmatprep.mubr.f32.mxu0 0.0
        %5366 = vmatmul.mubr.f32.gmra.mxu0 %v5157
        %v5367 = vpop.f32.mrf.mxu0
        %v5368 = vadd.f32 0.0, %v5367
        %v5369 = vpop.f32.mrf.mxu0
        %v5370 = vadd.f32 0.0, %v5369
        %5371 = vmatprep.mubr.f32.mxu0 0.0
        %5372 = vmatmul.mubr.f32.gmra.mxu0 %v5159
        %v5373 = vpop.f32.mrf.mxu0
        %v5374 = vadd.f32 0.0, %v5373
        %v5375 = vpop.f32.mrf.mxu0
        %v5376 = vadd.f32 0.0, %v5375
        %5377 = vmatprep.mubr.f32.mxu0 0.0
        %5378 = vmatmul.mubr.f32.gmra.mxu0 %v5161
        %v5379 = vpop.f32.mrf.mxu0
        %v5380 = vadd.f32 0.0, %v5379
        %v5381 = vpop.f32.mrf.mxu0
        %v5382 = vadd.f32 0.0, %v5381
        %5383 = vmatprep.mubr.f32.mxu0 0.0
        %5384 = vmatmul.mubr.f32.gmra.mxu0 %v5163
        %v5385 = vpop.f32.mrf.mxu0
        %v5386 = vadd.f32 0.0, %v5385
        %v5387 = vpop.f32.mrf.mxu0
        %v5388 = vadd.f32 0.0, %v5387
        %5389 = vmatprep.mubr.f32.mxu0 0.0
        %5390 = vmatmul.mubr.f32.gmra.mxu0 %v5165
        %v5391 = vpop.f32.mrf.mxu0
        %v5392 = vadd.f32 0.0, %v5391
        %v5393 = vpop.f32.mrf.mxu0
        %v5394 = vadd.f32 0.0, %v5393
        %5395 = vmatprep.mubr.f32.mxu0 0.0
        %5396 = vmatmul.mubr.f32.gmra.mxu0 %v5167
        %v5397 = vpop.f32.mrf.mxu0
        %v5398 = vadd.f32 0.0, %v5397
        %v5399 = vpop.f32.mrf.mxu0
        %v5400 = vadd.f32 0.0, %v5399
        %5401 = vmatprep.mubr.f32.mxu0 0.0
        %5402 = vmatmul.mubr.f32.gmra.mxu0 %v5169
        %v5403 = vpop.f32.mrf.mxu0
        %v5404 = vadd.f32 0.0, %v5403
        %v5405 = vpop.f32.mrf.mxu0
        %v5406 = vadd.f32 0.0, %v5405
        %5407 = vmatprep.mubr.f32.mxu0 0.0
        %5408 = vmatmul.mubr.f32.gmra.mxu0 %v5171
        %v5409 = vpop.f32.mrf.mxu0
        %v5410 = vadd.f32 0.0, %v5409
        %v5411 = vpop.f32.mrf.mxu0
        %v5412 = vadd.f32 0.0, %v5411
        %5413 = vmatprep.mubr.f32.mxu0 0.0
        %5414 = vmatmul.mubr.f32.gmra.mxu0 %v5173
        %v5415 = vpop.f32.mrf.mxu0
        %v5416 = vadd.f32 0.0, %v5415
        %v5417 = vpop.f32.mrf.mxu0
        %v5418 = vadd.f32 0.0, %v5417
        %5419 = vmatprep.mubr.f32.mxu0 0.0
        %5420 = vmatmul.mubr.f32.gmra.mxu0 %v5175
        %v5421 = vpop.f32.mrf.mxu0
        %v5422 = vadd.f32 0.0, %v5421
        %v5423 = vpop.f32.mrf.mxu0
        %v5424 = vadd.f32 0.0, %v5423
        %5425 = vmatprep.mubr.f32.mxu0 0.0
        %5426 = vmatmul.mubr.f32.gmra.mxu0 %v5177
        %v5427 = vpop.f32.mrf.mxu0
        %v5428 = vadd.f32 0.0, %v5427
        %v5429 = vpop.f32.mrf.mxu0
        %v5430 = vadd.f32 0.0, %v5429
        %5431 = vmatprep.mubr.f32.mxu0 0.0
        %5432 = vmatmul.mubr.f32.gmra.mxu0 %v5179
        %v5433 = vpop.f32.mrf.mxu0
        %v5434 = vadd.f32 0.0, %v5433
        %v5435 = vpop.f32.mrf.mxu0
        %v5436 = vadd.f32 0.0, %v5435
        %5437 = vdwg.mxu0
        %v5438 = vadd.f32 %v4969, %v5254
        %v5439 = vadd.f32 %v4970, %v5256
        %v5440 = vadd.f32 %v4971, %v5260
        %v5441 = vadd.f32 %v4972, %v5262
        %v5442 = vadd.f32 %v4973, %v5266
        %v5443 = vadd.f32 %v4974, %v5268
        %v5444 = vadd.f32 %v4975, %v5272
        %v5445 = vadd.f32 %v4976, %v5274
        %v5446 = vadd.f32 %v4977, %v5278
        %v5447 = vadd.f32 %v4978, %v5280
        %v5448 = vadd.f32 %v4979, %v5284
        %v5449 = vadd.f32 %v4980, %v5286
        %v5450 = vadd.f32 %v4981, %v5290
        %v5451 = vadd.f32 %v4982, %v5292
        %v5452 = vadd.f32 %v4983, %v5296
        %v5453 = vadd.f32 %v4984, %v5298
        %v5454 = vadd.f32 %v4985, %v5302
        %v5455 = vadd.f32 %v4986, %v5304
        %v5456 = vadd.f32 %v4987, %v5308
        %v5457 = vadd.f32 %v4988, %v5310
        %v5458 = vadd.f32 %v4989, %v5314
        %v5459 = vadd.f32 %v4990, %v5316
        %v5460 = vadd.f32 %v4991, %v5320
        %v5461 = vadd.f32 %v4992, %v5322
        %v5462 = vadd.f32 %v4993, %v5326
        %v5463 = vadd.f32 %v4994, %v5328
        %v5464 = vadd.f32 %v4995, %v5332
        %v5465 = vadd.f32 %v4996, %v5334
        %v5466 = vadd.f32 %v4997, %v5338
        %v5467 = vadd.f32 %v4998, %v5340
        %v5468 = vadd.f32 %v4999, %v5344
        %v5469 = vadd.f32 %v5000, %v5346
        %v5470 = vadd.f32 %v5001, %v5350
        %v5471 = vadd.f32 %v5002, %v5352
        %v5472 = vadd.f32 %v5003, %v5356
        %v5473 = vadd.f32 %v5004, %v5358
        %v5474 = vadd.f32 %v5005, %v5362
        %v5475 = vadd.f32 %v5006, %v5364
        %v5476 = vadd.f32 %v5007, %v5368
        %v5477 = vadd.f32 %v5008, %v5370
        %v5478 = vadd.f32 %v5009, %v5374
        %v5479 = vadd.f32 %v5010, %v5376
        %v5480 = vadd.f32 %v5011, %v5380
        %v5481 = vadd.f32 %v5012, %v5382
        %v5482 = vadd.f32 %v5013, %v5386
        %v5483 = vadd.f32 %v5014, %v5388
        %v5484 = vadd.f32 %v5015, %v5392
        %v5485 = vadd.f32 %v5016, %v5394
        %v5486 = vadd.f32 %v5017, %v5398
        %v5487 = vadd.f32 %v5018, %v5400
        %v5488 = vadd.f32 %v5019, %v5404
        %v5489 = vadd.f32 %v5020, %v5406
        %v5490 = vadd.f32 %v5021, %v5410
        %v5491 = vadd.f32 %v5022, %v5412
        %v5492 = vadd.f32 %v5023, %v5416
        %v5493 = vadd.f32 %v5024, %v5418
        %v5494 = vadd.f32 %v5025, %v5422
        %v5495 = vadd.f32 %v5026, %v5424
        %v5496 = vadd.f32 %v5027, %v5428
        %v5497 = vadd.f32 %v5028, %v5430
        %v5498 = vadd.f32 %v5029, %v5434
        %v5499 = vadd.f32 %v5030, %v5436
        %s5500 = scalar_lea.vmem %s4, 704
        %v5501 = vld [vmem:[%s5500] sm:$0xff]
        %v5502 = vld [vmem:[%s5500 + $0x8] sm:$0xff]
        %v5503 = vld [vmem:[%s5500 + $0x10] sm:$0xff]
        %v5504 = vld [vmem:[%s5500 + $0x18] sm:$0xff]
        %v5505 = vld [vmem:[%s5500 + $0x20] sm:$0xff]
        %v5506 = vld [vmem:[%s5500 + $0x28] sm:$0xff]
        %v5507 = vld [vmem:[%s5500 + $0x30] sm:$0xff]
        %v5508 = vld [vmem:[%s5500 + $0x38] sm:$0xff]
        %v5509 = vld [vmem:[%s5500 + $0x40] sm:$0xff]
        %v5510 = vld [vmem:[%s5500 + $0x48] sm:$0xff]
        %v5511 = vld [vmem:[%s5500 + $0x50] sm:$0xff]
        %v5512 = vld [vmem:[%s5500 + $0x58] sm:$0xff]
        %v5513 = vld [vmem:[%s5500 + $0x60] sm:$0xff]
        %v5514 = vld [vmem:[%s5500 + $0x68] sm:$0xff]
        %v5515 = vld [vmem:[%s5500 + $0x70] sm:$0xff]
        %v5516 = vld [vmem:[%s5500 + $0x78] sm:$0xff]
        %v5517 = vld [vmem:[%s5500 + $0x80] sm:$0xff]
        %v5518 = vld [vmem:[%s5500 + $0x88] sm:$0xff]
        %v5519 = vld [vmem:[%s5500 + $0x90] sm:$0xff]
        %v5520 = vld [vmem:[%s5500 + $0x98] sm:$0xff]
        %v5521 = vld [vmem:[%s5500 + $0xa0] sm:$0xf]
        %v5522 = vld [vmem:[%s5500 + $0xa8] sm:$0xf]
        %v5523 = vsel %vm3927, %v3789, 0
        %v5526 = vsel %vm2261, %v5521, 0
        %v5529 = vsel %vm2261, %v5522, 0
        %5531 = vmatprep.subr.mxu0 0.0
        %5532 = vmatpush1.msra.mxu0 0.0
        %5533 = vmatprep.subr.mxu0 0.0
        %5534 = vmatpush1.msra.mxu0 0.0
        %5535 = vmatprep.subr.mxu0 0.0
        %5536 = vmatpush1.msra.mxu0 0.0
        %5537 = vmatprep.subr.mxu0 0.0
        %5538 = vmatpush1.msra.mxu0 0.0
        %5539 = vmatprep.subr.mxu0 0.0
        %5540 = vmatpush1.msra.mxu0 0.0
        %5541 = vmatprep.subr.mxu0 %v5529
        %5542 = vmatpush1.msra.mxu0 %v5526
        %5543 = vmatprep.subr.mxu0 %v5520
        %5544 = vmatpush1.msra.mxu0 %v5519
        %5545 = vmatprep.subr.mxu0 %v5518
        %5546 = vmatpush1.msra.mxu0 %v5517
        %5547 = vmatprep.subr.mxu0 %v5516
        %5548 = vmatpush1.msra.mxu0 %v5515
        %5549 = vmatprep.subr.mxu0 %v5514
        %5550 = vmatpush1.msra.mxu0 %v5513
        %5551 = vmatprep.subr.mxu0 %v5512
        %5552 = vmatpush1.msra.mxu0 %v5511
        %5553 = vmatprep.subr.mxu0 %v5510
        %5554 = vmatpush1.msra.mxu0 %v5509
        %5555 = vmatprep.subr.mxu0 %v5508
        %5556 = vmatpush1.msra.mxu0 %v5507
        %5557 = vmatprep.subr.mxu0 %v5506
        %5558 = vmatpush1.msra.mxu0 %v5505
        %5559 = vmatprep.subr.mxu0 %v5504
        %5560 = vmatpush1.msra.mxu0 %v5503
        %5561 = vmatprep.subr.mxu0 %v5502
        %5562 = vmatpush1.msra.mxu0 %v5501
        %5563 = vmatprep.subr.mxu0 0.0
        %5564 = vmatpush2.msra.mxu0 0.0
        %5565 = vmatprep.subr.mxu0 0.0
        %5566 = vmatpush2.msra.mxu0 0.0
        %5567 = vmatprep.subr.mxu0 0.0
        %5568 = vmatpush2.msra.mxu0 0.0
        %5569 = vmatprep.subr.mxu0 0.0
        %5570 = vmatpush2.msra.mxu0 0.0
        %5571 = vmatprep.subr.mxu0 0.0
        %5572 = vmatpush2.msra.mxu0 0.0
        %5573 = vmatprep.subr.mxu0 0.0
        %5574 = vmatpush2.msra.mxu0 0.0
        %5575 = vmatprep.subr.mxu0 0.0
        %5576 = vmatpush2.msra.mxu0 0.0
        %5577 = vmatprep.subr.mxu0 0.0
        %5578 = vmatpush2.msra.mxu0 0.0
        %5579 = vmatprep.subr.mxu0 0.0
        %5580 = vmatpush2.msra.mxu0 0.0
        %5581 = vmatprep.subr.mxu0 0.0
        %5582 = vmatpush2.msra.mxu0 0.0
        %5583 = vmatprep.subr.mxu0 0.0
        %5584 = vmatpush2.msra.mxu0 0.0
        %5585 = vmatprep.subr.mxu0 0.0
        %5586 = vmatpush2.msra.mxu0 0.0
        %5587 = vmatprep.subr.mxu0 0.0
        %5588 = vmatpush2.msra.mxu0 0.0
        %5589 = vmatprep.subr.mxu0 0.0
        %5590 = vmatpush2.msra.mxu0 0.0
        %5591 = vmatprep.subr.mxu0 0.0
        %5592 = vmatpush2.msra.mxu0 0.0
        %5593 = vmatprep.subr.mxu0 0.0
        %5594 = vmatpush2.msra.mxu0 0.0
        %5595 = vmatprep.mubr.f32.mxu0 0.0
        %5596 = vmatmul.mubr.f32.gmra.mxu0 %v4249
        %v5597 = vpop.f32.mrf.mxu0
        %v5598 = vadd.f32 0.0, %v5597
        %v5599 = vpop.f32.mrf.mxu0
        %v5600 = vadd.f32 0.0, %v5599
        %5601 = vmatprep.mubr.f32.mxu0 0.0
        %5602 = vmatmul.mubr.f32.gmra.mxu0 %v4251
        %v5603 = vpop.f32.mrf.mxu0
        %v5604 = vadd.f32 0.0, %v5603
        %v5605 = vpop.f32.mrf.mxu0
        %v5606 = vadd.f32 0.0, %v5605
        %5607 = vmatprep.mubr.f32.mxu0 0.0
        %5608 = vmatmul.mubr.f32.gmra.mxu0 %v4253
        %v5609 = vpop.f32.mrf.mxu0
        %v5610 = vadd.f32 0.0, %v5609
        %v5611 = vpop.f32.mrf.mxu0
        %v5612 = vadd.f32 0.0, %v5611
        %5613 = vmatprep.mubr.f32.mxu0 0.0
        %5614 = vmatmul.mubr.f32.gmra.mxu0 %v4255
        %v5615 = vpop.f32.mrf.mxu0
        %v5616 = vadd.f32 0.0, %v5615
        %v5617 = vpop.f32.mrf.mxu0
        %v5618 = vadd.f32 0.0, %v5617
        %5619 = vmatprep.mubr.f32.mxu0 0.0
        %5620 = vmatmul.mubr.f32.gmra.mxu0 %v4257
        %v5621 = vpop.f32.mrf.mxu0
        %v5622 = vadd.f32 0.0, %v5621
        %v5623 = vpop.f32.mrf.mxu0
        %v5624 = vadd.f32 0.0, %v5623
        %5625 = vmatprep.mubr.f32.mxu0 0.0
        %5626 = vmatmul.mubr.f32.gmra.mxu0 %v4259
        %v5627 = vpop.f32.mrf.mxu0
        %v5628 = vadd.f32 0.0, %v5627
        %v5629 = vpop.f32.mrf.mxu0
        %v5630 = vadd.f32 0.0, %v5629
        %5631 = vmatprep.mubr.f32.mxu0 0.0
        %5632 = vmatmul.mubr.f32.gmra.mxu0 %v4261
        %v5633 = vpop.f32.mrf.mxu0
        %v5634 = vadd.f32 0.0, %v5633
        %v5635 = vpop.f32.mrf.mxu0
        %v5636 = vadd.f32 0.0, %v5635
        %5637 = vmatprep.mubr.f32.mxu0 0.0
        %5638 = vmatmul.mubr.f32.gmra.mxu0 %v4263
        %v5639 = vpop.f32.mrf.mxu0
        %v5640 = vadd.f32 0.0, %v5639
        %v5641 = vpop.f32.mrf.mxu0
        %v5642 = vadd.f32 0.0, %v5641
        %5643 = vmatprep.mubr.f32.mxu0 0.0
        %5644 = vmatmul.mubr.f32.gmra.mxu0 %v4265
        %v5645 = vpop.f32.mrf.mxu0
        %v5646 = vadd.f32 0.0, %v5645
        %v5647 = vpop.f32.mrf.mxu0
        %v5648 = vadd.f32 0.0, %v5647
        %5649 = vmatprep.mubr.f32.mxu0 0.0
        %5650 = vmatmul.mubr.f32.gmra.mxu0 %v4267
        %v5651 = vpop.f32.mrf.mxu0
        %v5652 = vadd.f32 0.0, %v5651
        %v5653 = vpop.f32.mrf.mxu0
        %v5654 = vadd.f32 0.0, %v5653
        %5655 = vmatprep.mubr.f32.mxu0 0.0
        %5656 = vmatmul.mubr.f32.gmra.mxu0 %v4269
        %v5657 = vpop.f32.mrf.mxu0
        %v5658 = vadd.f32 0.0, %v5657
        %v5659 = vpop.f32.mrf.mxu0
        %v5660 = vadd.f32 0.0, %v5659
        %5661 = vmatprep.mubr.f32.mxu0 0.0
        %5662 = vmatmul.mubr.f32.gmra.mxu0 %v4271
        %v5663 = vpop.f32.mrf.mxu0
        %v5664 = vadd.f32 0.0, %v5663
        %v5665 = vpop.f32.mrf.mxu0
        %v5666 = vadd.f32 0.0, %v5665
        %5667 = vmatprep.mubr.f32.mxu0 0.0
        %5668 = vmatmul.mubr.f32.gmra.mxu0 %v4273
        %v5669 = vpop.f32.mrf.mxu0
        %v5670 = vadd.f32 0.0, %v5669
        %v5671 = vpop.f32.mrf.mxu0
        %v5672 = vadd.f32 0.0, %v5671
        %5673 = vmatprep.mubr.f32.mxu0 0.0
        %5674 = vmatmul.mubr.f32.gmra.mxu0 %v4275
        %v5675 = vpop.f32.mrf.mxu0
        %v5676 = vadd.f32 0.0, %v5675
        %v5677 = vpop.f32.mrf.mxu0
        %v5678 = vadd.f32 0.0, %v5677
        %5679 = vmatprep.mubr.f32.mxu0 0.0
        %5680 = vmatmul.mubr.f32.gmra.mxu0 %v4277
        %v5681 = vpop.f32.mrf.mxu0
        %v5682 = vadd.f32 0.0, %v5681
        %v5683 = vpop.f32.mrf.mxu0
        %v5684 = vadd.f32 0.0, %v5683
        %5685 = vmatprep.mubr.f32.mxu0 0.0
        %5686 = vmatmul.mubr.f32.gmra.mxu0 %v4279
        %v5687 = vpop.f32.mrf.mxu0
        %v5688 = vadd.f32 0.0, %v5687
        %v5689 = vpop.f32.mrf.mxu0
        %v5690 = vadd.f32 0.0, %v5689
        %5691 = vmatprep.mubr.f32.mxu0 0.0
        %5692 = vmatmul.mubr.f32.gmra.mxu0 %v4281
        %v5693 = vpop.f32.mrf.mxu0
        %v5694 = vadd.f32 0.0, %v5693
        %v5695 = vpop.f32.mrf.mxu0
        %v5696 = vadd.f32 0.0, %v5695
        %5697 = vmatprep.mubr.f32.mxu0 0.0
        %5698 = vmatmul.mubr.f32.gmra.mxu0 %v4283
        %v5699 = vpop.f32.mrf.mxu0
        %v5700 = vadd.f32 0.0, %v5699
        %v5701 = vpop.f32.mrf.mxu0
        %v5702 = vadd.f32 0.0, %v5701
        %5703 = vmatprep.mubr.f32.mxu0 0.0
        %5704 = vmatmul.mubr.f32.gmra.mxu0 %v4285
        %v5705 = vpop.f32.mrf.mxu0
        %v5706 = vadd.f32 0.0, %v5705
        %v5707 = vpop.f32.mrf.mxu0
        %v5708 = vadd.f32 0.0, %v5707
        %5709 = vmatprep.mubr.f32.mxu0 0.0
        %5710 = vmatmul.mubr.f32.gmra.mxu0 %v4287
        %v5711 = vpop.f32.mrf.mxu0
        %v5712 = vadd.f32 0.0, %v5711
        %v5713 = vpop.f32.mrf.mxu0
        %v5714 = vadd.f32 0.0, %v5713
        %5715 = vmatprep.mubr.f32.mxu0 0.0
        %5716 = vmatmul.mubr.f32.gmra.mxu0 %v4289
        %v5717 = vpop.f32.mrf.mxu0
        %v5718 = vadd.f32 0.0, %v5717
        %v5719 = vpop.f32.mrf.mxu0
        %v5720 = vadd.f32 0.0, %v5719
        %5721 = vmatprep.mubr.f32.mxu0 0.0
        %5722 = vmatmul.mubr.f32.gmra.mxu0 %v4291
        %v5723 = vpop.f32.mrf.mxu0
        %v5724 = vadd.f32 0.0, %v5723
        %v5725 = vpop.f32.mrf.mxu0
        %v5726 = vadd.f32 0.0, %v5725
        %5727 = vmatprep.mubr.f32.mxu0 0.0
        %5728 = vmatmul.mubr.f32.gmra.mxu0 %v4293
        %v5729 = vpop.f32.mrf.mxu0
        %v5730 = vadd.f32 0.0, %v5729
        %v5731 = vpop.f32.mrf.mxu0
        %v5732 = vadd.f32 0.0, %v5731
        %5733 = vmatprep.mubr.f32.mxu0 0.0
        %5734 = vmatmul.mubr.f32.gmra.mxu0 %v4295
        %v5735 = vpop.f32.mrf.mxu0
        %v5736 = vadd.f32 0.0, %v5735
        %v5737 = vpop.f32.mrf.mxu0
        %v5738 = vadd.f32 0.0, %v5737
        %5739 = vmatprep.mubr.f32.mxu0 0.0
        %5740 = vmatmul.mubr.f32.gmra.mxu0 %v4297
        %v5741 = vpop.f32.mrf.mxu0
        %v5742 = vadd.f32 0.0, %v5741
        %v5743 = vpop.f32.mrf.mxu0
        %v5744 = vadd.f32 0.0, %v5743
        %5745 = vmatprep.mubr.f32.mxu0 0.0
        %5746 = vmatmul.mubr.f32.gmra.mxu0 %v4299
        %v5747 = vpop.f32.mrf.mxu0
        %v5748 = vadd.f32 0.0, %v5747
        %v5749 = vpop.f32.mrf.mxu0
        %v5750 = vadd.f32 0.0, %v5749
        %5751 = vmatprep.mubr.f32.mxu0 0.0
        %5752 = vmatmul.mubr.f32.gmra.mxu0 %v4301
        %v5753 = vpop.f32.mrf.mxu0
        %v5754 = vadd.f32 0.0, %v5753
        %v5755 = vpop.f32.mrf.mxu0
        %v5756 = vadd.f32 0.0, %v5755
        %5757 = vmatprep.mubr.f32.mxu0 0.0
        %5758 = vmatmul.mubr.f32.gmra.mxu0 %v4303
        %v5759 = vpop.f32.mrf.mxu0
        %v5760 = vadd.f32 0.0, %v5759
        %v5761 = vpop.f32.mrf.mxu0
        %v5762 = vadd.f32 0.0, %v5761
        %5763 = vmatprep.mubr.f32.mxu0 0.0
        %5764 = vmatmul.mubr.f32.gmra.mxu0 %v4305
        %v5765 = vpop.f32.mrf.mxu0
        %v5766 = vadd.f32 0.0, %v5765
        %v5767 = vpop.f32.mrf.mxu0
        %v5768 = vadd.f32 0.0, %v5767
        %5769 = vmatprep.mubr.f32.mxu0 0.0
        %5770 = vmatmul.mubr.f32.gmra.mxu0 %v4307
        %v5771 = vpop.f32.mrf.mxu0
        %v5772 = vadd.f32 0.0, %v5771
        %v5773 = vpop.f32.mrf.mxu0
        %v5774 = vadd.f32 0.0, %v5773
        %5775 = vmatprep.mubr.f32.mxu0 0.0
        %5776 = vmatmul.mubr.f32.gmra.mxu0 %v5523
        %v5777 = vpop.f32.mrf.mxu0
        %v5778 = vadd.f32 0.0, %v5777
        %v5779 = vpop.f32.mrf.mxu0
        %v5780 = vadd.f32 0.0, %v5779
        %5781 = vdwg.mxu0
        %v5782 = vadd.f32 %v5438, %v5598
        %v5783 = vadd.f32 %v5439, %v5600
        %v5784 = vadd.f32 %v5440, %v5604
        %v5785 = vadd.f32 %v5441, %v5606
        %v5786 = vadd.f32 %v5442, %v5610
        %v5787 = vadd.f32 %v5443, %v5612
        %v5788 = vadd.f32 %v5444, %v5616
        %v5789 = vadd.f32 %v5445, %v5618
        %v5790 = vadd.f32 %v5446, %v5622
        %v5791 = vadd.f32 %v5447, %v5624
        %v5792 = vadd.f32 %v5448, %v5628
        %v5793 = vadd.f32 %v5449, %v5630
        %v5794 = vadd.f32 %v5450, %v5634
        %v5795 = vadd.f32 %v5451, %v5636
        %v5796 = vadd.f32 %v5452, %v5640
        %v5797 = vadd.f32 %v5453, %v5642
        %v5798 = vadd.f32 %v5454, %v5646
        %v5799 = vadd.f32 %v5455, %v5648
        %v5800 = vadd.f32 %v5456, %v5652
        %v5801 = vadd.f32 %v5457, %v5654
        %v5802 = vadd.f32 %v5458, %v5658
        %v5803 = vadd.f32 %v5459, %v5660
        %v5804 = vadd.f32 %v5460, %v5664
        %v5805 = vadd.f32 %v5461, %v5666
        %v5806 = vadd.f32 %v5462, %v5670
        %v5807 = vadd.f32 %v5463, %v5672
        %v5808 = vadd.f32 %v5464, %v5676
        %v5809 = vadd.f32 %v5465, %v5678
        %v5810 = vadd.f32 %v5466, %v5682
        %v5811 = vadd.f32 %v5467, %v5684
        %v5812 = vadd.f32 %v5468, %v5688
        %v5813 = vadd.f32 %v5469, %v5690
        %v5814 = vadd.f32 %v5470, %v5694
        %v5815 = vadd.f32 %v5471, %v5696
        %v5816 = vadd.f32 %v5472, %v5700
        %v5817 = vadd.f32 %v5473, %v5702
        %v5818 = vadd.f32 %v5474, %v5706
        %v5819 = vadd.f32 %v5475, %v5708
        %v5820 = vadd.f32 %v5476, %v5712
        %v5821 = vadd.f32 %v5477, %v5714
        %v5822 = vadd.f32 %v5478, %v5718
        %v5823 = vadd.f32 %v5479, %v5720
        %v5824 = vadd.f32 %v5480, %v5724
        %v5825 = vadd.f32 %v5481, %v5726
        %v5826 = vadd.f32 %v5482, %v5730
        %v5827 = vadd.f32 %v5483, %v5732
        %v5828 = vadd.f32 %v5484, %v5736
        %v5829 = vadd.f32 %v5485, %v5738
        %v5830 = vadd.f32 %v5486, %v5742
        %v5831 = vadd.f32 %v5487, %v5744
        %v5832 = vadd.f32 %v5488, %v5748
        %v5833 = vadd.f32 %v5489, %v5750
        %v5834 = vadd.f32 %v5490, %v5754
        %v5835 = vadd.f32 %v5491, %v5756
        %v5836 = vadd.f32 %v5492, %v5760
        %v5837 = vadd.f32 %v5493, %v5762
        %v5838 = vadd.f32 %v5494, %v5766
        %v5839 = vadd.f32 %v5495, %v5768
        %v5840 = vadd.f32 %v5496, %v5772
        %v5841 = vadd.f32 %v5497, %v5774
        %v5842 = vadd.f32 %v5498, %v5778
        %v5843 = vadd.f32 %v5499, %v5780
        %v5844 = vld [vmem:[%s5] sm:$0x3]
        %v5846 = vlaneseq
        %v5847 = vshrl.u32 %v5846, 7
        %v5848 = vsub.s32 0, %v5847
        %v5849 = vrot.slane %v5844, %v5848
        %v5850 = vlaneseq
        %v5851 = vshrl.u32 %v5850, 7
        %v5852 = vsub.s32 1, %v5851
        %v5853 = vrot.slane %v5844, %v5852
        %v5856 = vadd.f32 %v5782, %v5849
        %v5857 = vadd.f32 %v5783, %v5853
        %v5858 = vadd.f32 %v5784, %v5849
        %v5859 = vadd.f32 %v5785, %v5853
        %v5860 = vadd.f32 %v5786, %v5849
        %v5861 = vadd.f32 %v5787, %v5853
        %v5862 = vadd.f32 %v5788, %v5849
        %v5863 = vadd.f32 %v5789, %v5853
        %v5864 = vadd.f32 %v5790, %v5849
        %v5865 = vadd.f32 %v5791, %v5853
        %v5866 = vadd.f32 %v5792, %v5849
        %v5867 = vadd.f32 %v5793, %v5853
        %v5868 = vadd.f32 %v5794, %v5849
        %v5869 = vadd.f32 %v5795, %v5853
        %v5870 = vadd.f32 %v5796, %v5849
        %v5871 = vadd.f32 %v5797, %v5853
        %v5872 = vadd.f32 %v5798, %v5849
        %v5873 = vadd.f32 %v5799, %v5853
        %v5874 = vadd.f32 %v5800, %v5849
        %v5875 = vadd.f32 %v5801, %v5853
        %v5876 = vadd.f32 %v5802, %v5849
        %v5877 = vadd.f32 %v5803, %v5853
        %v5878 = vadd.f32 %v5804, %v5849
        %v5879 = vadd.f32 %v5805, %v5853
        %v5880 = vadd.f32 %v5806, %v5849
        %v5881 = vadd.f32 %v5807, %v5853
        %v5882 = vadd.f32 %v5808, %v5849
        %v5883 = vadd.f32 %v5809, %v5853
        %v5884 = vadd.f32 %v5810, %v5849
        %v5885 = vadd.f32 %v5811, %v5853
        %v5886 = vadd.f32 %v5812, %v5849
        %v5887 = vadd.f32 %v5813, %v5853
        %v5888 = vadd.f32 %v5814, %v5849
        %v5889 = vadd.f32 %v5815, %v5853
        %v5890 = vadd.f32 %v5816, %v5849
        %v5891 = vadd.f32 %v5817, %v5853
        %v5892 = vadd.f32 %v5818, %v5849
        %v5893 = vadd.f32 %v5819, %v5853
        %v5894 = vadd.f32 %v5820, %v5849
        %v5895 = vadd.f32 %v5821, %v5853
        %v5896 = vadd.f32 %v5822, %v5849
        %v5897 = vadd.f32 %v5823, %v5853
        %v5898 = vadd.f32 %v5824, %v5849
        %v5899 = vadd.f32 %v5825, %v5853
        %v5900 = vadd.f32 %v5826, %v5849
        %v5901 = vadd.f32 %v5827, %v5853
        %v5902 = vadd.f32 %v5828, %v5849
        %v5903 = vadd.f32 %v5829, %v5853
        %v5904 = vadd.f32 %v5830, %v5849
        %v5905 = vadd.f32 %v5831, %v5853
        %v5906 = vadd.f32 %v5832, %v5849
        %v5907 = vadd.f32 %v5833, %v5853
        %v5908 = vadd.f32 %v5834, %v5849
        %v5909 = vadd.f32 %v5835, %v5853
        %v5910 = vadd.f32 %v5836, %v5849
        %v5911 = vadd.f32 %v5837, %v5853
        %v5912 = vadd.f32 %v5838, %v5849
        %v5913 = vadd.f32 %v5839, %v5853
        %v5914 = vadd.f32 %v5840, %v5849
        %v5915 = vadd.f32 %v5841, %v5853
        %v5916 = vadd.f32 %v5842, %v5849
        %v5917 = vadd.f32 %v5843, %v5853
        %v5918 = vmax.f32 %v5856, 0.0
        %v5919 = vmax.f32 %v5857, 0.0
        %v5920 = vmax.f32 %v5858, 0.0
        %v5921 = vmax.f32 %v5859, 0.0
        %v5922 = vmax.f32 %v5860, 0.0
        %v5923 = vmax.f32 %v5861, 0.0
        %v5924 = vmax.f32 %v5862, 0.0
        %v5925 = vmax.f32 %v5863, 0.0
        %v5926 = vmax.f32 %v5864, 0.0
        %v5927 = vmax.f32 %v5865, 0.0
        %v5928 = vmax.f32 %v5866, 0.0
        %v5929 = vmax.f32 %v5867, 0.0
        %v5930 = vmax.f32 %v5868, 0.0
        %v5931 = vmax.f32 %v5869, 0.0
        %v5932 = vmax.f32 %v5870, 0.0
        %v5933 = vmax.f32 %v5871, 0.0
        %v5934 = vmax.f32 %v5872, 0.0
        %v5935 = vmax.f32 %v5873, 0.0
        %v5936 = vmax.f32 %v5874, 0.0
        %v5937 = vmax.f32 %v5875, 0.0
        %v5938 = vmax.f32 %v5876, 0.0
        %v5939 = vmax.f32 %v5877, 0.0
        %v5940 = vmax.f32 %v5878, 0.0
        %v5941 = vmax.f32 %v5879, 0.0
        %v5942 = vmax.f32 %v5880, 0.0
        %v5943 = vmax.f32 %v5881, 0.0
        %v5944 = vmax.f32 %v5882, 0.0
        %v5945 = vmax.f32 %v5883, 0.0
        %v5946 = vmax.f32 %v5884, 0.0
        %v5947 = vmax.f32 %v5885, 0.0
        %v5948 = vmax.f32 %v5886, 0.0
        %v5949 = vmax.f32 %v5887, 0.0
        %v5950 = vmax.f32 %v5888, 0.0
        %v5951 = vmax.f32 %v5889, 0.0
        %v5952 = vmax.f32 %v5890, 0.0
        %v5953 = vmax.f32 %v5891, 0.0
        %v5954 = vmax.f32 %v5892, 0.0
        %v5955 = vmax.f32 %v5893, 0.0
        %v5956 = vmax.f32 %v5894, 0.0
        %v5957 = vmax.f32 %v5895, 0.0
        %v5958 = vmax.f32 %v5896, 0.0
        %v5959 = vmax.f32 %v5897, 0.0
        %v5960 = vmax.f32 %v5898, 0.0
        %v5961 = vmax.f32 %v5899, 0.0
        %v5962 = vmax.f32 %v5900, 0.0
        %v5963 = vmax.f32 %v5901, 0.0
        %v5964 = vmax.f32 %v5902, 0.0
        %v5965 = vmax.f32 %v5903, 0.0
        %v5966 = vmax.f32 %v5904, 0.0
        %v5967 = vmax.f32 %v5905, 0.0
        %v5968 = vmax.f32 %v5906, 0.0
        %v5969 = vmax.f32 %v5907, 0.0
        %v5970 = vmax.f32 %v5908, 0.0
        %v5971 = vmax.f32 %v5909, 0.0
        %v5972 = vmax.f32 %v5910, 0.0
        %v5973 = vmax.f32 %v5911, 0.0
        %v5974 = vmax.f32 %v5912, 0.0
        %v5975 = vmax.f32 %v5913, 0.0
        %v5976 = vmax.f32 %v5914, 0.0
        %v5977 = vmax.f32 %v5915, 0.0
        %v5978 = vmax.f32 %v5916, 0.0
        %v5979 = vmax.f32 %v5917, 0.0
        %v6042 = vrot.slane %v5918, 2
        %v6043 = vrot.slane %v5920, 2
        %v6044 = vsel %vm1313, %v6042, %v6043
        %v6045 = vrot.slane %v5919, 2
        %v6046 = vrot.slane %v5921, 2
        %v6047 = vsel %vm1313, %v6045, %v6046
        %v6048 = vrot.slane %v5922, 2
        %v6049 = vsel %vm1313, %v6043, %v6048
        %v6050 = vrot.slane %v5923, 2
        %v6051 = vsel %vm1313, %v6046, %v6050
        %v6052 = vrot.slane %v5924, 2
        %v6053 = vsel %vm1313, %v6048, %v6052
        %v6054 = vrot.slane %v5925, 2
        %v6055 = vsel %vm1313, %v6050, %v6054
        %v6056 = vrot.slane %v5926, 2
        %v6057 = vsel %vm1313, %v6052, %v6056
        %v6058 = vrot.slane %v5927, 2
        %v6059 = vsel %vm1313, %v6054, %v6058
        %v6060 = vrot.slane %v5928, 2
        %v6061 = vsel %vm1313, %v6056, %v6060
        %v6062 = vrot.slane %v5929, 2
        %v6063 = vsel %vm1313, %v6058, %v6062
        %v6064 = vrot.slane %v5930, 2
        %v6065 = vsel %vm1313, %v6060, %v6064
        %v6066 = vrot.slane %v5931, 2
        %v6067 = vsel %vm1313, %v6062, %v6066
        %v6068 = vrot.slane %v5932, 2
        %v6069 = vsel %vm1313, %v6064, %v6068
        %v6070 = vrot.slane %v5933, 2
        %v6071 = vsel %vm1313, %v6066, %v6070
        %v6072 = vrot.slane %v5934, 2
        %v6073 = vsel %vm1313, %v6068, %v6072
        %v6074 = vrot.slane %v5935, 2
        %v6075 = vsel %vm1313, %v6070, %v6074
        %v6076 = vrot.slane %v5936, 2
        %v6077 = vsel %vm1313, %v6072, %v6076
        %v6078 = vrot.slane %v5937, 2
        %v6079 = vsel %vm1313, %v6074, %v6078
        %v6080 = vrot.slane %v5938, 2
        %v6081 = vsel %vm1313, %v6076, %v6080
        %v6082 = vrot.slane %v5939, 2
        %v6083 = vsel %vm1313, %v6078, %v6082
        %v6084 = vrot.slane %v5940, 2
        %v6085 = vsel %vm1313, %v6080, %v6084
        %v6086 = vrot.slane %v5941, 2
        %v6087 = vsel %vm1313, %v6082, %v6086
        %v6088 = vrot.slane %v5942, 2
        %v6089 = vsel %vm1313, %v6084, %v6088
        %v6090 = vrot.slane %v5943, 2
        %v6091 = vsel %vm1313, %v6086, %v6090
        %v6092 = vrot.slane %v5944, 2
        %v6093 = vsel %vm1313, %v6088, %v6092
        %v6094 = vrot.slane %v5945, 2
        %v6095 = vsel %vm1313, %v6090, %v6094
        %v6096 = vrot.slane %v5946, 2
        %v6097 = vsel %vm1313, %v6092, %v6096
        %v6098 = vrot.slane %v5947, 2
        %v6099 = vsel %vm1313, %v6094, %v6098
        %v6100 = vrot.slane %v5948, 2
        %v6101 = vsel %vm1313, %v6096, %v6100
        %v6102 = vrot.slane %v5949, 2
        %v6103 = vsel %vm1313, %v6098, %v6102
        %v6104 = vrot.slane %v5950, 2
        %v6105 = vsel %vm1313, %v6100, %v6104
        %v6106 = vrot.slane %v5951, 2
        %v6107 = vsel %vm1313, %v6102, %v6106
        %v6108 = vrot.slane %v5952, 2
        %v6109 = vsel %vm1313, %v6104, %v6108
        %v6110 = vrot.slane %v5953, 2
        %v6111 = vsel %vm1313, %v6106, %v6110
        %v6112 = vrot.slane %v5954, 2
        %v6113 = vsel %vm1313, %v6108, %v6112
        %v6114 = vrot.slane %v5955, 2
        %v6115 = vsel %vm1313, %v6110, %v6114
        %v6116 = vrot.slane %v5956, 2
        %v6117 = vsel %vm1313, %v6112, %v6116
        %v6118 = vrot.slane %v5957, 2
        %v6119 = vsel %vm1313, %v6114, %v6118
        %v6120 = vrot.slane %v5958, 2
        %v6121 = vsel %vm1313, %v6116, %v6120
        %v6122 = vrot.slane %v5959, 2
        %v6123 = vsel %vm1313, %v6118, %v6122
        %v6124 = vrot.slane %v5960, 2
        %v6125 = vsel %vm1313, %v6120, %v6124
        %v6126 = vrot.slane %v5961, 2
        %v6127 = vsel %vm1313, %v6122, %v6126
        %v6128 = vrot.slane %v5962, 2
        %v6129 = vsel %vm1313, %v6124, %v6128
        %v6130 = vrot.slane %v5963, 2
        %v6131 = vsel %vm1313, %v6126, %v6130
        %v6132 = vrot.slane %v5964, 2
        %v6133 = vsel %vm1313, %v6128, %v6132
        %v6134 = vrot.slane %v5965, 2
        %v6135 = vsel %vm1313, %v6130, %v6134
        %v6136 = vrot.slane %v5966, 2
        %v6137 = vsel %vm1313, %v6132, %v6136
        %v6138 = vrot.slane %v5967, 2
        %v6139 = vsel %vm1313, %v6134, %v6138
        %v6140 = vrot.slane %v5968, 2
        %v6141 = vsel %vm1313, %v6136, %v6140
        %v6142 = vrot.slane %v5969, 2
        %v6143 = vsel %vm1313, %v6138, %v6142
        %v6144 = vrot.slane %v5970, 2
        %v6145 = vsel %vm1313, %v6140, %v6144
        %v6146 = vrot.slane %v5971, 2
        %v6147 = vsel %vm1313, %v6142, %v6146
        %v6148 = vrot.slane %v5972, 2
        %v6149 = vsel %vm1313, %v6144, %v6148
        %v6150 = vrot.slane %v5973, 2
        %v6151 = vsel %vm1313, %v6146, %v6150
        %v6152 = vrot.slane %v5974, 2
        %v6153 = vsel %vm1313, %v6148, %v6152
        %v6154 = vrot.slane %v5975, 2
        %v6155 = vsel %vm1313, %v6150, %v6154
        %v6156 = vrot.slane %v5976, 2
        %v6157 = vsel %vm1313, %v6152, %v6156
        %v6158 = vrot.slane %v5977, 2
        %v6159 = vsel %vm1313, %v6154, %v6158
        %v6160 = vrot.slane %v5978, 2
        %v6161 = vsel %vm1313, %v6156, %v6160
        %v6162 = vrot.slane %v5979, 2
        %v6163 = vsel %vm1313, %v6158, %v6162
        %v6226 = vmax.f32 %v5918, %v6044
        %v6227 = vmax.f32 %v5919, %v6047
        %v6228 = vmax.f32 %v5920, %v6049
        %v6229 = vmax.f32 %v5921, %v6051
        %v6230 = vmax.f32 %v5922, %v6053
        %v6231 = vmax.f32 %v5923, %v6055
        %v6232 = vmax.f32 %v5924, %v6057
        %v6233 = vmax.f32 %v5925, %v6059
        %v6234 = vmax.f32 %v5926, %v6061
        %v6235 = vmax.f32 %v5927, %v6063
        %v6236 = vmax.f32 %v5928, %v6065
        %v6237 = vmax.f32 %v5929, %v6067
        %v6238 = vmax.f32 %v5930, %v6069
        %v6239 = vmax.f32 %v5931, %v6071
        %v6240 = vmax.f32 %v5932, %v6073
        %v6241 = vmax.f32 %v5933, %v6075
        %v6242 = vmax.f32 %v5934, %v6077
        %v6243 = vmax.f32 %v5935, %v6079
        %v6244 = vmax.f32 %v5936, %v6081
        %v6245 = vmax.f32 %v5937, %v6083
        %v6246 = vmax.f32 %v5938, %v6085
        %v6247 = vmax.f32 %v5939, %v6087
        %v6248 = vmax.f32 %v5940, %v6089
        %v6249 = vmax.f32 %v5941, %v6091
        %v6250 = vmax.f32 %v5942, %v6093
        %v6251 = vmax.f32 %v5943, %v6095
        %v6252 = vmax.f32 %v5944, %v6097
        %v6253 = vmax.f32 %v5945, %v6099
        %v6254 = vmax.f32 %v5946, %v6101
        %v6255 = vmax.f32 %v5947, %v6103
        %v6256 = vmax.f32 %v5948, %v6105
        %v6257 = vmax.f32 %v5949, %v6107
        %v6258 = vmax.f32 %v5950, %v6109
        %v6259 = vmax.f32 %v5951, %v6111
        %v6260 = vmax.f32 %v5952, %v6113
        %v6261 = vmax.f32 %v5953, %v6115
        %v6262 = vmax.f32 %v5954, %v6117
        %v6263 = vmax.f32 %v5955, %v6119
        %v6264 = vmax.f32 %v5956, %v6121
        %v6265 = vmax.f32 %v5957, %v6123
        %v6266 = vmax.f32 %v5958, %v6125
        %v6267 = vmax.f32 %v5959, %v6127
        %v6268 = vmax.f32 %v5960, %v6129
        %v6269 = vmax.f32 %v5961, %v6131
        %v6270 = vmax.f32 %v5962, %v6133
        %v6271 = vmax.f32 %v5963, %v6135
        %v6272 = vmax.f32 %v5964, %v6137
        %v6273 = vmax.f32 %v5965, %v6139
        %v6274 = vmax.f32 %v5966, %v6141
        %v6275 = vmax.f32 %v5967, %v6143
        %v6276 = vmax.f32 %v5968, %v6145
        %v6277 = vmax.f32 %v5969, %v6147
        %v6278 = vmax.f32 %v5970, %v6149
        %v6279 = vmax.f32 %v5971, %v6151
        %v6280 = vmax.f32 %v5972, %v6153
        %v6281 = vmax.f32 %v5973, %v6155
        %v6282 = vmax.f32 %v5974, %v6157
        %v6283 = vmax.f32 %v5975, %v6159
        %v6284 = vmax.f32 %v5976, %v6161
        %v6285 = vmax.f32 %v5977, %v6163
        %v6286 = vmax.f32 %v5978, %v6160
        %v6287 = vmax.f32 %v5979, %v6162
        %v6288 = vld [vmem:[%s6] sm:$0xff]
        %v6289 = vld [vmem:[%s6 + $0x8] sm:$0xff]
        %v6290 = vld [vmem:[%s6 + $0x10] sm:$0xff]
        %v6291 = vld [vmem:[%s6 + $0x18] sm:$0xff]
        %v6292 = vld [vmem:[%s6 + $0x20] sm:$0xff]
        %v6293 = vld [vmem:[%s6 + $0x28] sm:$0xff]
        %v6294 = vld [vmem:[%s6 + $0x30] sm:$0xff]
        %v6295 = vld [vmem:[%s6 + $0x38] sm:$0xff]
        %v6296 = vld [vmem:[%s6 + $0x40] sm:$0xff]
        %v6297 = vld [vmem:[%s6 + $0x48] sm:$0xff]
        %v6298 = vld [vmem:[%s6 + $0x50] sm:$0xff]
        %v6299 = vld [vmem:[%s6 + $0x58] sm:$0xff]
        %v6300 = vld [vmem:[%s6 + $0x60] sm:$0xff]
        %v6301 = vld [vmem:[%s6 + $0x68] sm:$0xff]
        %v6302 = vld [vmem:[%s6 + $0x70] sm:$0xff]
        %v6303 = vld [vmem:[%s6 + $0x78] sm:$0xff]
        %v6304 = vld [vmem:[%s6 + $0x80] sm:$0xff]
        %v6305 = vld [vmem:[%s6 + $0x88] sm:$0xff]
        %v6306 = vld [vmem:[%s6 + $0x90] sm:$0xff]
        %v6307 = vld [vmem:[%s6 + $0x98] sm:$0xff]
        %vm6308 = vcmask 261120
        %v6310 = vsel %vm6308, %v6227, 0
        %v6313 = vsel %vm6308, %v6229, 0
        %v6316 = vsel %vm6308, %v6231, 0
        %v6319 = vsel %vm6308, %v6233, 0
        %v6322 = vsel %vm6308, %v6235, 0
        %v6325 = vsel %vm6308, %v6237, 0
        %v6328 = vsel %vm6308, %v6239, 0
        %v6331 = vsel %vm6308, %v6241, 0
        %v6334 = vsel %vm6308, %v6243, 0
        %v6337 = vsel %vm6308, %v6245, 0
        %v6340 = vsel %vm6308, %v6247, 0
        %v6343 = vsel %vm6308, %v6249, 0
        %v6346 = vsel %vm6308, %v6251, 0
        %v6349 = vsel %vm6308, %v6253, 0
        %v6352 = vsel %vm6308, %v6255, 0
        %v6355 = vsel %vm6308, %v6257, 0
        %v6358 = vsel %vm6308, %v6259, 0
        %v6361 = vsel %vm6308, %v6261, 0
        %v6364 = vsel %vm6308, %v6263, 0
        %v6367 = vsel %vm6308, %v6265, 0
        %v6370 = vsel %vm6308, %v6267, 0
        %v6373 = vsel %vm6308, %v6269, 0
        %v6376 = vsel %vm6308, %v6271, 0
        %v6379 = vsel %vm6308, %v6273, 0
        %v6382 = vsel %vm6308, %v6275, 0
        %v6385 = vsel %vm6308, %v6277, 0
        %v6388 = vsel %vm6308, %v6279, 0
        %v6391 = vsel %vm6308, %v6281, 0
        %v6394 = vsel %vm6308, %v6283, 0
        %v6397 = vsel %vm6308, %v6285, 0
        %v6400 = vsel %vm6308, %v6287, 0
        %6402 = vmatprep.subr.mxu0 0.0
        %6403 = vmatpush1.msra.mxu0 %v6303
        %6404 = vmatprep.subr.mxu0 0.0
        %6405 = vmatpush1.msra.mxu0 %v6302
        %6406 = vmatprep.subr.mxu0 0.0
        %6407 = vmatpush1.msra.mxu0 %v6301
        %6408 = vmatprep.subr.mxu0 0.0
        %6409 = vmatpush1.msra.mxu0 %v6300
        %6410 = vmatprep.subr.mxu0 0.0
        %6411 = vmatpush1.msra.mxu0 %v6299
        %6412 = vmatprep.subr.mxu0 0.0
        %6413 = vmatpush1.msra.mxu0 %v6298
        %6414 = vmatprep.subr.mxu0 0.0
        %6415 = vmatpush1.msra.mxu0 %v6297
        %6416 = vmatprep.subr.mxu0 0.0
        %6417 = vmatpush1.msra.mxu0 %v6296
        %6418 = vmatprep.subr.mxu0 0.0
        %6419 = vmatpush1.msra.mxu0 %v6295
        %6420 = vmatprep.subr.mxu0 0.0
        %6421 = vmatpush1.msra.mxu0 %v6294
        %6422 = vmatprep.subr.mxu0 0.0
        %6423 = vmatpush1.msra.mxu0 %v6293
        %6424 = vmatprep.subr.mxu0 0.0
        %6425 = vmatpush1.msra.mxu0 %v6292
        %6426 = vmatprep.subr.mxu0 0.0
        %6427 = vmatpush1.msra.mxu0 %v6291
        %6428 = vmatprep.subr.mxu0 0.0
        %6429 = vmatpush1.msra.mxu0 %v6290
        %6430 = vmatprep.subr.mxu0 0.0
        %6431 = vmatpush1.msra.mxu0 %v6289
        %6432 = vmatprep.subr.mxu0 0.0
        %6433 = vmatpush1.msra.mxu0 %v6288
        %6434 = vmatprep.subr.mxu0 0.0
        %6435 = vmatpush2.msra.mxu0 0.0
        %6436 = vmatprep.subr.mxu0 0.0
        %6437 = vmatpush2.msra.mxu0 0.0
        %6438 = vmatprep.subr.mxu0 0.0
        %6439 = vmatpush2.msra.mxu0 0.0
        %6440 = vmatprep.subr.mxu0 0.0
        %6441 = vmatpush2.msra.mxu0 0.0
        %6442 = vmatprep.subr.mxu0 0.0
        %6443 = vmatpush2.msra.mxu0 0.0
        %6444 = vmatprep.subr.mxu0 0.0
        %6445 = vmatpush2.msra.mxu0 0.0
        %6446 = vmatprep.subr.mxu0 0.0
        %6447 = vmatpush2.msra.mxu0 0.0
        %6448 = vmatprep.subr.mxu0 0.0
        %6449 = vmatpush2.msra.mxu0 0.0
        %6450 = vmatprep.subr.mxu0 0.0
        %6451 = vmatpush2.msra.mxu0 0.0
        %6452 = vmatprep.subr.mxu0 0.0
        %6453 = vmatpush2.msra.mxu0 0.0
        %6454 = vmatprep.subr.mxu0 0.0
        %6455 = vmatpush2.msra.mxu0 0.0
        %6456 = vmatprep.subr.mxu0 0.0
        %6457 = vmatpush2.msra.mxu0 0.0
        %6458 = vmatprep.subr.mxu0 0.0
        %6459 = vmatpush2.msra.mxu0 %v6307
        %6460 = vmatprep.subr.mxu0 0.0
        %6461 = vmatpush2.msra.mxu0 %v6306
        %6462 = vmatprep.subr.mxu0 0.0
        %6463 = vmatpush2.msra.mxu0 %v6305
        %6464 = vmatprep.subr.mxu0 0.0
        %6465 = vmatpush2.msra.mxu0 %v6304
        %6466 = vmatprep.mubr.f32.mxu0 %v6310
        %6467 = vmatmul.mubr.f32.gmra.mxu0 %v6226
        %v6468 = vpop.f32.mrf.mxu0
        %v6469 = vadd.f32 0.0, %v6468
        %v6470 = vpop.f32.mrf.mxu0
        %6471 = vmatprep.mubr.f32.mxu0 %v6313
        %6472 = vmatmul.mubr.f32.gmra.mxu0 %v6228
        %v6473 = vpop.f32.mrf.mxu0
        %v6474 = vadd.f32 0.0, %v6473
        %v6475 = vpop.f32.mrf.mxu0
        %6476 = vmatprep.mubr.f32.mxu0 %v6316
        %6477 = vmatmul.mubr.f32.gmra.mxu0 %v6230
        %v6478 = vpop.f32.mrf.mxu0
        %v6479 = vadd.f32 0.0, %v6478
        %v6480 = vpop.f32.mrf.mxu0
        %6481 = vmatprep.mubr.f32.mxu0 %v6319
        %6482 = vmatmul.mubr.f32.gmra.mxu0 %v6232
        %v6483 = vpop.f32.mrf.mxu0
        %v6484 = vadd.f32 0.0, %v6483
        %v6485 = vpop.f32.mrf.mxu0
        %6486 = vmatprep.mubr.f32.mxu0 %v6322
        %6487 = vmatmul.mubr.f32.gmra.mxu0 %v6234
        %v6488 = vpop.f32.mrf.mxu0
        %v6489 = vadd.f32 0.0, %v6488
        %v6490 = vpop.f32.mrf.mxu0
        %6491 = vmatprep.mubr.f32.mxu0 %v6325
        %6492 = vmatmul.mubr.f32.gmra.mxu0 %v6236
        %v6493 = vpop.f32.mrf.mxu0
        %v6494 = vadd.f32 0.0, %v6493
        %v6495 = vpop.f32.mrf.mxu0
        %6496 = vmatprep.mubr.f32.mxu0 %v6328
        %6497 = vmatmul.mubr.f32.gmra.mxu0 %v6238
        %v6498 = vpop.f32.mrf.mxu0
        %v6499 = vadd.f32 0.0, %v6498
        %v6500 = vpop.f32.mrf.mxu0
        %6501 = vmatprep.mubr.f32.mxu0 %v6331
        %6502 = vmatmul.mubr.f32.gmra.mxu0 %v6240
        %v6503 = vpop.f32.mrf.mxu0
        %v6504 = vadd.f32 0.0, %v6503
        %v6505 = vpop.f32.mrf.mxu0
        %6506 = vmatprep.mubr.f32.mxu0 %v6334
        %6507 = vmatmul.mubr.f32.gmra.mxu0 %v6242
        %v6508 = vpop.f32.mrf.mxu0
        %v6509 = vadd.f32 0.0, %v6508
        %v6510 = vpop.f32.mrf.mxu0
        %6511 = vmatprep.mubr.f32.mxu0 %v6337
        %6512 = vmatmul.mubr.f32.gmra.mxu0 %v6244
        %v6513 = vpop.f32.mrf.mxu0
        %v6514 = vadd.f32 0.0, %v6513
        %v6515 = vpop.f32.mrf.mxu0
        %6516 = vmatprep.mubr.f32.mxu0 %v6340
        %6517 = vmatmul.mubr.f32.gmra.mxu0 %v6246
        %v6518 = vpop.f32.mrf.mxu0
        %v6519 = vadd.f32 0.0, %v6518
        %v6520 = vpop.f32.mrf.mxu0
        %6521 = vmatprep.mubr.f32.mxu0 %v6343
        %6522 = vmatmul.mubr.f32.gmra.mxu0 %v6248
        %v6523 = vpop.f32.mrf.mxu0
        %v6524 = vadd.f32 0.0, %v6523
        %v6525 = vpop.f32.mrf.mxu0
        %6526 = vmatprep.mubr.f32.mxu0 %v6346
        %6527 = vmatmul.mubr.f32.gmra.mxu0 %v6250
        %v6528 = vpop.f32.mrf.mxu0
        %v6529 = vadd.f32 0.0, %v6528
        %v6530 = vpop.f32.mrf.mxu0
        %6531 = vmatprep.mubr.f32.mxu0 %v6349
        %6532 = vmatmul.mubr.f32.gmra.mxu0 %v6252
        %v6533 = vpop.f32.mrf.mxu0
        %v6534 = vadd.f32 0.0, %v6533
        %v6535 = vpop.f32.mrf.mxu0
        %6536 = vmatprep.mubr.f32.mxu0 %v6352
        %6537 = vmatmul.mubr.f32.gmra.mxu0 %v6254
        %v6538 = vpop.f32.mrf.mxu0
        %v6539 = vadd.f32 0.0, %v6538
        %v6540 = vpop.f32.mrf.mxu0
        %6541 = vmatprep.mubr.f32.mxu0 %v6355
        %6542 = vmatmul.mubr.f32.gmra.mxu0 %v6256
        %v6543 = vpop.f32.mrf.mxu0
        %v6544 = vadd.f32 0.0, %v6543
        %v6545 = vpop.f32.mrf.mxu0
        %6546 = vmatprep.mubr.f32.mxu0 %v6358
        %6547 = vmatmul.mubr.f32.gmra.mxu0 %v6258
        %v6548 = vpop.f32.mrf.mxu0
        %v6549 = vadd.f32 0.0, %v6548
        %v6550 = vpop.f32.mrf.mxu0
        %6551 = vmatprep.mubr.f32.mxu0 %v6361
        %6552 = vmatmul.mubr.f32.gmra.mxu0 %v6260
        %v6553 = vpop.f32.mrf.mxu0
        %v6554 = vadd.f32 0.0, %v6553
        %v6555 = vpop.f32.mrf.mxu0
        %6556 = vmatprep.mubr.f32.mxu0 %v6364
        %6557 = vmatmul.mubr.f32.gmra.mxu0 %v6262
        %v6558 = vpop.f32.mrf.mxu0
        %v6559 = vadd.f32 0.0, %v6558
        %v6560 = vpop.f32.mrf.mxu0
        %6561 = vmatprep.mubr.f32.mxu0 %v6367
        %6562 = vmatmul.mubr.f32.gmra.mxu0 %v6264
        %v6563 = vpop.f32.mrf.mxu0
        %v6564 = vadd.f32 0.0, %v6563
        %v6565 = vpop.f32.mrf.mxu0
        %6566 = vmatprep.mubr.f32.mxu0 %v6370
        %6567 = vmatmul.mubr.f32.gmra.mxu0 %v6266
        %v6568 = vpop.f32.mrf.mxu0
        %v6569 = vadd.f32 0.0, %v6568
        %v6570 = vpop.f32.mrf.mxu0
        %6571 = vmatprep.mubr.f32.mxu0 %v6373
        %6572 = vmatmul.mubr.f32.gmra.mxu0 %v6268
        %v6573 = vpop.f32.mrf.mxu0
        %v6574 = vadd.f32 0.0, %v6573
        %v6575 = vpop.f32.mrf.mxu0
        %6576 = vmatprep.mubr.f32.mxu0 %v6376
        %6577 = vmatmul.mubr.f32.gmra.mxu0 %v6270
        %v6578 = vpop.f32.mrf.mxu0
        %v6579 = vadd.f32 0.0, %v6578
        %v6580 = vpop.f32.mrf.mxu0
        %6581 = vmatprep.mubr.f32.mxu0 %v6379
        %6582 = vmatmul.mubr.f32.gmra.mxu0 %v6272
        %v6583 = vpop.f32.mrf.mxu0
        %v6584 = vadd.f32 0.0, %v6583
        %v6585 = vpop.f32.mrf.mxu0
        %6586 = vmatprep.mubr.f32.mxu0 %v6382
        %6587 = vmatmul.mubr.f32.gmra.mxu0 %v6274
        %v6588 = vpop.f32.mrf.mxu0
        %v6589 = vadd.f32 0.0, %v6588
        %v6590 = vpop.f32.mrf.mxu0
        %6591 = vmatprep.mubr.f32.mxu0 %v6385
        %6592 = vmatmul.mubr.f32.gmra.mxu0 %v6276
        %v6593 = vpop.f32.mrf.mxu0
        %v6594 = vadd.f32 0.0, %v6593
        %v6595 = vpop.f32.mrf.mxu0
        %6596 = vmatprep.mubr.f32.mxu0 %v6388
        %6597 = vmatmul.mubr.f32.gmra.mxu0 %v6278
        %v6598 = vpop.f32.mrf.mxu0
        %v6599 = vadd.f32 0.0, %v6598
        %v6600 = vpop.f32.mrf.mxu0
        %6601 = vmatprep.mubr.f32.mxu0 %v6391
        %6602 = vmatmul.mubr.f32.gmra.mxu0 %v6280
        %v6603 = vpop.f32.mrf.mxu0
        %v6604 = vadd.f32 0.0, %v6603
        %v6605 = vpop.f32.mrf.mxu0
        %6606 = vmatprep.mubr.f32.mxu0 %v6394
        %6607 = vmatmul.mubr.f32.gmra.mxu0 %v6282
        %v6608 = vpop.f32.mrf.mxu0
        %v6609 = vadd.f32 0.0, %v6608
        %v6610 = vpop.f32.mrf.mxu0
        %6611 = vmatprep.mubr.f32.mxu0 %v6397
        %6612 = vmatmul.mubr.f32.gmra.mxu0 %v6284
        %v6613 = vpop.f32.mrf.mxu0
        %v6614 = vadd.f32 0.0, %v6613
        %v6615 = vpop.f32.mrf.mxu0
        %6616 = vmatprep.mubr.f32.mxu0 %v6400
        %6617 = vmatmul.mubr.f32.gmra.mxu0 %v6286
        %v6618 = vpop.f32.mrf.mxu0
        %v6619 = vadd.f32 0.0, %v6618
        %v6620 = vpop.f32.mrf.mxu0
        %6621 = vdwg.mxu0
        %s6622 = scalar_lea.vmem %s6, 160
        %v6623 = vld [vmem:[%s6622] sm:$0xff]
        %v6624 = vld [vmem:[%s6622 + $0x8] sm:$0xff]
        %v6625 = vld [vmem:[%s6622 + $0x10] sm:$0xff]
        %v6626 = vld [vmem:[%s6622 + $0x18] sm:$0xff]
        %v6627 = vld [vmem:[%s6622 + $0x20] sm:$0xff]
        %v6628 = vld [vmem:[%s6622 + $0x28] sm:$0xff]
        %v6629 = vld [vmem:[%s6622 + $0x30] sm:$0xff]
        %v6630 = vld [vmem:[%s6622 + $0x38] sm:$0xff]
        %v6631 = vld [vmem:[%s6622 + $0x40] sm:$0xff]
        %v6632 = vld [vmem:[%s6622 + $0x48] sm:$0xff]
        %v6633 = vld [vmem:[%s6622 + $0x50] sm:$0xff]
        %v6634 = vld [vmem:[%s6622 + $0x58] sm:$0xff]
        %v6635 = vld [vmem:[%s6622 + $0x60] sm:$0xff]
        %v6636 = vld [vmem:[%s6622 + $0x68] sm:$0xff]
        %v6637 = vld [vmem:[%s6622 + $0x70] sm:$0xff]
        %v6638 = vld [vmem:[%s6622 + $0x78] sm:$0xff]
        %v6639 = vld [vmem:[%s6622 + $0x80] sm:$0xff]
        %v6640 = vld [vmem:[%s6622 + $0x88] sm:$0xff]
        %v6641 = vld [vmem:[%s6622 + $0x90] sm:$0xff]
        %v6642 = vld [vmem:[%s6622 + $0x98] sm:$0xff]
        %6643 = vmatprep.subr.mxu0 0.0
        %6644 = vmatpush1.msra.mxu0 %v6638
        %6645 = vmatprep.subr.mxu0 0.0
        %6646 = vmatpush1.msra.mxu0 %v6637
        %6647 = vmatprep.subr.mxu0 0.0
        %6648 = vmatpush1.msra.mxu0 %v6636
        %6649 = vmatprep.subr.mxu0 0.0
        %6650 = vmatpush1.msra.mxu0 %v6635
        %6651 = vmatprep.subr.mxu0 0.0
        %6652 = vmatpush1.msra.mxu0 %v6634
        %6653 = vmatprep.subr.mxu0 0.0
        %6654 = vmatpush1.msra.mxu0 %v6633
        %6655 = vmatprep.subr.mxu0 0.0
        %6656 = vmatpush1.msra.mxu0 %v6632
        %6657 = vmatprep.subr.mxu0 0.0
        %6658 = vmatpush1.msra.mxu0 %v6631
        %6659 = vmatprep.subr.mxu0 0.0
        %6660 = vmatpush1.msra.mxu0 %v6630
        %6661 = vmatprep.subr.mxu0 0.0
        %6662 = vmatpush1.msra.mxu0 %v6629
        %6663 = vmatprep.subr.mxu0 0.0
        %6664 = vmatpush1.msra.mxu0 %v6628
        %6665 = vmatprep.subr.mxu0 0.0
        %6666 = vmatpush1.msra.mxu0 %v6627
        %6667 = vmatprep.subr.mxu0 0.0
        %6668 = vmatpush1.msra.mxu0 %v6626
        %6669 = vmatprep.subr.mxu0 0.0
        %6670 = vmatpush1.msra.mxu0 %v6625
        %6671 = vmatprep.subr.mxu0 0.0
        %6672 = vmatpush1.msra.mxu0 %v6624
        %6673 = vmatprep.subr.mxu0 0.0
        %6674 = vmatpush1.msra.mxu0 %v6623
        %6675 = vmatprep.subr.mxu0 0.0
        %6676 = vmatpush2.msra.mxu0 0.0
        %6677 = vmatprep.subr.mxu0 0.0
        %6678 = vmatpush2.msra.mxu0 0.0
        %6679 = vmatprep.subr.mxu0 0.0
        %6680 = vmatpush2.msra.mxu0 0.0
        %6681 = vmatprep.subr.mxu0 0.0
        %6682 = vmatpush2.msra.mxu0 0.0
        %6683 = vmatprep.subr.mxu0 0.0
        %6684 = vmatpush2.msra.mxu0 0.0
        %6685 = vmatprep.subr.mxu0 0.0
        %6686 = vmatpush2.msra.mxu0 0.0
        %6687 = vmatprep.subr.mxu0 0.0
        %6688 = vmatpush2.msra.mxu0 0.0
        %6689 = vmatprep.subr.mxu0 0.0
        %6690 = vmatpush2.msra.mxu0 0.0
        %6691 = vmatprep.subr.mxu0 0.0
        %6692 = vmatpush2.msra.mxu0 0.0
        %6693 = vmatprep.subr.mxu0 0.0
        %6694 = vmatpush2.msra.mxu0 0.0
        %6695 = vmatprep.subr.mxu0 0.0
        %6696 = vmatpush2.msra.mxu0 0.0
        %6697 = vmatprep.subr.mxu0 0.0
        %6698 = vmatpush2.msra.mxu0 0.0
        %6699 = vmatprep.subr.mxu0 0.0
        %6700 = vmatpush2.msra.mxu0 %v6642
        %6701 = vmatprep.subr.mxu0 0.0
        %6702 = vmatpush2.msra.mxu0 %v6641
        %6703 = vmatprep.subr.mxu0 0.0
        %6704 = vmatpush2.msra.mxu0 %v6640
        %6705 = vmatprep.subr.mxu0 0.0
        %6706 = vmatpush2.msra.mxu0 %v6639
        %6707 = vmatprep.mubr.f32.mxu0 %v6310
        %6708 = vmatmul.mubr.f32.gmra.mxu0 %v6226
        %v6709 = vpop.f32.mrf.mxu0
        %v6710 = vadd.f32 0.0, %v6709
        %v6711 = vpop.f32.mrf.mxu0
        %6712 = vmatprep.mubr.f32.mxu0 %v6313
        %6713 = vmatmul.mubr.f32.gmra.mxu0 %v6228
        %v6714 = vpop.f32.mrf.mxu0
        %v6715 = vadd.f32 0.0, %v6714
        %v6716 = vpop.f32.mrf.mxu0
        %6717 = vmatprep.mubr.f32.mxu0 %v6316
        %6718 = vmatmul.mubr.f32.gmra.mxu0 %v6230
        %v6719 = vpop.f32.mrf.mxu0
        %v6720 = vadd.f32 0.0, %v6719
        %v6721 = vpop.f32.mrf.mxu0
        %6722 = vmatprep.mubr.f32.mxu0 %v6319
        %6723 = vmatmul.mubr.f32.gmra.mxu0 %v6232
        %v6724 = vpop.f32.mrf.mxu0
        %v6725 = vadd.f32 0.0, %v6724
        %v6726 = vpop.f32.mrf.mxu0
        %6727 = vmatprep.mubr.f32.mxu0 %v6322
        %6728 = vmatmul.mubr.f32.gmra.mxu0 %v6234
        %v6729 = vpop.f32.mrf.mxu0
        %v6730 = vadd.f32 0.0, %v6729
        %v6731 = vpop.f32.mrf.mxu0
        %6732 = vmatprep.mubr.f32.mxu0 %v6325
        %6733 = vmatmul.mubr.f32.gmra.mxu0 %v6236
        %v6734 = vpop.f32.mrf.mxu0
        %v6735 = vadd.f32 0.0, %v6734
        %v6736 = vpop.f32.mrf.mxu0
        %6737 = vmatprep.mubr.f32.mxu0 %v6328
        %6738 = vmatmul.mubr.f32.gmra.mxu0 %v6238
        %v6739 = vpop.f32.mrf.mxu0
        %v6740 = vadd.f32 0.0, %v6739
        %v6741 = vpop.f32.mrf.mxu0
        %6742 = vmatprep.mubr.f32.mxu0 %v6331
        %6743 = vmatmul.mubr.f32.gmra.mxu0 %v6240
        %v6744 = vpop.f32.mrf.mxu0
        %v6745 = vadd.f32 0.0, %v6744
        %v6746 = vpop.f32.mrf.mxu0
        %6747 = vmatprep.mubr.f32.mxu0 %v6334
        %6748 = vmatmul.mubr.f32.gmra.mxu0 %v6242
        %v6749 = vpop.f32.mrf.mxu0
        %v6750 = vadd.f32 0.0, %v6749
        %v6751 = vpop.f32.mrf.mxu0
        %6752 = vmatprep.mubr.f32.mxu0 %v6337
        %6753 = vmatmul.mubr.f32.gmra.mxu0 %v6244
        %v6754 = vpop.f32.mrf.mxu0
        %v6755 = vadd.f32 0.0, %v6754
        %v6756 = vpop.f32.mrf.mxu0
        %6757 = vmatprep.mubr.f32.mxu0 %v6340
        %6758 = vmatmul.mubr.f32.gmra.mxu0 %v6246
        %v6759 = vpop.f32.mrf.mxu0
        %v6760 = vadd.f32 0.0, %v6759
        %v6761 = vpop.f32.mrf.mxu0
        %6762 = vmatprep.mubr.f32.mxu0 %v6343
        %6763 = vmatmul.mubr.f32.gmra.mxu0 %v6248
        %v6764 = vpop.f32.mrf.mxu0
        %v6765 = vadd.f32 0.0, %v6764
        %v6766 = vpop.f32.mrf.mxu0
        %6767 = vmatprep.mubr.f32.mxu0 %v6346
        %6768 = vmatmul.mubr.f32.gmra.mxu0 %v6250
        %v6769 = vpop.f32.mrf.mxu0
        %v6770 = vadd.f32 0.0, %v6769
        %v6771 = vpop.f32.mrf.mxu0
        %6772 = vmatprep.mubr.f32.mxu0 %v6349
        %6773 = vmatmul.mubr.f32.gmra.mxu0 %v6252
        %v6774 = vpop.f32.mrf.mxu0
        %v6775 = vadd.f32 0.0, %v6774
        %v6776 = vpop.f32.mrf.mxu0
        %6777 = vmatprep.mubr.f32.mxu0 %v6352
        %6778 = vmatmul.mubr.f32.gmra.mxu0 %v6254
        %v6779 = vpop.f32.mrf.mxu0
        %v6780 = vadd.f32 0.0, %v6779
        %v6781 = vpop.f32.mrf.mxu0
        %6782 = vmatprep.mubr.f32.mxu0 %v6355
        %6783 = vmatmul.mubr.f32.gmra.mxu0 %v6256
        %v6784 = vpop.f32.mrf.mxu0
        %v6785 = vadd.f32 0.0, %v6784
        %v6786 = vpop.f32.mrf.mxu0
        %6787 = vmatprep.mubr.f32.mxu0 %v6358
        %6788 = vmatmul.mubr.f32.gmra.mxu0 %v6258
        %v6789 = vpop.f32.mrf.mxu0
        %v6790 = vadd.f32 0.0, %v6789
        %v6791 = vpop.f32.mrf.mxu0
        %6792 = vmatprep.mubr.f32.mxu0 %v6361
        %6793 = vmatmul.mubr.f32.gmra.mxu0 %v6260
        %v6794 = vpop.f32.mrf.mxu0
        %v6795 = vadd.f32 0.0, %v6794
        %v6796 = vpop.f32.mrf.mxu0
        %6797 = vmatprep.mubr.f32.mxu0 %v6364
        %6798 = vmatmul.mubr.f32.gmra.mxu0 %v6262
        %v6799 = vpop.f32.mrf.mxu0
        %v6800 = vadd.f32 0.0, %v6799
        %v6801 = vpop.f32.mrf.mxu0
        %6802 = vmatprep.mubr.f32.mxu0 %v6367
        %6803 = vmatmul.mubr.f32.gmra.mxu0 %v6264
        %v6804 = vpop.f32.mrf.mxu0
        %v6805 = vadd.f32 0.0, %v6804
        %v6806 = vpop.f32.mrf.mxu0
        %6807 = vmatprep.mubr.f32.mxu0 %v6370
        %6808 = vmatmul.mubr.f32.gmra.mxu0 %v6266
        %v6809 = vpop.f32.mrf.mxu0
        %v6810 = vadd.f32 0.0, %v6809
        %v6811 = vpop.f32.mrf.mxu0
        %6812 = vmatprep.mubr.f32.mxu0 %v6373
        %6813 = vmatmul.mubr.f32.gmra.mxu0 %v6268
        %v6814 = vpop.f32.mrf.mxu0
        %v6815 = vadd.f32 0.0, %v6814
        %v6816 = vpop.f32.mrf.mxu0
        %6817 = vmatprep.mubr.f32.mxu0 %v6376
        %6818 = vmatmul.mubr.f32.gmra.mxu0 %v6270
        %v6819 = vpop.f32.mrf.mxu0
        %v6820 = vadd.f32 0.0, %v6819
        %v6821 = vpop.f32.mrf.mxu0
        %6822 = vmatprep.mubr.f32.mxu0 %v6379
        %6823 = vmatmul.mubr.f32.gmra.mxu0 %v6272
        %v6824 = vpop.f32.mrf.mxu0
        %v6825 = vadd.f32 0.0, %v6824
        %v6826 = vpop.f32.mrf.mxu0
        %6827 = vmatprep.mubr.f32.mxu0 %v6382
        %6828 = vmatmul.mubr.f32.gmra.mxu0 %v6274
        %v6829 = vpop.f32.mrf.mxu0
        %v6830 = vadd.f32 0.0, %v6829
        %v6831 = vpop.f32.mrf.mxu0
        %6832 = vmatprep.mubr.f32.mxu0 %v6385
        %6833 = vmatmul.mubr.f32.gmra.mxu0 %v6276
        %v6834 = vpop.f32.mrf.mxu0
        %v6835 = vadd.f32 0.0, %v6834
        %v6836 = vpop.f32.mrf.mxu0
        %6837 = vmatprep.mubr.f32.mxu0 %v6388
        %6838 = vmatmul.mubr.f32.gmra.mxu0 %v6278
        %v6839 = vpop.f32.mrf.mxu0
        %v6840 = vadd.f32 0.0, %v6839
        %v6841 = vpop.f32.mrf.mxu0
        %6842 = vmatprep.mubr.f32.mxu0 %v6391
        %6843 = vmatmul.mubr.f32.gmra.mxu0 %v6280
        %v6844 = vpop.f32.mrf.mxu0
        %v6845 = vadd.f32 0.0, %v6844
        %v6846 = vpop.f32.mrf.mxu0
        %6847 = vmatprep.mubr.f32.mxu0 %v6394
        %6848 = vmatmul.mubr.f32.gmra.mxu0 %v6282
        %v6849 = vpop.f32.mrf.mxu0
        %v6850 = vadd.f32 0.0, %v6849
        %v6851 = vpop.f32.mrf.mxu0
        %6852 = vmatprep.mubr.f32.mxu0 %v6397
        %6853 = vmatmul.mubr.f32.gmra.mxu0 %v6284
        %v6854 = vpop.f32.mrf.mxu0
        %v6855 = vadd.f32 0.0, %v6854
        %v6856 = vpop.f32.mrf.mxu0
        %6857 = vmatprep.mubr.f32.mxu0 %v6400
        %6858 = vmatmul.mubr.f32.gmra.mxu0 %v6286
        %v6859 = vpop.f32.mrf.mxu0
        %v6860 = vadd.f32 0.0, %v6859
        %v6861 = vpop.f32.mrf.mxu0
        %6862 = vdwg.mxu0
        %v6863 = vmax.f32 %v6469, %v6710
        %v6864 = vmax.f32 %v6474, %v6715
        %v6865 = vmax.f32 %v6479, %v6720
        %v6866 = vmax.f32 %v6484, %v6725
        %v6867 = vmax.f32 %v6489, %v6730
        %v6868 = vmax.f32 %v6494, %v6735
        %v6869 = vmax.f32 %v6499, %v6740
        %v6870 = vmax.f32 %v6504, %v6745
        %v6871 = vmax.f32 %v6509, %v6750
        %v6872 = vmax.f32 %v6514, %v6755
        %v6873 = vmax.f32 %v6519, %v6760
        %v6874 = vmax.f32 %v6524, %v6765
        %v6875 = vmax.f32 %v6529, %v6770
        %v6876 = vmax.f32 %v6534, %v6775
        %v6877 = vmax.f32 %v6539, %v6780
        %v6878 = vmax.f32 %v6544, %v6785
        %v6879 = vmax.f32 %v6549, %v6790
        %v6880 = vmax.f32 %v6554, %v6795
        %v6881 = vmax.f32 %v6559, %v6800
        %v6882 = vmax.f32 %v6564, %v6805
        %v6883 = vmax.f32 %v6569, %v6810
        %v6884 = vmax.f32 %v6574, %v6815
        %v6885 = vmax.f32 %v6579, %v6820
        %v6886 = vmax.f32 %v6584, %v6825
        %v6887 = vmax.f32 %v6589, %v6830
        %v6888 = vmax.f32 %v6594, %v6835
        %v6889 = vmax.f32 %v6599, %v6840
        %v6890 = vmax.f32 %v6604, %v6845
        %v6891 = vmax.f32 %v6609, %v6850
        %v6892 = vmax.f32 %v6614, %v6855
        %v6893 = vmax.f32 %v6619, %v6860
        %v6894 = vld [vmem:[%s7] sm:$0xff]
        %v6895 = vld [vmem:[%s7 + $0x8] sm:$0xff]
        %vm6896 = vcmask 924672
        %v6898 = vsel %vm6896, %v6895, 0
        %vm6900 = vcmask 1040384
        %v6902 = vsel %vm6900, %v6893, 0
        %6904 = vmatprep.subr.mxu0 0.0
        %6905 = vmatpush1.msra.mxu0 %v6878
        %6906 = vmatprep.subr.mxu0 0.0
        %6907 = vmatpush1.msra.mxu0 %v6877
        %6908 = vmatprep.subr.mxu0 0.0
        %6909 = vmatpush1.msra.mxu0 %v6876
        %6910 = vmatprep.subr.mxu0 0.0
        %6911 = vmatpush1.msra.mxu0 %v6875
        %6912 = vmatprep.subr.mxu0 0.0
        %6913 = vmatpush1.msra.mxu0 %v6874
        %6914 = vmatprep.subr.mxu0 0.0
        %6915 = vmatpush1.msra.mxu0 %v6873
        %6916 = vmatprep.subr.mxu0 0.0
        %6917 = vmatpush1.msra.mxu0 %v6872
        %6918 = vmatprep.subr.mxu0 0.0
        %6919 = vmatpush1.msra.mxu0 %v6871
        %6920 = vmatprep.subr.mxu0 0.0
        %6921 = vmatpush1.msra.mxu0 %v6870
        %6922 = vmatprep.subr.mxu0 0.0
        %6923 = vmatpush1.msra.mxu0 %v6869
        %6924 = vmatprep.subr.mxu0 0.0
        %6925 = vmatpush1.msra.mxu0 %v6868
        %6926 = vmatprep.subr.mxu0 0.0
        %6927 = vmatpush1.msra.mxu0 %v6867
        %6928 = vmatprep.subr.mxu0 0.0
        %6929 = vmatpush1.msra.mxu0 %v6866
        %6930 = vmatprep.subr.mxu0 0.0
        %6931 = vmatpush1.msra.mxu0 %v6865
        %6932 = vmatprep.subr.mxu0 0.0
        %6933 = vmatpush1.msra.mxu0 %v6864
        %6934 = vmatprep.subr.mxu0 0.0
        %6935 = vmatpush1.msra.mxu0 %v6863
        %6936 = vmatprep.subr.mxu0 0.0
        %6937 = vmatpush2.msra.mxu0 0.0
        %6938 = vmatprep.subr.mxu0 0.0
        %6939 = vmatpush2.msra.mxu0 %v6902
        %6940 = vmatprep.subr.mxu0 0.0
        %6941 = vmatpush2.msra.mxu0 %v6892
        %6942 = vmatprep.subr.mxu0 0.0
        %6943 = vmatpush2.msra.mxu0 %v6891
        %6944 = vmatprep.subr.mxu0 0.0
        %6945 = vmatpush2.msra.mxu0 %v6890
        %6946 = vmatprep.subr.mxu0 0.0
        %6947 = vmatpush2.msra.mxu0 %v6889
        %6948 = vmatprep.subr.mxu0 0.0
        %6949 = vmatpush2.msra.mxu0 %v6888
        %6950 = vmatprep.subr.mxu0 0.0
        %6951 = vmatpush2.msra.mxu0 %v6887
        %6952 = vmatprep.subr.mxu0 0.0
        %6953 = vmatpush2.msra.mxu0 %v6886
        %6954 = vmatprep.subr.mxu0 0.0
        %6955 = vmatpush2.msra.mxu0 %v6885
        %6956 = vmatprep.subr.mxu0 0.0
        %6957 = vmatpush2.msra.mxu0 %v6884
        %6958 = vmatprep.subr.mxu0 0.0
        %6959 = vmatpush2.msra.mxu0 %v6883
        %6960 = vmatprep.subr.mxu0 0.0
        %6961 = vmatpush2.msra.mxu0 %v6882
        %6962 = vmatprep.subr.mxu0 0.0
        %6963 = vmatpush2.msra.mxu0 %v6881
        %6964 = vmatprep.subr.mxu0 0.0
        %6965 = vmatpush2.msra.mxu0 %v6880
        %6966 = vmatprep.subr.mxu0 0.0
        %6967 = vmatpush2.msra.mxu0 %v6879
        %6968 = vmatprep.mubr.f32.mxu0 %v6898
        %6969 = vmatmul.mubr.f32.gmra.mxu0 %v6894
        %v6970 = vpop.f32.mrf.mxu0
        %v6971 = vadd.f32 0.0, %v6970
        %v6972 = vpop.f32.mrf.mxu0
        %6973 = vdwg.mxu0
        %v6974 = vld [vmem:[%s8] sm:$0xff]
        %v6975 = vld [vmem:[%s8 + $0x8] sm:$0xff]
        %v6976 = vld [vmem:[%s8 + $0x10] sm:$0xff]
        %v6977 = vld [vmem:[%s8 + $0x18] sm:$0xff]
        %v6978 = vld [vmem:[%s8 + $0x20] sm:$0xff]
        %v6979 = vld [vmem:[%s8 + $0x28] sm:$0xff]
        %v6980 = vld [vmem:[%s8 + $0x30] sm:$0xff]
        %v6981 = vld [vmem:[%s8 + $0x38] sm:$0xff]
        %v6982 = vld [vmem:[%s8 + $0x40] sm:$0xff]
        %v6983 = vld [vmem:[%s8 + $0x48] sm:$0xff]
        %s6984 = scalar_lea.vmem %s7, 16
        %v6985 = vld [vmem:[%s6984] sm:$0xff]
        %v6986 = vld [vmem:[%s6984 + $0x8] sm:$0xff]
        %v6988 = vsel %vm6896, %v6986, 0
        %6990 = vmatprep.subr.mxu0 0.0
        %6991 = vmatpush1.msra.mxu0 %v6878
        %6992 = vmatprep.subr.mxu0 0.0
        %6993 = vmatpush1.msra.mxu0 %v6877
        %6994 = vmatprep.subr.mxu0 0.0
        %6995 = vmatpush1.msra.mxu0 %v6876
        %6996 = vmatprep.subr.mxu0 0.0
        %6997 = vmatpush1.msra.mxu0 %v6875
        %6998 = vmatprep.subr.mxu0 0.0
        %6999 = vmatpush1.msra.mxu0 %v6874
        %7000 = vmatprep.subr.mxu0 0.0
        %7001 = vmatpush1.msra.mxu0 %v6873
        %7002 = vmatprep.subr.mxu0 0.0
        %7003 = vmatpush1.msra.mxu0 %v6872
        %7004 = vmatprep.subr.mxu0 0.0
        %7005 = vmatpush1.msra.mxu0 %v6871
        %7006 = vmatprep.subr.mxu0 0.0
        %7007 = vmatpush1.msra.mxu0 %v6870
        %7008 = vmatprep.subr.mxu0 0.0
        %7009 = vmatpush1.msra.mxu0 %v6869
        %7010 = vmatprep.subr.mxu0 0.0
        %7011 = vmatpush1.msra.mxu0 %v6868
        %7012 = vmatprep.subr.mxu0 0.0
        %7013 = vmatpush1.msra.mxu0 %v6867
        %7014 = vmatprep.subr.mxu0 0.0
        %7015 = vmatpush1.msra.mxu0 %v6866
        %7016 = vmatprep.subr.mxu0 0.0
        %7017 = vmatpush1.msra.mxu0 %v6865
        %7018 = vmatprep.subr.mxu0 0.0
        %7019 = vmatpush1.msra.mxu0 %v6864
        %7020 = vmatprep.subr.mxu0 0.0
        %7021 = vmatpush1.msra.mxu0 %v6863
        %7022 = vmatprep.subr.mxu0 0.0
        %7023 = vmatpush2.msra.mxu0 0.0
        %7024 = vmatprep.subr.mxu0 0.0
        %7025 = vmatpush2.msra.mxu0 %v6902
        %7026 = vmatprep.subr.mxu0 0.0
        %7027 = vmatpush2.msra.mxu0 %v6892
        %7028 = vmatprep.subr.mxu0 0.0
        %7029 = vmatpush2.msra.mxu0 %v6891
        %7030 = vmatprep.subr.mxu0 0.0
        %7031 = vmatpush2.msra.mxu0 %v6890
        %7032 = vmatprep.subr.mxu0 0.0
        %7033 = vmatpush2.msra.mxu0 %v6889
        %7034 = vmatprep.subr.mxu0 0.0
        %7035 = vmatpush2.msra.mxu0 %v6888
        %7036 = vmatprep.subr.mxu0 0.0
        %7037 = vmatpush2.msra.mxu0 %v6887
        %7038 = vmatprep.subr.mxu0 0.0
        %7039 = vmatpush2.msra.mxu0 %v6886
        %7040 = vmatprep.subr.mxu0 0.0
        %7041 = vmatpush2.msra.mxu0 %v6885
        %7042 = vmatprep.subr.mxu0 0.0
        %7043 = vmatpush2.msra.mxu0 %v6884
        %7044 = vmatprep.subr.mxu0 0.0
        %7045 = vmatpush2.msra.mxu0 %v6883
        %7046 = vmatprep.subr.mxu0 0.0
        %7047 = vmatpush2.msra.mxu0 %v6882
        %7048 = vmatprep.subr.mxu0 0.0
        %7049 = vmatpush2.msra.mxu0 %v6881
        %7050 = vmatprep.subr.mxu0 0.0
        %7051 = vmatpush2.msra.mxu0 %v6880
        %7052 = vmatprep.subr.mxu0 0.0
        %7053 = vmatpush2.msra.mxu0 %v6879
        %7054 = vmatprep.mubr.f32.mxu0 %v6988
        %7055 = vmatmul.mubr.f32.gmra.mxu0 %v6985
        %v7056 = vpop.f32.mrf.mxu0
        %v7057 = vadd.f32 0.0, %v7056
        %v7058 = vpop.f32.mrf.mxu0
        %7059 = vdwg.mxu0
        %s7060 = scalar_lea.vmem %s8, 80
        %v7061 = vld [vmem:[%s7060] sm:$0xff]
        %v7062 = vld [vmem:[%s7060 + $0x8] sm:$0xff]
        %v7063 = vld [vmem:[%s7060 + $0x10] sm:$0xff]
        %v7064 = vld [vmem:[%s7060 + $0x18] sm:$0xff]
        %v7065 = vld [vmem:[%s7060 + $0x20] sm:$0xff]
        %v7066 = vld [vmem:[%s7060 + $0x28] sm:$0xff]
        %v7067 = vld [vmem:[%s7060 + $0x30] sm:$0xff]
        %v7068 = vld [vmem:[%s7060 + $0x38] sm:$0xff]
        %v7069 = vld [vmem:[%s7060 + $0x40] sm:$0xff]
        %v7070 = vld [vmem:[%s7060 + $0x48] sm:$0xff]
        %vm7071 = vcmask 654336
        %v7073 = vsel %vm7071, %v7057, 0
        %7075 = vmatprep.subr.mxu0 0.0
        %7076 = vmatpush1.msra.mxu0 0.0
        %7077 = vmatprep.subr.mxu0 0.0
        %7078 = vmatpush1.msra.mxu0 0.0
        %7079 = vmatprep.subr.mxu0 0.0
        %7080 = vmatpush1.msra.mxu0 0.0
        %7081 = vmatprep.subr.mxu0 0.0
        %7082 = vmatpush1.msra.mxu0 0.0
        %7083 = vmatprep.subr.mxu0 0.0
        %7084 = vmatpush1.msra.mxu0 0.0
        %7085 = vmatprep.subr.mxu0 0.0
        %7086 = vmatpush1.msra.mxu0 0.0
        %7087 = vmatprep.subr.mxu0 0.0
        %7088 = vmatpush1.msra.mxu0 %v7070
        %7089 = vmatprep.subr.mxu0 0.0
        %7090 = vmatpush1.msra.mxu0 %v7069
        %7091 = vmatprep.subr.mxu0 0.0
        %7092 = vmatpush1.msra.mxu0 %v7068
        %7093 = vmatprep.subr.mxu0 0.0
        %7094 = vmatpush1.msra.mxu0 %v7067
        %7095 = vmatprep.subr.mxu0 0.0
        %7096 = vmatpush1.msra.mxu0 %v7066
        %7097 = vmatprep.subr.mxu0 0.0
        %7098 = vmatpush1.msra.mxu0 %v7065
        %7099 = vmatprep.subr.mxu0 0.0
        %7100 = vmatpush1.msra.mxu0 %v7064
        %7101 = vmatprep.subr.mxu0 0.0
        %7102 = vmatpush1.msra.mxu0 %v7063
        %7103 = vmatprep.subr.mxu0 0.0
        %7104 = vmatpush1.msra.mxu0 %v7062
        %7105 = vmatprep.subr.mxu0 0.0
        %7106 = vmatpush1.msra.mxu0 %v7061
        %7107 = vmatprep.subr.mxu0 0.0
        %7108 = vmatpush2.msra.mxu0 0.0
        %7109 = vmatprep.subr.mxu0 0.0
        %7110 = vmatpush2.msra.mxu0 0.0
        %7111 = vmatprep.subr.mxu0 0.0
        %7112 = vmatpush2.msra.mxu0 0.0
        %7113 = vmatprep.subr.mxu0 0.0
        %7114 = vmatpush2.msra.mxu0 0.0
        %7115 = vmatprep.subr.mxu0 0.0
        %7116 = vmatpush2.msra.mxu0 0.0
        %7117 = vmatprep.subr.mxu0 0.0
        %7118 = vmatpush2.msra.mxu0 0.0
        %7119 = vmatprep.subr.mxu0 0.0
        %7120 = vmatpush2.msra.mxu0 0.0
        %7121 = vmatprep.subr.mxu0 0.0
        %7122 = vmatpush2.msra.mxu0 0.0
        %7123 = vmatprep.subr.mxu0 0.0
        %7124 = vmatpush2.msra.mxu0 0.0
        %7125 = vmatprep.subr.mxu0 0.0
        %7126 = vmatpush2.msra.mxu0 0.0
        %7127 = vmatprep.subr.mxu0 0.0
        %7128 = vmatpush2.msra.mxu0 0.0
        %7129 = vmatprep.subr.mxu0 0.0
        %7130 = vmatpush2.msra.mxu0 0.0
        %7131 = vmatprep.subr.mxu0 0.0
        %7132 = vmatpush2.msra.mxu0 0.0
        %7133 = vmatprep.subr.mxu0 0.0
        %7134 = vmatpush2.msra.mxu0 0.0
        %7135 = vmatprep.subr.mxu0 0.0
        %7136 = vmatpush2.msra.mxu0 0.0
        %7137 = vmatprep.subr.mxu0 0.0
        %7138 = vmatpush2.msra.mxu0 0.0
        %7139 = vmatprep.mubr.f32.mxu0 0.0
        %7140 = vmatmul.mubr.f32.gmra.mxu0 %v7073
        %v7141 = vpop.f32.mrf.mxu0
        %v7142 = vadd.f32 0.0, %v7141
        %v7143 = vpop.f32.mrf.mxu0
        %7144 = vdwg.mxu0
        %v7146 = vsel %vm7071, %v6971, 0
        %7148 = vmatprep.subr.mxu0 0.0
        %7149 = vmatpush1.msra.mxu0 0.0
        %7150 = vmatprep.subr.mxu0 0.0
        %7151 = vmatpush1.msra.mxu0 0.0
        %7152 = vmatprep.subr.mxu0 0.0
        %7153 = vmatpush1.msra.mxu0 0.0
        %7154 = vmatprep.subr.mxu0 0.0
        %7155 = vmatpush1.msra.mxu0 0.0
        %7156 = vmatprep.subr.mxu0 0.0
        %7157 = vmatpush1.msra.mxu0 0.0
        %7158 = vmatprep.subr.mxu0 0.0
        %7159 = vmatpush1.msra.mxu0 0.0
        %7160 = vmatprep.subr.mxu0 0.0
        %7161 = vmatpush1.msra.mxu0 %v6983
        %7162 = vmatprep.subr.mxu0 0.0
        %7163 = vmatpush1.msra.mxu0 %v6982
        %7164 = vmatprep.subr.mxu0 0.0
        %7165 = vmatpush1.msra.mxu0 %v6981
        %7166 = vmatprep.subr.mxu0 0.0
        %7167 = vmatpush1.msra.mxu0 %v6980
        %7168 = vmatprep.subr.mxu0 0.0
        %7169 = vmatpush1.msra.mxu0 %v6979
        %7170 = vmatprep.subr.mxu0 0.0
        %7171 = vmatpush1.msra.mxu0 %v6978
        %7172 = vmatprep.subr.mxu0 0.0
        %7173 = vmatpush1.msra.mxu0 %v6977
        %7174 = vmatprep.subr.mxu0 0.0
        %7175 = vmatpush1.msra.mxu0 %v6976
        %7176 = vmatprep.subr.mxu0 0.0
        %7177 = vmatpush1.msra.mxu0 %v6975
        %7178 = vmatprep.subr.mxu0 0.0
        %7179 = vmatpush1.msra.mxu0 %v6974
        %7180 = vmatprep.subr.mxu0 0.0
        %7181 = vmatpush2.msra.mxu0 0.0
        %7182 = vmatprep.subr.mxu0 0.0
        %7183 = vmatpush2.msra.mxu0 0.0
        %7184 = vmatprep.subr.mxu0 0.0
        %7185 = vmatpush2.msra.mxu0 0.0
        %7186 = vmatprep.subr.mxu0 0.0
        %7187 = vmatpush2.msra.mxu0 0.0
        %7188 = vmatprep.subr.mxu0 0.0
        %7189 = vmatpush2.msra.mxu0 0.0
        %7190 = vmatprep.subr.mxu0 0.0
        %7191 = vmatpush2.msra.mxu0 0.0
        %7192 = vmatprep.subr.mxu0 0.0
        %7193 = vmatpush2.msra.mxu0 0.0
        %7194 = vmatprep.subr.mxu0 0.0
        %7195 = vmatpush2.msra.mxu0 0.0
        %7196 = vmatprep.subr.mxu0 0.0
        %7197 = vmatpush2.msra.mxu0 0.0
        %7198 = vmatprep.subr.mxu0 0.0
        %7199 = vmatpush2.msra.mxu0 0.0
        %7200 = vmatprep.subr.mxu0 0.0
        %7201 = vmatpush2.msra.mxu0 0.0
        %7202 = vmatprep.subr.mxu0 0.0
        %7203 = vmatpush2.msra.mxu0 0.0
        %7204 = vmatprep.subr.mxu0 0.0
        %7205 = vmatpush2.msra.mxu0 0.0
        %7206 = vmatprep.subr.mxu0 0.0
        %7207 = vmatpush2.msra.mxu0 0.0
        %7208 = vmatprep.subr.mxu0 0.0
        %7209 = vmatpush2.msra.mxu0 0.0
        %7210 = vmatprep.subr.mxu0 0.0
        %7211 = vmatpush2.msra.mxu0 0.0
        %7212 = vmatprep.mubr.f32.mxu0 0.0
        %7213 = vmatmul.mubr.f32.gmra.mxu0 %v7146
        %v7214 = vpop.f32.mrf.mxu0
        %v7215 = vadd.f32 %v7142, %v7214
        %v7216 = vpop.f32.mrf.mxu0
        %7217 = vdwg.mxu0
        %s7218 = scalar_lea.vmem %s7, 32
        %v7219 = vld [vmem:[%s7218] sm:$0xff]
        %v7220 = vld [vmem:[%s7218 + $0x8] sm:$0xff]
        %v7222 = vsel %vm6896, %v7220, 0
        %7224 = vmatprep.subr.mxu0 0.0
        %7225 = vmatpush1.msra.mxu0 %v6878
        %7226 = vmatprep.subr.mxu0 0.0
        %7227 = vmatpush1.msra.mxu0 %v6877
        %7228 = vmatprep.subr.mxu0 0.0
        %7229 = vmatpush1.msra.mxu0 %v6876
        %7230 = vmatprep.subr.mxu0 0.0
        %7231 = vmatpush1.msra.mxu0 %v6875
        %7232 = vmatprep.subr.mxu0 0.0
        %7233 = vmatpush1.msra.mxu0 %v6874
        %7234 = vmatprep.subr.mxu0 0.0
        %7235 = vmatpush1.msra.mxu0 %v6873
        %7236 = vmatprep.subr.mxu0 0.0
        %7237 = vmatpush1.msra.mxu0 %v6872
        %7238 = vmatprep.subr.mxu0 0.0
        %7239 = vmatpush1.msra.mxu0 %v6871
        %7240 = vmatprep.subr.mxu0 0.0
        %7241 = vmatpush1.msra.mxu0 %v6870
        %7242 = vmatprep.subr.mxu0 0.0
        %7243 = vmatpush1.msra.mxu0 %v6869
        %7244 = vmatprep.subr.mxu0 0.0
        %7245 = vmatpush1.msra.mxu0 %v6868
        %7246 = vmatprep.subr.mxu0 0.0
        %7247 = vmatpush1.msra.mxu0 %v6867
        %7248 = vmatprep.subr.mxu0 0.0
        %7249 = vmatpush1.msra.mxu0 %v6866
        %7250 = vmatprep.subr.mxu0 0.0
        %7251 = vmatpush1.msra.mxu0 %v6865
        %7252 = vmatprep.subr.mxu0 0.0
        %7253 = vmatpush1.msra.mxu0 %v6864
        %7254 = vmatprep.subr.mxu0 0.0
        %7255 = vmatpush1.msra.mxu0 %v6863
        %7256 = vmatprep.subr.mxu0 0.0
        %7257 = vmatpush2.msra.mxu0 0.0
        %7258 = vmatprep.subr.mxu0 0.0
        %7259 = vmatpush2.msra.mxu0 %v6902
        %7260 = vmatprep.subr.mxu0 0.0
        %7261 = vmatpush2.msra.mxu0 %v6892
        %7262 = vmatprep.subr.mxu0 0.0
        %7263 = vmatpush2.msra.mxu0 %v6891
        %7264 = vmatprep.subr.mxu0 0.0
        %7265 = vmatpush2.msra.mxu0 %v6890
        %7266 = vmatprep.subr.mxu0 0.0
        %7267 = vmatpush2.msra.mxu0 %v6889
        %7268 = vmatprep.subr.mxu0 0.0
        %7269 = vmatpush2.msra.mxu0 %v6888
        %7270 = vmatprep.subr.mxu0 0.0
        %7271 = vmatpush2.msra.mxu0 %v6887
        %7272 = vmatprep.subr.mxu0 0.0
        %7273 = vmatpush2.msra.mxu0 %v6886
        %7274 = vmatprep.subr.mxu0 0.0
        %7275 = vmatpush2.msra.mxu0 %v6885
        %7276 = vmatprep.subr.mxu0 0.0
        %7277 = vmatpush2.msra.mxu0 %v6884
        %7278 = vmatprep.subr.mxu0 0.0
        %7279 = vmatpush2.msra.mxu0 %v6883
        %7280 = vmatprep.subr.mxu0 0.0
        %7281 = vmatpush2.msra.mxu0 %v6882
        %7282 = vmatprep.subr.mxu0 0.0
        %7283 = vmatpush2.msra.mxu0 %v6881
        %7284 = vmatprep.subr.mxu0 0.0
        %7285 = vmatpush2.msra.mxu0 %v6880
        %7286 = vmatprep.subr.mxu0 0.0
        %7287 = vmatpush2.msra.mxu0 %v6879
        %7288 = vmatprep.mubr.f32.mxu0 %v7222
        %7289 = vmatmul.mubr.f32.gmra.mxu0 %v7219
        %v7290 = vpop.f32.mrf.mxu0
        %v7291 = vadd.f32 0.0, %v7290
        %v7292 = vpop.f32.mrf.mxu0
        %7293 = vdwg.mxu0
        %s7294 = scalar_lea.vmem %s8, 160
        %v7295 = vld [vmem:[%s7294] sm:$0xff]
        %v7296 = vld [vmem:[%s7294 + $0x8] sm:$0xff]
        %v7297 = vld [vmem:[%s7294 + $0x10] sm:$0xff]
        %v7298 = vld [vmem:[%s7294 + $0x18] sm:$0xff]
        %v7299 = vld [vmem:[%s7294 + $0x20] sm:$0xff]
        %v7300 = vld [vmem:[%s7294 + $0x28] sm:$0xff]
        %v7301 = vld [vmem:[%s7294 + $0x30] sm:$0xff]
        %v7302 = vld [vmem:[%s7294 + $0x38] sm:$0xff]
        %v7303 = vld [vmem:[%s7294 + $0x40] sm:$0xff]
        %v7304 = vld [vmem:[%s7294 + $0x48] sm:$0xff]
        %v7306 = vsel %vm7071, %v7291, 0
        %7308 = vmatprep.subr.mxu0 0.0
        %7309 = vmatpush1.msra.mxu0 0.0
        %7310 = vmatprep.subr.mxu0 0.0
        %7311 = vmatpush1.msra.mxu0 0.0
        %7312 = vmatprep.subr.mxu0 0.0
        %7313 = vmatpush1.msra.mxu0 0.0
        %7314 = vmatprep.subr.mxu0 0.0
        %7315 = vmatpush1.msra.mxu0 0.0
        %7316 = vmatprep.subr.mxu0 0.0
        %7317 = vmatpush1.msra.mxu0 0.0
        %7318 = vmatprep.subr.mxu0 0.0
        %7319 = vmatpush1.msra.mxu0 0.0
        %7320 = vmatprep.subr.mxu0 0.0
        %7321 = vmatpush1.msra.mxu0 %v7304
        %7322 = vmatprep.subr.mxu0 0.0
        %7323 = vmatpush1.msra.mxu0 %v7303
        %7324 = vmatprep.subr.mxu0 0.0
        %7325 = vmatpush1.msra.mxu0 %v7302
        %7326 = vmatprep.subr.mxu0 0.0
        %7327 = vmatpush1.msra.mxu0 %v7301
        %7328 = vmatprep.subr.mxu0 0.0
        %7329 = vmatpush1.msra.mxu0 %v7300
        %7330 = vmatprep.subr.mxu0 0.0
        %7331 = vmatpush1.msra.mxu0 %v7299
        %7332 = vmatprep.subr.mxu0 0.0
        %7333 = vmatpush1.msra.mxu0 %v7298
        %7334 = vmatprep.subr.mxu0 0.0
        %7335 = vmatpush1.msra.mxu0 %v7297
        %7336 = vmatprep.subr.mxu0 0.0
        %7337 = vmatpush1.msra.mxu0 %v7296
        %7338 = vmatprep.subr.mxu0 0.0
        %7339 = vmatpush1.msra.mxu0 %v7295
        %7340 = vmatprep.subr.mxu0 0.0
        %7341 = vmatpush2.msra.mxu0 0.0
        %7342 = vmatprep.subr.mxu0 0.0
        %7343 = vmatpush2.msra.mxu0 0.0
        %7344 = vmatprep.subr.mxu0 0.0
        %7345 = vmatpush2.msra.mxu0 0.0
        %7346 = vmatprep.subr.mxu0 0.0
        %7347 = vmatpush2.msra.mxu0 0.0
        %7348 = vmatprep.subr.mxu0 0.0
        %7349 = vmatpush2.msra.mxu0 0.0
        %7350 = vmatprep.subr.mxu0 0.0
        %7351 = vmatpush2.msra.mxu0 0.0
        %7352 = vmatprep.subr.mxu0 0.0
        %7353 = vmatpush2.msra.mxu0 0.0
        %7354 = vmatprep.subr.mxu0 0.0
        %7355 = vmatpush2.msra.mxu0 0.0
        %7356 = vmatprep.subr.mxu0 0.0
        %7357 = vmatpush2.msra.mxu0 0.0
        %7358 = vmatprep.subr.mxu0 0.0
        %7359 = vmatpush2.msra.mxu0 0.0
        %7360 = vmatprep.subr.mxu0 0.0
        %7361 = vmatpush2.msra.mxu0 0.0
        %7362 = vmatprep.subr.mxu0 0.0
        %7363 = vmatpush2.msra.mxu0 0.0
        %7364 = vmatprep.subr.mxu0 0.0
        %7365 = vmatpush2.msra.mxu0 0.0
        %7366 = vmatprep.subr.mxu0 0.0
        %7367 = vmatpush2.msra.mxu0 0.0
        %7368 = vmatprep.subr.mxu0 0.0
        %7369 = vmatpush2.msra.mxu0 0.0
        %7370 = vmatprep.subr.mxu0 0.0
        %7371 = vmatpush2.msra.mxu0 0.0
        %7372 = vmatprep.mubr.f32.mxu0 0.0
        %7373 = vmatmul.mubr.f32.gmra.mxu0 %v7306
        %v7374 = vpop.f32.mrf.mxu0
        %v7375 = vadd.f32 0.0, %v7374
        %v7376 = vpop.f32.mrf.mxu0
        %7377 = vdwg.mxu0
        %v7378 = vadd.f32 %v7215, %v7375
        %s7379 = scalar_lea.vmem %s7, 48
        %v7380 = vld [vmem:[%s7379] sm:$0xff]
        %v7381 = vld [vmem:[%s7379 + $0x8] sm:$0xff]
        %v7383 = vsel %vm6896, %v7381, 0
        %7385 = vmatprep.subr.mxu0 0.0
        %7386 = vmatpush1.msra.mxu0 %v6878
        %7387 = vmatprep.subr.mxu0 0.0
        %7388 = vmatpush1.msra.mxu0 %v6877
        %7389 = vmatprep.subr.mxu0 0.0
        %7390 = vmatpush1.msra.mxu0 %v6876
        %7391 = vmatprep.subr.mxu0 0.0
        %7392 = vmatpush1.msra.mxu0 %v6875
        %7393 = vmatprep.subr.mxu0 0.0
        %7394 = vmatpush1.msra.mxu0 %v6874
        %7395 = vmatprep.subr.mxu0 0.0
        %7396 = vmatpush1.msra.mxu0 %v6873
        %7397 = vmatprep.subr.mxu0 0.0
        %7398 = vmatpush1.msra.mxu0 %v6872
        %7399 = vmatprep.subr.mxu0 0.0
        %7400 = vmatpush1.msra.mxu0 %v6871
        %7401 = vmatprep.subr.mxu0 0.0
        %7402 = vmatpush1.msra.mxu0 %v6870
        %7403 = vmatprep.subr.mxu0 0.0
        %7404 = vmatpush1.msra.mxu0 %v6869
        %7405 = vmatprep.subr.mxu0 0.0
        %7406 = vmatpush1.msra.mxu0 %v6868
        %7407 = vmatprep.subr.mxu0 0.0
        %7408 = vmatpush1.msra.mxu0 %v6867
        %7409 = vmatprep.subr.mxu0 0.0
        %7410 = vmatpush1.msra.mxu0 %v6866
        %7411 = vmatprep.subr.mxu0 0.0
        %7412 = vmatpush1.msra.mxu0 %v6865
        %7413 = vmatprep.subr.mxu0 0.0
        %7414 = vmatpush1.msra.mxu0 %v6864
        %7415 = vmatprep.subr.mxu0 0.0
        %7416 = vmatpush1.msra.mxu0 %v6863
        %7417 = vmatprep.subr.mxu0 0.0
        %7418 = vmatpush2.msra.mxu0 0.0
        %7419 = vmatprep.subr.mxu0 0.0
        %7420 = vmatpush2.msra.mxu0 %v6902
        %7421 = vmatprep.subr.mxu0 0.0
        %7422 = vmatpush2.msra.mxu0 %v6892
        %7423 = vmatprep.subr.mxu0 0.0
        %7424 = vmatpush2.msra.mxu0 %v6891
        %7425 = vmatprep.subr.mxu0 0.0
        %7426 = vmatpush2.msra.mxu0 %v6890
        %7427 = vmatprep.subr.mxu0 0.0
        %7428 = vmatpush2.msra.mxu0 %v6889
        %7429 = vmatprep.subr.mxu0 0.0
        %7430 = vmatpush2.msra.mxu0 %v6888
        %7431 = vmatprep.subr.mxu0 0.0
        %7432 = vmatpush2.msra.mxu0 %v6887
        %7433 = vmatprep.subr.mxu0 0.0
        %7434 = vmatpush2.msra.mxu0 %v6886
        %7435 = vmatprep.subr.mxu0 0.0
        %7436 = vmatpush2.msra.mxu0 %v6885
        %7437 = vmatprep.subr.mxu0 0.0
        %7438 = vmatpush2.msra.mxu0 %v6884
        %7439 = vmatprep.subr.mxu0 0.0
        %7440 = vmatpush2.msra.mxu0 %v6883
        %7441 = vmatprep.subr.mxu0 0.0
        %7442 = vmatpush2.msra.mxu0 %v6882
        %7443 = vmatprep.subr.mxu0 0.0
        %7444 = vmatpush2.msra.mxu0 %v6881
        %7445 = vmatprep.subr.mxu0 0.0
        %7446 = vmatpush2.msra.mxu0 %v6880
        %7447 = vmatprep.subr.mxu0 0.0
        %7448 = vmatpush2.msra.mxu0 %v6879
        %7449 = vmatprep.mubr.f32.mxu0 %v7383
        %7450 = vmatmul.mubr.f32.gmra.mxu0 %v7380
        %v7451 = vpop.f32.mrf.mxu0
        %v7452 = vadd.f32 0.0, %v7451
        %v7453 = vpop.f32.mrf.mxu0
        %7454 = vdwg.mxu0
        %s7455 = scalar_lea.vmem %s8, 240
        %v7456 = vld [vmem:[%s7455] sm:$0xff]
        %v7457 = vld [vmem:[%s7455 + $0x8] sm:$0xff]
        %v7458 = vld [vmem:[%s7455 + $0x10] sm:$0xff]
        %v7459 = vld [vmem:[%s7455 + $0x18] sm:$0xff]
        %v7460 = vld [vmem:[%s7455 + $0x20] sm:$0xff]
        %v7461 = vld [vmem:[%s7455 + $0x28] sm:$0xff]
        %v7462 = vld [vmem:[%s7455 + $0x30] sm:$0xff]
        %v7463 = vld [vmem:[%s7455 + $0x38] sm:$0xff]
        %v7464 = vld [vmem:[%s7455 + $0x40] sm:$0xff]
        %v7465 = vld [vmem:[%s7455 + $0x48] sm:$0xff]
        %v7467 = vsel %vm7071, %v7452, 0
        %7469 = vmatprep.subr.mxu0 0.0
        %7470 = vmatpush1.msra.mxu0 0.0
        %7471 = vmatprep.subr.mxu0 0.0
        %7472 = vmatpush1.msra.mxu0 0.0
        %7473 = vmatprep.subr.mxu0 0.0
        %7474 = vmatpush1.msra.mxu0 0.0
        %7475 = vmatprep.subr.mxu0 0.0
        %7476 = vmatpush1.msra.mxu0 0.0
        %7477 = vmatprep.subr.mxu0 0.0
        %7478 = vmatpush1.msra.mxu0 0.0
        %7479 = vmatprep.subr.mxu0 0.0
        %7480 = vmatpush1.msra.mxu0 0.0
        %7481 = vmatprep.subr.mxu0 0.0
        %7482 = vmatpush1.msra.mxu0 %v7465
        %7483 = vmatprep.subr.mxu0 0.0
        %7484 = vmatpush1.msra.mxu0 %v7464
        %7485 = vmatprep.subr.mxu0 0.0
        %7486 = vmatpush1.msra.mxu0 %v7463
        %7487 = vmatprep.subr.mxu0 0.0
        %7488 = vmatpush1.msra.mxu0 %v7462
        %7489 = vmatprep.subr.mxu0 0.0
        %7490 = vmatpush1.msra.mxu0 %v7461
        %7491 = vmatprep.subr.mxu0 0.0
        %7492 = vmatpush1.msra.mxu0 %v7460
        %7493 = vmatprep.subr.mxu0 0.0
        %7494 = vmatpush1.msra.mxu0 %v7459
        %7495 = vmatprep.subr.mxu0 0.0
        %7496 = vmatpush1.msra.mxu0 %v7458
        %7497 = vmatprep.subr.mxu0 0.0
        %7498 = vmatpush1.msra.mxu0 %v7457
        %7499 = vmatprep.subr.mxu0 0.0
        %7500 = vmatpush1.msra.mxu0 %v7456
        %7501 = vmatprep.subr.mxu0 0.0
        %7502 = vmatpush2.msra.mxu0 0.0
        %7503 = vmatprep.subr.mxu0 0.0
        %7504 = vmatpush2.msra.mxu0 0.0
        %7505 = vmatprep.subr.mxu0 0.0
        %7506 = vmatpush2.msra.mxu0 0.0
        %7507 = vmatprep.subr.mxu0 0.0
        %7508 = vmatpush2.msra.mxu0 0.0
        %7509 = vmatprep.subr.mxu0 0.0
        %7510 = vmatpush2.msra.mxu0 0.0
        %7511 = vmatprep.subr.mxu0 0.0
        %7512 = vmatpush2.msra.mxu0 0.0
        %7513 = vmatprep.subr.mxu0 0.0
        %7514 = vmatpush2.msra.mxu0 0.0
        %7515 = vmatprep.subr.mxu0 0.0
        %7516 = vmatpush2.msra.mxu0 0.0
        %7517 = vmatprep.subr.mxu0 0.0
        %7518 = vmatpush2.msra.mxu0 0.0
        %7519 = vmatprep.subr.mxu0 0.0
        %7520 = vmatpush2.msra.mxu0 0.0
        %7521 = vmatprep.subr.mxu0 0.0
        %7522 = vmatpush2.msra.mxu0 0.0
        %7523 = vmatprep.subr.mxu0 0.0
        %7524 = vmatpush2.msra.mxu0 0.0
        %7525 = vmatprep.subr.mxu0 0.0
        %7526 = vmatpush2.msra.mxu0 0.0
        %7527 = vmatprep.subr.mxu0 0.0
        %7528 = vmatpush2.msra.mxu0 0.0
        %7529 = vmatprep.subr.mxu0 0.0
        %7530 = vmatpush2.msra.mxu0 0.0
        %7531 = vmatprep.subr.mxu0 0.0
        %7532 = vmatpush2.msra.mxu0 0.0
        %7533 = vmatprep.mubr.f32.mxu0 0.0
        %7534 = vmatmul.mubr.f32.gmra.mxu0 %v7467
        %v7535 = vpop.f32.mrf.mxu0
        %v7536 = vadd.f32 0.0, %v7535
        %v7537 = vpop.f32.mrf.mxu0
        %7538 = vdwg.mxu0
        %v7539 = vadd.f32 %v7378, %v7536
        %s7540 = scalar_lea.vmem %s7, 64
        %v7541 = vld [vmem:[%s7540] sm:$0xff]
        %v7542 = vld [vmem:[%s7540 + $0x8] sm:$0xff]
        %v7544 = vsel %vm6896, %v7542, 0
        %7546 = vmatprep.subr.mxu0 0.0
        %7547 = vmatpush1.msra.mxu0 %v6878
        %7548 = vmatprep.subr.mxu0 0.0
        %7549 = vmatpush1.msra.mxu0 %v6877
        %7550 = vmatprep.subr.mxu0 0.0
        %7551 = vmatpush1.msra.mxu0 %v6876
        %7552 = vmatprep.subr.mxu0 0.0
        %7553 = vmatpush1.msra.mxu0 %v6875
        %7554 = vmatprep.subr.mxu0 0.0
        %7555 = vmatpush1.msra.mxu0 %v6874
        %7556 = vmatprep.subr.mxu0 0.0
        %7557 = vmatpush1.msra.mxu0 %v6873
        %7558 = vmatprep.subr.mxu0 0.0
        %7559 = vmatpush1.msra.mxu0 %v6872
        %7560 = vmatprep.subr.mxu0 0.0
        %7561 = vmatpush1.msra.mxu0 %v6871
        %7562 = vmatprep.subr.mxu0 0.0
        %7563 = vmatpush1.msra.mxu0 %v6870
        %7564 = vmatprep.subr.mxu0 0.0
        %7565 = vmatpush1.msra.mxu0 %v6869
        %7566 = vmatprep.subr.mxu0 0.0
        %7567 = vmatpush1.msra.mxu0 %v6868
        %7568 = vmatprep.subr.mxu0 0.0
        %7569 = vmatpush1.msra.mxu0 %v6867
        %7570 = vmatprep.subr.mxu0 0.0
        %7571 = vmatpush1.msra.mxu0 %v6866
        %7572 = vmatprep.subr.mxu0 0.0
        %7573 = vmatpush1.msra.mxu0 %v6865
        %7574 = vmatprep.subr.mxu0 0.0
        %7575 = vmatpush1.msra.mxu0 %v6864
        %7576 = vmatprep.subr.mxu0 0.0
        %7577 = vmatpush1.msra.mxu0 %v6863
        %7578 = vmatprep.subr.mxu0 0.0
        %7579 = vmatpush2.msra.mxu0 0.0
        %7580 = vmatprep.subr.mxu0 0.0
        %7581 = vmatpush2.msra.mxu0 %v6902
        %7582 = vmatprep.subr.mxu0 0.0
        %7583 = vmatpush2.msra.mxu0 %v6892
        %7584 = vmatprep.subr.mxu0 0.0
        %7585 = vmatpush2.msra.mxu0 %v6891
        %7586 = vmatprep.subr.mxu0 0.0
        %7587 = vmatpush2.msra.mxu0 %v6890
        %7588 = vmatprep.subr.mxu0 0.0
        %7589 = vmatpush2.msra.mxu0 %v6889
        %7590 = vmatprep.subr.mxu0 0.0
        %7591 = vmatpush2.msra.mxu0 %v6888
        %7592 = vmatprep.subr.mxu0 0.0
        %7593 = vmatpush2.msra.mxu0 %v6887
        %7594 = vmatprep.subr.mxu0 0.0
        %7595 = vmatpush2.msra.mxu0 %v6886
        %7596 = vmatprep.subr.mxu0 0.0
        %7597 = vmatpush2.msra.mxu0 %v6885
        %7598 = vmatprep.subr.mxu0 0.0
        %7599 = vmatpush2.msra.mxu0 %v6884
        %7600 = vmatprep.subr.mxu0 0.0
        %7601 = vmatpush2.msra.mxu0 %v6883
        %7602 = vmatprep.subr.mxu0 0.0
        %7603 = vmatpush2.msra.mxu0 %v6882
        %7604 = vmatprep.subr.mxu0 0.0
        %7605 = vmatpush2.msra.mxu0 %v6881
        %7606 = vmatprep.subr.mxu0 0.0
        %7607 = vmatpush2.msra.mxu0 %v6880
        %7608 = vmatprep.subr.mxu0 0.0
        %7609 = vmatpush2.msra.mxu0 %v6879
        %7610 = vmatprep.mubr.f32.mxu0 %v7544
        %7611 = vmatmul.mubr.f32.gmra.mxu0 %v7541
        %v7612 = vpop.f32.mrf.mxu0
        %v7613 = vadd.f32 0.0, %v7612
        %v7614 = vpop.f32.mrf.mxu0
        %7615 = vdwg.mxu0
        %s7616 = scalar_lea.vmem %s8, 320
        %v7617 = vld [vmem:[%s7616] sm:$0xff]
        %v7618 = vld [vmem:[%s7616 + $0x8] sm:$0xff]
        %v7619 = vld [vmem:[%s7616 + $0x10] sm:$0xff]
        %v7620 = vld [vmem:[%s7616 + $0x18] sm:$0xff]
        %v7621 = vld [vmem:[%s7616 + $0x20] sm:$0xff]
        %v7622 = vld [vmem:[%s7616 + $0x28] sm:$0xff]
        %v7623 = vld [vmem:[%s7616 + $0x30] sm:$0xff]
        %v7624 = vld [vmem:[%s7616 + $0x38] sm:$0xff]
        %v7625 = vld [vmem:[%s7616 + $0x40] sm:$0xff]
        %v7626 = vld [vmem:[%s7616 + $0x48] sm:$0xff]
        %v7628 = vsel %vm7071, %v7613, 0
        %7630 = vmatprep.subr.mxu0 0.0
        %7631 = vmatpush1.msra.mxu0 0.0
        %7632 = vmatprep.subr.mxu0 0.0
        %7633 = vmatpush1.msra.mxu0 0.0
        %7634 = vmatprep.subr.mxu0 0.0
        %7635 = vmatpush1.msra.mxu0 0.0
        %7636 = vmatprep.subr.mxu0 0.0
        %7637 = vmatpush1.msra.mxu0 0.0
        %7638 = vmatprep.subr.mxu0 0.0
        %7639 = vmatpush1.msra.mxu0 0.0
        %7640 = vmatprep.subr.mxu0 0.0
        %7641 = vmatpush1.msra.mxu0 0.0
        %7642 = vmatprep.subr.mxu0 0.0
        %7643 = vmatpush1.msra.mxu0 %v7626
        %7644 = vmatprep.subr.mxu0 0.0
        %7645 = vmatpush1.msra.mxu0 %v7625
        %7646 = vmatprep.subr.mxu0 0.0
        %7647 = vmatpush1.msra.mxu0 %v7624
        %7648 = vmatprep.subr.mxu0 0.0
        %7649 = vmatpush1.msra.mxu0 %v7623
        %7650 = vmatprep.subr.mxu0 0.0
        %7651 = vmatpush1.msra.mxu0 %v7622
        %7652 = vmatprep.subr.mxu0 0.0
        %7653 = vmatpush1.msra.mxu0 %v7621
        %7654 = vmatprep.subr.mxu0 0.0
        %7655 = vmatpush1.msra.mxu0 %v7620
        %7656 = vmatprep.subr.mxu0 0.0
        %7657 = vmatpush1.msra.mxu0 %v7619
        %7658 = vmatprep.subr.mxu0 0.0
        %7659 = vmatpush1.msra.mxu0 %v7618
        %7660 = vmatprep.subr.mxu0 0.0
        %7661 = vmatpush1.msra.mxu0 %v7617
        %7662 = vmatprep.subr.mxu0 0.0
        %7663 = vmatpush2.msra.mxu0 0.0
        %7664 = vmatprep.subr.mxu0 0.0
        %7665 = vmatpush2.msra.mxu0 0.0
        %7666 = vmatprep.subr.mxu0 0.0
        %7667 = vmatpush2.msra.mxu0 0.0
        %7668 = vmatprep.subr.mxu0 0.0
        %7669 = vmatpush2.msra.mxu0 0.0
        %7670 = vmatprep.subr.mxu0 0.0
        %7671 = vmatpush2.msra.mxu0 0.0
        %7672 = vmatprep.subr.mxu0 0.0
        %7673 = vmatpush2.msra.mxu0 0.0
        %7674 = vmatprep.subr.mxu0 0.0
        %7675 = vmatpush2.msra.mxu0 0.0
        %7676 = vmatprep.subr.mxu0 0.0
        %7677 = vmatpush2.msra.mxu0 0.0
        %7678 = vmatprep.subr.mxu0 0.0
        %7679 = vmatpush2.msra.mxu0 0.0
        %7680 = vmatprep.subr.mxu0 0.0
        %7681 = vmatpush2.msra.mxu0 0.0
        %7682 = vmatprep.subr.mxu0 0.0
        %7683 = vmatpush2.msra.mxu0 0.0
        %7684 = vmatprep.subr.mxu0 0.0
        %7685 = vmatpush2.msra.mxu0 0.0
        %7686 = vmatprep.subr.mxu0 0.0
        %7687 = vmatpush2.msra.mxu0 0.0
        %7688 = vmatprep.subr.mxu0 0.0
        %7689 = vmatpush2.msra.mxu0 0.0
        %7690 = vmatprep.subr.mxu0 0.0
        %7691 = vmatpush2.msra.mxu0 0.0
        %7692 = vmatprep.subr.mxu0 0.0
        %7693 = vmatpush2.msra.mxu0 0.0
        %7694 = vmatprep.mubr.f32.mxu0 0.0
        %7695 = vmatmul.mubr.f32.gmra.mxu0 %v7628
        %v7696 = vpop.f32.mrf.mxu0
        %v7697 = vadd.f32 0.0, %v7696
        %v7698 = vpop.f32.mrf.mxu0
        %7699 = vdwg.mxu0
        %v7700 = vadd.f32 %v7539, %v7697
        %v7701 = vld [vmem:[%s9] sm:$0x1]
        %v7703 = vlaneseq
        %v7704 = vshrl.u32 %v7703, 7
        %v7705 = vsub.s32 0, %v7704
        %v7706 = vrot.slane %v7701, %v7705
        %v7708 = vadd.f32 %v7700, %v7706
        %v7709 = vmax.f32 %v7708, 0.0
        %v7710 = vld [vmem:[%s10] sm:$0xff]
        %v7711 = vld [vmem:[%s10 + $0x8] sm:$0xff]
        %v7712 = vld [vmem:[%s10 + $0x10] sm:$0xff]
        %v7713 = vld [vmem:[%s10 + $0x18] sm:$0xff]
        %v7714 = vld [vmem:[%s10 + $0x20] sm:$0xff]
        %v7715 = vld [vmem:[%s10 + $0x28] sm:$0xff]
        %v7716 = vld [vmem:[%s10 + $0x30] sm:$0xff]
        %v7717 = vld [vmem:[%s10 + $0x38] sm:$0xff]
        %v7718 = vld [vmem:[%s10 + $0x40] sm:$0xff]
        %v7719 = vld [vmem:[%s10 + $0x48] sm:$0xff]
        %v7720 = vld [vmem:[%s10 + $0x50] sm:$0xff]
        %v7721 = vld [vmem:[%s10 + $0x58] sm:$0xff]
        %v7722 = vld [vmem:[%s10 + $0x60] sm:$0xff]
        %v7723 = vld [vmem:[%s10 + $0x68] sm:$0xff]
        %v7724 = vld [vmem:[%s10 + $0x70] sm:$0xff]
        %v7725 = vld [vmem:[%s10 + $0x78] sm:$0xff]
        %v7726 = vld [vmem:[%s11] sm:$0x1]
        %v7728 = vlaneseq
        %v7729 = vshrl.u32 %v7728, 7
        %v7730 = vsub.s32 0, %v7729
        %v7731 = vrot.slane %v7726, %v7730
        %7733 = vmatprep.subr.mxu0 0.0
        %7734 = vmatpush1.msra.mxu0 %v7725
        %7735 = vmatprep.subr.mxu0 0.0
        %7736 = vmatpush1.msra.mxu0 %v7724
        %7737 = vmatprep.subr.mxu0 0.0
        %7738 = vmatpush1.msra.mxu0 %v7723
        %7739 = vmatprep.subr.mxu0 0.0
        %7740 = vmatpush1.msra.mxu0 %v7722
        %7741 = vmatprep.subr.mxu0 0.0
        %7742 = vmatpush1.msra.mxu0 %v7721
        %7743 = vmatprep.subr.mxu0 0.0
        %7744 = vmatpush1.msra.mxu0 %v7720
        %7745 = vmatprep.subr.mxu0 0.0
        %7746 = vmatpush1.msra.mxu0 %v7719
        %7747 = vmatprep.subr.mxu0 0.0
        %7748 = vmatpush1.msra.mxu0 %v7718
        %7749 = vmatprep.subr.mxu0 0.0
        %7750 = vmatpush1.msra.mxu0 %v7717
        %7751 = vmatprep.subr.mxu0 0.0
        %7752 = vmatpush1.msra.mxu0 %v7716
        %7753 = vmatprep.subr.mxu0 0.0
        %7754 = vmatpush1.msra.mxu0 %v7715
        %7755 = vmatprep.subr.mxu0 0.0
        %7756 = vmatpush1.msra.mxu0 %v7714
        %7757 = vmatprep.subr.mxu0 0.0
        %7758 = vmatpush1.msra.mxu0 %v7713
        %7759 = vmatprep.subr.mxu0 0.0
        %7760 = vmatpush1.msra.mxu0 %v7712
        %7761 = vmatprep.subr.mxu0 0.0
        %7762 = vmatpush1.msra.mxu0 %v7711
        %7763 = vmatprep.subr.mxu0 0.0
        %7764 = vmatpush1.msra.mxu0 %v7710
        %7765 = vmatprep.subr.mxu0 0.0
        %7766 = vmatpush2.msra.mxu0 0.0
        %7767 = vmatprep.subr.mxu0 0.0
        %7768 = vmatpush2.msra.mxu0 0.0
        %7769 = vmatprep.subr.mxu0 0.0
        %7770 = vmatpush2.msra.mxu0 0.0
        %7771 = vmatprep.subr.mxu0 0.0
        %7772 = vmatpush2.msra.mxu0 0.0
        %7773 = vmatprep.subr.mxu0 0.0
        %7774 = vmatpush2.msra.mxu0 0.0
        %7775 = vmatprep.subr.mxu0 0.0
        %7776 = vmatpush2.msra.mxu0 0.0
        %7777 = vmatprep.subr.mxu0 0.0
        %7778 = vmatpush2.msra.mxu0 0.0
        %7779 = vmatprep.subr.mxu0 0.0
        %7780 = vmatpush2.msra.mxu0 0.0
        %7781 = vmatprep.subr.mxu0 0.0
        %7782 = vmatpush2.msra.mxu0 0.0
        %7783 = vmatprep.subr.mxu0 0.0
        %7784 = vmatpush2.msra.mxu0 0.0
        %7785 = vmatprep.subr.mxu0 0.0
        %7786 = vmatpush2.msra.mxu0 0.0
        %7787 = vmatprep.subr.mxu0 0.0
        %7788 = vmatpush2.msra.mxu0 0.0
        %7789 = vmatprep.subr.mxu0 0.0
        %7790 = vmatpush2.msra.mxu0 0.0
        %7791 = vmatprep.subr.mxu0 0.0
        %7792 = vmatpush2.msra.mxu0 0.0
        %7793 = vmatprep.subr.mxu0 0.0
        %7794 = vmatpush2.msra.mxu0 0.0
        %7795 = vmatprep.subr.mxu0 0.0
        %7796 = vmatpush2.msra.mxu0 0.0
        %7797 = vmatprep.mubr.f32.mxu0 0.0
        %7798 = vmatmul.mubr.f32.gmra.mxu0 %v7709
        %v7799 = vpop.f32.mrf.mxu0
        %v7800 = vadd.f32 %v7731, %v7799
        %v7801 = vpop.f32.mrf.mxu0
        %7802 = vdwg.mxu0
        %v7803 = vmax.f32 %v7800, 0.0
        %v7804 = vld [vmem:[%s12] sm:$0xff]
        %v7805 = vld [vmem:[%s12 + $0x8] sm:$0xff]
        %v7806 = vld [vmem:[%s12 + $0x10] sm:$0xff]
        %v7807 = vld [vmem:[%s12 + $0x18] sm:$0xff]
        %v7808 = vld [vmem:[%s12 + $0x20] sm:$0xff]
        %v7809 = vld [vmem:[%s12 + $0x28] sm:$0xff]
        %v7810 = vld [vmem:[%s12 + $0x30] sm:$0xff]
        %v7811 = vld [vmem:[%s12 + $0x38] sm:$0xff]
        %v7812 = vld [vmem:[%s12 + $0x40] sm:$0xff]
        %v7813 = vld [vmem:[%s12 + $0x48] sm:$0xff]
        %v7814 = vld [vmem:[%s12 + $0x50] sm:$0xff]
        %v7815 = vld [vmem:[%s12 + $0x58] sm:$0xff]
        %v7816 = vld [vmem:[%s12 + $0x60] sm:$0xff]
        %v7817 = vld [vmem:[%s12 + $0x68] sm:$0xff]
        %v7818 = vld [vmem:[%s12 + $0x70] sm:$0xff]
        %v7819 = vld [vmem:[%s12 + $0x78] sm:$0xff]
        %v7820 = vld [vmem:[%s13] sm:$0x1]
        %v7822 = vlaneseq
        %v7823 = vshrl.u32 %v7822, 7
        %v7824 = vsub.s32 0, %v7823
        %v7825 = vrot.slane %v7820, %v7824
        %7827 = vmatprep.subr.mxu0 0.0
        %7828 = vmatpush1.msra.mxu0 %v7819
        %7829 = vmatprep.subr.mxu0 0.0
        %7830 = vmatpush1.msra.mxu0 %v7818
        %7831 = vmatprep.subr.mxu0 0.0
        %7832 = vmatpush1.msra.mxu0 %v7817
        %7833 = vmatprep.subr.mxu0 0.0
        %7834 = vmatpush1.msra.mxu0 %v7816
        %7835 = vmatprep.subr.mxu0 0.0
        %7836 = vmatpush1.msra.mxu0 %v7815
        %7837 = vmatprep.subr.mxu0 0.0
        %7838 = vmatpush1.msra.mxu0 %v7814
        %7839 = vmatprep.subr.mxu0 0.0
        %7840 = vmatpush1.msra.mxu0 %v7813
        %7841 = vmatprep.subr.mxu0 0.0
        %7842 = vmatpush1.msra.mxu0 %v7812
        %7843 = vmatprep.subr.mxu0 0.0
        %7844 = vmatpush1.msra.mxu0 %v7811
        %7845 = vmatprep.subr.mxu0 0.0
        %7846 = vmatpush1.msra.mxu0 %v7810
        %7847 = vmatprep.subr.mxu0 0.0
        %7848 = vmatpush1.msra.mxu0 %v7809
        %7849 = vmatprep.subr.mxu0 0.0
        %7850 = vmatpush1.msra.mxu0 %v7808
        %7851 = vmatprep.subr.mxu0 0.0
        %7852 = vmatpush1.msra.mxu0 %v7807
        %7853 = vmatprep.subr.mxu0 0.0
        %7854 = vmatpush1.msra.mxu0 %v7806
        %7855 = vmatprep.subr.mxu0 0.0
        %7856 = vmatpush1.msra.mxu0 %v7805
        %7857 = vmatprep.subr.mxu0 0.0
        %7858 = vmatpush1.msra.mxu0 %v7804
        %7859 = vmatprep.subr.mxu0 0.0
        %7860 = vmatpush2.msra.mxu0 0.0
        %7861 = vmatprep.subr.mxu0 0.0
        %7862 = vmatpush2.msra.mxu0 0.0
        %7863 = vmatprep.subr.mxu0 0.0
        %7864 = vmatpush2.msra.mxu0 0.0
        %7865 = vmatprep.subr.mxu0 0.0
        %7866 = vmatpush2.msra.mxu0 0.0
        %7867 = vmatprep.subr.mxu0 0.0
        %7868 = vmatpush2.msra.mxu0 0.0
        %7869 = vmatprep.subr.mxu0 0.0
        %7870 = vmatpush2.msra.mxu0 0.0
        %7871 = vmatprep.subr.mxu0 0.0
        %7872 = vmatpush2.msra.mxu0 0.0
        %7873 = vmatprep.subr.mxu0 0.0
        %7874 = vmatpush2.msra.mxu0 0.0
        %7875 = vmatprep.subr.mxu0 0.0
        %7876 = vmatpush2.msra.mxu0 0.0
        %7877 = vmatprep.subr.mxu0 0.0
        %7878 = vmatpush2.msra.mxu0 0.0
        %7879 = vmatprep.subr.mxu0 0.0
        %7880 = vmatpush2.msra.mxu0 0.0
        %7881 = vmatprep.subr.mxu0 0.0
        %7882 = vmatpush2.msra.mxu0 0.0
        %7883 = vmatprep.subr.mxu0 0.0
        %7884 = vmatpush2.msra.mxu0 0.0
        %7885 = vmatprep.subr.mxu0 0.0
        %7886 = vmatpush2.msra.mxu0 0.0
        %7887 = vmatprep.subr.mxu0 0.0
        %7888 = vmatpush2.msra.mxu0 0.0
        %7889 = vmatprep.subr.mxu0 0.0
        %7890 = vmatpush2.msra.mxu0 0.0
        %7891 = vmatprep.mubr.f32.mxu0 0.0
        %7892 = vmatmul.mubr.f32.gmra.mxu0 %v7803
        %v7893 = vpop.f32.mrf.mxu0
        %v7894 = vadd.f32 %v7825, %v7893
        %v7895 = vpop.f32.mrf.mxu0
        %7896 = vdwg.mxu0
        %vm7897 = vcmask 80896
        %7898 = vst.msk [vmem:[%s461] sm:$0xff] %vm7897, %v7894
        %s7899 = sand.u32 %s335, 1
        %s7900 = scalar_lea.sflag [#allocation3], %s7899
        %s7901 = sand.u32 %s335, 1
        %s7902 = smul.addr %s7901, 8
        %s7903 = scalar_lea.vmem [#allocation2], %s7902
        // Predicated region
        $region77: #{lenet_forward.1} parent=75 // pred_check
          %p7904 = pneg %p345
        $region78: #{lenet_forward.1} parent=75 // pred_check_branch
          %7906 = sbr.rel (%p7904) target = $region80
        $region79: #{lenet_forward.1} parent=75 // pred_region
          %s7908 = ssub.s32 128, 128
          %7909 = vsyncadd %s7900, %s7908
          %s7910 = smul.addr %s28, 128
          %s7911 = scalar_lea.hbm %s14, %s7910
          %s7913 = sshll.u32 %s7903, 4
          %s7914 = int_to_ptr.vmem [resolvable:$true] %s7913
          %7916 = dma.vmem_to_hbm [thread:$0]  %s7914, 128, %s7911, %s7900
        $region80: #{lenet_forward.1} parent=75 // pred_fallthru
          _
      $region76: #{lenet_forward.1} parent=5 // pred_fallthru
        _
      %p7917 = scmp.le.s32.totalorder 2, %s23
      // Predicated region
      $region81: #{lenet_forward.1} parent=5 // pred_check
        %p7918 = pneg %p7917
      $region82: #{lenet_forward.1} parent=5 // pred_check_branch
        %7920 = sbr.rel (%p7918) target = $region84
      $region83: #{lenet_forward.1} parent=5 // pred_region
        %s7921 = ssub.s32 %s23, 2
        // Predicated region
        $region85: #{lenet_forward.1} parent=83 // pred_check
          %p7922 = pneg %p351
        $region86: #{lenet_forward.1} parent=83 // pred_check_branch
          %7924 = sbr.rel (%p7922) target = $region88
        $region87: #{lenet_forward.1} parent=83 // pred_region
          %s7925 = sand.u32 %s336, 1
          %s7926 = scalar_lea.sflag [#allocation3], %s7925
          %s7927 = sand.u32 %s336, 1
          %s7928 = smul.addr %s7927, 8
          %s7929 = scalar_lea.vmem [#allocation2], %s7928
          %7930 = dma.done %s7926, 128
        $region88: #{lenet_forward.1} parent=83 // pred_fallthru
          _
      $region84: #{lenet_forward.1} parent=5 // pred_fallthru
        _
    $region6: #{lenet_forward.1} parent=1 // loop_footer
      %s27 = sadd.s32 1, %s23
    $region7: #{lenet_forward.1} parent=1 // loop_footer_branch
      %22 = sbr.rel target = $region3
    $region8: #{lenet_forward.1} parent=1 // loop_exit
      _
    %7931 = vsyncpa [#allocation3], 1
    %s7932 = scalar_lea.sflag [#allocation3], 1
    %7933 = vsyncpa %s7932, 1

</llo_original>
